<compile_context>
chip_gen: v6e
topology: v6e:2x2x1
jax: 0.10.0
libtpu: 0.0.40
codegen_flags: <defaults>
</compile_context>

<pallas_src>
import jax
import jax.numpy as jnp
from jax import lax
from jax.experimental import pallas as pl
from jax.experimental.pallas import tpu as pltpu

# ----------------------------- model sizes ---------------------------------
MAX_FEATURES = 1000   # embedding vocab
EMBED_SIZE   = 32     # E
MAXLEN       = 8      # T (sequence length / attention step_dim)
HIDDEN       = 64     # H (LSTM/GRU hidden size)
N_FEATS      = 4      # train_features.shape[1]
BATCH        = 2      # per-chunk batch (grid iterates over chunks of this size)
EPS_BN       = 1e-5
C_RAW        = 8 * HIDDEN + N_FEATS    # 516 (original concat width)
C_PAD        = 640                     # padded to 5 * 128 lanes
FEAT_PAD     = 128                     # feats padded into their own lane chunk


# ----------------------------- fused kernel --------------------------------
def fused_forward_kernel(x_ref, feat_ref,
                         wi_l_ref, wh_l_ref, b_l_ref,
                         wi_g_ref, wh_g_ref, bi_g_ref, bh_g_ref,
                         attl_w_ref, attl_b_ref, attg_w_ref, attg_b_ref,
                         w1_ref, b1_ref, w2_ref, b2_ref,
                         w3_ref, b3_ref, w4_ref, b4_ref,
                         out_ref,
                         gil_scr, hl_scr, gig_scr, hg_scr):
    T, B, H = MAXLEN, BATCH, HIDDEN
    D = 2 * H
    f32, bf16 = jnp.float32, jnp.bfloat16

    # Direction-routing lane masks: inside every 2H-wide gate block, lanes
    # [0:H] belong to the forward direction, [H:2H] to the reverse direction.
    fwd8 = (lax.broadcasted_iota(jnp.int32, (B, 8 * H), 1) % D) < H
    fwd6 = (lax.broadcasted_iota(jnp.int32, (B, 6 * H), 1) % D) < H

    def tree_sum(x):          # sum over time of a t-major (T*B, L) value
        n = x.shape[0]
        while n > B:
            n //= 2
            x = x[:n] + x[n:]
        return x              # (B, L)

    def tree_max(x):
        n = x.shape[0]
        while n > B:
            n //= 2
            x = jnp.maximum(x[:n], x[n:])
        return x

    # TODO(synk): Dropout2d(0.1) on the embedding is identity in eval mode.

    # ---- hoisted LSTM input projection (gate/direction-interleaved cols) ----
    gil_scr[...] = (jnp.dot(x_ref[...], wi_l_ref[...],
                            preferred_element_type=f32) + b_l_ref[...])

    # ---- bidirectional LSTM: both directions in lockstep --------------------
    # TODO(synk): weight-stationary MXU (pltpu.matmul_push_rhs/acc_lhs/pop) for
    # wh_l / wh_g would avoid re-streaming the hidden weight every step; kept
    # as plain jnp.dot for lowering safety.
    h = jnp.zeros((B, D), f32)       # [h_fwd | h_rev]
    c = jnp.zeros((B, D), f32)
    for s in range(T):               # fully unrolled (T static)
        tf, tr = s, T - 1 - s
        gx = jnp.where(fwd8, gil_scr[tf * B:(tf + 1) * B, :],
                             gil_scr[tr * B:(tr + 1) * B, :])
        g = gx + jnp.dot(h.astype(bf16), wh_l_ref[...],
                         preferred_element_type=f32)
        ifo = jax.nn.sigmoid(g[:, :3 * D])      # i|f|o, one 384-lane pass
        gg = jnp.tanh(g[:, 3 * D:])             # g,     one 128-lane pass
        c = ifo[:, D:2 * D] * c + ifo[:, :D] * gg
        h = ifo[:, 2 * D:] * jnp.tanh(c)
        hl_scr[tf * B:(tf + 1) * B, :H] = h[:, :H]
        hl_scr[tr * B:(tr + 1) * B, H:] = h[:, H:]

    # ---- hoisted GRU input projection ---------------------------------------
    gig_scr[...] = (jnp.dot(hl_scr[...].astype(bf16), wi_g_ref[...],
                            preferred_element_type=f32) + bi_g_ref[...])

    # ---- bidirectional GRU, same lockstep / interleaved scheme --------------
    h = jnp.zeros((B, D), f32)
    for s in range(T):
        tf, tr = s, T - 1 - s
        gx = jnp.where(fwd6, gig_scr[tf * B:(tf + 1) * B, :],
                             gig_scr[tr * B:(tr + 1) * B, :])
        gh = (jnp.dot(h.astype(bf16), wh_g_ref[...],
                      preferred_element_type=f32) + bh_g_ref[...])
        rz = jax.nn.sigmoid(gx[:, :2 * D] + gh[:, :2 * D])   # r|z, 256 lanes
        r, z = rz[:, :D], rz[:, D:]
        n = jnp.tanh(gx[:, 2 * D:] + r * gh[:, 2 * D:])      # b_hn inside r*( )
        h = (1.0 - z) * n + z * h
        hg_scr[tf * B:(tf + 1) * B, :H] = h[:, :H]
        hg_scr[tr * B:(tr + 1) * B, H:] = h[:, H:]

    # ---- vectorized attention (one dot + one fused activation per layer) ----
    def attention(seq, w_ref, bcol_ref):
        e = jnp.dot(seq, w_ref[...], preferred_element_type=f32)   # (T*B, 1)
        a = jnp.exp(jnp.tanh(e + bcol_ref[...]))                   # (T*B, 1)
        num = tree_sum(a * seq)                                    # (B, 2H)
        den = tree_sum(a)                                          # (B, 1)
        # reference: sum_t (a/den + 1e-10) * x  ==  num/den + 1e-10 * sum_t x
        return num / den + 1e-10 * tree_sum(seq)

    hl = hl_scr[...]
    hg = hg_scr[...]
    att_l = attention(hl, attl_w_ref, attl_b_ref)
    att_g = attention(hg, attg_w_ref, attg_b_ref)

    # ---- avg / max pool over time of h_gru -----------------------------------
    avg = tree_sum(hg) * (1.0 / T)
    mx = tree_max(hg)

    # ---- head: concat -> fc1(+BN)+ReLU -> fc2(+BN)+ReLU -> linear+ReLU -> out
    conc = jnp.concatenate([att_l, att_g, avg, mx, feat_ref[...]], axis=1)  # (B, 640)
    h1 = jnp.maximum(jnp.dot(conc.astype(bf16), w1_ref[...],
                             preferred_element_type=f32) + b1_ref[...], 0.0)
    h2 = jnp.maximum(jnp.dot(h1.astype(bf16), w2_ref[...],
                             preferred_element_type=f32) + b2_ref[...], 0.0)
    h3 = jnp.maximum(jnp.dot(h2, w3_ref[...], preferred_element_type=f32)
                     + b3_ref[...], 0.0)
    # TODO(synk): Dropout(0.1) between linear and out is identity in eval mode.
    out_ref[...] = jnp.dot(h3, w4_ref[...], preferred_element_type=f32) + b4_ref[...]


# ----------------------------- wrapper --------------------------------------
def _const_spec(shape):
    idx = (0,) * len(shape)
    return pl.BlockSpec(shape, lambda i, _idx=idx: _idx)


def forward(p, token_ids, feats):
    Btot, T = token_ids.shape
    assert T == MAXLEN and Btot % BATCH == 0
    BC = BATCH
    nc = Btot // BC

    # --- embedding lookup stays in the wrapper (gather out of the kernel) ---
    emb_x = jnp.take(p['emb'], token_ids.astype(jnp.int32), axis=0)   # (Btot,T,E)
    emb_x = (emb_x.reshape(nc, BC, T, EMBED_SIZE)
                  .transpose(0, 2, 1, 3)                 # t-major within a chunk
                  .reshape(nc, T * BC, EMBED_SIZE)
                  .astype(jnp.bfloat16))

    feats_pad = jnp.pad(feats.astype(jnp.float32),
                        ((0, 0), (0, FEAT_PAD - feats.shape[1])))
    feats_pad = feats_pad.reshape(nc, BC, FEAT_PAD)

    # attention biases as t-major (T*B, 1) VMEM columns
    attl_b = jnp.repeat(p['attl_b'], BC).reshape(T * BC, 1)
    attg_b = jnp.repeat(p['attg_b'], BC).reshape(T * BC, 1)

    weights = (p['wi_l'], p['wh_l'], p['b_l'],
               p['wi_g'], p['wh_g'], p['bi_g'], p['bh_g'],
               p['attl_w'], attl_b, p['attg_w'], attg_b,
               p['w1'], p['b1'], p['w2'], p['b2'],
               p['w3'], p['b3'], p['w4'], p['b4'])

    in_specs = (
        [pl.BlockSpec((None, T * BC, EMBED_SIZE), lambda i: (i, 0, 0)),
         pl.BlockSpec((None, BC, FEAT_PAD), lambda i: (i, 0, 0))]
        + [_const_spec(w.shape) for w in weights])          # weights stay resident

    out = pl.pallas_call(
        fused_forward_kernel,
        out_shape=jax.ShapeDtypeStruct((nc, BC, 1), jnp.float32),
        grid=(nc,),
        in_specs=in_specs,
        out_specs=pl.BlockSpec((None, BC, 1), lambda i: (i, 0, 0)),
        scratch_shapes=[
            pltpu.VMEM((T * BC, 8 * HIDDEN), jnp.float32),   # LSTM input preacts
            pltpu.VMEM((T * BC, 2 * HIDDEN), jnp.float32),   # h_lstm
            pltpu.VMEM((T * BC, 6 * HIDDEN), jnp.float32),   # GRU input preacts
            pltpu.VMEM((T * BC, 2 * HIDDEN), jnp.float32),   # h_gru
        ],
        compiler_params=pltpu.CompilerParams(
            dimension_semantics=("parallel",)),   # v7x: chunks across 2 TCs
    )(emb_x, feats_pad, *weights)
    return out.reshape(Btot, 1)


# ----------------------------- params ---------------------------------------
def init_params(key):
    H, E, T, V = HIDDEN, EMBED_SIZE, MAXLEN, MAX_FEATURES
    D = 2 * H
    ks = iter(jax.random.split(key, 40))
    rn = lambda shape, s=0.1: jax.random.normal(next(ks), shape, jnp.float32) * s
    p = {}
    p['emb'] = rn((V, E), 1.0)                       # frozen embedding matrix

    def ileave(wf, wr, ng):
        # per-direction gate-major (K, ng*H) -> [g0_f g0_r | g1_f g1_r | ...]
        K = wf.shape[0]
        return jnp.concatenate([wf.reshape(K, ng, H), wr.reshape(K, ng, H)],
                               axis=2).reshape(K, ng * 2 * H)

    # --- LSTM (E -> H, bidirectional); per-direction gate order [i|f|o|g],
    #     columns interleaved as [i_f i_r | f_f f_r | o_f o_r | g_f g_r] ------
    wif = rn((E, 4 * H)); whf = rn((H, 4 * H)); blf = rn((1, 4 * H))   # b_ih+b_hh
    wir = rn((E, 4 * H)); whr = rn((H, 4 * H)); blr = rn((1, 4 * H))
    p['wi_l'] = ileave(wif, wir, 4).astype(jnp.bfloat16)               # (E, 8H)
    wh_l = jnp.zeros((D, 8 * H), jnp.float32)
    wh_l = wh_l.at[:H].set(ileave(whf, jnp.zeros_like(whf), 4))
    wh_l = wh_l.at[H:].set(ileave(jnp.zeros_like(whr), whr, 4))
    p['wh_l'] = wh_l.astype(jnp.bfloat16)                              # (2H, 8H)
    p['b_l'] = ileave(blf, blr, 4)                                     # (1, 8H)

    # --- GRU (2H -> H, bidirectional); gate order [r|z|n], interleaved ------
    gwif = rn((D, 3 * H)); gwhf = rn((H, 3 * H)); gbif = rn((1, 3 * H)); gbhf = rn((1, 3 * H))
    gwir = rn((D, 3 * H)); gwhr = rn((H, 3 * H)); gbir = rn((1, 3 * H)); gbhr = rn((1, 3 * H))
    p['wi_g'] = ileave(gwif, gwir, 3).astype(jnp.bfloat16)             # (2H, 6H)
    wh_g = jnp.zeros((D, 6 * H), jnp.float32)
    wh_g = wh_g.at[:H].set(ileave(gwhf, jnp.zeros_like(gwhf), 3))
    wh_g = wh_g.at[H:].set(ileave(jnp.zeros_like(gwhr), gwhr, 3))
    p['wh_g'] = wh_g.astype(jnp.bfloat16)                              # (2H, 6H)
    p['bi_g'] = ileave(gbif, gbir, 3)
    p['bh_g'] = ileave(gbhf, gbhr, 3)

    # --- Attention (weight (2H,1); bias zeros like torch.zeros(step_dim)) ---
    p['attl_w'] = rn((D, 1)); p['attl_b'] = jnp.zeros((T,), jnp.float32)
    p['attg_w'] = rn((D, 1)); p['attg_b'] = jnp.zeros((T,), jnp.float32)

    # --- Head with eval-mode BatchNorm folded, padded to 640 lanes ----------
    def fold_bn(w, b, gamma, beta, mean, var):
        s = gamma / jnp.sqrt(var + EPS_BN)
        return w * s[None, :], (b - mean[None, :]) * s[None, :] + beta[None, :]

    w1 = rn((C_RAW, C_RAW), 0.05); b1 = rn((1, C_RAW))
    w1, b1 = fold_bn(w1, b1, jnp.ones((C_RAW,)), jnp.zeros((C_RAW,)),
                     jnp.zeros((C_RAW,)), jnp.ones((C_RAW,)))
    p['w1'] = (jnp.zeros((C_PAD, C_PAD), jnp.float32)
               .at[:C_RAW, :C_RAW].set(w1)).astype(jnp.bfloat16)
    p['b1'] = jnp.zeros((1, C_PAD), jnp.float32).at[:, :C_RAW].set(b1)

    w2 = rn((C_RAW, 64), 0.05); b2 = rn((1, 64))
    w2, b2 = fold_bn(w2, b2, jnp.ones((64,)), jnp.zeros((64,)),
                     jnp.zeros((64,)), jnp.ones((64,)))
    p['w2'] = (jnp.zeros((C_PAD, 64), jnp.float32)
               .at[:C_RAW, :].set(w2)).astype(jnp.bfloat16)
    p['b2'] = b2

    p['w3'] = rn((64, 16)); p['b3'] = rn((1, 16))
    p['w4'] = rn((16, 1));  p['b4'] = rn((1, 1))
    return p


# ----------------------------- main ------------------------------------------
if __name__ == "__main__":
    key = jax.random.PRNGKey(0)
    kp, kt, kf = jax.random.split(key, 3)
    params = init_params(kp)
    token_ids = jax.random.randint(kt, (BATCH, MAXLEN), 0, MAX_FEATURES,
                                   dtype=jnp.int32)                     # x[0]
    feats = jax.random.normal(kf, (BATCH, N_FEATS), jnp.float32)        # x[1]

    out = jax.jit(forward)(params, token_ids, feats)
    out = jax.block_until_ready(out)
    assert out.shape == (BATCH, 1) and out.dtype == jnp.float32
    print("KERNEL_OK")
</pallas_src>

<mosaic_0001>
module attributes {stable_mosaic.version = 11 : i64} {
  func.func @fused_forward_kernel(%arg0: i32, %arg1: memref<1x16x32xbf16, #tpu.memory_space<vmem>>, %arg2: memref<1x2x128xf32, #tpu.memory_space<vmem>>, %arg3: memref<32x512xbf16, #tpu.memory_space<vmem>>, %arg4: memref<128x512xbf16, #tpu.memory_space<vmem>>, %arg5: memref<1x512xf32, #tpu.memory_space<vmem>>, %arg6: memref<128x384xbf16, #tpu.memory_space<vmem>>, %arg7: memref<128x384xbf16, #tpu.memory_space<vmem>>, %arg8: memref<1x384xf32, #tpu.memory_space<vmem>>, %arg9: memref<1x384xf32, #tpu.memory_space<vmem>>, %arg10: memref<128x1xf32, #tpu.memory_space<vmem>>, %arg11: memref<16x1xf32, #tpu.memory_space<vmem>>, %arg12: memref<128x1xf32, #tpu.memory_space<vmem>>, %arg13: memref<16x1xf32, #tpu.memory_space<vmem>>, %arg14: memref<640x640xbf16, #tpu.memory_space<vmem>>, %arg15: memref<1x640xf32, #tpu.memory_space<vmem>>, %arg16: memref<640x64xbf16, #tpu.memory_space<vmem>>, %arg17: memref<1x64xf32, #tpu.memory_space<vmem>>, %arg18: memref<64x16xf32, #tpu.memory_space<vmem>>, %arg19: memref<1x16xf32, #tpu.memory_space<vmem>>, %arg20: memref<16x1xf32, #tpu.memory_space<vmem>>, %arg21: memref<1x1xf32, #tpu.memory_space<vmem>>, %arg22: memref<1x2x1xf32, #tpu.memory_space<vmem>>, %arg23: memref<16x512xf32, #tpu.memory_space<vmem>>, %arg24: memref<16x128xf32, #tpu.memory_space<vmem>>, %arg25: memref<16x384xf32, #tpu.memory_space<vmem>>, %arg26: memref<16x128xf32, #tpu.memory_space<vmem>>) attributes {dimension_semantics = [#tpu.dimension_semantics<parallel>], iteration_bounds = array<i64: 1>, scalar_prefetch = 0 : i64, scratch_operands = 4 : i64, tpu.core_type = #tpu.core_type<tc>, window_params = [{transform_indices = @transform_0, window_bounds = array<i64: 1, 16, 32>}, {transform_indices = @transform_1, window_bounds = array<i64: 1, 2, 128>}, {pipeline_mode = #tpu.pipeline_mode<synchronous>, transform_indices = @transform_2, window_bounds = array<i64: 32, 512>}, {pipeline_mode = #tpu.pipeline_mode<synchronous>, transform_indices = @transform_3, window_bounds = array<i64: 128, 512>}, {pipeline_mode = #tpu.pipeline_mode<synchronous>, transform_indices = @transform_4, window_bounds = array<i64: 1, 512>}, {pipeline_mode = #tpu.pipeline_mode<synchronous>, transform_indices = @transform_5, window_bounds = array<i64: 128, 384>}, {pipeline_mode = #tpu.pipeline_mode<synchronous>, transform_indices = @transform_6, window_bounds = array<i64: 128, 384>}, {pipeline_mode = #tpu.pipeline_mode<synchronous>, transform_indices = @transform_7, window_bounds = array<i64: 1, 384>}, {pipeline_mode = #tpu.pipeline_mode<synchronous>, transform_indices = @transform_8, window_bounds = array<i64: 1, 384>}, {pipeline_mode = #tpu.pipeline_mode<synchronous>, transform_indices = @transform_9, window_bounds = array<i64: 128, 1>}, {pipeline_mode = #tpu.pipeline_mode<synchronous>, transform_indices = @transform_10, window_bounds = array<i64: 16, 1>}, {pipeline_mode = #tpu.pipeline_mode<synchronous>, transform_indices = @transform_11, window_bounds = array<i64: 128, 1>}, {pipeline_mode = #tpu.pipeline_mode<synchronous>, transform_indices = @transform_12, window_bounds = array<i64: 16, 1>}, {pipeline_mode = #tpu.pipeline_mode<synchronous>, transform_indices = @transform_13, window_bounds = array<i64: 640, 640>}, {pipeline_mode = #tpu.pipeline_mode<synchronous>, transform_indices = @transform_14, window_bounds = array<i64: 1, 640>}, {pipeline_mode = #tpu.pipeline_mode<synchronous>, transform_indices = @transform_15, window_bounds = array<i64: 640, 64>}, {pipeline_mode = #tpu.pipeline_mode<synchronous>, transform_indices = @transform_16, window_bounds = array<i64: 1, 64>}, {pipeline_mode = #tpu.pipeline_mode<synchronous>, transform_indices = @transform_17, window_bounds = array<i64: 64, 16>}, {pipeline_mode = #tpu.pipeline_mode<synchronous>, transform_indices = @transform_18, window_bounds = array<i64: 1, 16>}, {pipeline_mode = #tpu.pipeline_mode<synchronous>, transform_indices = @transform_19, window_bounds = array<i64: 16, 1>}, {pipeline_mode = #tpu.pipeline_mode<synchronous>, transform_indices = @transform_20, window_bounds = array<i64: 1, 1>}, {transform_indices = @transform_21, window_bounds = array<i64: 1, 2, 1>}]} {
    %0 = tpu.iota {dimensions = array<i32: 1>} : vector<2x512xi32>
    %c128_i32 = arith.constant 128 : i32
    %c0_i32 = arith.constant 0 : i32
    %1 = arith.cmpi eq, %c128_i32, %c0_i32 : i32
    %c1_i32 = arith.constant 1 : i32
    %2 = arith.select %1, %c1_i32, %c128_i32 : i32
    %3 = vector.broadcast %2 : i32 to vector<2x512xi32>
    %4 = arith.remsi %0, %3 : vector<2x512xi32>
    %c0_i32_0 = arith.constant 0 : i32
    %5 = vector.broadcast %c0_i32_0 : i32 to vector<2x512xi32>
    %6 = arith.cmpi ne, %4, %5 : vector<2x512xi32>
    %c0_i32_1 = arith.constant 0 : i32
    %7 = vector.broadcast %c0_i32_1 : i32 to vector<2x512xi32>
    %8 = arith.cmpi slt, %4, %7 : vector<2x512xi32>
    %c0_i32_2 = arith.constant 0 : i32
    %9 = arith.cmpi slt, %2, %c0_i32_2 : i32
    %10 = vector.broadcast %9 : i1 to vector<2x512xi1>
    %11 = vector.broadcast %10 : vector<2x512xi1> to vector<2x512xi1>
    %12 = arith.xori %8, %11 : vector<2x512xi1>
    %13 = arith.andi %12, %6 : vector<2x512xi1>
    %14 = vector.broadcast %2 : i32 to vector<2x512xi32>
    %15 = arith.addi %4, %14 : vector<2x512xi32>
    %16 = arith.select %13, %15, %4 : vector<2x512xi1>, vector<2x512xi32>
    %c64_i32 = arith.constant 64 : i32
    %17 = vector.broadcast %c64_i32 : i32 to vector<2x512xi32>
    %18 = arith.cmpi slt, %16, %17 : vector<2x512xi32>
    %19 = tpu.iota {dimensions = array<i32: 1>} : vector<2x384xi32>
    %c128_i32_3 = arith.constant 128 : i32
    %c0_i32_4 = arith.constant 0 : i32
    %20 = arith.cmpi eq, %c128_i32_3, %c0_i32_4 : i32
    %c1_i32_5 = arith.constant 1 : i32
    %21 = arith.select %20, %c1_i32_5, %c128_i32_3 : i32
    %22 = vector.broadcast %21 : i32 to vector<2x384xi32>
    %23 = arith.remsi %19, %22 : vector<2x384xi32>
    %c0_i32_6 = arith.constant 0 : i32
    %24 = vector.broadcast %c0_i32_6 : i32 to vector<2x384xi32>
    %25 = arith.cmpi ne, %23, %24 : vector<2x384xi32>
    %c0_i32_7 = arith.constant 0 : i32
    %26 = vector.broadcast %c0_i32_7 : i32 to vector<2x384xi32>
    %27 = arith.cmpi slt, %23, %26 : vector<2x384xi32>
    %c0_i32_8 = arith.constant 0 : i32
    %28 = arith.cmpi slt, %21, %c0_i32_8 : i32
    %29 = vector.broadcast %28 : i1 to vector<2x384xi1>
    %30 = vector.broadcast %29 : vector<2x384xi1> to vector<2x384xi1>
    %31 = arith.xori %27, %30 : vector<2x384xi1>
    %32 = arith.andi %31, %25 : vector<2x384xi1>
    %33 = vector.broadcast %21 : i32 to vector<2x384xi32>
    %34 = arith.addi %23, %33 : vector<2x384xi32>
    %35 = arith.select %32, %34, %23 : vector<2x384xi1>, vector<2x384xi32>
    %c64_i32_9 = arith.constant 64 : i32
    %36 = vector.broadcast %c64_i32_9 : i32 to vector<2x384xi32>
    %37 = arith.cmpi slt, %35, %36 : vector<2x384xi32>
    %c0 = arith.constant 0 : index
    %c0_10 = arith.constant 0 : index
    %c0_11 = arith.constant 0 : index
    %38 = vector.load %arg1[%c0, %c0_10, %c0_11] : memref<1x16x32xbf16, #tpu.memory_space<vmem>>, vector<1x16x32xbf16>
    %39 = vector.shape_cast %38 : vector<1x16x32xbf16> to vector<16x32xbf16>
    %c0_12 = arith.constant 0 : index
    %c0_13 = arith.constant 0 : index
    %40 = vector.load %arg3[%c0_12, %c0_13] : memref<32x512xbf16, #tpu.memory_space<vmem>>, vector<32x512xbf16>
    %cst = arith.constant dense<0.000000e+00> : vector<16x512xf32>
    %41 = tpu.matmul %39, %40, %cst {dimension_numbers = #tpu.dot_dimension_numbers<[1], [0], [0], [1], [0, 0, 1, 1], [], []>} : vector<16x32xbf16>, vector<32x512xbf16>, vector<16x512xf32> -> vector<16x512xf32>
    %c0_14 = arith.constant 0 : index
    %c0_15 = arith.constant 0 : index
    %42 = vector.load %arg5[%c0_14, %c0_15] : memref<1x512xf32, #tpu.memory_space<vmem>>, vector<1x512xf32>
    %43 = vector.broadcast %42 : vector<1x512xf32> to vector<16x512xf32>
    %44 = arith.addf %41, %43 : vector<16x512xf32>
    %c0_16 = arith.constant 0 : index
    %c0_17 = arith.constant 0 : index
    %45 = vector.load %arg23[%c0_16, %c0_17] : memref<16x512xf32, #tpu.memory_space<vmem>>, vector<16x512xf32>
    tpu.vector_store %arg23[%c0_16, %c0_17], %44 {strides = array<i32>} : memref<16x512xf32, #tpu.memory_space<vmem>>, vector<16x512xf32>,
    %cst_18 = arith.constant 0.000000e+00 : f32
    %46 = vector.broadcast %cst_18 : f32 to vector<2x128xf32>
    %cst_19 = arith.constant 0.000000e+00 : f32
    %47 = vector.broadcast %cst_19 : f32 to vector<2x128xf32>
    %c0_20 = arith.constant 0 : index
    %c0_21 = arith.constant 0 : index
    %48 = vector.load %arg23[%c0_20, %c0_21] : memref<16x512xf32, #tpu.memory_space<vmem>>, vector<2x512xf32>
    %c14 = arith.constant 14 : index
    %c0_22 = arith.constant 0 : index
    %49 = vector.load %arg23[%c14, %c0_22] : memref<16x512xf32, #tpu.memory_space<vmem>>, vector<2x512xf32>
    %50 = arith.select %18, %48, %49 : vector<2x512xi1>, vector<2x512xf32>
    %51 = arith.truncf %46 : vector<2x128xf32> to vector<2x128xbf16>
    %c0_23 = arith.constant 0 : index
    %c0_24 = arith.constant 0 : index
    %52 = vector.load %arg4[%c0_23, %c0_24] : memref<128x512xbf16, #tpu.memory_space<vmem>>, vector<128x512xbf16>
    %cst_25 = arith.constant dense<0.000000e+00> : vector<2x512xf32>
    %53 = tpu.matmul %51, %52, %cst_25 {dimension_numbers = #tpu.dot_dimension_numbers<[1], [0], [0], [1], [0, 0, 1, 1], [], []>} : vector<2x128xbf16>, vector<128x512xbf16>, vector<2x512xf32> -> vector<2x512xf32>
    %54 = arith.addf %50, %53 : vector<2x512xf32>
    %55 = vector.extract_strided_slice %54 {offsets = [0, 0], sizes = [2, 384], strides = [1, 1]} : vector<2x512xf32> to vector<2x384xf32>
    %56 = arith.negf %55 : vector<2x384xf32>
    %57 = math.exp %56 : vector<2x384xf32>
    %cst_26 = arith.constant 1.000000e+00 : f32
    %58 = vector.broadcast %cst_26 : f32 to vector<2x384xf32>
    %59 = arith.addf %58, %57 : vector<2x384xf32>
    %60 = arith.divf %58, %59 : vector<2x384xf32>
    %61 = vector.extract_strided_slice %54 {offsets = [0, 384], sizes = [2, 128], strides = [1, 1]} : vector<2x512xf32> to vector<2x128xf32>
    %62 = math.tanh %61 : vector<2x128xf32>
    %63 = vector.extract_strided_slice %60 {offsets = [0, 128], sizes = [2, 128], strides = [1, 1]} : vector<2x384xf32> to vector<2x128xf32>
    %64 = arith.mulf %63, %47 : vector<2x128xf32>
    %65 = vector.extract_strided_slice %60 {offsets = [0, 0], sizes = [2, 128], strides = [1, 1]} : vector<2x384xf32> to vector<2x128xf32>
    %66 = arith.mulf %65, %62 : vector<2x128xf32>
    %67 = arith.addf %64, %66 : vector<2x128xf32>
    %68 = vector.extract_strided_slice %60 {offsets = [0, 256], sizes = [2, 128], strides = [1, 1]} : vector<2x384xf32> to vector<2x128xf32>
    %69 = math.tanh %67 : vector<2x128xf32>
    %70 = arith.mulf %68, %69 : vector<2x128xf32>
    %71 = vector.extract_strided_slice %70 {offsets = [0, 0], sizes = [2, 64], strides = [1, 1]} : vector<2x128xf32> to vector<2x64xf32>
    %c0_27 = arith.constant 0 : index
    %c0_28 = arith.constant 0 : index
    %72 = vector.load %arg24[%c0_27, %c0_28] : memref<16x128xf32, #tpu.memory_space<vmem>>, vector<2x64xf32>
    tpu.vector_store %arg24[%c0_27, %c0_28], %71 {strides = array<i32>} : memref<16x128xf32, #tpu.memory_space<vmem>>, vector<2x64xf32>,
    %73 = vector.extract_strided_slice %70 {offsets = [0, 64], sizes = [2, 64], strides = [1, 1]} : vector<2x128xf32> to vector<2x64xf32>
    %c14_29 = arith.constant 14 : index
    %c64 = arith.constant 64 : index
    %74 = vector.load %arg24[%c14_29, %c64] : memref<16x128xf32, #tpu.memory_space<vmem>>, vector<2x64xf32>
    tpu.vector_store %arg24[%c14_29, %c64], %73 {strides = array<i32>} : memref<16x128xf32, #tpu.memory_space<vmem>>, vector<2x64xf32>,
    %c2 = arith.constant 2 : index
    %c0_30 = arith.constant 0 : index
    %75 = vector.load %arg23[%c2, %c0_30] : memref<16x512xf32, #tpu.memory_space<vmem>>, vector<2x512xf32>
    %c12 = arith.constant 12 : index
    %c0_31 = arith.constant 0 : index
    %76 = vector.load %arg23[%c12, %c0_31] : memref<16x512xf32, #tpu.memory_space<vmem>>, vector<2x512xf32>
    %77 = arith.select %18, %75, %76 : vector<2x512xi1>, vector<2x512xf32>
    %78 = arith.truncf %70 : vector<2x128xf32> to vector<2x128xbf16>
    %c0_32 = arith.constant 0 : index
    %c0_33 = arith.constant 0 : index
    %79 = vector.load %arg4[%c0_32, %c0_33] : memref<128x512xbf16, #tpu.memory_space<vmem>>, vector<128x512xbf16>
    %cst_34 = arith.constant dense<0.000000e+00> : vector<2x512xf32>
    %80 = tpu.matmul %78, %79, %cst_34 {dimension_numbers = #tpu.dot_dimension_numbers<[1], [0], [0], [1], [0, 0, 1, 1], [], []>} : vector<2x128xbf16>, vector<128x512xbf16>, vector<2x512xf32> -> vector<2x512xf32>
    %81 = arith.addf %77, %80 : vector<2x512xf32>
    %82 = vector.extract_strided_slice %81 {offsets = [0, 0], sizes = [2, 384], strides = [1, 1]} : vector<2x512xf32> to vector<2x384xf32>
    %83 = arith.negf %82 : vector<2x384xf32>
    %84 = math.exp %83 : vector<2x384xf32>
    %cst_35 = arith.constant 1.000000e+00 : f32
    %85 = vector.broadcast %cst_35 : f32 to vector<2x384xf32>
    %86 = arith.addf %85, %84 : vector<2x384xf32>
    %87 = arith.divf %85, %86 : vector<2x384xf32>
    %88 = vector.extract_strided_slice %81 {offsets = [0, 384], sizes = [2, 128], strides = [1, 1]} : vector<2x512xf32> to vector<2x128xf32>
    %89 = math.tanh %88 : vector<2x128xf32>
    %90 = vector.extract_strided_slice %87 {offsets = [0, 128], sizes = [2, 128], strides = [1, 1]} : vector<2x384xf32> to vector<2x128xf32>
    %91 = arith.mulf %90, %67 : vector<2x128xf32>
    %92 = vector.extract_strided_slice %87 {offsets = [0, 0], sizes = [2, 128], strides = [1, 1]} : vector<2x384xf32> to vector<2x128xf32>
    %93 = arith.mulf %92, %89 : vector<2x128xf32>
    %94 = arith.addf %91, %93 : vector<2x128xf32>
    %95 = vector.extract_strided_slice %87 {offsets = [0, 256], sizes = [2, 128], strides = [1, 1]} : vector<2x384xf32> to vector<2x128xf32>
    %96 = math.tanh %94 : vector<2x128xf32>
    %97 = arith.mulf %95, %96 : vector<2x128xf32>
    %98 = vector.extract_strided_slice %97 {offsets = [0, 0], sizes = [2, 64], strides = [1, 1]} : vector<2x128xf32> to vector<2x64xf32>
    %c2_36 = arith.constant 2 : index
    %c0_37 = arith.constant 0 : index
    %99 = vector.load %arg24[%c2_36, %c0_37] : memref<16x128xf32, #tpu.memory_space<vmem>>, vector<2x64xf32>
    tpu.vector_store %arg24[%c2_36, %c0_37], %98 {strides = array<i32>} : memref<16x128xf32, #tpu.memory_space<vmem>>, vector<2x64xf32>,
    %100 = vector.extract_strided_slice %97 {offsets = [0, 64], sizes = [2, 64], strides = [1, 1]} : vector<2x128xf32> to vector<2x64xf32>
    %c12_38 = arith.constant 12 : index
    %c64_39 = arith.constant 64 : index
    %101 = vector.load %arg24[%c12_38, %c64_39] : memref<16x128xf32, #tpu.memory_space<vmem>>, vector<2x64xf32>
    tpu.vector_store %arg24[%c12_38, %c64_39], %100 {strides = array<i32>} : memref<16x128xf32, #tpu.memory_space<vmem>>, vector<2x64xf32>,
    %c4 = arith.constant 4 : index
    %c0_40 = arith.constant 0 : index
    %102 = vector.load %arg23[%c4, %c0_40] : memref<16x512xf32, #tpu.memory_space<vmem>>, vector<2x512xf32>
    %c10 = arith.constant 10 : index
    %c0_41 = arith.constant 0 : index
    %103 = vector.load %arg23[%c10, %c0_41] : memref<16x512xf32, #tpu.memory_space<vmem>>, vector<2x512xf32>
    %104 = arith.select %18, %102, %103 : vector<2x512xi1>, vector<2x512xf32>
    %105 = arith.truncf %97 : vector<2x128xf32> to vector<2x128xbf16>
    %c0_42 = arith.constant 0 : index
    %c0_43 = arith.constant 0 : index
    %106 = vector.load %arg4[%c0_42, %c0_43] : memref<128x512xbf16, #tpu.memory_space<vmem>>, vector<128x512xbf16>
    %cst_44 = arith.constant dense<0.000000e+00> : vector<2x512xf32>
    %107 = tpu.matmul %105, %106, %cst_44 {dimension_numbers = #tpu.dot_dimension_numbers<[1], [0], [0], [1], [0, 0, 1, 1], [], []>} : vector<2x128xbf16>, vector<128x512xbf16>, vector<2x512xf32> -> vector<2x512xf32>
    %108 = arith.addf %104, %107 : vector<2x512xf32>
    %109 = vector.extract_strided_slice %108 {offsets = [0, 0], sizes = [2, 384], strides = [1, 1]} : vector<2x512xf32> to vector<2x384xf32>
    %110 = arith.negf %109 : vector<2x384xf32>
    %111 = math.exp %110 : vector<2x384xf32>
    %cst_45 = arith.constant 1.000000e+00 : f32
    %112 = vector.broadcast %cst_45 : f32 to vector<2x384xf32>
    %113 = arith.addf %112, %111 : vector<2x384xf32>
    %114 = arith.divf %112, %113 : vector<2x384xf32>
    %115 = vector.extract_strided_slice %108 {offsets = [0, 384], sizes = [2, 128], strides = [1, 1]} : vector<2x512xf32> to vector<2x128xf32>
    %116 = math.tanh %115 : vector<2x128xf32>
    %117 = vector.extract_strided_slice %114 {offsets = [0, 128], sizes = [2, 128], strides = [1, 1]} : vector<2x384xf32> to vector<2x128xf32>
    %118 = arith.mulf %117, %94 : vector<2x128xf32>
    %119 = vector.extract_strided_slice %114 {offsets = [0, 0], sizes = [2, 128], strides = [1, 1]} : vector<2x384xf32> to vector<2x128xf32>
    %120 = arith.mulf %119, %116 : vector<2x128xf32>
    %121 = arith.addf %118, %120 : vector<2x128xf32>
    %122 = vector.extract_strided_slice %114 {offsets = [0, 256], sizes = [2, 128], strides = [1, 1]} : vector<2x384xf32> to vector<2x128xf32>
    %123 = math.tanh %121 : vector<2x128xf32>
    %124 = arith.mulf %122, %123 : vector<2x128xf32>
    %125 = vector.extract_strided_slice %124 {offsets = [0, 0], sizes = [2, 64], strides = [1, 1]} : vector<2x128xf32> to vector<2x64xf32>
    %c4_46 = arith.constant 4 : index
    %c0_47 = arith.constant 0 : index
    %126 = vector.load %arg24[%c4_46, %c0_47] : memref<16x128xf32, #tpu.memory_space<vmem>>, vector<2x64xf32>
    tpu.vector_store %arg24[%c4_46, %c0_47], %125 {strides = array<i32>} : memref<16x128xf32, #tpu.memory_space<vmem>>, vector<2x64xf32>,
    %127 = vector.extract_strided_slice %124 {offsets = [0, 64], sizes = [2, 64], strides = [1, 1]} : vector<2x128xf32> to vector<2x64xf32>
    %c10_48 = arith.constant 10 : index
    %c64_49 = arith.constant 64 : index
    %128 = vector.load %arg24[%c10_48, %c64_49] : memref<16x128xf32, #tpu.memory_space<vmem>>, vector<2x64xf32>
    tpu.vector_store %arg24[%c10_48, %c64_49], %127 {strides = array<i32>} : memref<16x128xf32, #tpu.memory_space<vmem>>, vector<2x64xf32>,
    %c6 = arith.constant 6 : index
    %c0_50 = arith.constant 0 : index
    %129 = vector.load %arg23[%c6, %c0_50] : memref<16x512xf32, #tpu.memory_space<vmem>>, vector<2x512xf32>
    %c8 = arith.constant 8 : index
    %c0_51 = arith.constant 0 : index
    %130 = vector.load %arg23[%c8, %c0_51] : memref<16x512xf32, #tpu.memory_space<vmem>>, vector<2x512xf32>
    %131 = arith.select %18, %129, %130 : vector<2x512xi1>, vector<2x512xf32>
    %132 = arith.truncf %124 : vector<2x128xf32> to vector<2x128xbf16>
    %c0_52 = arith.constant 0 : index
    %c0_53 = arith.constant 0 : index
    %133 = vector.load %arg4[%c0_52, %c0_53] : memref<128x512xbf16, #tpu.memory_space<vmem>>, vector<128x512xbf16>
    %cst_54 = arith.constant dense<0.000000e+00> : vector<2x512xf32>
    %134 = tpu.matmul %132, %133, %cst_54 {dimension_numbers = #tpu.dot_dimension_numbers<[1], [0], [0], [1], [0, 0, 1, 1], [], []>} : vector<2x128xbf16>, vector<128x512xbf16>, vector<2x512xf32> -> vector<2x512xf32>
    %135 = arith.addf %131, %134 : vector<2x512xf32>
    %136 = vector.extract_strided_slice %135 {offsets = [0, 0], sizes = [2, 384], strides = [1, 1]} : vector<2x512xf32> to vector<2x384xf32>
    %137 = arith.negf %136 : vector<2x384xf32>
    %138 = math.exp %137 : vector<2x384xf32>
    %cst_55 = arith.constant 1.000000e+00 : f32
    %139 = vector.broadcast %cst_55 : f32 to vector<2x384xf32>
    %140 = arith.addf %139, %138 : vector<2x384xf32>
    %141 = arith.divf %139, %140 : vector<2x384xf32>
    %142 = vector.extract_strided_slice %135 {offsets = [0, 384], sizes = [2, 128], strides = [1, 1]} : vector<2x512xf32> to vector<2x128xf32>
    %143 = math.tanh %142 : vector<2x128xf32>
    %144 = vector.extract_strided_slice %141 {offsets = [0, 128], sizes = [2, 128], strides = [1, 1]} : vector<2x384xf32> to vector<2x128xf32>
    %145 = arith.mulf %144, %121 : vector<2x128xf32>
    %146 = vector.extract_strided_slice %141 {offsets = [0, 0], sizes = [2, 128], strides = [1, 1]} : vector<2x384xf32> to vector<2x128xf32>
    %147 = arith.mulf %146, %143 : vector<2x128xf32>
    %148 = arith.addf %145, %147 : vector<2x128xf32>
    %149 = vector.extract_strided_slice %141 {offsets = [0, 256], sizes = [2, 128], strides = [1, 1]} : vector<2x384xf32> to vector<2x128xf32>
    %150 = math.tanh %148 : vector<2x128xf32>
    %151 = arith.mulf %149, %150 : vector<2x128xf32>
    %152 = vector.extract_strided_slice %151 {offsets = [0, 0], sizes = [2, 64], strides = [1, 1]} : vector<2x128xf32> to vector<2x64xf32>
    %c6_56 = arith.constant 6 : index
    %c0_57 = arith.constant 0 : index
    %153 = vector.load %arg24[%c6_56, %c0_57] : memref<16x128xf32, #tpu.memory_space<vmem>>, vector<2x64xf32>
    tpu.vector_store %arg24[%c6_56, %c0_57], %152 {strides = array<i32>} : memref<16x128xf32, #tpu.memory_space<vmem>>, vector<2x64xf32>,
    %154 = vector.extract_strided_slice %151 {offsets = [0, 64], sizes = [2, 64], strides = [1, 1]} : vector<2x128xf32> to vector<2x64xf32>
    %c8_58 = arith.constant 8 : index
    %c64_59 = arith.constant 64 : index
    %155 = vector.load %arg24[%c8_58, %c64_59] : memref<16x128xf32, #tpu.memory_space<vmem>>, vector<2x64xf32>
    tpu.vector_store %arg24[%c8_58, %c64_59], %154 {strides = array<i32>} : memref<16x128xf32, #tpu.memory_space<vmem>>, vector<2x64xf32>,
    %c8_60 = arith.constant 8 : index
    %c0_61 = arith.constant 0 : index
    %156 = vector.load %arg23[%c8_60, %c0_61] : memref<16x512xf32, #tpu.memory_space<vmem>>, vector<2x512xf32>
    %c6_62 = arith.constant 6 : index
    %c0_63 = arith.constant 0 : index
    %157 = vector.load %arg23[%c6_62, %c0_63] : memref<16x512xf32, #tpu.memory_space<vmem>>, vector<2x512xf32>
    %158 = arith.select %18, %156, %157 : vector<2x512xi1>, vector<2x512xf32>
    %159 = arith.truncf %151 : vector<2x128xf32> to vector<2x128xbf16>
    %c0_64 = arith.constant 0 : index
    %c0_65 = arith.constant 0 : index
    %160 = vector.load %arg4[%c0_64, %c0_65] : memref<128x512xbf16, #tpu.memory_space<vmem>>, vector<128x512xbf16>
    %cst_66 = arith.constant dense<0.000000e+00> : vector<2x512xf32>
    %161 = tpu.matmul %159, %160, %cst_66 {dimension_numbers = #tpu.dot_dimension_numbers<[1], [0], [0], [1], [0, 0, 1, 1], [], []>} : vector<2x128xbf16>, vector<128x512xbf16>, vector<2x512xf32> -> vector<2x512xf32>
    %162 = arith.addf %158, %161 : vector<2x512xf32>
    %163 = vector.extract_strided_slice %162 {offsets = [0, 0], sizes = [2, 384], strides = [1, 1]} : vector<2x512xf32> to vector<2x384xf32>
    %164 = arith.negf %163 : vector<2x384xf32>
    %165 = math.exp %164 : vector<2x384xf32>
    %cst_67 = arith.constant 1.000000e+00 : f32
    %166 = vector.broadcast %cst_67 : f32 to vector<2x384xf32>
    %167 = arith.addf %166, %165 : vector<2x384xf32>
    %168 = arith.divf %166, %167 : vector<2x384xf32>
    %169 = vector.extract_strided_slice %162 {offsets = [0, 384], sizes = [2, 128], strides = [1, 1]} : vector<2x512xf32> to vector<2x128xf32>
    %170 = math.tanh %169 : vector<2x128xf32>
    %171 = vector.extract_strided_slice %168 {offsets = [0, 128], sizes = [2, 128], strides = [1, 1]} : vector<2x384xf32> to vector<2x128xf32>
    %172 = arith.mulf %171, %148 : vector<2x128xf32>
    %173 = vector.extract_strided_slice %168 {offsets = [0, 0], sizes = [2, 128], strides = [1, 1]} : vector<2x384xf32> to vector<2x128xf32>
    %174 = arith.mulf %173, %170 : vector<2x128xf32>
    %175 = arith.addf %172, %174 : vector<2x128xf32>
    %176 = vector.extract_strided_slice %168 {offsets = [0, 256], sizes = [2, 128], strides = [1, 1]} : vector<2x384xf32> to vector<2x128xf32>
    %177 = math.tanh %175 : vector<2x128xf32>
    %178 = arith.mulf %176, %177 : vector<2x128xf32>
    %179 = vector.extract_strided_slice %178 {offsets = [0, 0], sizes = [2, 64], strides = [1, 1]} : vector<2x128xf32> to vector<2x64xf32>
    %c8_68 = arith.constant 8 : index
    %c0_69 = arith.constant 0 : index
    %180 = vector.load %arg24[%c8_68, %c0_69] : memref<16x128xf32, #tpu.memory_space<vmem>>, vector<2x64xf32>
    tpu.vector_store %arg24[%c8_68, %c0_69], %179 {strides = array<i32>} : memref<16x128xf32, #tpu.memory_space<vmem>>, vector<2x64xf32>,
    %181 = vector.extract_strided_slice %178 {offsets = [0, 64], sizes = [2, 64], strides = [1, 1]} : vector<2x128xf32> to vector<2x64xf32>
    %c6_70 = arith.constant 6 : index
    %c64_71 = arith.constant 64 : index
    %182 = vector.load %arg24[%c6_70, %c64_71] : memref<16x128xf32, #tpu.memory_space<vmem>>, vector<2x64xf32>
    tpu.vector_store %arg24[%c6_70, %c64_71], %181 {strides = array<i32>} : memref<16x128xf32, #tpu.memory_space<vmem>>, vector<2x64xf32>,
    %c10_72 = arith.constant 10 : index
    %c0_73 = arith.constant 0 : index
    %183 = vector.load %arg23[%c10_72, %c0_73] : memref<16x512xf32, #tpu.memory_space<vmem>>, vector<2x512xf32>
    %c4_74 = arith.constant 4 : index
    %c0_75 = arith.constant 0 : index
    %184 = vector.load %arg23[%c4_74, %c0_75] : memref<16x512xf32, #tpu.memory_space<vmem>>, vector<2x512xf32>
    %185 = arith.select %18, %183, %184 : vector<2x512xi1>, vector<2x512xf32>
    %186 = arith.truncf %178 : vector<2x128xf32> to vector<2x128xbf16>
    %c0_76 = arith.constant 0 : index
    %c0_77 = arith.constant 0 : index
    %187 = vector.load %arg4[%c0_76, %c0_77] : memref<128x512xbf16, #tpu.memory_space<vmem>>, vector<128x512xbf16>
    %cst_78 = arith.constant dense<0.000000e+00> : vector<2x512xf32>
    %188 = tpu.matmul %186, %187, %cst_78 {dimension_numbers = #tpu.dot_dimension_numbers<[1], [0], [0], [1], [0, 0, 1, 1], [], []>} : vector<2x128xbf16>, vector<128x512xbf16>, vector<2x512xf32> -> vector<2x512xf32>
    %189 = arith.addf %185, %188 : vector<2x512xf32>
    %190 = vector.extract_strided_slice %189 {offsets = [0, 0], sizes = [2, 384], strides = [1, 1]} : vector<2x512xf32> to vector<2x384xf32>
    %191 = arith.negf %190 : vector<2x384xf32>
    %192 = math.exp %191 : vector<2x384xf32>
    %cst_79 = arith.constant 1.000000e+00 : f32
    %193 = vector.broadcast %cst_79 : f32 to vector<2x384xf32>
    %194 = arith.addf %193, %192 : vector<2x384xf32>
    %195 = arith.divf %193, %194 : vector<2x384xf32>
    %196 = vector.extract_strided_slice %189 {offsets = [0, 384], sizes = [2, 128], strides = [1, 1]} : vector<2x512xf32> to vector<2x128xf32>
    %197 = math.tanh %196 : vector<2x128xf32>
    %198 = vector.extract_strided_slice %195 {offsets = [0, 128], sizes = [2, 128], strides = [1, 1]} : vector<2x384xf32> to vector<2x128xf32>
    %199 = arith.mulf %198, %175 : vector<2x128xf32>
    %200 = vector.extract_strided_slice %195 {offsets = [0, 0], sizes = [2, 128], strides = [1, 1]} : vector<2x384xf32> to vector<2x128xf32>
    %201 = arith.mulf %200, %197 : vector<2x128xf32>
    %202 = arith.addf %199, %201 : vector<2x128xf32>
    %203 = vector.extract_strided_slice %195 {offsets = [0, 256], sizes = [2, 128], strides = [1, 1]} : vector<2x384xf32> to vector<2x128xf32>
    %204 = math.tanh %202 : vector<2x128xf32>
    %205 = arith.mulf %203, %204 : vector<2x128xf32>
    %206 = vector.extract_strided_slice %205 {offsets = [0, 0], sizes = [2, 64], strides = [1, 1]} : vector<2x128xf32> to vector<2x64xf32>
    %c10_80 = arith.constant 10 : index
    %c0_81 = arith.constant 0 : index
    %207 = vector.load %arg24[%c10_80, %c0_81] : memref<16x128xf32, #tpu.memory_space<vmem>>, vector<2x64xf32>
    tpu.vector_store %arg24[%c10_80, %c0_81], %206 {strides = array<i32>} : memref<16x128xf32, #tpu.memory_space<vmem>>, vector<2x64xf32>,
    %208 = vector.extract_strided_slice %205 {offsets = [0, 64], sizes = [2, 64], strides = [1, 1]} : vector<2x128xf32> to vector<2x64xf32>
    %c4_82 = arith.constant 4 : index
    %c64_83 = arith.constant 64 : index
    %209 = vector.load %arg24[%c4_82, %c64_83] : memref<16x128xf32, #tpu.memory_space<vmem>>, vector<2x64xf32>
    tpu.vector_store %arg24[%c4_82, %c64_83], %208 {strides = array<i32>} : memref<16x128xf32, #tpu.memory_space<vmem>>, vector<2x64xf32>,
    %c12_84 = arith.constant 12 : index
    %c0_85 = arith.constant 0 : index
    %210 = vector.load %arg23[%c12_84, %c0_85] : memref<16x512xf32, #tpu.memory_space<vmem>>, vector<2x512xf32>
    %c2_86 = arith.constant 2 : index
    %c0_87 = arith.constant 0 : index
    %211 = vector.load %arg23[%c2_86, %c0_87] : memref<16x512xf32, #tpu.memory_space<vmem>>, vector<2x512xf32>
    %212 = arith.select %18, %210, %211 : vector<2x512xi1>, vector<2x512xf32>
    %213 = arith.truncf %205 : vector<2x128xf32> to vector<2x128xbf16>
    %c0_88 = arith.constant 0 : index
    %c0_89 = arith.constant 0 : index
    %214 = vector.load %arg4[%c0_88, %c0_89] : memref<128x512xbf16, #tpu.memory_space<vmem>>, vector<128x512xbf16>
    %cst_90 = arith.constant dense<0.000000e+00> : vector<2x512xf32>
    %215 = tpu.matmul %213, %214, %cst_90 {dimension_numbers = #tpu.dot_dimension_numbers<[1], [0], [0], [1], [0, 0, 1, 1], [], []>} : vector<2x128xbf16>, vector<128x512xbf16>, vector<2x512xf32> -> vector<2x512xf32>
    %216 = arith.addf %212, %215 : vector<2x512xf32>
    %217 = vector.extract_strided_slice %216 {offsets = [0, 0], sizes = [2, 384], strides = [1, 1]} : vector<2x512xf32> to vector<2x384xf32>
    %218 = arith.negf %217 : vector<2x384xf32>
    %219 = math.exp %218 : vector<2x384xf32>
    %cst_91 = arith.constant 1.000000e+00 : f32
    %220 = vector.broadcast %cst_91 : f32 to vector<2x384xf32>
    %221 = arith.addf %220, %219 : vector<2x384xf32>
    %222 = arith.divf %220, %221 : vector<2x384xf32>
    %223 = vector.extract_strided_slice %216 {offsets = [0, 384], sizes = [2, 128], strides = [1, 1]} : vector<2x512xf32> to vector<2x128xf32>
    %224 = math.tanh %223 : vector<2x128xf32>
    %225 = vector.extract_strided_slice %222 {offsets = [0, 128], sizes = [2, 128], strides = [1, 1]} : vector<2x384xf32> to vector<2x128xf32>
    %226 = arith.mulf %225, %202 : vector<2x128xf32>
    %227 = vector.extract_strided_slice %222 {offsets = [0, 0], sizes = [2, 128], strides = [1, 1]} : vector<2x384xf32> to vector<2x128xf32>
    %228 = arith.mulf %227, %224 : vector<2x128xf32>
    %229 = arith.addf %226, %228 : vector<2x128xf32>
    %230 = vector.extract_strided_slice %222 {offsets = [0, 256], sizes = [2, 128], strides = [1, 1]} : vector<2x384xf32> to vector<2x128xf32>
    %231 = math.tanh %229 : vector<2x128xf32>
    %232 = arith.mulf %230, %231 : vector<2x128xf32>
    %233 = vector.extract_strided_slice %232 {offsets = [0, 0], sizes = [2, 64], strides = [1, 1]} : vector<2x128xf32> to vector<2x64xf32>
    %c12_92 = arith.constant 12 : index
    %c0_93 = arith.constant 0 : index
    %234 = vector.load %arg24[%c12_92, %c0_93] : memref<16x128xf32, #tpu.memory_space<vmem>>, vector<2x64xf32>
    tpu.vector_store %arg24[%c12_92, %c0_93], %233 {strides = array<i32>} : memref<16x128xf32, #tpu.memory_space<vmem>>, vector<2x64xf32>,
    %235 = vector.extract_strided_slice %232 {offsets = [0, 64], sizes = [2, 64], strides = [1, 1]} : vector<2x128xf32> to vector<2x64xf32>
    %c2_94 = arith.constant 2 : index
    %c64_95 = arith.constant 64 : index
    %236 = vector.load %arg24[%c2_94, %c64_95] : memref<16x128xf32, #tpu.memory_space<vmem>>, vector<2x64xf32>
    tpu.vector_store %arg24[%c2_94, %c64_95], %235 {strides = array<i32>} : memref<16x128xf32, #tpu.memory_space<vmem>>, vector<2x64xf32>,
    %c14_96 = arith.constant 14 : index
    %c0_97 = arith.constant 0 : index
    %237 = vector.load %arg23[%c14_96, %c0_97] : memref<16x512xf32, #tpu.memory_space<vmem>>, vector<2x512xf32>
    %c0_98 = arith.constant 0 : index
    %c0_99 = arith.constant 0 : index
    %238 = vector.load %arg23[%c0_98, %c0_99] : memref<16x512xf32, #tpu.memory_space<vmem>>, vector<2x512xf32>
    %239 = arith.select %18, %237, %238 : vector<2x512xi1>, vector<2x512xf32>
    %240 = arith.truncf %232 : vector<2x128xf32> to vector<2x128xbf16>
    %c0_100 = arith.constant 0 : index
    %c0_101 = arith.constant 0 : index
    %241 = vector.load %arg4[%c0_100, %c0_101] : memref<128x512xbf16, #tpu.memory_space<vmem>>, vector<128x512xbf16>
    %cst_102 = arith.constant dense<0.000000e+00> : vector<2x512xf32>
    %242 = tpu.matmul %240, %241, %cst_102 {dimension_numbers = #tpu.dot_dimension_numbers<[1], [0], [0], [1], [0, 0, 1, 1], [], []>} : vector<2x128xbf16>, vector<128x512xbf16>, vector<2x512xf32> -> vector<2x512xf32>
    %243 = arith.addf %239, %242 : vector<2x512xf32>
    %244 = vector.extract_strided_slice %243 {offsets = [0, 0], sizes = [2, 384], strides = [1, 1]} : vector<2x512xf32> to vector<2x384xf32>
    %245 = arith.negf %244 : vector<2x384xf32>
    %246 = math.exp %245 : vector<2x384xf32>
    %cst_103 = arith.constant 1.000000e+00 : f32
    %247 = vector.broadcast %cst_103 : f32 to vector<2x384xf32>
    %248 = arith.addf %247, %246 : vector<2x384xf32>
    %249 = arith.divf %247, %248 : vector<2x384xf32>
    %250 = vector.extract_strided_slice %243 {offsets = [0, 384], sizes = [2, 128], strides = [1, 1]} : vector<2x512xf32> to vector<2x128xf32>
    %251 = math.tanh %250 : vector<2x128xf32>
    %252 = vector.extract_strided_slice %249 {offsets = [0, 128], sizes = [2, 128], strides = [1, 1]} : vector<2x384xf32> to vector<2x128xf32>
    %253 = arith.mulf %252, %229 : vector<2x128xf32>
    %254 = vector.extract_strided_slice %249 {offsets = [0, 0], sizes = [2, 128], strides = [1, 1]} : vector<2x384xf32> to vector<2x128xf32>
    %255 = arith.mulf %254, %251 : vector<2x128xf32>
    %256 = arith.addf %253, %255 : vector<2x128xf32>
    %257 = vector.extract_strided_slice %249 {offsets = [0, 256], sizes = [2, 128], strides = [1, 1]} : vector<2x384xf32> to vector<2x128xf32>
    %258 = math.tanh %256 : vector<2x128xf32>
    %259 = arith.mulf %257, %258 : vector<2x128xf32>
    %260 = vector.extract_strided_slice %259 {offsets = [0, 0], sizes = [2, 64], strides = [1, 1]} : vector<2x128xf32> to vector<2x64xf32>
    %c14_104 = arith.constant 14 : index
    %c0_105 = arith.constant 0 : index
    %261 = vector.load %arg24[%c14_104, %c0_105] : memref<16x128xf32, #tpu.memory_space<vmem>>, vector<2x64xf32>
    tpu.vector_store %arg24[%c14_104, %c0_105], %260 {strides = array<i32>} : memref<16x128xf32, #tpu.memory_space<vmem>>, vector<2x64xf32>,
    %262 = vector.extract_strided_slice %259 {offsets = [0, 64], sizes = [2, 64], strides = [1, 1]} : vector<2x128xf32> to vector<2x64xf32>
    %c0_106 = arith.constant 0 : index
    %c64_107 = arith.constant 64 : index
    %263 = vector.load %arg24[%c0_106, %c64_107] : memref<16x128xf32, #tpu.memory_space<vmem>>, vector<2x64xf32>
    tpu.vector_store %arg24[%c0_106, %c64_107], %262 {strides = array<i32>} : memref<16x128xf32, #tpu.memory_space<vmem>>, vector<2x64xf32>,
    %c0_108 = arith.constant 0 : index
    %c0_109 = arith.constant 0 : index
    %264 = vector.load %arg24[%c0_108, %c0_109] : memref<16x128xf32, #tpu.memory_space<vmem>>, vector<16x128xf32>
    %265 = arith.truncf %264 : vector<16x128xf32> to vector<16x128xbf16>
    %c0_110 = arith.constant 0 : index
    %c0_111 = arith.constant 0 : index
    %266 = vector.load %arg6[%c0_110, %c0_111] : memref<128x384xbf16, #tpu.memory_space<vmem>>, vector<128x384xbf16>
    %cst_112 = arith.constant dense<0.000000e+00> : vector<16x384xf32>
    %267 = tpu.matmul %265, %266, %cst_112 {dimension_numbers = #tpu.dot_dimension_numbers<[1], [0], [0], [1], [0, 0, 1, 1], [], []>} : vector<16x128xbf16>, vector<128x384xbf16>, vector<16x384xf32> -> vector<16x384xf32>
    %c0_113 = arith.constant 0 : index
    %c0_114 = arith.constant 0 : index
    %268 = vector.load %arg8[%c0_113, %c0_114] : memref<1x384xf32, #tpu.memory_space<vmem>>, vector<1x384xf32>
    %269 = vector.broadcast %268 : vector<1x384xf32> to vector<16x384xf32>
    %270 = arith.addf %267, %269 : vector<16x384xf32>
    %c0_115 = arith.constant 0 : index
    %c0_116 = arith.constant 0 : index
    %271 = vector.load %arg25[%c0_115, %c0_116] : memref<16x384xf32, #tpu.memory_space<vmem>>, vector<16x384xf32>
    tpu.vector_store %arg25[%c0_115, %c0_116], %270 {strides = array<i32>} : memref<16x384xf32, #tpu.memory_space<vmem>>, vector<16x384xf32>,
    %cst_117 = arith.constant 0.000000e+00 : f32
    %272 = vector.broadcast %cst_117 : f32 to vector<2x128xf32>
    %c0_118 = arith.constant 0 : index
    %c0_119 = arith.constant 0 : index
    %273 = vector.load %arg25[%c0_118, %c0_119] : memref<16x384xf32, #tpu.memory_space<vmem>>, vector<2x384xf32>
    %c14_120 = arith.constant 14 : index
    %c0_121 = arith.constant 0 : index
    %274 = vector.load %arg25[%c14_120, %c0_121] : memref<16x384xf32, #tpu.memory_space<vmem>>, vector<2x384xf32>
    %275 = arith.select %37, %273, %274 : vector<2x384xi1>, vector<2x384xf32>
    %276 = arith.truncf %272 : vector<2x128xf32> to vector<2x128xbf16>
    %c0_122 = arith.constant 0 : index
    %c0_123 = arith.constant 0 : index
    %277 = vector.load %arg7[%c0_122, %c0_123] : memref<128x384xbf16, #tpu.memory_space<vmem>>, vector<128x384xbf16>
    %cst_124 = arith.constant dense<0.000000e+00> : vector<2x384xf32>
    %278 = tpu.matmul %276, %277, %cst_124 {dimension_numbers = #tpu.dot_dimension_numbers<[1], [0], [0], [1], [0, 0, 1, 1], [], []>} : vector<2x128xbf16>, vector<128x384xbf16>, vector<2x384xf32> -> vector<2x384xf32>
    %c0_125 = arith.constant 0 : index
    %c0_126 = arith.constant 0 : index
    %279 = vector.load %arg9[%c0_125, %c0_126] : memref<1x384xf32, #tpu.memory_space<vmem>>, vector<1x384xf32>
    %280 = vector.broadcast %279 : vector<1x384xf32> to vector<2x384xf32>
    %281 = arith.addf %278, %280 : vector<2x384xf32>
    %282 = vector.extract_strided_slice %275 {offsets = [0, 0], sizes = [2, 256], strides = [1, 1]} : vector<2x384xf32> to vector<2x256xf32>
    %283 = vector.extract_strided_slice %281 {offsets = [0, 0], sizes = [2, 256], strides = [1, 1]} : vector<2x384xf32> to vector<2x256xf32>
    %284 = arith.addf %282, %283 : vector<2x256xf32>
    %285 = arith.negf %284 : vector<2x256xf32>
    %286 = math.exp %285 : vector<2x256xf32>
    %cst_127 = arith.constant 1.000000e+00 : f32
    %287 = vector.broadcast %cst_127 : f32 to vector<2x256xf32>
    %288 = arith.addf %287, %286 : vector<2x256xf32>
    %289 = arith.divf %287, %288 : vector<2x256xf32>
    %290 = vector.extract_strided_slice %289 {offsets = [0, 0], sizes = [2, 128], strides = [1, 1]} : vector<2x256xf32> to vector<2x128xf32>
    %291 = vector.extract_strided_slice %289 {offsets = [0, 128], sizes = [2, 128], strides = [1, 1]} : vector<2x256xf32> to vector<2x128xf32>
    %292 = vector.extract_strided_slice %275 {offsets = [0, 256], sizes = [2, 128], strides = [1, 1]} : vector<2x384xf32> to vector<2x128xf32>
    %293 = vector.extract_strided_slice %281 {offsets = [0, 256], sizes = [2, 128], strides = [1, 1]} : vector<2x384xf32> to vector<2x128xf32>
    %294 = arith.mulf %290, %293 : vector<2x128xf32>
    %295 = arith.addf %292, %294 : vector<2x128xf32>
    %296 = math.tanh %295 : vector<2x128xf32>
    %cst_128 = arith.constant 1.000000e+00 : f32
    %297 = vector.broadcast %cst_128 : f32 to vector<2x128xf32>
    %298 = arith.subf %297, %291 : vector<2x128xf32>
    %299 = arith.mulf %298, %296 : vector<2x128xf32>
    %300 = arith.mulf %291, %272 : vector<2x128xf32>
    %301 = arith.addf %299, %300 : vector<2x128xf32>
    %302 = vector.extract_strided_slice %301 {offsets = [0, 0], sizes = [2, 64], strides = [1, 1]} : vector<2x128xf32> to vector<2x64xf32>
    %c0_129 = arith.constant 0 : index
    %c0_130 = arith.constant 0 : index
    %303 = vector.load %arg26[%c0_129, %c0_130] : memref<16x128xf32, #tpu.memory_space<vmem>>, vector<2x64xf32>
    tpu.vector_store %arg26[%c0_129, %c0_130], %302 {strides = array<i32>} : memref<16x128xf32, #tpu.memory_space<vmem>>, vector<2x64xf32>,
    %304 = vector.extract_strided_slice %301 {offsets = [0, 64], sizes = [2, 64], strides = [1, 1]} : vector<2x128xf32> to vector<2x64xf32>
    %c14_131 = arith.constant 14 : index
    %c64_132 = arith.constant 64 : index
    %305 = vector.load %arg26[%c14_131, %c64_132] : memref<16x128xf32, #tpu.memory_space<vmem>>, vector<2x64xf32>
    tpu.vector_store %arg26[%c14_131, %c64_132], %304 {strides = array<i32>} : memref<16x128xf32, #tpu.memory_space<vmem>>, vector<2x64xf32>,
    %c2_133 = arith.constant 2 : index
    %c0_134 = arith.constant 0 : index
    %306 = vector.load %arg25[%c2_133, %c0_134] : memref<16x384xf32, #tpu.memory_space<vmem>>, vector<2x384xf32>
    %c12_135 = arith.constant 12 : index
    %c0_136 = arith.constant 0 : index
    %307 = vector.load %arg25[%c12_135, %c0_136] : memref<16x384xf32, #tpu.memory_space<vmem>>, vector<2x384xf32>
    %308 = arith.select %37, %306, %307 : vector<2x384xi1>, vector<2x384xf32>
    %309 = arith.truncf %301 : vector<2x128xf32> to vector<2x128xbf16>
    %c0_137 = arith.constant 0 : index
    %c0_138 = arith.constant 0 : index
    %310 = vector.load %arg7[%c0_137, %c0_138] : memref<128x384xbf16, #tpu.memory_space<vmem>>, vector<128x384xbf16>
    %cst_139 = arith.constant dense<0.000000e+00> : vector<2x384xf32>
    %311 = tpu.matmul %309, %310, %cst_139 {dimension_numbers = #tpu.dot_dimension_numbers<[1], [0], [0], [1], [0, 0, 1, 1], [], []>} : vector<2x128xbf16>, vector<128x384xbf16>, vector<2x384xf32> -> vector<2x384xf32>
    %c0_140 = arith.constant 0 : index
    %c0_141 = arith.constant 0 : index
    %312 = vector.load %arg9[%c0_140, %c0_141] : memref<1x384xf32, #tpu.memory_space<vmem>>, vector<1x384xf32>
    %313 = vector.broadcast %312 : vector<1x384xf32> to vector<2x384xf32>
    %314 = arith.addf %311, %313 : vector<2x384xf32>
    %315 = vector.extract_strided_slice %308 {offsets = [0, 0], sizes = [2, 256], strides = [1, 1]} : vector<2x384xf32> to vector<2x256xf32>
    %316 = vector.extract_strided_slice %314 {offsets = [0, 0], sizes = [2, 256], strides = [1, 1]} : vector<2x384xf32> to vector<2x256xf32>
    %317 = arith.addf %315, %316 : vector<2x256xf32>
    %318 = arith.negf %317 : vector<2x256xf32>
    %319 = math.exp %318 : vector<2x256xf32>
    %cst_142 = arith.constant 1.000000e+00 : f32
    %320 = vector.broadcast %cst_142 : f32 to vector<2x256xf32>
    %321 = arith.addf %320, %319 : vector<2x256xf32>
    %322 = arith.divf %320, %321 : vector<2x256xf32>
    %323 = vector.extract_strided_slice %322 {offsets = [0, 0], sizes = [2, 128], strides = [1, 1]} : vector<2x256xf32> to vector<2x128xf32>
    %324 = vector.extract_strided_slice %322 {offsets = [0, 128], sizes = [2, 128], strides = [1, 1]} : vector<2x256xf32> to vector<2x128xf32>
    %325 = vector.extract_strided_slice %308 {offsets = [0, 256], sizes = [2, 128], strides = [1, 1]} : vector<2x384xf32> to vector<2x128xf32>
    %326 = vector.extract_strided_slice %314 {offsets = [0, 256], sizes = [2, 128], strides = [1, 1]} : vector<2x384xf32> to vector<2x128xf32>
    %327 = arith.mulf %323, %326 : vector<2x128xf32>
    %328 = arith.addf %325, %327 : vector<2x128xf32>
    %329 = math.tanh %328 : vector<2x128xf32>
    %cst_143 = arith.constant 1.000000e+00 : f32
    %330 = vector.broadcast %cst_143 : f32 to vector<2x128xf32>
    %331 = arith.subf %330, %324 : vector<2x128xf32>
    %332 = arith.mulf %331, %329 : vector<2x128xf32>
    %333 = arith.mulf %324, %301 : vector<2x128xf32>
    %334 = arith.addf %332, %333 : vector<2x128xf32>
    %335 = vector.extract_strided_slice %334 {offsets = [0, 0], sizes = [2, 64], strides = [1, 1]} : vector<2x128xf32> to vector<2x64xf32>
    %c2_144 = arith.constant 2 : index
    %c0_145 = arith.constant 0 : index
    %336 = vector.load %arg26[%c2_144, %c0_145] : memref<16x128xf32, #tpu.memory_space<vmem>>, vector<2x64xf32>
    tpu.vector_store %arg26[%c2_144, %c0_145], %335 {strides = array<i32>} : memref<16x128xf32, #tpu.memory_space<vmem>>, vector<2x64xf32>,
    %337 = vector.extract_strided_slice %334 {offsets = [0, 64], sizes = [2, 64], strides = [1, 1]} : vector<2x128xf32> to vector<2x64xf32>
    %c12_146 = arith.constant 12 : index
    %c64_147 = arith.constant 64 : index
    %338 = vector.load %arg26[%c12_146, %c64_147] : memref<16x128xf32, #tpu.memory_space<vmem>>, vector<2x64xf32>
    tpu.vector_store %arg26[%c12_146, %c64_147], %337 {strides = array<i32>} : memref<16x128xf32, #tpu.memory_space<vmem>>, vector<2x64xf32>,
    %c4_148 = arith.constant 4 : index
    %c0_149 = arith.constant 0 : index
    %339 = vector.load %arg25[%c4_148, %c0_149] : memref<16x384xf32, #tpu.memory_space<vmem>>, vector<2x384xf32>
    %c10_150 = arith.constant 10 : index
    %c0_151 = arith.constant 0 : index
    %340 = vector.load %arg25[%c10_150, %c0_151] : memref<16x384xf32, #tpu.memory_space<vmem>>, vector<2x384xf32>
    %341 = arith.select %37, %339, %340 : vector<2x384xi1>, vector<2x384xf32>
    %342 = arith.truncf %334 : vector<2x128xf32> to vector<2x128xbf16>
    %c0_152 = arith.constant 0 : index
    %c0_153 = arith.constant 0 : index
    %343 = vector.load %arg7[%c0_152, %c0_153] : memref<128x384xbf16, #tpu.memory_space<vmem>>, vector<128x384xbf16>
    %cst_154 = arith.constant dense<0.000000e+00> : vector<2x384xf32>
    %344 = tpu.matmul %342, %343, %cst_154 {dimension_numbers = #tpu.dot_dimension_numbers<[1], [0], [0], [1], [0, 0, 1, 1], [], []>} : vector<2x128xbf16>, vector<128x384xbf16>, vector<2x384xf32> -> vector<2x384xf32>
    %c0_155 = arith.constant 0 : index
    %c0_156 = arith.constant 0 : index
    %345 = vector.load %arg9[%c0_155, %c0_156] : memref<1x384xf32, #tpu.memory_space<vmem>>, vector<1x384xf32>
    %346 = vector.broadcast %345 : vector<1x384xf32> to vector<2x384xf32>
    %347 = arith.addf %344, %346 : vector<2x384xf32>
    %348 = vector.extract_strided_slice %341 {offsets = [0, 0], sizes = [2, 256], strides = [1, 1]} : vector<2x384xf32> to vector<2x256xf32>
    %349 = vector.extract_strided_slice %347 {offsets = [0, 0], sizes = [2, 256], strides = [1, 1]} : vector<2x384xf32> to vector<2x256xf32>
    %350 = arith.addf %348, %349 : vector<2x256xf32>
    %351 = arith.negf %350 : vector<2x256xf32>
    %352 = math.exp %351 : vector<2x256xf32>
    %cst_157 = arith.constant 1.000000e+00 : f32
    %353 = vector.broadcast %cst_157 : f32 to vector<2x256xf32>
    %354 = arith.addf %353, %352 : vector<2x256xf32>
    %355 = arith.divf %353, %354 : vector<2x256xf32>
    %356 = vector.extract_strided_slice %355 {offsets = [0, 0], sizes = [2, 128], strides = [1, 1]} : vector<2x256xf32> to vector<2x128xf32>
    %357 = vector.extract_strided_slice %355 {offsets = [0, 128], sizes = [2, 128], strides = [1, 1]} : vector<2x256xf32> to vector<2x128xf32>
    %358 = vector.extract_strided_slice %341 {offsets = [0, 256], sizes = [2, 128], strides = [1, 1]} : vector<2x384xf32> to vector<2x128xf32>
    %359 = vector.extract_strided_slice %347 {offsets = [0, 256], sizes = [2, 128], strides = [1, 1]} : vector<2x384xf32> to vector<2x128xf32>
    %360 = arith.mulf %356, %359 : vector<2x128xf32>
    %361 = arith.addf %358, %360 : vector<2x128xf32>
    %362 = math.tanh %361 : vector<2x128xf32>
    %cst_158 = arith.constant 1.000000e+00 : f32
    %363 = vector.broadcast %cst_158 : f32 to vector<2x128xf32>
    %364 = arith.subf %363, %357 : vector<2x128xf32>
    %365 = arith.mulf %364, %362 : vector<2x128xf32>
    %366 = arith.mulf %357, %334 : vector<2x128xf32>
    %367 = arith.addf %365, %366 : vector<2x128xf32>
    %368 = vector.extract_strided_slice %367 {offsets = [0, 0], sizes = [2, 64], strides = [1, 1]} : vector<2x128xf32> to vector<2x64xf32>
    %c4_159 = arith.constant 4 : index
    %c0_160 = arith.constant 0 : index
    %369 = vector.load %arg26[%c4_159, %c0_160] : memref<16x128xf32, #tpu.memory_space<vmem>>, vector<2x64xf32>
    tpu.vector_store %arg26[%c4_159, %c0_160], %368 {strides = array<i32>} : memref<16x128xf32, #tpu.memory_space<vmem>>, vector<2x64xf32>,
    %370 = vector.extract_strided_slice %367 {offsets = [0, 64], sizes = [2, 64], strides = [1, 1]} : vector<2x128xf32> to vector<2x64xf32>
    %c10_161 = arith.constant 10 : index
    %c64_162 = arith.constant 64 : index
    %371 = vector.load %arg26[%c10_161, %c64_162] : memref<16x128xf32, #tpu.memory_space<vmem>>, vector<2x64xf32>
    tpu.vector_store %arg26[%c10_161, %c64_162], %370 {strides = array<i32>} : memref<16x128xf32, #tpu.memory_space<vmem>>, vector<2x64xf32>,
    %c6_163 = arith.constant 6 : index
    %c0_164 = arith.constant 0 : index
    %372 = vector.load %arg25[%c6_163, %c0_164] : memref<16x384xf32, #tpu.memory_space<vmem>>, vector<2x384xf32>
    %c8_165 = arith.constant 8 : index
    %c0_166 = arith.constant 0 : index
    %373 = vector.load %arg25[%c8_165, %c0_166] : memref<16x384xf32, #tpu.memory_space<vmem>>, vector<2x384xf32>
    %374 = arith.select %37, %372, %373 : vector<2x384xi1>, vector<2x384xf32>
    %375 = arith.truncf %367 : vector<2x128xf32> to vector<2x128xbf16>
    %c0_167 = arith.constant 0 : index
    %c0_168 = arith.constant 0 : index
    %376 = vector.load %arg7[%c0_167, %c0_168] : memref<128x384xbf16, #tpu.memory_space<vmem>>, vector<128x384xbf16>
    %cst_169 = arith.constant dense<0.000000e+00> : vector<2x384xf32>
    %377 = tpu.matmul %375, %376, %cst_169 {dimension_numbers = #tpu.dot_dimension_numbers<[1], [0], [0], [1], [0, 0, 1, 1], [], []>} : vector<2x128xbf16>, vector<128x384xbf16>, vector<2x384xf32> -> vector<2x384xf32>
    %c0_170 = arith.constant 0 : index
    %c0_171 = arith.constant 0 : index
    %378 = vector.load %arg9[%c0_170, %c0_171] : memref<1x384xf32, #tpu.memory_space<vmem>>, vector<1x384xf32>
    %379 = vector.broadcast %378 : vector<1x384xf32> to vector<2x384xf32>
    %380 = arith.addf %377, %379 : vector<2x384xf32>
    %381 = vector.extract_strided_slice %374 {offsets = [0, 0], sizes = [2, 256], strides = [1, 1]} : vector<2x384xf32> to vector<2x256xf32>
    %382 = vector.extract_strided_slice %380 {offsets = [0, 0], sizes = [2, 256], strides = [1, 1]} : vector<2x384xf32> to vector<2x256xf32>
    %383 = arith.addf %381, %382 : vector<2x256xf32>
    %384 = arith.negf %383 : vector<2x256xf32>
    %385 = math.exp %384 : vector<2x256xf32>
    %cst_172 = arith.constant 1.000000e+00 : f32
    %386 = vector.broadcast %cst_172 : f32 to vector<2x256xf32>
    %387 = arith.addf %386, %385 : vector<2x256xf32>
    %388 = arith.divf %386, %387 : vector<2x256xf32>
    %389 = vector.extract_strided_slice %388 {offsets = [0, 0], sizes = [2, 128], strides = [1, 1]} : vector<2x256xf32> to vector<2x128xf32>
    %390 = vector.extract_strided_slice %388 {offsets = [0, 128], sizes = [2, 128], strides = [1, 1]} : vector<2x256xf32> to vector<2x128xf32>
    %391 = vector.extract_strided_slice %374 {offsets = [0, 256], sizes = [2, 128], strides = [1, 1]} : vector<2x384xf32> to vector<2x128xf32>
    %392 = vector.extract_strided_slice %380 {offsets = [0, 256], sizes = [2, 128], strides = [1, 1]} : vector<2x384xf32> to vector<2x128xf32>
    %393 = arith.mulf %389, %392 : vector<2x128xf32>
    %394 = arith.addf %391, %393 : vector<2x128xf32>
    %395 = math.tanh %394 : vector<2x128xf32>
    %cst_173 = arith.constant 1.000000e+00 : f32
    %396 = vector.broadcast %cst_173 : f32 to vector<2x128xf32>
    %397 = arith.subf %396, %390 : vector<2x128xf32>
    %398 = arith.mulf %397, %395 : vector<2x128xf32>
    %399 = arith.mulf %390, %367 : vector<2x128xf32>
    %400 = arith.addf %398, %399 : vector<2x128xf32>
    %401 = vector.extract_strided_slice %400 {offsets = [0, 0], sizes = [2, 64], strides = [1, 1]} : vector<2x128xf32> to vector<2x64xf32>
    %c6_174 = arith.constant 6 : index
    %c0_175 = arith.constant 0 : index
    %402 = vector.load %arg26[%c6_174, %c0_175] : memref<16x128xf32, #tpu.memory_space<vmem>>, vector<2x64xf32>
    tpu.vector_store %arg26[%c6_174, %c0_175], %401 {strides = array<i32>} : memref<16x128xf32, #tpu.memory_space<vmem>>, vector<2x64xf32>,
    %403 = vector.extract_strided_slice %400 {offsets = [0, 64], sizes = [2, 64], strides = [1, 1]} : vector<2x128xf32> to vector<2x64xf32>
    %c8_176 = arith.constant 8 : index
    %c64_177 = arith.constant 64 : index
    %404 = vector.load %arg26[%c8_176, %c64_177] : memref<16x128xf32, #tpu.memory_space<vmem>>, vector<2x64xf32>
    tpu.vector_store %arg26[%c8_176, %c64_177], %403 {strides = array<i32>} : memref<16x128xf32, #tpu.memory_space<vmem>>, vector<2x64xf32>,
    %c8_178 = arith.constant 8 : index
    %c0_179 = arith.constant 0 : index
    %405 = vector.load %arg25[%c8_178, %c0_179] : memref<16x384xf32, #tpu.memory_space<vmem>>, vector<2x384xf32>
    %c6_180 = arith.constant 6 : index
    %c0_181 = arith.constant 0 : index
    %406 = vector.load %arg25[%c6_180, %c0_181] : memref<16x384xf32, #tpu.memory_space<vmem>>, vector<2x384xf32>
    %407 = arith.select %37, %405, %406 : vector<2x384xi1>, vector<2x384xf32>
    %408 = arith.truncf %400 : vector<2x128xf32> to vector<2x128xbf16>
    %c0_182 = arith.constant 0 : index
    %c0_183 = arith.constant 0 : index
    %409 = vector.load %arg7[%c0_182, %c0_183] : memref<128x384xbf16, #tpu.memory_space<vmem>>, vector<128x384xbf16>
    %cst_184 = arith.constant dense<0.000000e+00> : vector<2x384xf32>
    %410 = tpu.matmul %408, %409, %cst_184 {dimension_numbers = #tpu.dot_dimension_numbers<[1], [0], [0], [1], [0, 0, 1, 1], [], []>} : vector<2x128xbf16>, vector<128x384xbf16>, vector<2x384xf32> -> vector<2x384xf32>
    %c0_185 = arith.constant 0 : index
    %c0_186 = arith.constant 0 : index
    %411 = vector.load %arg9[%c0_185, %c0_186] : memref<1x384xf32, #tpu.memory_space<vmem>>, vector<1x384xf32>
    %412 = vector.broadcast %411 : vector<1x384xf32> to vector<2x384xf32>
    %413 = arith.addf %410, %412 : vector<2x384xf32>
    %414 = vector.extract_strided_slice %407 {offsets = [0, 0], sizes = [2, 256], strides = [1, 1]} : vector<2x384xf32> to vector<2x256xf32>
    %415 = vector.extract_strided_slice %413 {offsets = [0, 0], sizes = [2, 256], strides = [1, 1]} : vector<2x384xf32> to vector<2x256xf32>
    %416 = arith.addf %414, %415 : vector<2x256xf32>
    %417 = arith.negf %416 : vector<2x256xf32>
    %418 = math.exp %417 : vector<2x256xf32>
    %cst_187 = arith.constant 1.000000e+00 : f32
    %419 = vector.broadcast %cst_187 : f32 to vector<2x256xf32>
    %420 = arith.addf %419, %418 : vector<2x256xf32>
    %421 = arith.divf %419, %420 : vector<2x256xf32>
    %422 = vector.extract_strided_slice %421 {offsets = [0, 0], sizes = [2, 128], strides = [1, 1]} : vector<2x256xf32> to vector<2x128xf32>
    %423 = vector.extract_strided_slice %421 {offsets = [0, 128], sizes = [2, 128], strides = [1, 1]} : vector<2x256xf32> to vector<2x128xf32>
    %424 = vector.extract_strided_slice %407 {offsets = [0, 256], sizes = [2, 128], strides = [1, 1]} : vector<2x384xf32> to vector<2x128xf32>
    %425 = vector.extract_strided_slice %413 {offsets = [0, 256], sizes = [2, 128], strides = [1, 1]} : vector<2x384xf32> to vector<2x128xf32>
    %426 = arith.mulf %422, %425 : vector<2x128xf32>
    %427 = arith.addf %424, %426 : vector<2x128xf32>
    %428 = math.tanh %427 : vector<2x128xf32>
    %cst_188 = arith.constant 1.000000e+00 : f32
    %429 = vector.broadcast %cst_188 : f32 to vector<2x128xf32>
    %430 = arith.subf %429, %423 : vector<2x128xf32>
    %431 = arith.mulf %430, %428 : vector<2x128xf32>
    %432 = arith.mulf %423, %400 : vector<2x128xf32>
    %433 = arith.addf %431, %432 : vector<2x128xf32>
    %434 = vector.extract_strided_slice %433 {offsets = [0, 0], sizes = [2, 64], strides = [1, 1]} : vector<2x128xf32> to vector<2x64xf32>
    %c8_189 = arith.constant 8 : index
    %c0_190 = arith.constant 0 : index
    %435 = vector.load %arg26[%c8_189, %c0_190] : memref<16x128xf32, #tpu.memory_space<vmem>>, vector<2x64xf32>
    tpu.vector_store %arg26[%c8_189, %c0_190], %434 {strides = array<i32>} : memref<16x128xf32, #tpu.memory_space<vmem>>, vector<2x64xf32>,
    %436 = vector.extract_strided_slice %433 {offsets = [0, 64], sizes = [2, 64], strides = [1, 1]} : vector<2x128xf32> to vector<2x64xf32>
    %c6_191 = arith.constant 6 : index
    %c64_192 = arith.constant 64 : index
    %437 = vector.load %arg26[%c6_191, %c64_192] : memref<16x128xf32, #tpu.memory_space<vmem>>, vector<2x64xf32>
    tpu.vector_store %arg26[%c6_191, %c64_192], %436 {strides = array<i32>} : memref<16x128xf32, #tpu.memory_space<vmem>>, vector<2x64xf32>,
    %c10_193 = arith.constant 10 : index
    %c0_194 = arith.constant 0 : index
    %438 = vector.load %arg25[%c10_193, %c0_194] : memref<16x384xf32, #tpu.memory_space<vmem>>, vector<2x384xf32>
    %c4_195 = arith.constant 4 : index
    %c0_196 = arith.constant 0 : index
    %439 = vector.load %arg25[%c4_195, %c0_196] : memref<16x384xf32, #tpu.memory_space<vmem>>, vector<2x384xf32>
    %440 = arith.select %37, %438, %439 : vector<2x384xi1>, vector<2x384xf32>
    %441 = arith.truncf %433 : vector<2x128xf32> to vector<2x128xbf16>
    %c0_197 = arith.constant 0 : index
    %c0_198 = arith.constant 0 : index
    %442 = vector.load %arg7[%c0_197, %c0_198] : memref<128x384xbf16, #tpu.memory_space<vmem>>, vector<128x384xbf16>
    %cst_199 = arith.constant dense<0.000000e+00> : vector<2x384xf32>
    %443 = tpu.matmul %441, %442, %cst_199 {dimension_numbers = #tpu.dot_dimension_numbers<[1], [0], [0], [1], [0, 0, 1, 1], [], []>} : vector<2x128xbf16>, vector<128x384xbf16>, vector<2x384xf32> -> vector<2x384xf32>
    %c0_200 = arith.constant 0 : index
    %c0_201 = arith.constant 0 : index
    %444 = vector.load %arg9[%c0_200, %c0_201] : memref<1x384xf32, #tpu.memory_space<vmem>>, vector<1x384xf32>
    %445 = vector.broadcast %444 : vector<1x384xf32> to vector<2x384xf32>
    %446 = arith.addf %443, %445 : vector<2x384xf32>
    %447 = vector.extract_strided_slice %440 {offsets = [0, 0], sizes = [2, 256], strides = [1, 1]} : vector<2x384xf32> to vector<2x256xf32>
    %448 = vector.extract_strided_slice %446 {offsets = [0, 0], sizes = [2, 256], strides = [1, 1]} : vector<2x384xf32> to vector<2x256xf32>
    %449 = arith.addf %447, %448 : vector<2x256xf32>
    %450 = arith.negf %449 : vector<2x256xf32>
    %451 = math.exp %450 : vector<2x256xf32>
    %cst_202 = arith.constant 1.000000e+00 : f32
    %452 = vector.broadcast %cst_202 : f32 to vector<2x256xf32>
    %453 = arith.addf %452, %451 : vector<2x256xf32>
    %454 = arith.divf %452, %453 : vector<2x256xf32>
    %455 = vector.extract_strided_slice %454 {offsets = [0, 0], sizes = [2, 128], strides = [1, 1]} : vector<2x256xf32> to vector<2x128xf32>
    %456 = vector.extract_strided_slice %454 {offsets = [0, 128], sizes = [2, 128], strides = [1, 1]} : vector<2x256xf32> to vector<2x128xf32>
    %457 = vector.extract_strided_slice %440 {offsets = [0, 256], sizes = [2, 128], strides = [1, 1]} : vector<2x384xf32> to vector<2x128xf32>
    %458 = vector.extract_strided_slice %446 {offsets = [0, 256], sizes = [2, 128], strides = [1, 1]} : vector<2x384xf32> to vector<2x128xf32>
    %459 = arith.mulf %455, %458 : vector<2x128xf32>
    %460 = arith.addf %457, %459 : vector<2x128xf32>
    %461 = math.tanh %460 : vector<2x128xf32>
    %cst_203 = arith.constant 1.000000e+00 : f32
    %462 = vector.broadcast %cst_203 : f32 to vector<2x128xf32>
    %463 = arith.subf %462, %456 : vector<2x128xf32>
    %464 = arith.mulf %463, %461 : vector<2x128xf32>
    %465 = arith.mulf %456, %433 : vector<2x128xf32>
    %466 = arith.addf %464, %465 : vector<2x128xf32>
    %467 = vector.extract_strided_slice %466 {offsets = [0, 0], sizes = [2, 64], strides = [1, 1]} : vector<2x128xf32> to vector<2x64xf32>
    %c10_204 = arith.constant 10 : index
    %c0_205 = arith.constant 0 : index
    %468 = vector.load %arg26[%c10_204, %c0_205] : memref<16x128xf32, #tpu.memory_space<vmem>>, vector<2x64xf32>
    tpu.vector_store %arg26[%c10_204, %c0_205], %467 {strides = array<i32>} : memref<16x128xf32, #tpu.memory_space<vmem>>, vector<2x64xf32>,
    %469 = vector.extract_strided_slice %466 {offsets = [0, 64], sizes = [2, 64], strides = [1, 1]} : vector<2x128xf32> to vector<2x64xf32>
    %c4_206 = arith.constant 4 : index
    %c64_207 = arith.constant 64 : index
    %470 = vector.load %arg26[%c4_206, %c64_207] : memref<16x128xf32, #tpu.memory_space<vmem>>, vector<2x64xf32>
    tpu.vector_store %arg26[%c4_206, %c64_207], %469 {strides = array<i32>} : memref<16x128xf32, #tpu.memory_space<vmem>>, vector<2x64xf32>,
    %c12_208 = arith.constant 12 : index
    %c0_209 = arith.constant 0 : index
    %471 = vector.load %arg25[%c12_208, %c0_209] : memref<16x384xf32, #tpu.memory_space<vmem>>, vector<2x384xf32>
    %c2_210 = arith.constant 2 : index
    %c0_211 = arith.constant 0 : index
    %472 = vector.load %arg25[%c2_210, %c0_211] : memref<16x384xf32, #tpu.memory_space<vmem>>, vector<2x384xf32>
    %473 = arith.select %37, %471, %472 : vector<2x384xi1>, vector<2x384xf32>
    %474 = arith.truncf %466 : vector<2x128xf32> to vector<2x128xbf16>
    %c0_212 = arith.constant 0 : index
    %c0_213 = arith.constant 0 : index
    %475 = vector.load %arg7[%c0_212, %c0_213] : memref<128x384xbf16, #tpu.memory_space<vmem>>, vector<128x384xbf16>
    %cst_214 = arith.constant dense<0.000000e+00> : vector<2x384xf32>
    %476 = tpu.matmul %474, %475, %cst_214 {dimension_numbers = #tpu.dot_dimension_numbers<[1], [0], [0], [1], [0, 0, 1, 1], [], []>} : vector<2x128xbf16>, vector<128x384xbf16>, vector<2x384xf32> -> vector<2x384xf32>
    %c0_215 = arith.constant 0 : index
    %c0_216 = arith.constant 0 : index
    %477 = vector.load %arg9[%c0_215, %c0_216] : memref<1x384xf32, #tpu.memory_space<vmem>>, vector<1x384xf32>
    %478 = vector.broadcast %477 : vector<1x384xf32> to vector<2x384xf32>
    %479 = arith.addf %476, %478 : vector<2x384xf32>
    %480 = vector.extract_strided_slice %473 {offsets = [0, 0], sizes = [2, 256], strides = [1, 1]} : vector<2x384xf32> to vector<2x256xf32>
    %481 = vector.extract_strided_slice %479 {offsets = [0, 0], sizes = [2, 256], strides = [1, 1]} : vector<2x384xf32> to vector<2x256xf32>
    %482 = arith.addf %480, %481 : vector<2x256xf32>
    %483 = arith.negf %482 : vector<2x256xf32>
    %484 = math.exp %483 : vector<2x256xf32>
    %cst_217 = arith.constant 1.000000e+00 : f32
    %485 = vector.broadcast %cst_217 : f32 to vector<2x256xf32>
    %486 = arith.addf %485, %484 : vector<2x256xf32>
    %487 = arith.divf %485, %486 : vector<2x256xf32>
    %488 = vector.extract_strided_slice %487 {offsets = [0, 0], sizes = [2, 128], strides = [1, 1]} : vector<2x256xf32> to vector<2x128xf32>
    %489 = vector.extract_strided_slice %487 {offsets = [0, 128], sizes = [2, 128], strides = [1, 1]} : vector<2x256xf32> to vector<2x128xf32>
    %490 = vector.extract_strided_slice %473 {offsets = [0, 256], sizes = [2, 128], strides = [1, 1]} : vector<2x384xf32> to vector<2x128xf32>
    %491 = vector.extract_strided_slice %479 {offsets = [0, 256], sizes = [2, 128], strides = [1, 1]} : vector<2x384xf32> to vector<2x128xf32>
    %492 = arith.mulf %488, %491 : vector<2x128xf32>
    %493 = arith.addf %490, %492 : vector<2x128xf32>
    %494 = math.tanh %493 : vector<2x128xf32>
    %cst_218 = arith.constant 1.000000e+00 : f32
    %495 = vector.broadcast %cst_218 : f32 to vector<2x128xf32>
    %496 = arith.subf %495, %489 : vector<2x128xf32>
    %497 = arith.mulf %496, %494 : vector<2x128xf32>
    %498 = arith.mulf %489, %466 : vector<2x128xf32>
    %499 = arith.addf %497, %498 : vector<2x128xf32>
    %500 = vector.extract_strided_slice %499 {offsets = [0, 0], sizes = [2, 64], strides = [1, 1]} : vector<2x128xf32> to vector<2x64xf32>
    %c12_219 = arith.constant 12 : index
    %c0_220 = arith.constant 0 : index
    %501 = vector.load %arg26[%c12_219, %c0_220] : memref<16x128xf32, #tpu.memory_space<vmem>>, vector<2x64xf32>
    tpu.vector_store %arg26[%c12_219, %c0_220], %500 {strides = array<i32>} : memref<16x128xf32, #tpu.memory_space<vmem>>, vector<2x64xf32>,
    %502 = vector.extract_strided_slice %499 {offsets = [0, 64], sizes = [2, 64], strides = [1, 1]} : vector<2x128xf32> to vector<2x64xf32>
    %c2_221 = arith.constant 2 : index
    %c64_222 = arith.constant 64 : index
    %503 = vector.load %arg26[%c2_221, %c64_222] : memref<16x128xf32, #tpu.memory_space<vmem>>, vector<2x64xf32>
    tpu.vector_store %arg26[%c2_221, %c64_222], %502 {strides = array<i32>} : memref<16x128xf32, #tpu.memory_space<vmem>>, vector<2x64xf32>,
    %c14_223 = arith.constant 14 : index
    %c0_224 = arith.constant 0 : index
    %504 = vector.load %arg25[%c14_223, %c0_224] : memref<16x384xf32, #tpu.memory_space<vmem>>, vector<2x384xf32>
    %c0_225 = arith.constant 0 : index
    %c0_226 = arith.constant 0 : index
    %505 = vector.load %arg25[%c0_225, %c0_226] : memref<16x384xf32, #tpu.memory_space<vmem>>, vector<2x384xf32>
    %506 = arith.select %37, %504, %505 : vector<2x384xi1>, vector<2x384xf32>
    %507 = arith.truncf %499 : vector<2x128xf32> to vector<2x128xbf16>
    %c0_227 = arith.constant 0 : index
    %c0_228 = arith.constant 0 : index
    %508 = vector.load %arg7[%c0_227, %c0_228] : memref<128x384xbf16, #tpu.memory_space<vmem>>, vector<128x384xbf16>
    %cst_229 = arith.constant dense<0.000000e+00> : vector<2x384xf32>
    %509 = tpu.matmul %507, %508, %cst_229 {dimension_numbers = #tpu.dot_dimension_numbers<[1], [0], [0], [1], [0, 0, 1, 1], [], []>} : vector<2x128xbf16>, vector<128x384xbf16>, vector<2x384xf32> -> vector<2x384xf32>
    %c0_230 = arith.constant 0 : index
    %c0_231 = arith.constant 0 : index
    %510 = vector.load %arg9[%c0_230, %c0_231] : memref<1x384xf32, #tpu.memory_space<vmem>>, vector<1x384xf32>
    %511 = vector.broadcast %510 : vector<1x384xf32> to vector<2x384xf32>
    %512 = arith.addf %509, %511 : vector<2x384xf32>
    %513 = vector.extract_strided_slice %506 {offsets = [0, 0], sizes = [2, 256], strides = [1, 1]} : vector<2x384xf32> to vector<2x256xf32>
    %514 = vector.extract_strided_slice %512 {offsets = [0, 0], sizes = [2, 256], strides = [1, 1]} : vector<2x384xf32> to vector<2x256xf32>
    %515 = arith.addf %513, %514 : vector<2x256xf32>
    %516 = arith.negf %515 : vector<2x256xf32>
    %517 = math.exp %516 : vector<2x256xf32>
    %cst_232 = arith.constant 1.000000e+00 : f32
    %518 = vector.broadcast %cst_232 : f32 to vector<2x256xf32>
    %519 = arith.addf %518, %517 : vector<2x256xf32>
    %520 = arith.divf %518, %519 : vector<2x256xf32>
    %521 = vector.extract_strided_slice %520 {offsets = [0, 0], sizes = [2, 128], strides = [1, 1]} : vector<2x256xf32> to vector<2x128xf32>
    %522 = vector.extract_strided_slice %520 {offsets = [0, 128], sizes = [2, 128], strides = [1, 1]} : vector<2x256xf32> to vector<2x128xf32>
    %523 = vector.extract_strided_slice %506 {offsets = [0, 256], sizes = [2, 128], strides = [1, 1]} : vector<2x384xf32> to vector<2x128xf32>
    %524 = vector.extract_strided_slice %512 {offsets = [0, 256], sizes = [2, 128], strides = [1, 1]} : vector<2x384xf32> to vector<2x128xf32>
    %525 = arith.mulf %521, %524 : vector<2x128xf32>
    %526 = arith.addf %523, %525 : vector<2x128xf32>
    %527 = math.tanh %526 : vector<2x128xf32>
    %cst_233 = arith.constant 1.000000e+00 : f32
    %528 = vector.broadcast %cst_233 : f32 to vector<2x128xf32>
    %529 = arith.subf %528, %522 : vector<2x128xf32>
    %530 = arith.mulf %529, %527 : vector<2x128xf32>
    %531 = arith.mulf %522, %499 : vector<2x128xf32>
    %532 = arith.addf %530, %531 : vector<2x128xf32>
    %533 = vector.extract_strided_slice %532 {offsets = [0, 0], sizes = [2, 64], strides = [1, 1]} : vector<2x128xf32> to vector<2x64xf32>
    %c14_234 = arith.constant 14 : index
    %c0_235 = arith.constant 0 : index
    %534 = vector.load %arg26[%c14_234, %c0_235] : memref<16x128xf32, #tpu.memory_space<vmem>>, vector<2x64xf32>
    tpu.vector_store %arg26[%c14_234, %c0_235], %533 {strides = array<i32>} : memref<16x128xf32, #tpu.memory_space<vmem>>, vector<2x64xf32>,
    %535 = vector.extract_strided_slice %532 {offsets = [0, 64], sizes = [2, 64], strides = [1, 1]} : vector<2x128xf32> to vector<2x64xf32>
    %c0_236 = arith.constant 0 : index
    %c64_237 = arith.constant 64 : index
    %536 = vector.load %arg26[%c0_236, %c64_237] : memref<16x128xf32, #tpu.memory_space<vmem>>, vector<2x64xf32>
    tpu.vector_store %arg26[%c0_236, %c64_237], %535 {strides = array<i32>} : memref<16x128xf32, #tpu.memory_space<vmem>>, vector<2x64xf32>,
    %c0_238 = arith.constant 0 : index
    %c0_239 = arith.constant 0 : index
    %537 = vector.load %arg24[%c0_238, %c0_239] : memref<16x128xf32, #tpu.memory_space<vmem>>, vector<16x128xf32>
    %c0_240 = arith.constant 0 : index
    %c0_241 = arith.constant 0 : index
    %538 = vector.load %arg26[%c0_240, %c0_241] : memref<16x128xf32, #tpu.memory_space<vmem>>, vector<16x128xf32>
    %c0_242 = arith.constant 0 : index
    %c0_243 = arith.constant 0 : index
    %539 = vector.load %arg10[%c0_242, %c0_243] : memref<128x1xf32, #tpu.memory_space<vmem>>, vector<128x1xf32>
    %cst_244 = arith.constant dense<0.000000e+00> : vector<16x1xf32>
    %540 = tpu.matmul %537, %539, %cst_244 {dimension_numbers = #tpu.dot_dimension_numbers<[1], [0], [0], [1], [0, 0, 1, 1], [], []>} : vector<16x128xf32>, vector<128x1xf32>, vector<16x1xf32> -> vector<16x1xf32>
    %c0_245 = arith.constant 0 : index
    %c0_246 = arith.constant 0 : index
    %541 = vector.load %arg11[%c0_245, %c0_246] : memref<16x1xf32, #tpu.memory_space<vmem>>, vector<16x1xf32>
    %542 = arith.addf %540, %541 : vector<16x1xf32>
    %543 = math.tanh %542 : vector<16x1xf32>
    %544 = math.exp %543 : vector<16x1xf32>
    %545 = vector.broadcast %544 : vector<16x1xf32> to vector<16x128xf32>
    %546 = arith.mulf %545, %537 : vector<16x128xf32>
    %547 = vector.extract_strided_slice %546 {offsets = [0, 0], sizes = [8, 128], strides = [1, 1]} : vector<16x128xf32> to vector<8x128xf32>
    %548 = vector.extract_strided_slice %546 {offsets = [8, 0], sizes = [8, 128], strides = [1, 1]} : vector<16x128xf32> to vector<8x128xf32>
    %549 = arith.addf %547, %548 : vector<8x128xf32>
    %550 = vector.extract_strided_slice %549 {offsets = [0, 0], sizes = [4, 128], strides = [1, 1]} : vector<8x128xf32> to vector<4x128xf32>
    %551 = vector.extract_strided_slice %549 {offsets = [4, 0], sizes = [4, 128], strides = [1, 1]} : vector<8x128xf32> to vector<4x128xf32>
    %552 = arith.addf %550, %551 : vector<4x128xf32>
    %553 = vector.extract_strided_slice %552 {offsets = [0, 0], sizes = [2, 128], strides = [1, 1]} : vector<4x128xf32> to vector<2x128xf32>
    %554 = vector.extract_strided_slice %552 {offsets = [2, 0], sizes = [2, 128], strides = [1, 1]} : vector<4x128xf32> to vector<2x128xf32>
    %555 = arith.addf %553, %554 : vector<2x128xf32>
    %556 = vector.extract_strided_slice %544 {offsets = [0, 0], sizes = [8, 1], strides = [1, 1]} : vector<16x1xf32> to vector<8x1xf32>
    %557 = vector.extract_strided_slice %544 {offsets = [8, 0], sizes = [8, 1], strides = [1, 1]} : vector<16x1xf32> to vector<8x1xf32>
    %558 = arith.addf %556, %557 : vector<8x1xf32>
    %559 = vector.extract_strided_slice %558 {offsets = [0, 0], sizes = [4, 1], strides = [1, 1]} : vector<8x1xf32> to vector<4x1xf32>
    %560 = vector.extract_strided_slice %558 {offsets = [4, 0], sizes = [4, 1], strides = [1, 1]} : vector<8x1xf32> to vector<4x1xf32>
    %561 = arith.addf %559, %560 : vector<4x1xf32>
    %562 = vector.extract_strided_slice %561 {offsets = [0, 0], sizes = [2, 1], strides = [1, 1]} : vector<4x1xf32> to vector<2x1xf32>
    %563 = vector.extract_strided_slice %561 {offsets = [2, 0], sizes = [2, 1], strides = [1, 1]} : vector<4x1xf32> to vector<2x1xf32>
    %564 = arith.addf %562, %563 : vector<2x1xf32>
    %565 = vector.broadcast %564 : vector<2x1xf32> to vector<2x128xf32>
    %566 = arith.divf %555, %565 : vector<2x128xf32>
    %567 = vector.extract_strided_slice %537 {offsets = [0, 0], sizes = [8, 128], strides = [1, 1]} : vector<16x128xf32> to vector<8x128xf32>
    %568 = vector.extract_strided_slice %537 {offsets = [8, 0], sizes = [8, 128], strides = [1, 1]} : vector<16x128xf32> to vector<8x128xf32>
    %569 = arith.addf %567, %568 : vector<8x128xf32>
    %570 = vector.extract_strided_slice %569 {offsets = [0, 0], sizes = [4, 128], strides = [1, 1]} : vector<8x128xf32> to vector<4x128xf32>
    %571 = vector.extract_strided_slice %569 {offsets = [4, 0], sizes = [4, 128], strides = [1, 1]} : vector<8x128xf32> to vector<4x128xf32>
    %572 = arith.addf %570, %571 : vector<4x128xf32>
    %573 = vector.extract_strided_slice %572 {offsets = [0, 0], sizes = [2, 128], strides = [1, 1]} : vector<4x128xf32> to vector<2x128xf32>
    %574 = vector.extract_strided_slice %572 {offsets = [2, 0], sizes = [2, 128], strides = [1, 1]} : vector<4x128xf32> to vector<2x128xf32>
    %575 = arith.addf %573, %574 : vector<2x128xf32>
    %cst_247 = arith.constant 1.000000e-10 : f32
    %576 = vector.broadcast %cst_247 : f32 to vector<2x128xf32>
    %577 = arith.mulf %576, %575 : vector<2x128xf32>
    %578 = arith.addf %566, %577 : vector<2x128xf32>
    %c0_248 = arith.constant 0 : index
    %c0_249 = arith.constant 0 : index
    %579 = vector.load %arg12[%c0_248, %c0_249] : memref<128x1xf32, #tpu.memory_space<vmem>>, vector<128x1xf32>
    %cst_250 = arith.constant dense<0.000000e+00> : vector<16x1xf32>
    %580 = tpu.matmul %538, %579, %cst_250 {dimension_numbers = #tpu.dot_dimension_numbers<[1], [0], [0], [1], [0, 0, 1, 1], [], []>} : vector<16x128xf32>, vector<128x1xf32>, vector<16x1xf32> -> vector<16x1xf32>
    %c0_251 = arith.constant 0 : index
    %c0_252 = arith.constant 0 : index
    %581 = vector.load %arg13[%c0_251, %c0_252] : memref<16x1xf32, #tpu.memory_space<vmem>>, vector<16x1xf32>
    %582 = arith.addf %580, %581 : vector<16x1xf32>
    %583 = math.tanh %582 : vector<16x1xf32>
    %584 = math.exp %583 : vector<16x1xf32>
    %585 = vector.broadcast %584 : vector<16x1xf32> to vector<16x128xf32>
    %586 = arith.mulf %585, %538 : vector<16x128xf32>
    %587 = vector.extract_strided_slice %586 {offsets = [0, 0], sizes = [8, 128], strides = [1, 1]} : vector<16x128xf32> to vector<8x128xf32>
    %588 = vector.extract_strided_slice %586 {offsets = [8, 0], sizes = [8, 128], strides = [1, 1]} : vector<16x128xf32> to vector<8x128xf32>
    %589 = arith.addf %587, %588 : vector<8x128xf32>
    %590 = vector.extract_strided_slice %589 {offsets = [0, 0], sizes = [4, 128], strides = [1, 1]} : vector<8x128xf32> to vector<4x128xf32>
    %591 = vector.extract_strided_slice %589 {offsets = [4, 0], sizes = [4, 128], strides = [1, 1]} : vector<8x128xf32> to vector<4x128xf32>
    %592 = arith.addf %590, %591 : vector<4x128xf32>
    %593 = vector.extract_strided_slice %592 {offsets = [0, 0], sizes = [2, 128], strides = [1, 1]} : vector<4x128xf32> to vector<2x128xf32>
    %594 = vector.extract_strided_slice %592 {offsets = [2, 0], sizes = [2, 128], strides = [1, 1]} : vector<4x128xf32> to vector<2x128xf32>
    %595 = arith.addf %593, %594 : vector<2x128xf32>
    %596 = vector.extract_strided_slice %584 {offsets = [0, 0], sizes = [8, 1], strides = [1, 1]} : vector<16x1xf32> to vector<8x1xf32>
    %597 = vector.extract_strided_slice %584 {offsets = [8, 0], sizes = [8, 1], strides = [1, 1]} : vector<16x1xf32> to vector<8x1xf32>
    %598 = arith.addf %596, %597 : vector<8x1xf32>
    %599 = vector.extract_strided_slice %598 {offsets = [0, 0], sizes = [4, 1], strides = [1, 1]} : vector<8x1xf32> to vector<4x1xf32>
    %600 = vector.extract_strided_slice %598 {offsets = [4, 0], sizes = [4, 1], strides = [1, 1]} : vector<8x1xf32> to vector<4x1xf32>
    %601 = arith.addf %599, %600 : vector<4x1xf32>
    %602 = vector.extract_strided_slice %601 {offsets = [0, 0], sizes = [2, 1], strides = [1, 1]} : vector<4x1xf32> to vector<2x1xf32>
    %603 = vector.extract_strided_slice %601 {offsets = [2, 0], sizes = [2, 1], strides = [1, 1]} : vector<4x1xf32> to vector<2x1xf32>
    %604 = arith.addf %602, %603 : vector<2x1xf32>
    %605 = vector.broadcast %604 : vector<2x1xf32> to vector<2x128xf32>
    %606 = arith.divf %595, %605 : vector<2x128xf32>
    %607 = vector.extract_strided_slice %538 {offsets = [0, 0], sizes = [8, 128], strides = [1, 1]} : vector<16x128xf32> to vector<8x128xf32>
    %608 = vector.extract_strided_slice %538 {offsets = [8, 0], sizes = [8, 128], strides = [1, 1]} : vector<16x128xf32> to vector<8x128xf32>
    %609 = arith.addf %607, %608 : vector<8x128xf32>
    %610 = vector.extract_strided_slice %609 {offsets = [0, 0], sizes = [4, 128], strides = [1, 1]} : vector<8x128xf32> to vector<4x128xf32>
    %611 = vector.extract_strided_slice %609 {offsets = [4, 0], sizes = [4, 128], strides = [1, 1]} : vector<8x128xf32> to vector<4x128xf32>
    %612 = arith.addf %610, %611 : vector<4x128xf32>
    %613 = vector.extract_strided_slice %612 {offsets = [0, 0], sizes = [2, 128], strides = [1, 1]} : vector<4x128xf32> to vector<2x128xf32>
    %614 = vector.extract_strided_slice %612 {offsets = [2, 0], sizes = [2, 128], strides = [1, 1]} : vector<4x128xf32> to vector<2x128xf32>
    %615 = arith.addf %613, %614 : vector<2x128xf32>
    %cst_253 = arith.constant 1.000000e-10 : f32
    %616 = vector.broadcast %cst_253 : f32 to vector<2x128xf32>
    %617 = arith.mulf %616, %615 : vector<2x128xf32>
    %618 = arith.addf %606, %617 : vector<2x128xf32>
    %619 = vector.extract_strided_slice %538 {offsets = [0, 0], sizes = [8, 128], strides = [1, 1]} : vector<16x128xf32> to vector<8x128xf32>
    %620 = vector.extract_strided_slice %538 {offsets = [8, 0], sizes = [8, 128], strides = [1, 1]} : vector<16x128xf32> to vector<8x128xf32>
    %621 = arith.addf %619, %620 : vector<8x128xf32>
    %622 = vector.extract_strided_slice %621 {offsets = [0, 0], sizes = [4, 128], strides = [1, 1]} : vector<8x128xf32> to vector<4x128xf32>
    %623 = vector.extract_strided_slice %621 {offsets = [4, 0], sizes = [4, 128], strides = [1, 1]} : vector<8x128xf32> to vector<4x128xf32>
    %624 = arith.addf %622, %623 : vector<4x128xf32>
    %625 = vector.extract_strided_slice %624 {offsets = [0, 0], sizes = [2, 128], strides = [1, 1]} : vector<4x128xf32> to vector<2x128xf32>
    %626 = vector.extract_strided_slice %624 {offsets = [2, 0], sizes = [2, 128], strides = [1, 1]} : vector<4x128xf32> to vector<2x128xf32>
    %627 = arith.addf %625, %626 : vector<2x128xf32>
    %cst_254 = arith.constant 1.250000e-01 : f32
    %628 = vector.broadcast %cst_254 : f32 to vector<2x128xf32>
    %629 = arith.mulf %627, %628 : vector<2x128xf32>
    %630 = vector.extract_strided_slice %538 {offsets = [0, 0], sizes = [8, 128], strides = [1, 1]} : vector<16x128xf32> to vector<8x128xf32>
    %631 = vector.extract_strided_slice %538 {offsets = [8, 0], sizes = [8, 128], strides = [1, 1]} : vector<16x128xf32> to vector<8x128xf32>
    %632 = arith.maximumf %630, %631 : vector<8x128xf32>
    %633 = vector.extract_strided_slice %632 {offsets = [0, 0], sizes = [4, 128], strides = [1, 1]} : vector<8x128xf32> to vector<4x128xf32>
    %634 = vector.extract_strided_slice %632 {offsets = [4, 0], sizes = [4, 128], strides = [1, 1]} : vector<8x128xf32> to vector<4x128xf32>
    %635 = arith.maximumf %633, %634 : vector<4x128xf32>
    %636 = vector.extract_strided_slice %635 {offsets = [0, 0], sizes = [2, 128], strides = [1, 1]} : vector<4x128xf32> to vector<2x128xf32>
    %637 = vector.extract_strided_slice %635 {offsets = [2, 0], sizes = [2, 128], strides = [1, 1]} : vector<4x128xf32> to vector<2x128xf32>
    %638 = arith.maximumf %636, %637 : vector<2x128xf32>
    %c0_255 = arith.constant 0 : index
    %c0_256 = arith.constant 0 : index
    %c0_257 = arith.constant 0 : index
    %639 = vector.load %arg2[%c0_255, %c0_256, %c0_257] : memref<1x2x128xf32, #tpu.memory_space<vmem>>, vector<1x2x128xf32>
    %640 = vector.shape_cast %639 : vector<1x2x128xf32> to vector<2x128xf32>
    %641 = tpu.concatenate %578, %618, %629, %638, %640 in 1 : vector<2x128xf32>, vector<2x128xf32>, vector<2x128xf32>, vector<2x128xf32>, vector<2x128xf32> -> vector<2x640xf32>
    %642 = arith.truncf %641 : vector<2x640xf32> to vector<2x640xbf16>
    %c0_258 = arith.constant 0 : index
    %c0_259 = arith.constant 0 : index
    %643 = vector.load %arg14[%c0_258, %c0_259] : memref<640x640xbf16, #tpu.memory_space<vmem>>, vector<640x640xbf16>
    %cst_260 = arith.constant dense<0.000000e+00> : vector<2x640xf32>
    %644 = tpu.matmul %642, %643, %cst_260 {dimension_numbers = #tpu.dot_dimension_numbers<[1], [0], [0], [1], [0, 0, 1, 1], [], []>} : vector<2x640xbf16>, vector<640x640xbf16>, vector<2x640xf32> -> vector<2x640xf32>
    %c0_261 = arith.constant 0 : index
    %c0_262 = arith.constant 0 : index
    %645 = vector.load %arg15[%c0_261, %c0_262] : memref<1x640xf32, #tpu.memory_space<vmem>>, vector<1x640xf32>
    %646 = vector.broadcast %645 : vector<1x640xf32> to vector<2x640xf32>
    %647 = arith.addf %644, %646 : vector<2x640xf32>
    %cst_263 = arith.constant 0.000000e+00 : f32
    %648 = vector.broadcast %cst_263 : f32 to vector<2x640xf32>
    %649 = arith.maximumf %647, %648 : vector<2x640xf32>
    %650 = arith.truncf %649 : vector<2x640xf32> to vector<2x640xbf16>
    %c0_264 = arith.constant 0 : index
    %c0_265 = arith.constant 0 : index
    %651 = vector.load %arg16[%c0_264, %c0_265] : memref<640x64xbf16, #tpu.memory_space<vmem>>, vector<640x64xbf16>
    %cst_266 = arith.constant dense<0.000000e+00> : vector<2x64xf32>
    %652 = tpu.matmul %650, %651, %cst_266 {dimension_numbers = #tpu.dot_dimension_numbers<[1], [0], [0], [1], [0, 0, 1, 1], [], []>} : vector<2x640xbf16>, vector<640x64xbf16>, vector<2x64xf32> -> vector<2x64xf32>
    %c0_267 = arith.constant 0 : index
    %c0_268 = arith.constant 0 : index
    %653 = vector.load %arg17[%c0_267, %c0_268] : memref<1x64xf32, #tpu.memory_space<vmem>>, vector<1x64xf32>
    %654 = vector.broadcast %653 : vector<1x64xf32> to vector<2x64xf32>
    %655 = arith.addf %652, %654 : vector<2x64xf32>
    %cst_269 = arith.constant 0.000000e+00 : f32
    %656 = vector.broadcast %cst_269 : f32 to vector<2x64xf32>
    %657 = arith.maximumf %655, %656 : vector<2x64xf32>
    %c0_270 = arith.constant 0 : index
    %c0_271 = arith.constant 0 : index
    %658 = vector.load %arg18[%c0_270, %c0_271] : memref<64x16xf32, #tpu.memory_space<vmem>>, vector<64x16xf32>
    %cst_272 = arith.constant dense<0.000000e+00> : vector<2x16xf32>
    %659 = tpu.matmul %657, %658, %cst_272 {dimension_numbers = #tpu.dot_dimension_numbers<[1], [0], [0], [1], [0, 0, 1, 1], [], []>} : vector<2x64xf32>, vector<64x16xf32>, vector<2x16xf32> -> vector<2x16xf32>
    %c0_273 = arith.constant 0 : index
    %c0_274 = arith.constant 0 : index
    %660 = vector.load %arg19[%c0_273, %c0_274] : memref<1x16xf32, #tpu.memory_space<vmem>>, vector<1x16xf32>
    %661 = vector.broadcast %660 : vector<1x16xf32> to vector<2x16xf32>
    %662 = arith.addf %659, %661 : vector<2x16xf32>
    %cst_275 = arith.constant 0.000000e+00 : f32
    %663 = vector.broadcast %cst_275 : f32 to vector<2x16xf32>
    %664 = arith.maximumf %662, %663 : vector<2x16xf32>
    %c0_276 = arith.constant 0 : index
    %c0_277 = arith.constant 0 : index
    %665 = vector.load %arg20[%c0_276, %c0_277] : memref<16x1xf32, #tpu.memory_space<vmem>>, vector<16x1xf32>
    %cst_278 = arith.constant dense<0.000000e+00> : vector<2x1xf32>
    %666 = tpu.matmul %664, %665, %cst_278 {dimension_numbers = #tpu.dot_dimension_numbers<[1], [0], [0], [1], [0, 0, 1, 1], [], []>} : vector<2x16xf32>, vector<16x1xf32>, vector<2x1xf32> -> vector<2x1xf32>
    %c0_279 = arith.constant 0 : index
    %c0_280 = arith.constant 0 : index
    %667 = vector.load %arg21[%c0_279, %c0_280] : memref<1x1xf32, #tpu.memory_space<vmem>>, vector<1x1xf32>
    %668 = vector.broadcast %667 : vector<1x1xf32> to vector<2x1xf32>
    %669 = arith.addf %666, %668 : vector<2x1xf32>
    %c0_281 = arith.constant 0 : index
    %c0_282 = arith.constant 0 : index
    %c0_283 = arith.constant 0 : index
    %670 = vector.load %arg22[%c0_281, %c0_282, %c0_283] : memref<1x2x1xf32, #tpu.memory_space<vmem>>, vector<1x2x1xf32>
    %671 = vector.shape_cast %670 : vector<1x2x1xf32> to vector<2x1xf32>
    %672 = vector.shape_cast %669 : vector<2x1xf32> to vector<1x2x1xf32>
    tpu.vector_store %arg22[%c0_281, %c0_282, %c0_283], %672 {strides = array<i32>} : memref<1x2x1xf32, #tpu.memory_space<vmem>>, vector<1x2x1xf32>,
    return
  }
  func.func @transform_0(%arg0: i32) -> (i32, i32, i32) {
    %c0_i32 = arith.constant 0 : i32
    %c0_i32_0 = arith.constant 0 : i32
    %c0_i32_1 = arith.constant 0 : i32
    return %arg0, %c0_i32, %c0_i32_0 : i32, i32, i32
  }
  func.func @transform_1(%arg0: i32) -> (i32, i32, i32) {
    %c0_i32 = arith.constant 0 : i32
    %c0_i32_0 = arith.constant 0 : i32
    %c0_i32_1 = arith.constant 0 : i32
    return %arg0, %c0_i32, %c0_i32_0 : i32, i32, i32
  }
  func.func @transform_2(%arg0: i32) -> (i32, i32) {
    %c0_i32 = arith.constant 0 : i32
    %c0_i32_0 = arith.constant 0 : i32
    %c0_i32_1 = arith.constant 0 : i32
    return %c0_i32, %c0_i32_0 : i32, i32
  }
  func.func @transform_3(%arg0: i32) -> (i32, i32) {
    %c0_i32 = arith.constant 0 : i32
    %c0_i32_0 = arith.constant 0 : i32
    %c0_i32_1 = arith.constant 0 : i32
    return %c0_i32, %c0_i32_0 : i32, i32
  }
  func.func @transform_4(%arg0: i32) -> (i32, i32) {
    %c0_i32 = arith.constant 0 : i32
    %c0_i32_0 = arith.constant 0 : i32
    %c0_i32_1 = arith.constant 0 : i32
    return %c0_i32, %c0_i32_0 : i32, i32
  }
  func.func @transform_5(%arg0: i32) -> (i32, i32) {
    %c0_i32 = arith.constant 0 : i32
    %c0_i32_0 = arith.constant 0 : i32
    %c0_i32_1 = arith.constant 0 : i32
    return %c0_i32, %c0_i32_0 : i32, i32
  }
  func.func @transform_6(%arg0: i32) -> (i32, i32) {
    %c0_i32 = arith.constant 0 : i32
    %c0_i32_0 = arith.constant 0 : i32
    %c0_i32_1 = arith.constant 0 : i32
    return %c0_i32, %c0_i32_0 : i32, i32
  }
  func.func @transform_7(%arg0: i32) -> (i32, i32) {
    %c0_i32 = arith.constant 0 : i32
    %c0_i32_0 = arith.constant 0 : i32
    %c0_i32_1 = arith.constant 0 : i32
    return %c0_i32, %c0_i32_0 : i32, i32
  }
  func.func @transform_8(%arg0: i32) -> (i32, i32) {
    %c0_i32 = arith.constant 0 : i32
    %c0_i32_0 = arith.constant 0 : i32
    %c0_i32_1 = arith.constant 0 : i32
    return %c0_i32, %c0_i32_0 : i32, i32
  }
  func.func @transform_9(%arg0: i32) -> (i32, i32) {
    %c0_i32 = arith.constant 0 : i32
    %c0_i32_0 = arith.constant 0 : i32
    %c0_i32_1 = arith.constant 0 : i32
    return %c0_i32, %c0_i32_0 : i32, i32
  }
  func.func @transform_10(%arg0: i32) -> (i32, i32) {
    %c0_i32 = arith.constant 0 : i32
    %c0_i32_0 = arith.constant 0 : i32
    %c0_i32_1 = arith.constant 0 : i32
    return %c0_i32, %c0_i32_0 : i32, i32
  }
  func.func @transform_11(%arg0: i32) -> (i32, i32) {
    %c0_i32 = arith.constant 0 : i32
    %c0_i32_0 = arith.constant 0 : i32
    %c0_i32_1 = arith.constant 0 : i32
    return %c0_i32, %c0_i32_0 : i32, i32
  }
  func.func @transform_12(%arg0: i32) -> (i32, i32) {
    %c0_i32 = arith.constant 0 : i32
    %c0_i32_0 = arith.constant 0 : i32
    %c0_i32_1 = arith.constant 0 : i32
    return %c0_i32, %c0_i32_0 : i32, i32
  }
  func.func @transform_13(%arg0: i32) -> (i32, i32) {
    %c0_i32 = arith.constant 0 : i32
    %c0_i32_0 = arith.constant 0 : i32
    %c0_i32_1 = arith.constant 0 : i32
    return %c0_i32, %c0_i32_0 : i32, i32
  }
  func.func @transform_14(%arg0: i32) -> (i32, i32) {
    %c0_i32 = arith.constant 0 : i32
    %c0_i32_0 = arith.constant 0 : i32
    %c0_i32_1 = arith.constant 0 : i32
    return %c0_i32, %c0_i32_0 : i32, i32
  }
  func.func @transform_15(%arg0: i32) -> (i32, i32) {
    %c0_i32 = arith.constant 0 : i32
    %c0_i32_0 = arith.constant 0 : i32
    %c0_i32_1 = arith.constant 0 : i32
    return %c0_i32, %c0_i32_0 : i32, i32
  }
  func.func @transform_16(%arg0: i32) -> (i32, i32) {
    %c0_i32 = arith.constant 0 : i32
    %c0_i32_0 = arith.constant 0 : i32
    %c0_i32_1 = arith.constant 0 : i32
    return %c0_i32, %c0_i32_0 : i32, i32
  }
  func.func @transform_17(%arg0: i32) -> (i32, i32) {
    %c0_i32 = arith.constant 0 : i32
    %c0_i32_0 = arith.constant 0 : i32
    %c0_i32_1 = arith.constant 0 : i32
    return %c0_i32, %c0_i32_0 : i32, i32
  }
  func.func @transform_18(%arg0: i32) -> (i32, i32) {
    %c0_i32 = arith.constant 0 : i32
    %c0_i32_0 = arith.constant 0 : i32
    %c0_i32_1 = arith.constant 0 : i32
    return %c0_i32, %c0_i32_0 : i32, i32
  }
  func.func @transform_19(%arg0: i32) -> (i32, i32) {
    %c0_i32 = arith.constant 0 : i32
    %c0_i32_0 = arith.constant 0 : i32
    %c0_i32_1 = arith.constant 0 : i32
    return %c0_i32, %c0_i32_0 : i32, i32
  }
  func.func @transform_20(%arg0: i32) -> (i32, i32) {
    %c0_i32 = arith.constant 0 : i32
    %c0_i32_0 = arith.constant 0 : i32
    %c0_i32_1 = arith.constant 0 : i32
    return %c0_i32, %c0_i32_0 : i32, i32
  }
  func.func @transform_21(%arg0: i32) -> (i32, i32, i32) {
    %c0_i32 = arith.constant 0 : i32
    %c0_i32_0 = arith.constant 0 : i32
    %c0_i32_1 = arith.constant 0 : i32
    return %arg0, %c0_i32, %c0_i32_0 : i32, i32, i32
  }
}

</mosaic_0001>

<llo_original>
// kernel: forward.1
$region0: #{forward.1}
  #allocation0 [shape = 'u32[]', space=smem, size = 0x4, offset = 0x4, fixed_abs, tag = 'smem constant byte address 0x4 - core index']
  #allocation1 [shape = 'u32[144,128]{1,0:T(1,128)}', space=vmem, size = 0x12000, scoped, tag = 'internal scratch']
  #allocation2 [shape = 'f32[16,512]{1,0:T(8,128)}', space=vmem, size = 0x8000, scoped, tag = 'scratch operand']
  #allocation3 [shape = 'f32[16,128]{1,0:T(8,128)}', space=vmem, size = 0x2000, scoped, tag = 'scratch operand']
  #allocation4 [shape = 'f32[16,384]{1,0:T(8,128)}', space=vmem, size = 0x6000, scoped, tag = 'scratch operand']
  #allocation5 [shape = 'f32[16,128]{1,0:T(8,128)}', space=vmem, size = 0x2000, scoped, tag = 'scratch operand']
  #allocation6 [shape = 'f32[1,1]{1,0:T(1,128)S(1)}', space=vmem, size = 0x200, scoped, tag = 'scoped memory for forward.1']
  %s0 = inlined_call_operand.vmem [shape: bf16[1,16,32], index: 0, kind: input, shape index: {}]
  %s1 = inlined_call_operand.vmem [shape: f32[1,2,128], index: 1, kind: input, shape index: {}]
  %s2 = inlined_call_operand.hbm [shape: bf16[32,512], index: 2, kind: input, shape index: {}]
  %s3 = inlined_call_operand.hbm [shape: bf16[128,512], index: 3, kind: input, shape index: {}]
  %s4 = inlined_call_operand.vmem [shape: f32[1,512], index: 4, kind: input, shape index: {}]
  %s5 = inlined_call_operand.hbm [shape: bf16[128,384], index: 5, kind: input, shape index: {}]
  %s6 = inlined_call_operand.hbm [shape: bf16[128,384], index: 6, kind: input, shape index: {}]
  %s7 = inlined_call_operand.vmem [shape: f32[1,384], index: 7, kind: input, shape index: {}]
  %s8 = inlined_call_operand.vmem [shape: f32[1,384], index: 8, kind: input, shape index: {}]
  %s9 = inlined_call_operand.vmem [shape: f32[128,1], index: 9, kind: input, shape index: {}]
  %s10 = inlined_call_operand.vmem [shape: f32[16,1], index: 10, kind: input, shape index: {}]
  %s11 = inlined_call_operand.vmem [shape: f32[128,1], index: 11, kind: input, shape index: {}]
  %s12 = inlined_call_operand.vmem [shape: f32[16,1], index: 12, kind: input, shape index: {}]
  %s13 = inlined_call_operand.vmem [shape: bf16[640,640], index: 13, kind: input, shape index: {}]
  %s14 = inlined_call_operand.vmem [shape: f32[1,640], index: 14, kind: input, shape index: {}]
  %s15 = inlined_call_operand.vmem [shape: bf16[640,64], index: 15, kind: input, shape index: {}]
  %s16 = inlined_call_operand.vmem [shape: f32[1,64], index: 16, kind: input, shape index: {}]
  %s17 = inlined_call_operand.vmem [shape: f32[64,16], index: 17, kind: input, shape index: {}]
  %s18 = inlined_call_operand.vmem [shape: f32[1,16], index: 18, kind: input, shape index: {}]
  %s19 = inlined_call_operand.vmem [shape: f32[16,1], index: 19, kind: input, shape index: {}]
  %s20 = inlined_call_operand.<no memory space> [shape: f32[1,1], index: 20, kind: input, shape index: {}]
  %s21 = inlined_call_operand.vmem [shape: f32[1,2,1], index: 21, kind: output, shape index: {}]
  %s22 = sld [smem:[#allocation0]]
  $region110: #{forward.1} parent=0
    _
  %s24 = ssub.s32 1, %s22
  %s25 = scalar_select 0, %s24, %s22
  %v26 = vstv %s20
  %27 = vst [vmem:[#allocation6] sm:$0x1] %v26
  $region1: #{forward.1} parent=0
    #allocation7 [shape = 'u8[32768]{0}', space=vmem, size = 0x8000, scoped, tag = 'input window, operand 2, single buffered']
    #allocation8 [shape = 's32[1]{0}', space=sflag, size = 0x4, scoped, tag = 'scoped memory for forward.1']
    #allocation9 [shape = 'u8[131072]{0}', space=vmem, size = 0x20000, scoped, tag = 'input window, operand 3, single buffered']
    #allocation10 [shape = 's32[1]{0}', space=sflag, size = 0x4, scoped, tag = 'scoped memory for forward.1']
    #allocation11 [shape = 'u8[98304]{0}', space=vmem, size = 0x18000, scoped, tag = 'input window, operand 5, single buffered']
    #allocation12 [shape = 'u8[98304]{0}', space=vmem, size = 0x18000, scoped, tag = 'input window, operand 6, single buffered']
    #allocation13 [shape = 's32[1]{0}', space=sflag, size = 0x4, scoped, tag = 'scoped memory for forward.1']
    %28 = vsyncpa [#allocation8], 0
    %29 = vsyncpa [#allocation10], 0
    %30 = vsyncpa [#allocation13], 0
    // Predicated region
    $region2: #{forward.1} parent=1 // pred_check
      _
    $region3: #{forward.1} parent=1 // pred_check_branch
      %32 = sbr.rel (0) target = $region5
    $region4: #{forward.1} parent=1 // pred_region
      _
    $region5: #{forward.1} parent=1 // pred_fallthru
      _
    // Predicated region
    $region6: #{forward.1} parent=1 // pred_check
      _
    $region7: #{forward.1} parent=1 // pred_check_branch
      %34 = sbr.rel (0) target = $region9
    $region8: #{forward.1} parent=1 // pred_region
      _
    $region9: #{forward.1} parent=1 // pred_fallthru
      _
    // Predicated region
    $region10: #{forward.1} parent=1 // pred_check
      _
    $region11: #{forward.1} parent=1 // pred_check_branch
      %36 = sbr.rel (0) target = $region13
    $region12: #{forward.1} parent=1 // pred_region
      %s38 = ssub.s32 1024, 1024
      %39 = vsyncadd [#allocation8], %s38
      %s40 = sshll.u32 [#allocation7], 4
      %s41 = int_to_ptr.vmem [resolvable:$true] %s40
      %46 = dma.hbm_to_vmem [thread:$0]  %s2, 1024, %s41, [#allocation8], 256, 256, 16
    $region13: #{forward.1} parent=1 // pred_fallthru
      _
    // Predicated region
    $region14: #{forward.1} parent=1 // pred_check
      _
    $region15: #{forward.1} parent=1 // pred_check_branch
      %48 = sbr.rel (0) target = $region17
    $region16: #{forward.1} parent=1 // pred_region
      %s50 = ssub.s32 4096, 4096
      %51 = vsyncadd [#allocation10], %s50
      %s52 = sshll.u32 [#allocation9], 4
      %s53 = int_to_ptr.vmem [resolvable:$true] %s52
      %58 = dma.hbm_to_vmem [thread:$0]  %s3, 4096, %s53, [#allocation10], 256, 256, 16
    $region17: #{forward.1} parent=1 // pred_fallthru
      _
    // Predicated region
    $region18: #{forward.1} parent=1 // pred_check
      _
    $region19: #{forward.1} parent=1 // pred_check_branch
      %60 = sbr.rel (0) target = $region21
    $region20: #{forward.1} parent=1 // pred_region
      _
    $region21: #{forward.1} parent=1 // pred_fallthru
      _
    // Predicated region
    $region22: #{forward.1} parent=1 // pred_check
      _
    $region23: #{forward.1} parent=1 // pred_check_branch
      %62 = sbr.rel (0) target = $region25
    $region24: #{forward.1} parent=1 // pred_region
      %s64 = ssub.s32 3072, 3072
      %65 = vsyncadd [#allocation10], %s64
      %s66 = sshll.u32 [#allocation11], 4
      %s67 = int_to_ptr.vmem [resolvable:$true] %s66
      %72 = dma.hbm_to_vmem [thread:$0]  %s5, 3072, %s67, [#allocation10], 192, 192, 12
    $region25: #{forward.1} parent=1 // pred_fallthru
      _
    // Predicated region
    $region26: #{forward.1} parent=1 // pred_check
      _
    $region27: #{forward.1} parent=1 // pred_check_branch
      %74 = sbr.rel (0) target = $region29
    $region28: #{forward.1} parent=1 // pred_region
      %s76 = ssub.s32 3072, 3072
      %77 = vsyncadd [#allocation13], %s76
      %s78 = sshll.u32 [#allocation12], 4
      %s79 = int_to_ptr.vmem [resolvable:$true] %s78
      %84 = dma.hbm_to_vmem [thread:$0]  %s6, 3072, %s79, [#allocation13], 192, 192, 12
    $region29: #{forward.1} parent=1 // pred_fallthru
      _
    // Predicated region
    $region30: #{forward.1} parent=1 // pred_check
      _
    $region31: #{forward.1} parent=1 // pred_check_branch
      %86 = sbr.rel (0) target = $region33
    $region32: #{forward.1} parent=1 // pred_region
      _
    $region33: #{forward.1} parent=1 // pred_fallthru
      _
    // Predicated region
    $region34: #{forward.1} parent=1 // pred_check
      _
    $region35: #{forward.1} parent=1 // pred_check_branch
      %88 = sbr.rel (0) target = $region37
    $region36: #{forward.1} parent=1 // pred_region
      _
    $region37: #{forward.1} parent=1 // pred_fallthru
      _
    // Predicated region
    $region38: #{forward.1} parent=1 // pred_check
      _
    $region39: #{forward.1} parent=1 // pred_check_branch
      %90 = sbr.rel (0) target = $region41
    $region40: #{forward.1} parent=1 // pred_region
      _
    $region41: #{forward.1} parent=1 // pred_fallthru
      _
    // Predicated region
    $region42: #{forward.1} parent=1 // pred_check
      _
    $region43: #{forward.1} parent=1 // pred_check_branch
      %92 = sbr.rel (0) target = $region45
    $region44: #{forward.1} parent=1 // pred_region
      _
    $region45: #{forward.1} parent=1 // pred_fallthru
      _
    // Predicated region
    $region46: #{forward.1} parent=1 // pred_check
      _
    $region47: #{forward.1} parent=1 // pred_check_branch
      %94 = sbr.rel (0) target = $region49
    $region48: #{forward.1} parent=1 // pred_region
      _
    $region49: #{forward.1} parent=1 // pred_fallthru
      _
    // Predicated region
    $region50: #{forward.1} parent=1 // pred_check
      _
    $region51: #{forward.1} parent=1 // pred_check_branch
      %96 = sbr.rel (0) target = $region53
    $region52: #{forward.1} parent=1 // pred_region
      _
    $region53: #{forward.1} parent=1 // pred_fallthru
      _
    // Predicated region
    $region54: #{forward.1} parent=1 // pred_check
      _
    $region55: #{forward.1} parent=1 // pred_check_branch
      %98 = sbr.rel (0) target = $region57
    $region56: #{forward.1} parent=1 // pred_region
      _
    $region57: #{forward.1} parent=1 // pred_fallthru
      _
    // Predicated region
    $region58: #{forward.1} parent=1 // pred_check
      _
    $region59: #{forward.1} parent=1 // pred_check_branch
      %100 = sbr.rel (0) target = $region61
    $region60: #{forward.1} parent=1 // pred_region
      _
    $region61: #{forward.1} parent=1 // pred_fallthru
      _
    // Predicated region
    $region62: #{forward.1} parent=1 // pred_check
      _
    $region63: #{forward.1} parent=1 // pred_check_branch
      %102 = sbr.rel (0) target = $region65
    $region64: #{forward.1} parent=1 // pred_region
      _
    $region65: #{forward.1} parent=1 // pred_fallthru
      _
    // Predicated region
    $region66: #{forward.1} parent=1 // pred_check
      _
    $region67: #{forward.1} parent=1 // pred_check_branch
      %104 = sbr.rel (0) target = $region69
    $region68: #{forward.1} parent=1 // pred_region
      _
    $region69: #{forward.1} parent=1 // pred_fallthru
      _
    // Predicated region
    $region70: #{forward.1} parent=1 // pred_check
      _
    $region71: #{forward.1} parent=1 // pred_check_branch
      %106 = sbr.rel (0) target = $region73
    $region72: #{forward.1} parent=1 // pred_region
      _
    $region73: #{forward.1} parent=1 // pred_fallthru
      _
    // Predicated region
    $region74: #{forward.1} parent=1 // pred_check
      _
    $region75: #{forward.1} parent=1 // pred_check_branch
      %108 = sbr.rel (0) target = $region77
    $region76: #{forward.1} parent=1 // pred_region
      _
    $region77: #{forward.1} parent=1 // pred_fallthru
      _
    // Predicated region
    $region78: #{forward.1} parent=1 // pred_check
      _
    $region79: #{forward.1} parent=1 // pred_check_branch
      %110 = sbr.rel (0) target = $region81
    $region80: #{forward.1} parent=1 // pred_region
      _
    $region81: #{forward.1} parent=1 // pred_fallthru
      _
    // Predicated region
    $region82: #{forward.1} parent=1 // pred_check
      _
    $region83: #{forward.1} parent=1 // pred_check_branch
      %112 = sbr.rel (0) target = $region85
    $region84: #{forward.1} parent=1 // pred_region
      _
    $region85: #{forward.1} parent=1 // pred_fallthru
      _
    // Predicated region
    $region86: #{forward.1} parent=1 // pred_check
      _
    $region87: #{forward.1} parent=1 // pred_check_branch
      %114 = sbr.rel (0) target = $region89
    $region88: #{forward.1} parent=1 // pred_region
      %115 = dma.done [#allocation8], 1024
    $region89: #{forward.1} parent=1 // pred_fallthru
      _
    // Predicated region
    $region90: #{forward.1} parent=1 // pred_check
      _
    $region91: #{forward.1} parent=1 // pred_check_branch
      %117 = sbr.rel (0) target = $region93
    $region92: #{forward.1} parent=1 // pred_region
      %118 = dma.done [#allocation10], 4096
    $region93: #{forward.1} parent=1 // pred_fallthru
      _
    // Predicated region
    $region94: #{forward.1} parent=1 // pred_check
      _
    $region95: #{forward.1} parent=1 // pred_check_branch
      %120 = sbr.rel (0) target = $region97
    $region96: #{forward.1} parent=1 // pred_region
      %121 = dma.done [#allocation10], 3072
    $region97: #{forward.1} parent=1 // pred_fallthru
      _
    // Predicated region
    $region98: #{forward.1} parent=1 // pred_check
      _
    $region99: #{forward.1} parent=1 // pred_check_branch
      %123 = sbr.rel (0) target = $region101
    $region100: #{forward.1} parent=1 // pred_region
      %124 = dma.done [#allocation13], 3072
    $region101: #{forward.1} parent=1 // pred_fallthru
      _
    %v126 = vlaneseq
    %v127 = vand.u32 %v126, 127
    %v128 = vadd.s32 %v127, 128
    %v129 = vadd.s32 %v127, 256
    %v130 = vadd.s32 %v127, 384
    %vm131 = vcmp.lt.s32.totalorder %v127, 0
    %v132 = vsub.s32 0, %v127
    %v133 = vsel %vm131, %v132, %v127
    %v134 = vshrl.u32 %v133, 7
    %v135 = vand.u32 %v133, 127
    %v136 = vsub.s32 0, %v135
    %v137 = vsel %vm131, %v136, %v135
    %vm138 = vcmp.lt.s32.totalorder %v128, 0
    %v139 = vsub.s32 0, %v128
    %v140 = vsel %vm138, %v139, %v128
    %v141 = vshrl.u32 %v140, 7
    %v142 = vand.u32 %v140, 127
    %v143 = vsub.s32 0, %v142
    %v144 = vsel %vm138, %v143, %v142
    %vm145 = vcmp.lt.s32.totalorder %v129, 0
    %v146 = vsub.s32 0, %v129
    %v147 = vsel %vm145, %v146, %v129
    %v148 = vshrl.u32 %v147, 7
    %v149 = vand.u32 %v147, 127
    %v150 = vsub.s32 0, %v149
    %v151 = vsel %vm145, %v150, %v149
    %vm152 = vcmp.lt.s32.totalorder %v130, 0
    %v153 = vsub.s32 0, %v130
    %v154 = vsel %vm152, %v153, %v130
    %v155 = vshrl.u32 %v154, 7
    %v156 = vand.u32 %v154, 127
    %v157 = vsub.s32 0, %v156
    %v158 = vsel %vm152, %v157, %v156
    %vm159 = vcmp.ne.s32.totalorder %v137, 0
    %vm160 = vcmp.ne.s32.totalorder %v144, 0
    %vm161 = vcmp.ne.s32.totalorder %v151, 0
    %vm162 = vcmp.ne.s32.totalorder %v158, 0
    %vm163 = vcmp.lt.s32.totalorder %v137, 0
    %vm164 = vcmp.lt.s32.totalorder %v144, 0
    %vm165 = vcmp.lt.s32.totalorder %v151, 0
    %vm166 = vcmp.lt.s32.totalorder %v158, 0
    %vm167 = vmand %vm163, %vm159
    %vm168 = vmand %vm164, %vm160
    %vm169 = vmand %vm165, %vm161
    %vm170 = vmand %vm166, %vm162
    %v171 = vadd.s32 %v137, 128
    %v172 = vadd.s32 %v144, 128
    %v173 = vadd.s32 %v151, 128
    %v174 = vadd.s32 %v158, 128
    %v175 = vsel %vm167, %v171, %v137
    %v176 = vsel %vm168, %v172, %v144
    %v177 = vsel %vm169, %v173, %v151
    %v178 = vsel %vm170, %v174, %v158
    %vm179 = vcmp.lt.s32.totalorder %v175, 64
    %vm180 = vcmp.lt.s32.totalorder %v176, 64
    %vm181 = vcmp.lt.s32.totalorder %v177, 64
    %vm182 = vcmp.lt.s32.totalorder %v178, 64
    %v183 = vld [vmem:[%s0] sm:$0xf]
    %v184 = vld [vmem:[%s0 + $0x4] sm:$0xf]
    %v185 = vld [vmem:[#allocation7] sm:$0xff]
    %v186 = vld [vmem:[#allocation7 + $0x8] sm:$0xff]
    %v187 = vld [vmem:[#allocation7 + $0x10] sm:$0xff]
    %v188 = vld [vmem:[#allocation7 + $0x18] sm:$0xff]
    %v189 = vld [vmem:[#allocation7 + $0x20] sm:$0xff]
    %v190 = vld [vmem:[#allocation7 + $0x28] sm:$0xff]
    %v191 = vld [vmem:[#allocation7 + $0x30] sm:$0xff]
    %v192 = vld [vmem:[#allocation7 + $0x38] sm:$0xff]
    %v193 = vld [vmem:[%s4] sm:$0xf]
    %v195 = vlaneseq
    %v196 = vshrl.u32 %v195, 7
    %v197 = vsub.s32 0, %v196
    %v198 = vrot.slane %v193, %v197
    %v199 = vlaneseq
    %v200 = vshrl.u32 %v199, 7
    %v201 = vsub.s32 1, %v200
    %v202 = vrot.slane %v193, %v201
    %v203 = vlaneseq
    %v204 = vshrl.u32 %v203, 7
    %v205 = vsub.s32 2, %v204
    %v206 = vrot.slane %v193, %v205
    %v207 = vlaneseq
    %v208 = vshrl.u32 %v207, 7
    %v209 = vsub.s32 3, %v208
    %v210 = vrot.slane %v193, %v209
    %v217 = vunpack.c.l.b16 %v183
    %v218 = vunpack.c.l.b16 %v184
    %v219 = vpack.c.b16 %v218, %v217
    %v228 = vunpack.c.l.b16 %v185
    %v229 = vunpack.c.h.b16 %v185
    %v230 = vunpack.c.l.b16 %v186
    %v231 = vunpack.c.h.b16 %v186
    %v232 = vunpack.c.l.b16 %v187
    %v233 = vunpack.c.h.b16 %v187
    %v234 = vunpack.c.l.b16 %v188
    %v235 = vunpack.c.h.b16 %v188
    %v236 = vunpack.c.l.b16 %v189
    %v237 = vunpack.c.h.b16 %v189
    %v238 = vunpack.c.l.b16 %v190
    %v239 = vunpack.c.h.b16 %v190
    %v240 = vunpack.c.l.b16 %v191
    %v241 = vunpack.c.h.b16 %v191
    %v242 = vunpack.c.l.b16 %v192
    %v243 = vunpack.c.h.b16 %v192
    %v244 = vpack.c.b16 %v232, %v228
    %v245 = vpack.c.b16 %v233, %v229
    %v246 = vpack.c.b16 %v234, %v230
    %v247 = vpack.c.b16 %v235, %v231
    %v248 = vpack.c.b16 %v240, %v236
    %v249 = vpack.c.b16 %v241, %v237
    %v250 = vpack.c.b16 %v242, %v238
    %v251 = vpack.c.b16 %v243, %v239
    %vm260 = vcmask 261120
    %v262 = vsel %vm260, %v219, 0
    %264 = vmatprep.subr.bf16.mxu0 0
    %265 = vmatpush1.bf16.msra.mxu0 0
    %266 = vmatprep.subr.bf16.mxu0 0
    %267 = vmatpush1.bf16.msra.mxu0 0
    %268 = vmatprep.subr.bf16.mxu0 0
    %269 = vmatpush1.bf16.msra.mxu0 0
    %270 = vmatprep.subr.bf16.mxu0 0
    %271 = vmatpush1.bf16.msra.mxu0 0
    %272 = vmatprep.subr.bf16.mxu0 0
    %273 = vmatpush1.bf16.msra.mxu0 0
    %274 = vmatprep.subr.bf16.mxu0 0
    %275 = vmatpush1.bf16.msra.mxu0 0
    %276 = vmatprep.subr.bf16.mxu0 %v249
    %277 = vmatpush1.bf16.msra.mxu0 %v248
    %278 = vmatprep.subr.bf16.mxu0 %v245
    %279 = vmatpush1.bf16.msra.mxu0 %v244
    %280 = vmatprep.subr.bf16.mxu0 0
    %281 = vmatpush2.bf16.msra.mxu0 0
    %282 = vmatprep.subr.bf16.mxu0 0
    %283 = vmatpush2.bf16.msra.mxu0 0
    %284 = vmatprep.subr.bf16.mxu0 0
    %285 = vmatpush2.bf16.msra.mxu0 0
    %286 = vmatprep.subr.bf16.mxu0 0
    %287 = vmatpush2.bf16.msra.mxu0 0
    %288 = vmatprep.subr.bf16.mxu0 0
    %289 = vmatpush2.bf16.msra.mxu0 0
    %290 = vmatprep.subr.bf16.mxu0 0
    %291 = vmatpush2.bf16.msra.mxu0 0
    %292 = vmatprep.subr.bf16.mxu0 0
    %293 = vmatpush2.bf16.msra.mxu0 0
    %294 = vmatprep.subr.bf16.mxu0 0
    %295 = vmatpush2.bf16.msra.mxu0 0
    %296 = vmatprep.mubr.bf16.mxu0 0
    %297 = vmatmul.mubr.bf16.gmra.mxu0 %v262
    %v298 = vpop.f32.mrf.mxu0
    %v299 = vadd.f32 %v198, %v298
    %v300 = vpop.f32.mrf.mxu0
    %v301 = vadd.f32 %v202, %v300
    %v302 = vpop.f32.mrf.mxu0
    %v303 = vadd.f32 %v198, %v302
    %v304 = vpop.f32.mrf.mxu0
    %v305 = vadd.f32 %v202, %v304
    %306 = vdwg.mxu0
    %307 = vmatprep.subr.bf16.mxu0 0
    %308 = vmatpush1.bf16.msra.mxu0 0
    %309 = vmatprep.subr.bf16.mxu0 0
    %310 = vmatpush1.bf16.msra.mxu0 0
    %311 = vmatprep.subr.bf16.mxu0 0
    %312 = vmatpush1.bf16.msra.mxu0 0
    %313 = vmatprep.subr.bf16.mxu0 0
    %314 = vmatpush1.bf16.msra.mxu0 0
    %315 = vmatprep.subr.bf16.mxu0 0
    %316 = vmatpush1.bf16.msra.mxu0 0
    %317 = vmatprep.subr.bf16.mxu0 0
    %318 = vmatpush1.bf16.msra.mxu0 0
    %319 = vmatprep.subr.bf16.mxu0 %v251
    %320 = vmatpush1.bf16.msra.mxu0 %v250
    %321 = vmatprep.subr.bf16.mxu0 %v247
    %322 = vmatpush1.bf16.msra.mxu0 %v246
    %323 = vmatprep.subr.bf16.mxu0 0
    %324 = vmatpush2.bf16.msra.mxu0 0
    %325 = vmatprep.subr.bf16.mxu0 0
    %326 = vmatpush2.bf16.msra.mxu0 0
    %327 = vmatprep.subr.bf16.mxu0 0
    %328 = vmatpush2.bf16.msra.mxu0 0
    %329 = vmatprep.subr.bf16.mxu0 0
    %330 = vmatpush2.bf16.msra.mxu0 0
    %331 = vmatprep.subr.bf16.mxu0 0
    %332 = vmatpush2.bf16.msra.mxu0 0
    %333 = vmatprep.subr.bf16.mxu0 0
    %334 = vmatpush2.bf16.msra.mxu0 0
    %335 = vmatprep.subr.bf16.mxu0 0
    %336 = vmatpush2.bf16.msra.mxu0 0
    %337 = vmatprep.subr.bf16.mxu0 0
    %338 = vmatpush2.bf16.msra.mxu0 0
    %339 = vmatprep.mubr.bf16.mxu0 0
    %340 = vmatmul.mubr.bf16.gmra.mxu0 %v262
    %v341 = vpop.f32.mrf.mxu0
    %v342 = vadd.f32 %v206, %v341
    %v343 = vpop.f32.mrf.mxu0
    %v344 = vadd.f32 %v210, %v343
    %v345 = vpop.f32.mrf.mxu0
    %v346 = vadd.f32 %v206, %v345
    %v347 = vpop.f32.mrf.mxu0
    %v348 = vadd.f32 %v210, %v347
    %349 = vdwg.mxu0
    %350 = vst [vmem:[#allocation2] sm:$0xff] %v299
    %351 = vst [vmem:[#allocation2 + $0x8] sm:$0xff] %v301
    %352 = vst [vmem:[#allocation2 + $0x10] sm:$0xff] %v342
    %353 = vst [vmem:[#allocation2 + $0x18] sm:$0xff] %v344
    %354 = vst [vmem:[#allocation2 + $0x20] sm:$0xff] %v303
    %355 = vst [vmem:[#allocation2 + $0x28] sm:$0xff] %v305
    %356 = vst [vmem:[#allocation2 + $0x30] sm:$0xff] %v346
    %357 = vst [vmem:[#allocation2 + $0x38] sm:$0xff] %v348
    %v358 = vld [vmem:[#allocation2] sm:$0x3]
    %v359 = vld [vmem:[#allocation2 + $0x8] sm:$0x3]
    %v360 = vld [vmem:[#allocation2 + $0x10] sm:$0x3]
    %v361 = vld [vmem:[#allocation2 + $0x18] sm:$0x3]
    %v362 = vld [vmem:[#allocation2 + $0x20] sm:$0xc0]
    %v363 = vld [vmem:[#allocation2 + $0x28] sm:$0xc0]
    %v364 = vld [vmem:[#allocation2 + $0x30] sm:$0xc0]
    %v365 = vld [vmem:[#allocation2 + $0x38] sm:$0xc0]
    %v370 = vrot.slane %v362, 6
    %v371 = vrot.slane %v363, 6
    %v372 = vrot.slane %v364, 6
    %v373 = vrot.slane %v365, 6
    %v378 = vsel %vm179, %v358, %v370
    %v379 = vsel %vm180, %v359, %v371
    %v380 = vsel %vm181, %v360, %v372
    %v381 = vsel %vm182, %v361, %v373
    %v382 = vld [vmem:[#allocation9] sm:$0xff]
    %v383 = vld [vmem:[#allocation9 + $0x8] sm:$0xff]
    %v384 = vld [vmem:[#allocation9 + $0x10] sm:$0xff]
    %v385 = vld [vmem:[#allocation9 + $0x18] sm:$0xff]
    %v386 = vld [vmem:[#allocation9 + $0x20] sm:$0xff]
    %v387 = vld [vmem:[#allocation9 + $0x28] sm:$0xff]
    %v388 = vld [vmem:[#allocation9 + $0x30] sm:$0xff]
    %v389 = vld [vmem:[#allocation9 + $0x38] sm:$0xff]
    %v390 = vld [vmem:[#allocation9 + $0x40] sm:$0xff]
    %v391 = vld [vmem:[#allocation9 + $0x48] sm:$0xff]
    %v392 = vld [vmem:[#allocation9 + $0x50] sm:$0xff]
    %v393 = vld [vmem:[#allocation9 + $0x58] sm:$0xff]
    %v394 = vld [vmem:[#allocation9 + $0x60] sm:$0xff]
    %v395 = vld [vmem:[#allocation9 + $0x68] sm:$0xff]
    %v396 = vld [vmem:[#allocation9 + $0x70] sm:$0xff]
    %v397 = vld [vmem:[#allocation9 + $0x78] sm:$0xff]
    %v398 = vld [vmem:[#allocation9 + $0x80] sm:$0xff]
    %v399 = vld [vmem:[#allocation9 + $0x88] sm:$0xff]
    %v400 = vld [vmem:[#allocation9 + $0x90] sm:$0xff]
    %v401 = vld [vmem:[#allocation9 + $0x98] sm:$0xff]
    %v402 = vld [vmem:[#allocation9 + $0xa0] sm:$0xff]
    %v403 = vld [vmem:[#allocation9 + $0xa8] sm:$0xff]
    %v404 = vld [vmem:[#allocation9 + $0xb0] sm:$0xff]
    %v405 = vld [vmem:[#allocation9 + $0xb8] sm:$0xff]
    %v406 = vld [vmem:[#allocation9 + $0xc0] sm:$0xff]
    %v407 = vld [vmem:[#allocation9 + $0xc8] sm:$0xff]
    %v408 = vld [vmem:[#allocation9 + $0xd0] sm:$0xff]
    %v409 = vld [vmem:[#allocation9 + $0xd8] sm:$0xff]
    %v410 = vld [vmem:[#allocation9 + $0xe0] sm:$0xff]
    %v411 = vld [vmem:[#allocation9 + $0xe8] sm:$0xff]
    %v412 = vld [vmem:[#allocation9 + $0xf0] sm:$0xff]
    %v413 = vld [vmem:[#allocation9 + $0xf8] sm:$0xff]
    %v446 = vunpack.c.l.b16 %v382
    %v447 = vunpack.c.h.b16 %v382
    %v448 = vunpack.c.l.b16 %v383
    %v449 = vunpack.c.h.b16 %v383
    %v450 = vunpack.c.l.b16 %v384
    %v451 = vunpack.c.h.b16 %v384
    %v452 = vunpack.c.l.b16 %v385
    %v453 = vunpack.c.h.b16 %v385
    %v454 = vunpack.c.l.b16 %v386
    %v455 = vunpack.c.h.b16 %v386
    %v456 = vunpack.c.l.b16 %v387
    %v457 = vunpack.c.h.b16 %v387
    %v458 = vunpack.c.l.b16 %v388
    %v459 = vunpack.c.h.b16 %v388
    %v460 = vunpack.c.l.b16 %v389
    %v461 = vunpack.c.h.b16 %v389
    %v462 = vunpack.c.l.b16 %v390
    %v463 = vunpack.c.h.b16 %v390
    %v464 = vunpack.c.l.b16 %v391
    %v465 = vunpack.c.h.b16 %v391
    %v466 = vunpack.c.l.b16 %v392
    %v467 = vunpack.c.h.b16 %v392
    %v468 = vunpack.c.l.b16 %v393
    %v469 = vunpack.c.h.b16 %v393
    %v470 = vunpack.c.l.b16 %v394
    %v471 = vunpack.c.h.b16 %v394
    %v472 = vunpack.c.l.b16 %v395
    %v473 = vunpack.c.h.b16 %v395
    %v474 = vunpack.c.l.b16 %v396
    %v475 = vunpack.c.h.b16 %v396
    %v476 = vunpack.c.l.b16 %v397
    %v477 = vunpack.c.h.b16 %v397
    %v478 = vunpack.c.l.b16 %v398
    %v479 = vunpack.c.h.b16 %v398
    %v480 = vunpack.c.l.b16 %v399
    %v481 = vunpack.c.h.b16 %v399
    %v482 = vunpack.c.l.b16 %v400
    %v483 = vunpack.c.h.b16 %v400
    %v484 = vunpack.c.l.b16 %v401
    %v485 = vunpack.c.h.b16 %v401
    %v486 = vunpack.c.l.b16 %v402
    %v487 = vunpack.c.h.b16 %v402
    %v488 = vunpack.c.l.b16 %v403
    %v489 = vunpack.c.h.b16 %v403
    %v490 = vunpack.c.l.b16 %v404
    %v491 = vunpack.c.h.b16 %v404
    %v492 = vunpack.c.l.b16 %v405
    %v493 = vunpack.c.h.b16 %v405
    %v494 = vunpack.c.l.b16 %v406
    %v495 = vunpack.c.h.b16 %v406
    %v496 = vunpack.c.l.b16 %v407
    %v497 = vunpack.c.h.b16 %v407
    %v498 = vunpack.c.l.b16 %v408
    %v499 = vunpack.c.h.b16 %v408
    %v500 = vunpack.c.l.b16 %v409
    %v501 = vunpack.c.h.b16 %v409
    %v502 = vunpack.c.l.b16 %v410
    %v503 = vunpack.c.h.b16 %v410
    %v504 = vunpack.c.l.b16 %v411
    %v505 = vunpack.c.h.b16 %v411
    %v506 = vunpack.c.l.b16 %v412
    %v507 = vunpack.c.h.b16 %v412
    %v508 = vunpack.c.l.b16 %v413
    %v509 = vunpack.c.h.b16 %v413
    %v510 = vpack.c.b16 %v450, %v446
    %v511 = vpack.c.b16 %v451, %v447
    %v512 = vpack.c.b16 %v452, %v448
    %v513 = vpack.c.b16 %v453, %v449
    %v514 = vpack.c.b16 %v458, %v454
    %v515 = vpack.c.b16 %v459, %v455
    %v516 = vpack.c.b16 %v460, %v456
    %v517 = vpack.c.b16 %v461, %v457
    %v518 = vpack.c.b16 %v466, %v462
    %v519 = vpack.c.b16 %v467, %v463
    %v520 = vpack.c.b16 %v468, %v464
    %v521 = vpack.c.b16 %v469, %v465
    %v522 = vpack.c.b16 %v474, %v470
    %v523 = vpack.c.b16 %v475, %v471
    %v524 = vpack.c.b16 %v476, %v472
    %v525 = vpack.c.b16 %v477, %v473
    %v526 = vpack.c.b16 %v482, %v478
    %v527 = vpack.c.b16 %v483, %v479
    %v528 = vpack.c.b16 %v484, %v480
    %v529 = vpack.c.b16 %v485, %v481
    %v530 = vpack.c.b16 %v490, %v486
    %v531 = vpack.c.b16 %v491, %v487
    %v532 = vpack.c.b16 %v492, %v488
    %v533 = vpack.c.b16 %v493, %v489
    %v534 = vpack.c.b16 %v498, %v494
    %v535 = vpack.c.b16 %v499, %v495
    %v536 = vpack.c.b16 %v500, %v496
    %v537 = vpack.c.b16 %v501, %v497
    %v538 = vpack.c.b16 %v506, %v502
    %v539 = vpack.c.b16 %v507, %v503
    %v540 = vpack.c.b16 %v508, %v504
    %v541 = vpack.c.b16 %v509, %v505
    %574 = vmatprep.subr.bf16.mxu0 %v539
    %575 = vmatpush1.bf16.msra.mxu0 %v538
    %576 = vmatprep.subr.bf16.mxu0 %v535
    %577 = vmatpush1.bf16.msra.mxu0 %v534
    %578 = vmatprep.subr.bf16.mxu0 %v531
    %579 = vmatpush1.bf16.msra.mxu0 %v530
    %580 = vmatprep.subr.bf16.mxu0 %v527
    %581 = vmatpush1.bf16.msra.mxu0 %v526
    %582 = vmatprep.subr.bf16.mxu0 %v523
    %583 = vmatpush1.bf16.msra.mxu0 %v522
    %584 = vmatprep.subr.bf16.mxu0 %v519
    %585 = vmatpush1.bf16.msra.mxu0 %v518
    %586 = vmatprep.subr.bf16.mxu0 %v515
    %587 = vmatpush1.bf16.msra.mxu0 %v514
    %588 = vmatprep.subr.bf16.mxu0 %v511
    %589 = vmatpush1.bf16.msra.mxu0 %v510
    %590 = vmatprep.subr.bf16.mxu0 0
    %591 = vmatpush2.bf16.msra.mxu0 0
    %592 = vmatprep.subr.bf16.mxu0 0
    %593 = vmatpush2.bf16.msra.mxu0 0
    %594 = vmatprep.subr.bf16.mxu0 0
    %595 = vmatpush2.bf16.msra.mxu0 0
    %596 = vmatprep.subr.bf16.mxu0 0
    %597 = vmatpush2.bf16.msra.mxu0 0
    %598 = vmatprep.subr.bf16.mxu0 0
    %599 = vmatpush2.bf16.msra.mxu0 0
    %600 = vmatprep.subr.bf16.mxu0 0
    %601 = vmatpush2.bf16.msra.mxu0 0
    %602 = vmatprep.subr.bf16.mxu0 0
    %603 = vmatpush2.bf16.msra.mxu0 0
    %604 = vmatprep.subr.bf16.mxu0 0
    %605 = vmatpush2.bf16.msra.mxu0 0
    %606 = vmatprep.mubr.bf16.mxu0 0
    %607 = vmatmul.mubr.bf16.gmra.mxu0 0
    %v608 = vpop.f32.mrf.mxu0
    %v609 = vadd.f32 0.0, %v608
    %v610 = vpop.f32.mrf.mxu0
    %v611 = vadd.f32 0.0, %v610
    %v612 = vpop.f32.mrf.mxu0
    %v613 = vpop.f32.mrf.mxu0
    %614 = vdwg.mxu0
    %615 = vmatprep.subr.bf16.mxu0 %v541
    %616 = vmatpush1.bf16.msra.mxu0 %v540
    %617 = vmatprep.subr.bf16.mxu0 %v537
    %618 = vmatpush1.bf16.msra.mxu0 %v536
    %619 = vmatprep.subr.bf16.mxu0 %v533
    %620 = vmatpush1.bf16.msra.mxu0 %v532
    %621 = vmatprep.subr.bf16.mxu0 %v529
    %622 = vmatpush1.bf16.msra.mxu0 %v528
    %623 = vmatprep.subr.bf16.mxu0 %v525
    %624 = vmatpush1.bf16.msra.mxu0 %v524
    %625 = vmatprep.subr.bf16.mxu0 %v521
    %626 = vmatpush1.bf16.msra.mxu0 %v520
    %627 = vmatprep.subr.bf16.mxu0 %v517
    %628 = vmatpush1.bf16.msra.mxu0 %v516
    %629 = vmatprep.subr.bf16.mxu0 %v513
    %630 = vmatpush1.bf16.msra.mxu0 %v512
    %631 = vmatprep.subr.bf16.mxu0 0
    %632 = vmatpush2.bf16.msra.mxu0 0
    %633 = vmatprep.subr.bf16.mxu0 0
    %634 = vmatpush2.bf16.msra.mxu0 0
    %635 = vmatprep.subr.bf16.mxu0 0
    %636 = vmatpush2.bf16.msra.mxu0 0
    %637 = vmatprep.subr.bf16.mxu0 0
    %638 = vmatpush2.bf16.msra.mxu0 0
    %639 = vmatprep.subr.bf16.mxu0 0
    %640 = vmatpush2.bf16.msra.mxu0 0
    %641 = vmatprep.subr.bf16.mxu0 0
    %642 = vmatpush2.bf16.msra.mxu0 0
    %643 = vmatprep.subr.bf16.mxu0 0
    %644 = vmatpush2.bf16.msra.mxu0 0
    %645 = vmatprep.subr.bf16.mxu0 0
    %646 = vmatpush2.bf16.msra.mxu0 0
    %647 = vmatprep.mubr.bf16.mxu0 0
    %648 = vmatmul.mubr.bf16.gmra.mxu0 0
    %v649 = vpop.f32.mrf.mxu0
    %v650 = vadd.f32 0.0, %v649
    %v651 = vpop.f32.mrf.mxu0
    %v652 = vadd.f32 0.0, %v651
    %v653 = vpop.f32.mrf.mxu0
    %v654 = vpop.f32.mrf.mxu0
    %655 = vdwg.mxu0
    %v656 = vadd.f32 %v378, %v609
    %v657 = vadd.f32 %v379, %v611
    %v658 = vadd.f32 %v380, %v650
    %v659 = vadd.f32 %v381, %v652
    %v660 = vxor.u32 %v656, 2147483648
    %v661 = vxor.u32 %v657, 2147483648
    %v662 = vxor.u32 %v658, 2147483648
    %v663 = vmul.f32 %v660, 1.442695
    %v664 = vpow.pop %v663
    %v665 = vmul.f32 %v661, 1.442695
    %v666 = vpow.pop %v665
    %v667 = vmul.f32 %v662, 1.442695
    %v668 = vpow.pop %v667
    %v669 = vadd.f32 %v664, 1.0
    %v670 = vadd.f32 %v666, 1.0
    %v671 = vadd.f32 %v668, 1.0
    %v672 = vrcp.pop %v669
    %v673 = vmul.f32 1.0, %v672
    %v674 = vrcp.pop %v670
    %v675 = vmul.f32 1.0, %v674
    %v676 = vrcp.pop %v671
    %v677 = vmul.f32 1.0, %v676
    %v678 = vtanh.pop %v659
    %v679 = vmul.f32 %v675, 0.0
    %v680 = vmul.f32 %v673, %v678
    %v681 = vadd.f32 %v679, %v680
    %v682 = vtanh.pop %v681
    %v683 = vmul.f32 %v677, %v682
    %vm684 = vcmask 517120
    %685 = vst.msk [vmem:[#allocation3] sm:$0x3] %vm684, %v683
    %vm686 = vcmask 1041920
    %687 = vst.msk [vmem:[#allocation3 + $0xe] sm:$0x3] %vm686, %v683
    %v688 = vld [vmem:[#allocation2] sm:$0xc]
    %v689 = vld [vmem:[#allocation2 + $0x8] sm:$0xc]
    %v690 = vld [vmem:[#allocation2 + $0x10] sm:$0xc]
    %v691 = vld [vmem:[#allocation2 + $0x18] sm:$0xc]
    %v692 = vld [vmem:[#allocation2 + $0x20] sm:$0x30]
    %v693 = vld [vmem:[#allocation2 + $0x28] sm:$0x30]
    %v694 = vld [vmem:[#allocation2 + $0x30] sm:$0x30]
    %v695 = vld [vmem:[#allocation2 + $0x38] sm:$0x30]
    %v700 = vrot.slane %v692, 2
    %v701 = vrot.slane %v693, 2
    %v702 = vrot.slane %v694, 2
    %v703 = vrot.slane %v695, 2
    %v708 = vsel %vm179, %v688, %v700
    %v709 = vsel %vm180, %v689, %v701
    %v710 = vsel %vm181, %v690, %v702
    %v711 = vsel %vm182, %v691, %v703
    %v712 = vpack.c.bf16 %v683, %v683
    %v713 = vld [vmem:[#allocation9] sm:$0xff]
    %v714 = vld [vmem:[#allocation9 + $0x8] sm:$0xff]
    %v715 = vld [vmem:[#allocation9 + $0x10] sm:$0xff]
    %v716 = vld [vmem:[#allocation9 + $0x18] sm:$0xff]
    %v717 = vld [vmem:[#allocation9 + $0x20] sm:$0xff]
    %v718 = vld [vmem:[#allocation9 + $0x28] sm:$0xff]
    %v719 = vld [vmem:[#allocation9 + $0x30] sm:$0xff]
    %v720 = vld [vmem:[#allocation9 + $0x38] sm:$0xff]
    %v721 = vld [vmem:[#allocation9 + $0x40] sm:$0xff]
    %v722 = vld [vmem:[#allocation9 + $0x48] sm:$0xff]
    %v723 = vld [vmem:[#allocation9 + $0x50] sm:$0xff]
    %v724 = vld [vmem:[#allocation9 + $0x58] sm:$0xff]
    %v725 = vld [vmem:[#allocation9 + $0x60] sm:$0xff]
    %v726 = vld [vmem:[#allocation9 + $0x68] sm:$0xff]
    %v727 = vld [vmem:[#allocation9 + $0x70] sm:$0xff]
    %v728 = vld [vmem:[#allocation9 + $0x78] sm:$0xff]
    %v729 = vld [vmem:[#allocation9 + $0x80] sm:$0xff]
    %v730 = vld [vmem:[#allocation9 + $0x88] sm:$0xff]
    %v731 = vld [vmem:[#allocation9 + $0x90] sm:$0xff]
    %v732 = vld [vmem:[#allocation9 + $0x98] sm:$0xff]
    %v733 = vld [vmem:[#allocation9 + $0xa0] sm:$0xff]
    %v734 = vld [vmem:[#allocation9 + $0xa8] sm:$0xff]
    %v735 = vld [vmem:[#allocation9 + $0xb0] sm:$0xff]
    %v736 = vld [vmem:[#allocation9 + $0xb8] sm:$0xff]
    %v737 = vld [vmem:[#allocation9 + $0xc0] sm:$0xff]
    %v738 = vld [vmem:[#allocation9 + $0xc8] sm:$0xff]
    %v739 = vld [vmem:[#allocation9 + $0xd0] sm:$0xff]
    %v740 = vld [vmem:[#allocation9 + $0xd8] sm:$0xff]
    %v741 = vld [vmem:[#allocation9 + $0xe0] sm:$0xff]
    %v742 = vld [vmem:[#allocation9 + $0xe8] sm:$0xff]
    %v743 = vld [vmem:[#allocation9 + $0xf0] sm:$0xff]
    %v744 = vld [vmem:[#allocation9 + $0xf8] sm:$0xff]
    %v777 = vunpack.c.l.b16 %v713
    %v778 = vunpack.c.h.b16 %v713
    %v779 = vunpack.c.l.b16 %v714
    %v780 = vunpack.c.h.b16 %v714
    %v781 = vunpack.c.l.b16 %v715
    %v782 = vunpack.c.h.b16 %v715
    %v783 = vunpack.c.l.b16 %v716
    %v784 = vunpack.c.h.b16 %v716
    %v785 = vunpack.c.l.b16 %v717
    %v786 = vunpack.c.h.b16 %v717
    %v787 = vunpack.c.l.b16 %v718
    %v788 = vunpack.c.h.b16 %v718
    %v789 = vunpack.c.l.b16 %v719
    %v790 = vunpack.c.h.b16 %v719
    %v791 = vunpack.c.l.b16 %v720
    %v792 = vunpack.c.h.b16 %v720
    %v793 = vunpack.c.l.b16 %v721
    %v794 = vunpack.c.h.b16 %v721
    %v795 = vunpack.c.l.b16 %v722
    %v796 = vunpack.c.h.b16 %v722
    %v797 = vunpack.c.l.b16 %v723
    %v798 = vunpack.c.h.b16 %v723
    %v799 = vunpack.c.l.b16 %v724
    %v800 = vunpack.c.h.b16 %v724
    %v801 = vunpack.c.l.b16 %v725
    %v802 = vunpack.c.h.b16 %v725
    %v803 = vunpack.c.l.b16 %v726
    %v804 = vunpack.c.h.b16 %v726
    %v805 = vunpack.c.l.b16 %v727
    %v806 = vunpack.c.h.b16 %v727
    %v807 = vunpack.c.l.b16 %v728
    %v808 = vunpack.c.h.b16 %v728
    %v809 = vunpack.c.l.b16 %v729
    %v810 = vunpack.c.h.b16 %v729
    %v811 = vunpack.c.l.b16 %v730
    %v812 = vunpack.c.h.b16 %v730
    %v813 = vunpack.c.l.b16 %v731
    %v814 = vunpack.c.h.b16 %v731
    %v815 = vunpack.c.l.b16 %v732
    %v816 = vunpack.c.h.b16 %v732
    %v817 = vunpack.c.l.b16 %v733
    %v818 = vunpack.c.h.b16 %v733
    %v819 = vunpack.c.l.b16 %v734
    %v820 = vunpack.c.h.b16 %v734
    %v821 = vunpack.c.l.b16 %v735
    %v822 = vunpack.c.h.b16 %v735
    %v823 = vunpack.c.l.b16 %v736
    %v824 = vunpack.c.h.b16 %v736
    %v825 = vunpack.c.l.b16 %v737
    %v826 = vunpack.c.h.b16 %v737
    %v827 = vunpack.c.l.b16 %v738
    %v828 = vunpack.c.h.b16 %v738
    %v829 = vunpack.c.l.b16 %v739
    %v830 = vunpack.c.h.b16 %v739
    %v831 = vunpack.c.l.b16 %v740
    %v832 = vunpack.c.h.b16 %v740
    %v833 = vunpack.c.l.b16 %v741
    %v834 = vunpack.c.h.b16 %v741
    %v835 = vunpack.c.l.b16 %v742
    %v836 = vunpack.c.h.b16 %v742
    %v837 = vunpack.c.l.b16 %v743
    %v838 = vunpack.c.h.b16 %v743
    %v839 = vunpack.c.l.b16 %v744
    %v840 = vunpack.c.h.b16 %v744
    %v841 = vpack.c.b16 %v781, %v777
    %v842 = vpack.c.b16 %v782, %v778
    %v843 = vpack.c.b16 %v783, %v779
    %v844 = vpack.c.b16 %v784, %v780
    %v845 = vpack.c.b16 %v789, %v785
    %v846 = vpack.c.b16 %v790, %v786
    %v847 = vpack.c.b16 %v791, %v787
    %v848 = vpack.c.b16 %v792, %v788
    %v849 = vpack.c.b16 %v797, %v793
    %v850 = vpack.c.b16 %v798, %v794
    %v851 = vpack.c.b16 %v799, %v795
    %v852 = vpack.c.b16 %v800, %v796
    %v853 = vpack.c.b16 %v805, %v801
    %v854 = vpack.c.b16 %v806, %v802
    %v855 = vpack.c.b16 %v807, %v803
    %v856 = vpack.c.b16 %v808, %v804
    %v857 = vpack.c.b16 %v813, %v809
    %v858 = vpack.c.b16 %v814, %v810
    %v859 = vpack.c.b16 %v815, %v811
    %v860 = vpack.c.b16 %v816, %v812
    %v861 = vpack.c.b16 %v821, %v817
    %v862 = vpack.c.b16 %v822, %v818
    %v863 = vpack.c.b16 %v823, %v819
    %v864 = vpack.c.b16 %v824, %v820
    %v865 = vpack.c.b16 %v829, %v825
    %v866 = vpack.c.b16 %v830, %v826
    %v867 = vpack.c.b16 %v831, %v827
    %v868 = vpack.c.b16 %v832, %v828
    %v869 = vpack.c.b16 %v837, %v833
    %v870 = vpack.c.b16 %v838, %v834
    %v871 = vpack.c.b16 %v839, %v835
    %v872 = vpack.c.b16 %v840, %v836
    %905 = vmatprep.subr.bf16.mxu0 %v870
    %906 = vmatpush1.bf16.msra.mxu0 %v869
    %907 = vmatprep.subr.bf16.mxu0 %v866
    %908 = vmatpush1.bf16.msra.mxu0 %v865
    %909 = vmatprep.subr.bf16.mxu0 %v862
    %910 = vmatpush1.bf16.msra.mxu0 %v861
    %911 = vmatprep.subr.bf16.mxu0 %v858
    %912 = vmatpush1.bf16.msra.mxu0 %v857
    %913 = vmatprep.subr.bf16.mxu0 %v854
    %914 = vmatpush1.bf16.msra.mxu0 %v853
    %915 = vmatprep.subr.bf16.mxu0 %v850
    %916 = vmatpush1.bf16.msra.mxu0 %v849
    %917 = vmatprep.subr.bf16.mxu0 %v846
    %918 = vmatpush1.bf16.msra.mxu0 %v845
    %919 = vmatprep.subr.bf16.mxu0 %v842
    %920 = vmatpush1.bf16.msra.mxu0 %v841
    %921 = vmatprep.subr.bf16.mxu0 0
    %922 = vmatpush2.bf16.msra.mxu0 0
    %923 = vmatprep.subr.bf16.mxu0 0
    %924 = vmatpush2.bf16.msra.mxu0 0
    %925 = vmatprep.subr.bf16.mxu0 0
    %926 = vmatpush2.bf16.msra.mxu0 0
    %927 = vmatprep.subr.bf16.mxu0 0
    %928 = vmatpush2.bf16.msra.mxu0 0
    %929 = vmatprep.subr.bf16.mxu0 0
    %930 = vmatpush2.bf16.msra.mxu0 0
    %931 = vmatprep.subr.bf16.mxu0 0
    %932 = vmatpush2.bf16.msra.mxu0 0
    %933 = vmatprep.subr.bf16.mxu0 0
    %934 = vmatpush2.bf16.msra.mxu0 0
    %935 = vmatprep.subr.bf16.mxu0 0
    %936 = vmatpush2.bf16.msra.mxu0 0
    %937 = vmatprep.mubr.bf16.mxu0 0
    %938 = vmatmul.mubr.bf16.gmra.mxu0 %v712
    %v939 = vpop.f32.mrf.mxu0
    %v940 = vadd.f32 0.0, %v939
    %v941 = vpop.f32.mrf.mxu0
    %v942 = vadd.f32 0.0, %v941
    %v943 = vpop.f32.mrf.mxu0
    %v944 = vpop.f32.mrf.mxu0
    %945 = vdwg.mxu0
    %946 = vmatprep.subr.bf16.mxu0 %v872
    %947 = vmatpush1.bf16.msra.mxu0 %v871
    %948 = vmatprep.subr.bf16.mxu0 %v868
    %949 = vmatpush1.bf16.msra.mxu0 %v867
    %950 = vmatprep.subr.bf16.mxu0 %v864
    %951 = vmatpush1.bf16.msra.mxu0 %v863
    %952 = vmatprep.subr.bf16.mxu0 %v860
    %953 = vmatpush1.bf16.msra.mxu0 %v859
    %954 = vmatprep.subr.bf16.mxu0 %v856
    %955 = vmatpush1.bf16.msra.mxu0 %v855
    %956 = vmatprep.subr.bf16.mxu0 %v852
    %957 = vmatpush1.bf16.msra.mxu0 %v851
    %958 = vmatprep.subr.bf16.mxu0 %v848
    %959 = vmatpush1.bf16.msra.mxu0 %v847
    %960 = vmatprep.subr.bf16.mxu0 %v844
    %961 = vmatpush1.bf16.msra.mxu0 %v843
    %962 = vmatprep.subr.bf16.mxu0 0
    %963 = vmatpush2.bf16.msra.mxu0 0
    %964 = vmatprep.subr.bf16.mxu0 0
    %965 = vmatpush2.bf16.msra.mxu0 0
    %966 = vmatprep.subr.bf16.mxu0 0
    %967 = vmatpush2.bf16.msra.mxu0 0
    %968 = vmatprep.subr.bf16.mxu0 0
    %969 = vmatpush2.bf16.msra.mxu0 0
    %970 = vmatprep.subr.bf16.mxu0 0
    %971 = vmatpush2.bf16.msra.mxu0 0
    %972 = vmatprep.subr.bf16.mxu0 0
    %973 = vmatpush2.bf16.msra.mxu0 0
    %974 = vmatprep.subr.bf16.mxu0 0
    %975 = vmatpush2.bf16.msra.mxu0 0
    %976 = vmatprep.subr.bf16.mxu0 0
    %977 = vmatpush2.bf16.msra.mxu0 0
    %978 = vmatprep.mubr.bf16.mxu0 0
    %979 = vmatmul.mubr.bf16.gmra.mxu0 %v712
    %v980 = vpop.f32.mrf.mxu0
    %v981 = vadd.f32 0.0, %v980
    %v982 = vpop.f32.mrf.mxu0
    %v983 = vadd.f32 0.0, %v982
    %v984 = vpop.f32.mrf.mxu0
    %v985 = vpop.f32.mrf.mxu0
    %986 = vdwg.mxu0
    %v991 = vrot.slane %v940, 6
    %v992 = vrot.slane %v942, 6
    %v993 = vrot.slane %v981, 6
    %v994 = vrot.slane %v983, 6
    %v999 = vadd.f32 %v708, %v991
    %v1000 = vadd.f32 %v709, %v992
    %v1001 = vadd.f32 %v710, %v993
    %v1002 = vadd.f32 %v711, %v994
    %v1003 = vxor.u32 %v999, 2147483648
    %v1004 = vxor.u32 %v1000, 2147483648
    %v1005 = vxor.u32 %v1001, 2147483648
    %v1006 = vmul.f32 %v1003, 1.442695
    %v1007 = vpow.pop %v1006
    %v1008 = vmul.f32 %v1004, 1.442695
    %v1009 = vpow.pop %v1008
    %v1010 = vmul.f32 %v1005, 1.442695
    %v1011 = vpow.pop %v1010
    %v1012 = vadd.f32 %v1007, 1.0
    %v1013 = vadd.f32 %v1009, 1.0
    %v1014 = vadd.f32 %v1011, 1.0
    %v1015 = vrcp.pop %v1012
    %v1016 = vmul.f32 1.0, %v1015
    %v1017 = vrcp.pop %v1013
    %v1018 = vmul.f32 1.0, %v1017
    %v1019 = vrcp.pop %v1014
    %v1020 = vmul.f32 1.0, %v1019
    %v1021 = vtanh.pop %v1002
    %v1023 = vrot.slane %v681, 6
    %v1025 = vmul.f32 %v1018, %v1023
    %v1026 = vmul.f32 %v1016, %v1021
    %v1027 = vadd.f32 %v1025, %v1026
    %v1028 = vtanh.pop %v1027
    %v1029 = vmul.f32 %v1020, %v1028
    %vm1030 = vcmask 519170
    %1031 = vst.msk [vmem:[#allocation3] sm:$0xc] %vm1030, %v1029
    %vm1032 = vcmask 1043970
    %1033 = vst.msk [vmem:[#allocation3 + $0xa] sm:$0xc] %vm1032, %v1029
    %v1034 = vld [vmem:[#allocation2] sm:$0x30]
    %v1035 = vld [vmem:[#allocation2 + $0x8] sm:$0x30]
    %v1036 = vld [vmem:[#allocation2 + $0x10] sm:$0x30]
    %v1037 = vld [vmem:[#allocation2 + $0x18] sm:$0x30]
    %v1038 = vld [vmem:[#allocation2 + $0x20] sm:$0xc]
    %v1039 = vld [vmem:[#allocation2 + $0x28] sm:$0xc]
    %v1040 = vld [vmem:[#allocation2 + $0x30] sm:$0xc]
    %v1041 = vld [vmem:[#allocation2 + $0x38] sm:$0xc]
    %v1046 = vrot.slane %v1038, 6
    %v1047 = vrot.slane %v1039, 6
    %v1048 = vrot.slane %v1040, 6
    %v1049 = vrot.slane %v1041, 6
    %v1054 = vsel %vm179, %v1034, %v1046
    %v1055 = vsel %vm180, %v1035, %v1047
    %v1056 = vsel %vm181, %v1036, %v1048
    %v1057 = vsel %vm182, %v1037, %v1049
    %v1058 = vpack.c.bf16 %v1029, %v1029
    %v1059 = vld [vmem:[#allocation9] sm:$0xff]
    %v1060 = vld [vmem:[#allocation9 + $0x8] sm:$0xff]
    %v1061 = vld [vmem:[#allocation9 + $0x10] sm:$0xff]
    %v1062 = vld [vmem:[#allocation9 + $0x18] sm:$0xff]
    %v1063 = vld [vmem:[#allocation9 + $0x20] sm:$0xff]
    %v1064 = vld [vmem:[#allocation9 + $0x28] sm:$0xff]
    %v1065 = vld [vmem:[#allocation9 + $0x30] sm:$0xff]
    %v1066 = vld [vmem:[#allocation9 + $0x38] sm:$0xff]
    %v1067 = vld [vmem:[#allocation9 + $0x40] sm:$0xff]
    %v1068 = vld [vmem:[#allocation9 + $0x48] sm:$0xff]
    %v1069 = vld [vmem:[#allocation9 + $0x50] sm:$0xff]
    %v1070 = vld [vmem:[#allocation9 + $0x58] sm:$0xff]
    %v1071 = vld [vmem:[#allocation9 + $0x60] sm:$0xff]
    %v1072 = vld [vmem:[#allocation9 + $0x68] sm:$0xff]
    %v1073 = vld [vmem:[#allocation9 + $0x70] sm:$0xff]
    %v1074 = vld [vmem:[#allocation9 + $0x78] sm:$0xff]
    %v1075 = vld [vmem:[#allocation9 + $0x80] sm:$0xff]
    %v1076 = vld [vmem:[#allocation9 + $0x88] sm:$0xff]
    %v1077 = vld [vmem:[#allocation9 + $0x90] sm:$0xff]
    %v1078 = vld [vmem:[#allocation9 + $0x98] sm:$0xff]
    %v1079 = vld [vmem:[#allocation9 + $0xa0] sm:$0xff]
    %v1080 = vld [vmem:[#allocation9 + $0xa8] sm:$0xff]
    %v1081 = vld [vmem:[#allocation9 + $0xb0] sm:$0xff]
    %v1082 = vld [vmem:[#allocation9 + $0xb8] sm:$0xff]
    %v1083 = vld [vmem:[#allocation9 + $0xc0] sm:$0xff]
    %v1084 = vld [vmem:[#allocation9 + $0xc8] sm:$0xff]
    %v1085 = vld [vmem:[#allocation9 + $0xd0] sm:$0xff]
    %v1086 = vld [vmem:[#allocation9 + $0xd8] sm:$0xff]
    %v1087 = vld [vmem:[#allocation9 + $0xe0] sm:$0xff]
    %v1088 = vld [vmem:[#allocation9 + $0xe8] sm:$0xff]
    %v1089 = vld [vmem:[#allocation9 + $0xf0] sm:$0xff]
    %v1090 = vld [vmem:[#allocation9 + $0xf8] sm:$0xff]
    %v1092 = vrot.slane %v1058, 1
    %v1126 = vunpack.c.l.b16 %v1059
    %v1127 = vunpack.c.h.b16 %v1059
    %v1128 = vunpack.c.l.b16 %v1060
    %v1129 = vunpack.c.h.b16 %v1060
    %v1130 = vunpack.c.l.b16 %v1061
    %v1131 = vunpack.c.h.b16 %v1061
    %v1132 = vunpack.c.l.b16 %v1062
    %v1133 = vunpack.c.h.b16 %v1062
    %v1134 = vunpack.c.l.b16 %v1063
    %v1135 = vunpack.c.h.b16 %v1063
    %v1136 = vunpack.c.l.b16 %v1064
    %v1137 = vunpack.c.h.b16 %v1064
    %v1138 = vunpack.c.l.b16 %v1065
    %v1139 = vunpack.c.h.b16 %v1065
    %v1140 = vunpack.c.l.b16 %v1066
    %v1141 = vunpack.c.h.b16 %v1066
    %v1142 = vunpack.c.l.b16 %v1067
    %v1143 = vunpack.c.h.b16 %v1067
    %v1144 = vunpack.c.l.b16 %v1068
    %v1145 = vunpack.c.h.b16 %v1068
    %v1146 = vunpack.c.l.b16 %v1069
    %v1147 = vunpack.c.h.b16 %v1069
    %v1148 = vunpack.c.l.b16 %v1070
    %v1149 = vunpack.c.h.b16 %v1070
    %v1150 = vunpack.c.l.b16 %v1071
    %v1151 = vunpack.c.h.b16 %v1071
    %v1152 = vunpack.c.l.b16 %v1072
    %v1153 = vunpack.c.h.b16 %v1072
    %v1154 = vunpack.c.l.b16 %v1073
    %v1155 = vunpack.c.h.b16 %v1073
    %v1156 = vunpack.c.l.b16 %v1074
    %v1157 = vunpack.c.h.b16 %v1074
    %v1158 = vunpack.c.l.b16 %v1075
    %v1159 = vunpack.c.h.b16 %v1075
    %v1160 = vunpack.c.l.b16 %v1076
    %v1161 = vunpack.c.h.b16 %v1076
    %v1162 = vunpack.c.l.b16 %v1077
    %v1163 = vunpack.c.h.b16 %v1077
    %v1164 = vunpack.c.l.b16 %v1078
    %v1165 = vunpack.c.h.b16 %v1078
    %v1166 = vunpack.c.l.b16 %v1079
    %v1167 = vunpack.c.h.b16 %v1079
    %v1168 = vunpack.c.l.b16 %v1080
    %v1169 = vunpack.c.h.b16 %v1080
    %v1170 = vunpack.c.l.b16 %v1081
    %v1171 = vunpack.c.h.b16 %v1081
    %v1172 = vunpack.c.l.b16 %v1082
    %v1173 = vunpack.c.h.b16 %v1082
    %v1174 = vunpack.c.l.b16 %v1083
    %v1175 = vunpack.c.h.b16 %v1083
    %v1176 = vunpack.c.l.b16 %v1084
    %v1177 = vunpack.c.h.b16 %v1084
    %v1178 = vunpack.c.l.b16 %v1085
    %v1179 = vunpack.c.h.b16 %v1085
    %v1180 = vunpack.c.l.b16 %v1086
    %v1181 = vunpack.c.h.b16 %v1086
    %v1182 = vunpack.c.l.b16 %v1087
    %v1183 = vunpack.c.h.b16 %v1087
    %v1184 = vunpack.c.l.b16 %v1088
    %v1185 = vunpack.c.h.b16 %v1088
    %v1186 = vunpack.c.l.b16 %v1089
    %v1187 = vunpack.c.h.b16 %v1089
    %v1188 = vunpack.c.l.b16 %v1090
    %v1189 = vunpack.c.h.b16 %v1090
    %v1190 = vpack.c.b16 %v1130, %v1126
    %v1191 = vpack.c.b16 %v1131, %v1127
    %v1192 = vpack.c.b16 %v1132, %v1128
    %v1193 = vpack.c.b16 %v1133, %v1129
    %v1194 = vpack.c.b16 %v1138, %v1134
    %v1195 = vpack.c.b16 %v1139, %v1135
    %v1196 = vpack.c.b16 %v1140, %v1136
    %v1197 = vpack.c.b16 %v1141, %v1137
    %v1198 = vpack.c.b16 %v1146, %v1142
    %v1199 = vpack.c.b16 %v1147, %v1143
    %v1200 = vpack.c.b16 %v1148, %v1144
    %v1201 = vpack.c.b16 %v1149, %v1145
    %v1202 = vpack.c.b16 %v1154, %v1150
    %v1203 = vpack.c.b16 %v1155, %v1151
    %v1204 = vpack.c.b16 %v1156, %v1152
    %v1205 = vpack.c.b16 %v1157, %v1153
    %v1206 = vpack.c.b16 %v1162, %v1158
    %v1207 = vpack.c.b16 %v1163, %v1159
    %v1208 = vpack.c.b16 %v1164, %v1160
    %v1209 = vpack.c.b16 %v1165, %v1161
    %v1210 = vpack.c.b16 %v1170, %v1166
    %v1211 = vpack.c.b16 %v1171, %v1167
    %v1212 = vpack.c.b16 %v1172, %v1168
    %v1213 = vpack.c.b16 %v1173, %v1169
    %v1214 = vpack.c.b16 %v1178, %v1174
    %v1215 = vpack.c.b16 %v1179, %v1175
    %v1216 = vpack.c.b16 %v1180, %v1176
    %v1217 = vpack.c.b16 %v1181, %v1177
    %v1218 = vpack.c.b16 %v1186, %v1182
    %v1219 = vpack.c.b16 %v1187, %v1183
    %v1220 = vpack.c.b16 %v1188, %v1184
    %v1221 = vpack.c.b16 %v1189, %v1185
    %1254 = vmatprep.subr.bf16.mxu0 %v1219
    %1255 = vmatpush1.bf16.msra.mxu0 %v1218
    %1256 = vmatprep.subr.bf16.mxu0 %v1215
    %1257 = vmatpush1.bf16.msra.mxu0 %v1214
    %1258 = vmatprep.subr.bf16.mxu0 %v1211
    %1259 = vmatpush1.bf16.msra.mxu0 %v1210
    %1260 = vmatprep.subr.bf16.mxu0 %v1207
    %1261 = vmatpush1.bf16.msra.mxu0 %v1206
    %1262 = vmatprep.subr.bf16.mxu0 %v1203
    %1263 = vmatpush1.bf16.msra.mxu0 %v1202
    %1264 = vmatprep.subr.bf16.mxu0 %v1199
    %1265 = vmatpush1.bf16.msra.mxu0 %v1198
    %1266 = vmatprep.subr.bf16.mxu0 %v1195
    %1267 = vmatpush1.bf16.msra.mxu0 %v1194
    %1268 = vmatprep.subr.bf16.mxu0 %v1191
    %1269 = vmatpush1.bf16.msra.mxu0 %v1190
    %1270 = vmatprep.subr.bf16.mxu0 0
    %1271 = vmatpush2.bf16.msra.mxu0 0
    %1272 = vmatprep.subr.bf16.mxu0 0
    %1273 = vmatpush2.bf16.msra.mxu0 0
    %1274 = vmatprep.subr.bf16.mxu0 0
    %1275 = vmatpush2.bf16.msra.mxu0 0
    %1276 = vmatprep.subr.bf16.mxu0 0
    %1277 = vmatpush2.bf16.msra.mxu0 0
    %1278 = vmatprep.subr.bf16.mxu0 0
    %1279 = vmatpush2.bf16.msra.mxu0 0
    %1280 = vmatprep.subr.bf16.mxu0 0
    %1281 = vmatpush2.bf16.msra.mxu0 0
    %1282 = vmatprep.subr.bf16.mxu0 0
    %1283 = vmatpush2.bf16.msra.mxu0 0
    %1284 = vmatprep.subr.bf16.mxu0 0
    %1285 = vmatpush2.bf16.msra.mxu0 0
    %1286 = vmatprep.mubr.bf16.mxu0 0
    %1287 = vmatmul.mubr.bf16.gmra.mxu0 %v1092
    %v1288 = vpop.f32.mrf.mxu0
    %v1289 = vadd.f32 0.0, %v1288
    %v1290 = vpop.f32.mrf.mxu0
    %v1291 = vadd.f32 0.0, %v1290
    %v1292 = vpop.f32.mrf.mxu0
    %v1293 = vpop.f32.mrf.mxu0
    %1294 = vdwg.mxu0
    %1295 = vmatprep.subr.bf16.mxu0 %v1221
    %1296 = vmatpush1.bf16.msra.mxu0 %v1220
    %1297 = vmatprep.subr.bf16.mxu0 %v1217
    %1298 = vmatpush1.bf16.msra.mxu0 %v1216
    %1299 = vmatprep.subr.bf16.mxu0 %v1213
    %1300 = vmatpush1.bf16.msra.mxu0 %v1212
    %1301 = vmatprep.subr.bf16.mxu0 %v1209
    %1302 = vmatpush1.bf16.msra.mxu0 %v1208
    %1303 = vmatprep.subr.bf16.mxu0 %v1205
    %1304 = vmatpush1.bf16.msra.mxu0 %v1204
    %1305 = vmatprep.subr.bf16.mxu0 %v1201
    %1306 = vmatpush1.bf16.msra.mxu0 %v1200
    %1307 = vmatprep.subr.bf16.mxu0 %v1197
    %1308 = vmatpush1.bf16.msra.mxu0 %v1196
    %1309 = vmatprep.subr.bf16.mxu0 %v1193
    %1310 = vmatpush1.bf16.msra.mxu0 %v1192
    %1311 = vmatprep.subr.bf16.mxu0 0
    %1312 = vmatpush2.bf16.msra.mxu0 0
    %1313 = vmatprep.subr.bf16.mxu0 0
    %1314 = vmatpush2.bf16.msra.mxu0 0
    %1315 = vmatprep.subr.bf16.mxu0 0
    %1316 = vmatpush2.bf16.msra.mxu0 0
    %1317 = vmatprep.subr.bf16.mxu0 0
    %1318 = vmatpush2.bf16.msra.mxu0 0
    %1319 = vmatprep.subr.bf16.mxu0 0
    %1320 = vmatpush2.bf16.msra.mxu0 0
    %1321 = vmatprep.subr.bf16.mxu0 0
    %1322 = vmatpush2.bf16.msra.mxu0 0
    %1323 = vmatprep.subr.bf16.mxu0 0
    %1324 = vmatpush2.bf16.msra.mxu0 0
    %1325 = vmatprep.subr.bf16.mxu0 0
    %1326 = vmatpush2.bf16.msra.mxu0 0
    %1327 = vmatprep.mubr.bf16.mxu0 0
    %1328 = vmatmul.mubr.bf16.gmra.mxu0 %v1092
    %v1329 = vpop.f32.mrf.mxu0
    %v1330 = vadd.f32 0.0, %v1329
    %v1331 = vpop.f32.mrf.mxu0
    %v1332 = vadd.f32 0.0, %v1331
    %v1333 = vpop.f32.mrf.mxu0
    %v1334 = vpop.f32.mrf.mxu0
    %1335 = vdwg.mxu0
    %v1340 = vrot.slane %v1289, 4
    %v1341 = vrot.slane %v1291, 4
    %v1342 = vrot.slane %v1330, 4
    %v1343 = vrot.slane %v1332, 4
    %v1348 = vadd.f32 %v1054, %v1340
    %v1349 = vadd.f32 %v1055, %v1341
    %v1350 = vadd.f32 %v1056, %v1342
    %v1351 = vadd.f32 %v1057, %v1343
    %v1352 = vxor.u32 %v1348, 2147483648
    %v1353 = vxor.u32 %v1349, 2147483648
    %v1354 = vxor.u32 %v1350, 2147483648
    %v1355 = vmul.f32 %v1352, 1.442695
    %v1356 = vpow.pop %v1355
    %v1357 = vmul.f32 %v1353, 1.442695
    %v1358 = vpow.pop %v1357
    %v1359 = vmul.f32 %v1354, 1.442695
    %v1360 = vpow.pop %v1359
    %v1361 = vadd.f32 %v1356, 1.0
    %v1362 = vadd.f32 %v1358, 1.0
    %v1363 = vadd.f32 %v1360, 1.0
    %v1364 = vrcp.pop %v1361
    %v1365 = vmul.f32 1.0, %v1364
    %v1366 = vrcp.pop %v1362
    %v1367 = vmul.f32 1.0, %v1366
    %v1368 = vrcp.pop %v1363
    %v1369 = vmul.f32 1.0, %v1368
    %v1370 = vtanh.pop %v1351
    %v1372 = vrot.slane %v1027, 6
    %v1374 = vmul.f32 %v1367, %v1372
    %v1375 = vmul.f32 %v1365, %v1370
    %v1376 = vadd.f32 %v1374, %v1375
    %v1377 = vtanh.pop %v1376
    %v1378 = vmul.f32 %v1369, %v1377
    %vm1379 = vcmask 521220
    %1380 = vst.msk [vmem:[#allocation3] sm:$0x30] %vm1379, %v1378
    %vm1381 = vcmask 1046020
    %1382 = vst.msk [vmem:[#allocation3 + $0x6] sm:$0x30] %vm1381, %v1378
    %v1383 = vld [vmem:[#allocation2] sm:$0xc0]
    %v1384 = vld [vmem:[#allocation2 + $0x8] sm:$0xc0]
    %v1385 = vld [vmem:[#allocation2 + $0x10] sm:$0xc0]
    %v1386 = vld [vmem:[#allocation2 + $0x18] sm:$0xc0]
    %v1387 = vld [vmem:[#allocation2 + $0x20] sm:$0x3]
    %v1388 = vld [vmem:[#allocation2 + $0x28] sm:$0x3]
    %v1389 = vld [vmem:[#allocation2 + $0x30] sm:$0x3]
    %v1390 = vld [vmem:[#allocation2 + $0x38] sm:$0x3]
    %v1395 = vrot.slane %v1387, 2
    %v1396 = vrot.slane %v1388, 2
    %v1397 = vrot.slane %v1389, 2
    %v1398 = vrot.slane %v1390, 2
    %v1403 = vsel %vm179, %v1383, %v1395
    %v1404 = vsel %vm180, %v1384, %v1396
    %v1405 = vsel %vm181, %v1385, %v1397
    %v1406 = vsel %vm182, %v1386, %v1398
    %v1407 = vpack.c.bf16 %v1378, %v1378
    %v1408 = vld [vmem:[#allocation9] sm:$0xff]
    %v1409 = vld [vmem:[#allocation9 + $0x8] sm:$0xff]
    %v1410 = vld [vmem:[#allocation9 + $0x10] sm:$0xff]
    %v1411 = vld [vmem:[#allocation9 + $0x18] sm:$0xff]
    %v1412 = vld [vmem:[#allocation9 + $0x20] sm:$0xff]
    %v1413 = vld [vmem:[#allocation9 + $0x28] sm:$0xff]
    %v1414 = vld [vmem:[#allocation9 + $0x30] sm:$0xff]
    %v1415 = vld [vmem:[#allocation9 + $0x38] sm:$0xff]
    %v1416 = vld [vmem:[#allocation9 + $0x40] sm:$0xff]
    %v1417 = vld [vmem:[#allocation9 + $0x48] sm:$0xff]
    %v1418 = vld [vmem:[#allocation9 + $0x50] sm:$0xff]
    %v1419 = vld [vmem:[#allocation9 + $0x58] sm:$0xff]
    %v1420 = vld [vmem:[#allocation9 + $0x60] sm:$0xff]
    %v1421 = vld [vmem:[#allocation9 + $0x68] sm:$0xff]
    %v1422 = vld [vmem:[#allocation9 + $0x70] sm:$0xff]
    %v1423 = vld [vmem:[#allocation9 + $0x78] sm:$0xff]
    %v1424 = vld [vmem:[#allocation9 + $0x80] sm:$0xff]
    %v1425 = vld [vmem:[#allocation9 + $0x88] sm:$0xff]
    %v1426 = vld [vmem:[#allocation9 + $0x90] sm:$0xff]
    %v1427 = vld [vmem:[#allocation9 + $0x98] sm:$0xff]
    %v1428 = vld [vmem:[#allocation9 + $0xa0] sm:$0xff]
    %v1429 = vld [vmem:[#allocation9 + $0xa8] sm:$0xff]
    %v1430 = vld [vmem:[#allocation9 + $0xb0] sm:$0xff]
    %v1431 = vld [vmem:[#allocation9 + $0xb8] sm:$0xff]
    %v1432 = vld [vmem:[#allocation9 + $0xc0] sm:$0xff]
    %v1433 = vld [vmem:[#allocation9 + $0xc8] sm:$0xff]
    %v1434 = vld [vmem:[#allocation9 + $0xd0] sm:$0xff]
    %v1435 = vld [vmem:[#allocation9 + $0xd8] sm:$0xff]
    %v1436 = vld [vmem:[#allocation9 + $0xe0] sm:$0xff]
    %v1437 = vld [vmem:[#allocation9 + $0xe8] sm:$0xff]
    %v1438 = vld [vmem:[#allocation9 + $0xf0] sm:$0xff]
    %v1439 = vld [vmem:[#allocation9 + $0xf8] sm:$0xff]
    %v1441 = vrot.slane %v1407, 2
    %v1475 = vunpack.c.l.b16 %v1408
    %v1476 = vunpack.c.h.b16 %v1408
    %v1477 = vunpack.c.l.b16 %v1409
    %v1478 = vunpack.c.h.b16 %v1409
    %v1479 = vunpack.c.l.b16 %v1410
    %v1480 = vunpack.c.h.b16 %v1410
    %v1481 = vunpack.c.l.b16 %v1411
    %v1482 = vunpack.c.h.b16 %v1411
    %v1483 = vunpack.c.l.b16 %v1412
    %v1484 = vunpack.c.h.b16 %v1412
    %v1485 = vunpack.c.l.b16 %v1413
    %v1486 = vunpack.c.h.b16 %v1413
    %v1487 = vunpack.c.l.b16 %v1414
    %v1488 = vunpack.c.h.b16 %v1414
    %v1489 = vunpack.c.l.b16 %v1415
    %v1490 = vunpack.c.h.b16 %v1415
    %v1491 = vunpack.c.l.b16 %v1416
    %v1492 = vunpack.c.h.b16 %v1416
    %v1493 = vunpack.c.l.b16 %v1417
    %v1494 = vunpack.c.h.b16 %v1417
    %v1495 = vunpack.c.l.b16 %v1418
    %v1496 = vunpack.c.h.b16 %v1418
    %v1497 = vunpack.c.l.b16 %v1419
    %v1498 = vunpack.c.h.b16 %v1419
    %v1499 = vunpack.c.l.b16 %v1420
    %v1500 = vunpack.c.h.b16 %v1420
    %v1501 = vunpack.c.l.b16 %v1421
    %v1502 = vunpack.c.h.b16 %v1421
    %v1503 = vunpack.c.l.b16 %v1422
    %v1504 = vunpack.c.h.b16 %v1422
    %v1505 = vunpack.c.l.b16 %v1423
    %v1506 = vunpack.c.h.b16 %v1423
    %v1507 = vunpack.c.l.b16 %v1424
    %v1508 = vunpack.c.h.b16 %v1424
    %v1509 = vunpack.c.l.b16 %v1425
    %v1510 = vunpack.c.h.b16 %v1425
    %v1511 = vunpack.c.l.b16 %v1426
    %v1512 = vunpack.c.h.b16 %v1426
    %v1513 = vunpack.c.l.b16 %v1427
    %v1514 = vunpack.c.h.b16 %v1427
    %v1515 = vunpack.c.l.b16 %v1428
    %v1516 = vunpack.c.h.b16 %v1428
    %v1517 = vunpack.c.l.b16 %v1429
    %v1518 = vunpack.c.h.b16 %v1429
    %v1519 = vunpack.c.l.b16 %v1430
    %v1520 = vunpack.c.h.b16 %v1430
    %v1521 = vunpack.c.l.b16 %v1431
    %v1522 = vunpack.c.h.b16 %v1431
    %v1523 = vunpack.c.l.b16 %v1432
    %v1524 = vunpack.c.h.b16 %v1432
    %v1525 = vunpack.c.l.b16 %v1433
    %v1526 = vunpack.c.h.b16 %v1433
    %v1527 = vunpack.c.l.b16 %v1434
    %v1528 = vunpack.c.h.b16 %v1434
    %v1529 = vunpack.c.l.b16 %v1435
    %v1530 = vunpack.c.h.b16 %v1435
    %v1531 = vunpack.c.l.b16 %v1436
    %v1532 = vunpack.c.h.b16 %v1436
    %v1533 = vunpack.c.l.b16 %v1437
    %v1534 = vunpack.c.h.b16 %v1437
    %v1535 = vunpack.c.l.b16 %v1438
    %v1536 = vunpack.c.h.b16 %v1438
    %v1537 = vunpack.c.l.b16 %v1439
    %v1538 = vunpack.c.h.b16 %v1439
    %v1539 = vpack.c.b16 %v1479, %v1475
    %v1540 = vpack.c.b16 %v1480, %v1476
    %v1541 = vpack.c.b16 %v1481, %v1477
    %v1542 = vpack.c.b16 %v1482, %v1478
    %v1543 = vpack.c.b16 %v1487, %v1483
    %v1544 = vpack.c.b16 %v1488, %v1484
    %v1545 = vpack.c.b16 %v1489, %v1485
    %v1546 = vpack.c.b16 %v1490, %v1486
    %v1547 = vpack.c.b16 %v1495, %v1491
    %v1548 = vpack.c.b16 %v1496, %v1492
    %v1549 = vpack.c.b16 %v1497, %v1493
    %v1550 = vpack.c.b16 %v1498, %v1494
    %v1551 = vpack.c.b16 %v1503, %v1499
    %v1552 = vpack.c.b16 %v1504, %v1500
    %v1553 = vpack.c.b16 %v1505, %v1501
    %v1554 = vpack.c.b16 %v1506, %v1502
    %v1555 = vpack.c.b16 %v1511, %v1507
    %v1556 = vpack.c.b16 %v1512, %v1508
    %v1557 = vpack.c.b16 %v1513, %v1509
    %v1558 = vpack.c.b16 %v1514, %v1510
    %v1559 = vpack.c.b16 %v1519, %v1515
    %v1560 = vpack.c.b16 %v1520, %v1516
    %v1561 = vpack.c.b16 %v1521, %v1517
    %v1562 = vpack.c.b16 %v1522, %v1518
    %v1563 = vpack.c.b16 %v1527, %v1523
    %v1564 = vpack.c.b16 %v1528, %v1524
    %v1565 = vpack.c.b16 %v1529, %v1525
    %v1566 = vpack.c.b16 %v1530, %v1526
    %v1567 = vpack.c.b16 %v1535, %v1531
    %v1568 = vpack.c.b16 %v1536, %v1532
    %v1569 = vpack.c.b16 %v1537, %v1533
    %v1570 = vpack.c.b16 %v1538, %v1534
    %1603 = vmatprep.subr.bf16.mxu0 %v1568
    %1604 = vmatpush1.bf16.msra.mxu0 %v1567
    %1605 = vmatprep.subr.bf16.mxu0 %v1564
    %1606 = vmatpush1.bf16.msra.mxu0 %v1563
    %1607 = vmatprep.subr.bf16.mxu0 %v1560
    %1608 = vmatpush1.bf16.msra.mxu0 %v1559
    %1609 = vmatprep.subr.bf16.mxu0 %v1556
    %1610 = vmatpush1.bf16.msra.mxu0 %v1555
    %1611 = vmatprep.subr.bf16.mxu0 %v1552
    %1612 = vmatpush1.bf16.msra.mxu0 %v1551
    %1613 = vmatprep.subr.bf16.mxu0 %v1548
    %1614 = vmatpush1.bf16.msra.mxu0 %v1547
    %1615 = vmatprep.subr.bf16.mxu0 %v1544
    %1616 = vmatpush1.bf16.msra.mxu0 %v1543
    %1617 = vmatprep.subr.bf16.mxu0 %v1540
    %1618 = vmatpush1.bf16.msra.mxu0 %v1539
    %1619 = vmatprep.subr.bf16.mxu0 0
    %1620 = vmatpush2.bf16.msra.mxu0 0
    %1621 = vmatprep.subr.bf16.mxu0 0
    %1622 = vmatpush2.bf16.msra.mxu0 0
    %1623 = vmatprep.subr.bf16.mxu0 0
    %1624 = vmatpush2.bf16.msra.mxu0 0
    %1625 = vmatprep.subr.bf16.mxu0 0
    %1626 = vmatpush2.bf16.msra.mxu0 0
    %1627 = vmatprep.subr.bf16.mxu0 0
    %1628 = vmatpush2.bf16.msra.mxu0 0
    %1629 = vmatprep.subr.bf16.mxu0 0
    %1630 = vmatpush2.bf16.msra.mxu0 0
    %1631 = vmatprep.subr.bf16.mxu0 0
    %1632 = vmatpush2.bf16.msra.mxu0 0
    %1633 = vmatprep.subr.bf16.mxu0 0
    %1634 = vmatpush2.bf16.msra.mxu0 0
    %1635 = vmatprep.mubr.bf16.mxu0 0
    %1636 = vmatmul.mubr.bf16.gmra.mxu0 %v1441
    %v1637 = vpop.f32.mrf.mxu0
    %v1638 = vadd.f32 0.0, %v1637
    %v1639 = vpop.f32.mrf.mxu0
    %v1640 = vadd.f32 0.0, %v1639
    %v1641 = vpop.f32.mrf.mxu0
    %v1642 = vpop.f32.mrf.mxu0
    %1643 = vdwg.mxu0
    %1644 = vmatprep.subr.bf16.mxu0 %v1570
    %1645 = vmatpush1.bf16.msra.mxu0 %v1569
    %1646 = vmatprep.subr.bf16.mxu0 %v1566
    %1647 = vmatpush1.bf16.msra.mxu0 %v1565
    %1648 = vmatprep.subr.bf16.mxu0 %v1562
    %1649 = vmatpush1.bf16.msra.mxu0 %v1561
    %1650 = vmatprep.subr.bf16.mxu0 %v1558
    %1651 = vmatpush1.bf16.msra.mxu0 %v1557
    %1652 = vmatprep.subr.bf16.mxu0 %v1554
    %1653 = vmatpush1.bf16.msra.mxu0 %v1553
    %1654 = vmatprep.subr.bf16.mxu0 %v1550
    %1655 = vmatpush1.bf16.msra.mxu0 %v1549
    %1656 = vmatprep.subr.bf16.mxu0 %v1546
    %1657 = vmatpush1.bf16.msra.mxu0 %v1545
    %1658 = vmatprep.subr.bf16.mxu0 %v1542
    %1659 = vmatpush1.bf16.msra.mxu0 %v1541
    %1660 = vmatprep.subr.bf16.mxu0 0
    %1661 = vmatpush2.bf16.msra.mxu0 0
    %1662 = vmatprep.subr.bf16.mxu0 0
    %1663 = vmatpush2.bf16.msra.mxu0 0
    %1664 = vmatprep.subr.bf16.mxu0 0
    %1665 = vmatpush2.bf16.msra.mxu0 0
    %1666 = vmatprep.subr.bf16.mxu0 0
    %1667 = vmatpush2.bf16.msra.mxu0 0
    %1668 = vmatprep.subr.bf16.mxu0 0
    %1669 = vmatpush2.bf16.msra.mxu0 0
    %1670 = vmatprep.subr.bf16.mxu0 0
    %1671 = vmatpush2.bf16.msra.mxu0 0
    %1672 = vmatprep.subr.bf16.mxu0 0
    %1673 = vmatpush2.bf16.msra.mxu0 0
    %1674 = vmatprep.subr.bf16.mxu0 0
    %1675 = vmatpush2.bf16.msra.mxu0 0
    %1676 = vmatprep.mubr.bf16.mxu0 0
    %1677 = vmatmul.mubr.bf16.gmra.mxu0 %v1441
    %v1678 = vpop.f32.mrf.mxu0
    %v1679 = vadd.f32 0.0, %v1678
    %v1680 = vpop.f32.mrf.mxu0
    %v1681 = vadd.f32 0.0, %v1680
    %v1682 = vpop.f32.mrf.mxu0
    %v1683 = vpop.f32.mrf.mxu0
    %1684 = vdwg.mxu0
    %v1689 = vrot.slane %v1638, 2
    %v1690 = vrot.slane %v1640, 2
    %v1691 = vrot.slane %v1679, 2
    %v1692 = vrot.slane %v1681, 2
    %v1697 = vadd.f32 %v1403, %v1689
    %v1698 = vadd.f32 %v1404, %v1690
    %v1699 = vadd.f32 %v1405, %v1691
    %v1700 = vadd.f32 %v1406, %v1692
    %v1701 = vxor.u32 %v1697, 2147483648
    %v1702 = vxor.u32 %v1698, 2147483648
    %v1703 = vxor.u32 %v1699, 2147483648
    %v1704 = vmul.f32 %v1701, 1.442695
    %v1705 = vpow.pop %v1704
    %v1706 = vmul.f32 %v1702, 1.442695
    %v1707 = vpow.pop %v1706
    %v1708 = vmul.f32 %v1703, 1.442695
    %v1709 = vpow.pop %v1708
    %v1710 = vadd.f32 %v1705, 1.0
    %v1711 = vadd.f32 %v1707, 1.0
    %v1712 = vadd.f32 %v1709, 1.0
    %v1713 = vrcp.pop %v1710
    %v1714 = vmul.f32 1.0, %v1713
    %v1715 = vrcp.pop %v1711
    %v1716 = vmul.f32 1.0, %v1715
    %v1717 = vrcp.pop %v1712
    %v1718 = vmul.f32 1.0, %v1717
    %v1719 = vtanh.pop %v1700
    %v1721 = vrot.slane %v1376, 6
    %v1723 = vmul.f32 %v1716, %v1721
    %v1724 = vmul.f32 %v1714, %v1719
    %v1725 = vadd.f32 %v1723, %v1724
    %v1726 = vtanh.pop %v1725
    %v1727 = vmul.f32 %v1718, %v1726
    %vm1728 = vcmask 523270
    %1729 = vst.msk [vmem:[#allocation3] sm:$0xc0] %vm1728, %v1727
    %vm1730 = vcmask 1048070
    %1731 = vst.msk [vmem:[#allocation3 + $0x2] sm:$0xc0] %vm1730, %v1727
    %v1732 = vld [vmem:[#allocation2 + $0x20] sm:$0x3]
    %v1733 = vld [vmem:[#allocation2 + $0x28] sm:$0x3]
    %v1734 = vld [vmem:[#allocation2 + $0x30] sm:$0x3]
    %v1735 = vld [vmem:[#allocation2 + $0x38] sm:$0x3]
    %v1736 = vld [vmem:[#allocation2] sm:$0xc0]
    %v1737 = vld [vmem:[#allocation2 + $0x8] sm:$0xc0]
    %v1738 = vld [vmem:[#allocation2 + $0x10] sm:$0xc0]
    %v1739 = vld [vmem:[#allocation2 + $0x18] sm:$0xc0]
    %v1744 = vrot.slane %v1736, 6
    %v1745 = vrot.slane %v1737, 6
    %v1746 = vrot.slane %v1738, 6
    %v1747 = vrot.slane %v1739, 6
    %v1752 = vsel %vm179, %v1732, %v1744
    %v1753 = vsel %vm180, %v1733, %v1745
    %v1754 = vsel %vm181, %v1734, %v1746
    %v1755 = vsel %vm182, %v1735, %v1747
    %v1756 = vpack.c.bf16 %v1727, %v1727
    %v1757 = vld [vmem:[#allocation9] sm:$0xff]
    %v1758 = vld [vmem:[#allocation9 + $0x8] sm:$0xff]
    %v1759 = vld [vmem:[#allocation9 + $0x10] sm:$0xff]
    %v1760 = vld [vmem:[#allocation9 + $0x18] sm:$0xff]
    %v1761 = vld [vmem:[#allocation9 + $0x20] sm:$0xff]
    %v1762 = vld [vmem:[#allocation9 + $0x28] sm:$0xff]
    %v1763 = vld [vmem:[#allocation9 + $0x30] sm:$0xff]
    %v1764 = vld [vmem:[#allocation9 + $0x38] sm:$0xff]
    %v1765 = vld [vmem:[#allocation9 + $0x40] sm:$0xff]
    %v1766 = vld [vmem:[#allocation9 + $0x48] sm:$0xff]
    %v1767 = vld [vmem:[#allocation9 + $0x50] sm:$0xff]
    %v1768 = vld [vmem:[#allocation9 + $0x58] sm:$0xff]
    %v1769 = vld [vmem:[#allocation9 + $0x60] sm:$0xff]
    %v1770 = vld [vmem:[#allocation9 + $0x68] sm:$0xff]
    %v1771 = vld [vmem:[#allocation9 + $0x70] sm:$0xff]
    %v1772 = vld [vmem:[#allocation9 + $0x78] sm:$0xff]
    %v1773 = vld [vmem:[#allocation9 + $0x80] sm:$0xff]
    %v1774 = vld [vmem:[#allocation9 + $0x88] sm:$0xff]
    %v1775 = vld [vmem:[#allocation9 + $0x90] sm:$0xff]
    %v1776 = vld [vmem:[#allocation9 + $0x98] sm:$0xff]
    %v1777 = vld [vmem:[#allocation9 + $0xa0] sm:$0xff]
    %v1778 = vld [vmem:[#allocation9 + $0xa8] sm:$0xff]
    %v1779 = vld [vmem:[#allocation9 + $0xb0] sm:$0xff]
    %v1780 = vld [vmem:[#allocation9 + $0xb8] sm:$0xff]
    %v1781 = vld [vmem:[#allocation9 + $0xc0] sm:$0xff]
    %v1782 = vld [vmem:[#allocation9 + $0xc8] sm:$0xff]
    %v1783 = vld [vmem:[#allocation9 + $0xd0] sm:$0xff]
    %v1784 = vld [vmem:[#allocation9 + $0xd8] sm:$0xff]
    %v1785 = vld [vmem:[#allocation9 + $0xe0] sm:$0xff]
    %v1786 = vld [vmem:[#allocation9 + $0xe8] sm:$0xff]
    %v1787 = vld [vmem:[#allocation9 + $0xf0] sm:$0xff]
    %v1788 = vld [vmem:[#allocation9 + $0xf8] sm:$0xff]
    %v1790 = vrot.slane %v1756, 3
    %v1824 = vunpack.c.l.b16 %v1757
    %v1825 = vunpack.c.h.b16 %v1757
    %v1826 = vunpack.c.l.b16 %v1758
    %v1827 = vunpack.c.h.b16 %v1758
    %v1828 = vunpack.c.l.b16 %v1759
    %v1829 = vunpack.c.h.b16 %v1759
    %v1830 = vunpack.c.l.b16 %v1760
    %v1831 = vunpack.c.h.b16 %v1760
    %v1832 = vunpack.c.l.b16 %v1761
    %v1833 = vunpack.c.h.b16 %v1761
    %v1834 = vunpack.c.l.b16 %v1762
    %v1835 = vunpack.c.h.b16 %v1762
    %v1836 = vunpack.c.l.b16 %v1763
    %v1837 = vunpack.c.h.b16 %v1763
    %v1838 = vunpack.c.l.b16 %v1764
    %v1839 = vunpack.c.h.b16 %v1764
    %v1840 = vunpack.c.l.b16 %v1765
    %v1841 = vunpack.c.h.b16 %v1765
    %v1842 = vunpack.c.l.b16 %v1766
    %v1843 = vunpack.c.h.b16 %v1766
    %v1844 = vunpack.c.l.b16 %v1767
    %v1845 = vunpack.c.h.b16 %v1767
    %v1846 = vunpack.c.l.b16 %v1768
    %v1847 = vunpack.c.h.b16 %v1768
    %v1848 = vunpack.c.l.b16 %v1769
    %v1849 = vunpack.c.h.b16 %v1769
    %v1850 = vunpack.c.l.b16 %v1770
    %v1851 = vunpack.c.h.b16 %v1770
    %v1852 = vunpack.c.l.b16 %v1771
    %v1853 = vunpack.c.h.b16 %v1771
    %v1854 = vunpack.c.l.b16 %v1772
    %v1855 = vunpack.c.h.b16 %v1772
    %v1856 = vunpack.c.l.b16 %v1773
    %v1857 = vunpack.c.h.b16 %v1773
    %v1858 = vunpack.c.l.b16 %v1774
    %v1859 = vunpack.c.h.b16 %v1774
    %v1860 = vunpack.c.l.b16 %v1775
    %v1861 = vunpack.c.h.b16 %v1775
    %v1862 = vunpack.c.l.b16 %v1776
    %v1863 = vunpack.c.h.b16 %v1776
    %v1864 = vunpack.c.l.b16 %v1777
    %v1865 = vunpack.c.h.b16 %v1777
    %v1866 = vunpack.c.l.b16 %v1778
    %v1867 = vunpack.c.h.b16 %v1778
    %v1868 = vunpack.c.l.b16 %v1779
    %v1869 = vunpack.c.h.b16 %v1779
    %v1870 = vunpack.c.l.b16 %v1780
    %v1871 = vunpack.c.h.b16 %v1780
    %v1872 = vunpack.c.l.b16 %v1781
    %v1873 = vunpack.c.h.b16 %v1781
    %v1874 = vunpack.c.l.b16 %v1782
    %v1875 = vunpack.c.h.b16 %v1782
    %v1876 = vunpack.c.l.b16 %v1783
    %v1877 = vunpack.c.h.b16 %v1783
    %v1878 = vunpack.c.l.b16 %v1784
    %v1879 = vunpack.c.h.b16 %v1784
    %v1880 = vunpack.c.l.b16 %v1785
    %v1881 = vunpack.c.h.b16 %v1785
    %v1882 = vunpack.c.l.b16 %v1786
    %v1883 = vunpack.c.h.b16 %v1786
    %v1884 = vunpack.c.l.b16 %v1787
    %v1885 = vunpack.c.h.b16 %v1787
    %v1886 = vunpack.c.l.b16 %v1788
    %v1887 = vunpack.c.h.b16 %v1788
    %v1888 = vpack.c.b16 %v1828, %v1824
    %v1889 = vpack.c.b16 %v1829, %v1825
    %v1890 = vpack.c.b16 %v1830, %v1826
    %v1891 = vpack.c.b16 %v1831, %v1827
    %v1892 = vpack.c.b16 %v1836, %v1832
    %v1893 = vpack.c.b16 %v1837, %v1833
    %v1894 = vpack.c.b16 %v1838, %v1834
    %v1895 = vpack.c.b16 %v1839, %v1835
    %v1896 = vpack.c.b16 %v1844, %v1840
    %v1897 = vpack.c.b16 %v1845, %v1841
    %v1898 = vpack.c.b16 %v1846, %v1842
    %v1899 = vpack.c.b16 %v1847, %v1843
    %v1900 = vpack.c.b16 %v1852, %v1848
    %v1901 = vpack.c.b16 %v1853, %v1849
    %v1902 = vpack.c.b16 %v1854, %v1850
    %v1903 = vpack.c.b16 %v1855, %v1851
    %v1904 = vpack.c.b16 %v1860, %v1856
    %v1905 = vpack.c.b16 %v1861, %v1857
    %v1906 = vpack.c.b16 %v1862, %v1858
    %v1907 = vpack.c.b16 %v1863, %v1859
    %v1908 = vpack.c.b16 %v1868, %v1864
    %v1909 = vpack.c.b16 %v1869, %v1865
    %v1910 = vpack.c.b16 %v1870, %v1866
    %v1911 = vpack.c.b16 %v1871, %v1867
    %v1912 = vpack.c.b16 %v1876, %v1872
    %v1913 = vpack.c.b16 %v1877, %v1873
    %v1914 = vpack.c.b16 %v1878, %v1874
    %v1915 = vpack.c.b16 %v1879, %v1875
    %v1916 = vpack.c.b16 %v1884, %v1880
    %v1917 = vpack.c.b16 %v1885, %v1881
    %v1918 = vpack.c.b16 %v1886, %v1882
    %v1919 = vpack.c.b16 %v1887, %v1883
    %1952 = vmatprep.subr.bf16.mxu0 %v1917
    %1953 = vmatpush1.bf16.msra.mxu0 %v1916
    %1954 = vmatprep.subr.bf16.mxu0 %v1913
    %1955 = vmatpush1.bf16.msra.mxu0 %v1912
    %1956 = vmatprep.subr.bf16.mxu0 %v1909
    %1957 = vmatpush1.bf16.msra.mxu0 %v1908
    %1958 = vmatprep.subr.bf16.mxu0 %v1905
    %1959 = vmatpush1.bf16.msra.mxu0 %v1904
    %1960 = vmatprep.subr.bf16.mxu0 %v1901
    %1961 = vmatpush1.bf16.msra.mxu0 %v1900
    %1962 = vmatprep.subr.bf16.mxu0 %v1897
    %1963 = vmatpush1.bf16.msra.mxu0 %v1896
    %1964 = vmatprep.subr.bf16.mxu0 %v1893
    %1965 = vmatpush1.bf16.msra.mxu0 %v1892
    %1966 = vmatprep.subr.bf16.mxu0 %v1889
    %1967 = vmatpush1.bf16.msra.mxu0 %v1888
    %1968 = vmatprep.subr.bf16.mxu0 0
    %1969 = vmatpush2.bf16.msra.mxu0 0
    %1970 = vmatprep.subr.bf16.mxu0 0
    %1971 = vmatpush2.bf16.msra.mxu0 0
    %1972 = vmatprep.subr.bf16.mxu0 0
    %1973 = vmatpush2.bf16.msra.mxu0 0
    %1974 = vmatprep.subr.bf16.mxu0 0
    %1975 = vmatpush2.bf16.msra.mxu0 0
    %1976 = vmatprep.subr.bf16.mxu0 0
    %1977 = vmatpush2.bf16.msra.mxu0 0
    %1978 = vmatprep.subr.bf16.mxu0 0
    %1979 = vmatpush2.bf16.msra.mxu0 0
    %1980 = vmatprep.subr.bf16.mxu0 0
    %1981 = vmatpush2.bf16.msra.mxu0 0
    %1982 = vmatprep.subr.bf16.mxu0 0
    %1983 = vmatpush2.bf16.msra.mxu0 0
    %1984 = vmatprep.mubr.bf16.mxu0 0
    %1985 = vmatmul.mubr.bf16.gmra.mxu0 %v1790
    %v1986 = vpop.f32.mrf.mxu0
    %v1987 = vadd.f32 0.0, %v1986
    %v1988 = vpop.f32.mrf.mxu0
    %v1989 = vadd.f32 0.0, %v1988
    %v1990 = vpop.f32.mrf.mxu0
    %v1991 = vpop.f32.mrf.mxu0
    %1992 = vdwg.mxu0
    %1993 = vmatprep.subr.bf16.mxu0 %v1919
    %1994 = vmatpush1.bf16.msra.mxu0 %v1918
    %1995 = vmatprep.subr.bf16.mxu0 %v1915
    %1996 = vmatpush1.bf16.msra.mxu0 %v1914
    %1997 = vmatprep.subr.bf16.mxu0 %v1911
    %1998 = vmatpush1.bf16.msra.mxu0 %v1910
    %1999 = vmatprep.subr.bf16.mxu0 %v1907
    %2000 = vmatpush1.bf16.msra.mxu0 %v1906
    %2001 = vmatprep.subr.bf16.mxu0 %v1903
    %2002 = vmatpush1.bf16.msra.mxu0 %v1902
    %2003 = vmatprep.subr.bf16.mxu0 %v1899
    %2004 = vmatpush1.bf16.msra.mxu0 %v1898
    %2005 = vmatprep.subr.bf16.mxu0 %v1895
    %2006 = vmatpush1.bf16.msra.mxu0 %v1894
    %2007 = vmatprep.subr.bf16.mxu0 %v1891
    %2008 = vmatpush1.bf16.msra.mxu0 %v1890
    %2009 = vmatprep.subr.bf16.mxu0 0
    %2010 = vmatpush2.bf16.msra.mxu0 0
    %2011 = vmatprep.subr.bf16.mxu0 0
    %2012 = vmatpush2.bf16.msra.mxu0 0
    %2013 = vmatprep.subr.bf16.mxu0 0
    %2014 = vmatpush2.bf16.msra.mxu0 0
    %2015 = vmatprep.subr.bf16.mxu0 0
    %2016 = vmatpush2.bf16.msra.mxu0 0
    %2017 = vmatprep.subr.bf16.mxu0 0
    %2018 = vmatpush2.bf16.msra.mxu0 0
    %2019 = vmatprep.subr.bf16.mxu0 0
    %2020 = vmatpush2.bf16.msra.mxu0 0
    %2021 = vmatprep.subr.bf16.mxu0 0
    %2022 = vmatpush2.bf16.msra.mxu0 0
    %2023 = vmatprep.subr.bf16.mxu0 0
    %2024 = vmatpush2.bf16.msra.mxu0 0
    %2025 = vmatprep.mubr.bf16.mxu0 0
    %2026 = vmatmul.mubr.bf16.gmra.mxu0 %v1790
    %v2027 = vpop.f32.mrf.mxu0
    %v2028 = vadd.f32 0.0, %v2027
    %v2029 = vpop.f32.mrf.mxu0
    %v2030 = vadd.f32 0.0, %v2029
    %v2031 = vpop.f32.mrf.mxu0
    %v2032 = vpop.f32.mrf.mxu0
    %2033 = vdwg.mxu0
    %v2034 = vadd.f32 %v1752, %v1987
    %v2035 = vadd.f32 %v1753, %v1989
    %v2036 = vadd.f32 %v1754, %v2028
    %v2037 = vadd.f32 %v1755, %v2030
    %v2038 = vxor.u32 %v2034, 2147483648
    %v2039 = vxor.u32 %v2035, 2147483648
    %v2040 = vxor.u32 %v2036, 2147483648
    %v2041 = vmul.f32 %v2038, 1.442695
    %v2042 = vpow.pop %v2041
    %v2043 = vmul.f32 %v2039, 1.442695
    %v2044 = vpow.pop %v2043
    %v2045 = vmul.f32 %v2040, 1.442695
    %v2046 = vpow.pop %v2045
    %v2047 = vadd.f32 %v2042, 1.0
    %v2048 = vadd.f32 %v2044, 1.0
    %v2049 = vadd.f32 %v2046, 1.0
    %v2050 = vrcp.pop %v2047
    %v2051 = vmul.f32 1.0, %v2050
    %v2052 = vrcp.pop %v2048
    %v2053 = vmul.f32 1.0, %v2052
    %v2054 = vrcp.pop %v2049
    %v2055 = vmul.f32 1.0, %v2054
    %v2056 = vtanh.pop %v2037
    %v2058 = vrot.slane %v1725, 6
    %v2060 = vmul.f32 %v2053, %v2058
    %v2061 = vmul.f32 %v2051, %v2056
    %v2062 = vadd.f32 %v2060, %v2061
    %v2063 = vtanh.pop %v2062
    %v2064 = vmul.f32 %v2055, %v2063
    %2065 = vst.msk [vmem:[#allocation3 + $0x8] sm:$0x3] %vm684, %v2064
    %2066 = vst.msk [vmem:[#allocation3 + $0x6] sm:$0x3] %vm686, %v2064
    %v2067 = vld [vmem:[#allocation2 + $0x20] sm:$0xc]
    %v2068 = vld [vmem:[#allocation2 + $0x28] sm:$0xc]
    %v2069 = vld [vmem:[#allocation2 + $0x30] sm:$0xc]
    %v2070 = vld [vmem:[#allocation2 + $0x38] sm:$0xc]
    %v2071 = vld [vmem:[#allocation2] sm:$0x30]
    %v2072 = vld [vmem:[#allocation2 + $0x8] sm:$0x30]
    %v2073 = vld [vmem:[#allocation2 + $0x10] sm:$0x30]
    %v2074 = vld [vmem:[#allocation2 + $0x18] sm:$0x30]
    %v2079 = vrot.slane %v2071, 2
    %v2080 = vrot.slane %v2072, 2
    %v2081 = vrot.slane %v2073, 2
    %v2082 = vrot.slane %v2074, 2
    %v2087 = vsel %vm179, %v2067, %v2079
    %v2088 = vsel %vm180, %v2068, %v2080
    %v2089 = vsel %vm181, %v2069, %v2081
    %v2090 = vsel %vm182, %v2070, %v2082
    %v2091 = vpack.c.bf16 %v2064, %v2064
    %v2092 = vld [vmem:[#allocation9] sm:$0xff]
    %v2093 = vld [vmem:[#allocation9 + $0x8] sm:$0xff]
    %v2094 = vld [vmem:[#allocation9 + $0x10] sm:$0xff]
    %v2095 = vld [vmem:[#allocation9 + $0x18] sm:$0xff]
    %v2096 = vld [vmem:[#allocation9 + $0x20] sm:$0xff]
    %v2097 = vld [vmem:[#allocation9 + $0x28] sm:$0xff]
    %v2098 = vld [vmem:[#allocation9 + $0x30] sm:$0xff]
    %v2099 = vld [vmem:[#allocation9 + $0x38] sm:$0xff]
    %v2100 = vld [vmem:[#allocation9 + $0x40] sm:$0xff]
    %v2101 = vld [vmem:[#allocation9 + $0x48] sm:$0xff]
    %v2102 = vld [vmem:[#allocation9 + $0x50] sm:$0xff]
    %v2103 = vld [vmem:[#allocation9 + $0x58] sm:$0xff]
    %v2104 = vld [vmem:[#allocation9 + $0x60] sm:$0xff]
    %v2105 = vld [vmem:[#allocation9 + $0x68] sm:$0xff]
    %v2106 = vld [vmem:[#allocation9 + $0x70] sm:$0xff]
    %v2107 = vld [vmem:[#allocation9 + $0x78] sm:$0xff]
    %v2108 = vld [vmem:[#allocation9 + $0x80] sm:$0xff]
    %v2109 = vld [vmem:[#allocation9 + $0x88] sm:$0xff]
    %v2110 = vld [vmem:[#allocation9 + $0x90] sm:$0xff]
    %v2111 = vld [vmem:[#allocation9 + $0x98] sm:$0xff]
    %v2112 = vld [vmem:[#allocation9 + $0xa0] sm:$0xff]
    %v2113 = vld [vmem:[#allocation9 + $0xa8] sm:$0xff]
    %v2114 = vld [vmem:[#allocation9 + $0xb0] sm:$0xff]
    %v2115 = vld [vmem:[#allocation9 + $0xb8] sm:$0xff]
    %v2116 = vld [vmem:[#allocation9 + $0xc0] sm:$0xff]
    %v2117 = vld [vmem:[#allocation9 + $0xc8] sm:$0xff]
    %v2118 = vld [vmem:[#allocation9 + $0xd0] sm:$0xff]
    %v2119 = vld [vmem:[#allocation9 + $0xd8] sm:$0xff]
    %v2120 = vld [vmem:[#allocation9 + $0xe0] sm:$0xff]
    %v2121 = vld [vmem:[#allocation9 + $0xe8] sm:$0xff]
    %v2122 = vld [vmem:[#allocation9 + $0xf0] sm:$0xff]
    %v2123 = vld [vmem:[#allocation9 + $0xf8] sm:$0xff]
    %v2156 = vunpack.c.l.b16 %v2092
    %v2157 = vunpack.c.h.b16 %v2092
    %v2158 = vunpack.c.l.b16 %v2093
    %v2159 = vunpack.c.h.b16 %v2093
    %v2160 = vunpack.c.l.b16 %v2094
    %v2161 = vunpack.c.h.b16 %v2094
    %v2162 = vunpack.c.l.b16 %v2095
    %v2163 = vunpack.c.h.b16 %v2095
    %v2164 = vunpack.c.l.b16 %v2096
    %v2165 = vunpack.c.h.b16 %v2096
    %v2166 = vunpack.c.l.b16 %v2097
    %v2167 = vunpack.c.h.b16 %v2097
    %v2168 = vunpack.c.l.b16 %v2098
    %v2169 = vunpack.c.h.b16 %v2098
    %v2170 = vunpack.c.l.b16 %v2099
    %v2171 = vunpack.c.h.b16 %v2099
    %v2172 = vunpack.c.l.b16 %v2100
    %v2173 = vunpack.c.h.b16 %v2100
    %v2174 = vunpack.c.l.b16 %v2101
    %v2175 = vunpack.c.h.b16 %v2101
    %v2176 = vunpack.c.l.b16 %v2102
    %v2177 = vunpack.c.h.b16 %v2102
    %v2178 = vunpack.c.l.b16 %v2103
    %v2179 = vunpack.c.h.b16 %v2103
    %v2180 = vunpack.c.l.b16 %v2104
    %v2181 = vunpack.c.h.b16 %v2104
    %v2182 = vunpack.c.l.b16 %v2105
    %v2183 = vunpack.c.h.b16 %v2105
    %v2184 = vunpack.c.l.b16 %v2106
    %v2185 = vunpack.c.h.b16 %v2106
    %v2186 = vunpack.c.l.b16 %v2107
    %v2187 = vunpack.c.h.b16 %v2107
    %v2188 = vunpack.c.l.b16 %v2108
    %v2189 = vunpack.c.h.b16 %v2108
    %v2190 = vunpack.c.l.b16 %v2109
    %v2191 = vunpack.c.h.b16 %v2109
    %v2192 = vunpack.c.l.b16 %v2110
    %v2193 = vunpack.c.h.b16 %v2110
    %v2194 = vunpack.c.l.b16 %v2111
    %v2195 = vunpack.c.h.b16 %v2111
    %v2196 = vunpack.c.l.b16 %v2112
    %v2197 = vunpack.c.h.b16 %v2112
    %v2198 = vunpack.c.l.b16 %v2113
    %v2199 = vunpack.c.h.b16 %v2113
    %v2200 = vunpack.c.l.b16 %v2114
    %v2201 = vunpack.c.h.b16 %v2114
    %v2202 = vunpack.c.l.b16 %v2115
    %v2203 = vunpack.c.h.b16 %v2115
    %v2204 = vunpack.c.l.b16 %v2116
    %v2205 = vunpack.c.h.b16 %v2116
    %v2206 = vunpack.c.l.b16 %v2117
    %v2207 = vunpack.c.h.b16 %v2117
    %v2208 = vunpack.c.l.b16 %v2118
    %v2209 = vunpack.c.h.b16 %v2118
    %v2210 = vunpack.c.l.b16 %v2119
    %v2211 = vunpack.c.h.b16 %v2119
    %v2212 = vunpack.c.l.b16 %v2120
    %v2213 = vunpack.c.h.b16 %v2120
    %v2214 = vunpack.c.l.b16 %v2121
    %v2215 = vunpack.c.h.b16 %v2121
    %v2216 = vunpack.c.l.b16 %v2122
    %v2217 = vunpack.c.h.b16 %v2122
    %v2218 = vunpack.c.l.b16 %v2123
    %v2219 = vunpack.c.h.b16 %v2123
    %v2220 = vpack.c.b16 %v2160, %v2156
    %v2221 = vpack.c.b16 %v2161, %v2157
    %v2222 = vpack.c.b16 %v2162, %v2158
    %v2223 = vpack.c.b16 %v2163, %v2159
    %v2224 = vpack.c.b16 %v2168, %v2164
    %v2225 = vpack.c.b16 %v2169, %v2165
    %v2226 = vpack.c.b16 %v2170, %v2166
    %v2227 = vpack.c.b16 %v2171, %v2167
    %v2228 = vpack.c.b16 %v2176, %v2172
    %v2229 = vpack.c.b16 %v2177, %v2173
    %v2230 = vpack.c.b16 %v2178, %v2174
    %v2231 = vpack.c.b16 %v2179, %v2175
    %v2232 = vpack.c.b16 %v2184, %v2180
    %v2233 = vpack.c.b16 %v2185, %v2181
    %v2234 = vpack.c.b16 %v2186, %v2182
    %v2235 = vpack.c.b16 %v2187, %v2183
    %v2236 = vpack.c.b16 %v2192, %v2188
    %v2237 = vpack.c.b16 %v2193, %v2189
    %v2238 = vpack.c.b16 %v2194, %v2190
    %v2239 = vpack.c.b16 %v2195, %v2191
    %v2240 = vpack.c.b16 %v2200, %v2196
    %v2241 = vpack.c.b16 %v2201, %v2197
    %v2242 = vpack.c.b16 %v2202, %v2198
    %v2243 = vpack.c.b16 %v2203, %v2199
    %v2244 = vpack.c.b16 %v2208, %v2204
    %v2245 = vpack.c.b16 %v2209, %v2205
    %v2246 = vpack.c.b16 %v2210, %v2206
    %v2247 = vpack.c.b16 %v2211, %v2207
    %v2248 = vpack.c.b16 %v2216, %v2212
    %v2249 = vpack.c.b16 %v2217, %v2213
    %v2250 = vpack.c.b16 %v2218, %v2214
    %v2251 = vpack.c.b16 %v2219, %v2215
    %2284 = vmatprep.subr.bf16.mxu0 %v2249
    %2285 = vmatpush1.bf16.msra.mxu0 %v2248
    %2286 = vmatprep.subr.bf16.mxu0 %v2245
    %2287 = vmatpush1.bf16.msra.mxu0 %v2244
    %2288 = vmatprep.subr.bf16.mxu0 %v2241
    %2289 = vmatpush1.bf16.msra.mxu0 %v2240
    %2290 = vmatprep.subr.bf16.mxu0 %v2237
    %2291 = vmatpush1.bf16.msra.mxu0 %v2236
    %2292 = vmatprep.subr.bf16.mxu0 %v2233
    %2293 = vmatpush1.bf16.msra.mxu0 %v2232
    %2294 = vmatprep.subr.bf16.mxu0 %v2229
    %2295 = vmatpush1.bf16.msra.mxu0 %v2228
    %2296 = vmatprep.subr.bf16.mxu0 %v2225
    %2297 = vmatpush1.bf16.msra.mxu0 %v2224
    %2298 = vmatprep.subr.bf16.mxu0 %v2221
    %2299 = vmatpush1.bf16.msra.mxu0 %v2220
    %2300 = vmatprep.subr.bf16.mxu0 0
    %2301 = vmatpush2.bf16.msra.mxu0 0
    %2302 = vmatprep.subr.bf16.mxu0 0
    %2303 = vmatpush2.bf16.msra.mxu0 0
    %2304 = vmatprep.subr.bf16.mxu0 0
    %2305 = vmatpush2.bf16.msra.mxu0 0
    %2306 = vmatprep.subr.bf16.mxu0 0
    %2307 = vmatpush2.bf16.msra.mxu0 0
    %2308 = vmatprep.subr.bf16.mxu0 0
    %2309 = vmatpush2.bf16.msra.mxu0 0
    %2310 = vmatprep.subr.bf16.mxu0 0
    %2311 = vmatpush2.bf16.msra.mxu0 0
    %2312 = vmatprep.subr.bf16.mxu0 0
    %2313 = vmatpush2.bf16.msra.mxu0 0
    %2314 = vmatprep.subr.bf16.mxu0 0
    %2315 = vmatpush2.bf16.msra.mxu0 0
    %2316 = vmatprep.mubr.bf16.mxu0 0
    %2317 = vmatmul.mubr.bf16.gmra.mxu0 %v2091
    %v2318 = vpop.f32.mrf.mxu0
    %v2319 = vadd.f32 0.0, %v2318
    %v2320 = vpop.f32.mrf.mxu0
    %v2321 = vadd.f32 0.0, %v2320
    %v2322 = vpop.f32.mrf.mxu0
    %v2323 = vpop.f32.mrf.mxu0
    %2324 = vdwg.mxu0
    %2325 = vmatprep.subr.bf16.mxu0 %v2251
    %2326 = vmatpush1.bf16.msra.mxu0 %v2250
    %2327 = vmatprep.subr.bf16.mxu0 %v2247
    %2328 = vmatpush1.bf16.msra.mxu0 %v2246
    %2329 = vmatprep.subr.bf16.mxu0 %v2243
    %2330 = vmatpush1.bf16.msra.mxu0 %v2242
    %2331 = vmatprep.subr.bf16.mxu0 %v2239
    %2332 = vmatpush1.bf16.msra.mxu0 %v2238
    %2333 = vmatprep.subr.bf16.mxu0 %v2235
    %2334 = vmatpush1.bf16.msra.mxu0 %v2234
    %2335 = vmatprep.subr.bf16.mxu0 %v2231
    %2336 = vmatpush1.bf16.msra.mxu0 %v2230
    %2337 = vmatprep.subr.bf16.mxu0 %v2227
    %2338 = vmatpush1.bf16.msra.mxu0 %v2226
    %2339 = vmatprep.subr.bf16.mxu0 %v2223
    %2340 = vmatpush1.bf16.msra.mxu0 %v2222
    %2341 = vmatprep.subr.bf16.mxu0 0
    %2342 = vmatpush2.bf16.msra.mxu0 0
    %2343 = vmatprep.subr.bf16.mxu0 0
    %2344 = vmatpush2.bf16.msra.mxu0 0
    %2345 = vmatprep.subr.bf16.mxu0 0
    %2346 = vmatpush2.bf16.msra.mxu0 0
    %2347 = vmatprep.subr.bf16.mxu0 0
    %2348 = vmatpush2.bf16.msra.mxu0 0
    %2349 = vmatprep.subr.bf16.mxu0 0
    %2350 = vmatpush2.bf16.msra.mxu0 0
    %2351 = vmatprep.subr.bf16.mxu0 0
    %2352 = vmatpush2.bf16.msra.mxu0 0
    %2353 = vmatprep.subr.bf16.mxu0 0
    %2354 = vmatpush2.bf16.msra.mxu0 0
    %2355 = vmatprep.subr.bf16.mxu0 0
    %2356 = vmatpush2.bf16.msra.mxu0 0
    %2357 = vmatprep.mubr.bf16.mxu0 0
    %2358 = vmatmul.mubr.bf16.gmra.mxu0 %v2091
    %v2359 = vpop.f32.mrf.mxu0
    %v2360 = vadd.f32 0.0, %v2359
    %v2361 = vpop.f32.mrf.mxu0
    %v2362 = vadd.f32 0.0, %v2361
    %v2363 = vpop.f32.mrf.mxu0
    %v2364 = vpop.f32.mrf.mxu0
    %2365 = vdwg.mxu0
    %v2370 = vrot.slane %v2319, 6
    %v2371 = vrot.slane %v2321, 6
    %v2372 = vrot.slane %v2360, 6
    %v2373 = vrot.slane %v2362, 6
    %v2378 = vadd.f32 %v2087, %v2370
    %v2379 = vadd.f32 %v2088, %v2371
    %v2380 = vadd.f32 %v2089, %v2372
    %v2381 = vadd.f32 %v2090, %v2373
    %v2382 = vxor.u32 %v2378, 2147483648
    %v2383 = vxor.u32 %v2379, 2147483648
    %v2384 = vxor.u32 %v2380, 2147483648
    %v2385 = vmul.f32 %v2382, 1.442695
    %v2386 = vpow.pop %v2385
    %v2387 = vmul.f32 %v2383, 1.442695
    %v2388 = vpow.pop %v2387
    %v2389 = vmul.f32 %v2384, 1.442695
    %v2390 = vpow.pop %v2389
    %v2391 = vadd.f32 %v2386, 1.0
    %v2392 = vadd.f32 %v2388, 1.0
    %v2393 = vadd.f32 %v2390, 1.0
    %v2394 = vrcp.pop %v2391
    %v2395 = vmul.f32 1.0, %v2394
    %v2396 = vrcp.pop %v2392
    %v2397 = vmul.f32 1.0, %v2396
    %v2398 = vrcp.pop %v2393
    %v2399 = vmul.f32 1.0, %v2398
    %v2400 = vtanh.pop %v2381
    %v2402 = vrot.slane %v2062, 6
    %v2404 = vmul.f32 %v2397, %v2402
    %v2405 = vmul.f32 %v2395, %v2400
    %v2406 = vadd.f32 %v2404, %v2405
    %v2407 = vtanh.pop %v2406
    %v2408 = vmul.f32 %v2399, %v2407
    %2409 = vst.msk [vmem:[#allocation3 + $0x8] sm:$0xc] %vm1030, %v2408
    %2410 = vst.msk [vmem:[#allocation3 + $0x2] sm:$0xc] %vm1032, %v2408
    %v2411 = vld [vmem:[#allocation2 + $0x20] sm:$0x30]
    %v2412 = vld [vmem:[#allocation2 + $0x28] sm:$0x30]
    %v2413 = vld [vmem:[#allocation2 + $0x30] sm:$0x30]
    %v2414 = vld [vmem:[#allocation2 + $0x38] sm:$0x30]
    %v2415 = vld [vmem:[#allocation2] sm:$0xc]
    %v2416 = vld [vmem:[#allocation2 + $0x8] sm:$0xc]
    %v2417 = vld [vmem:[#allocation2 + $0x10] sm:$0xc]
    %v2418 = vld [vmem:[#allocation2 + $0x18] sm:$0xc]
    %v2423 = vrot.slane %v2415, 6
    %v2424 = vrot.slane %v2416, 6
    %v2425 = vrot.slane %v2417, 6
    %v2426 = vrot.slane %v2418, 6
    %v2431 = vsel %vm179, %v2411, %v2423
    %v2432 = vsel %vm180, %v2412, %v2424
    %v2433 = vsel %vm181, %v2413, %v2425
    %v2434 = vsel %vm182, %v2414, %v2426
    %v2435 = vpack.c.bf16 %v2408, %v2408
    %v2436 = vld [vmem:[#allocation9] sm:$0xff]
    %v2437 = vld [vmem:[#allocation9 + $0x8] sm:$0xff]
    %v2438 = vld [vmem:[#allocation9 + $0x10] sm:$0xff]
    %v2439 = vld [vmem:[#allocation9 + $0x18] sm:$0xff]
    %v2440 = vld [vmem:[#allocation9 + $0x20] sm:$0xff]
    %v2441 = vld [vmem:[#allocation9 + $0x28] sm:$0xff]
    %v2442 = vld [vmem:[#allocation9 + $0x30] sm:$0xff]
    %v2443 = vld [vmem:[#allocation9 + $0x38] sm:$0xff]
    %v2444 = vld [vmem:[#allocation9 + $0x40] sm:$0xff]
    %v2445 = vld [vmem:[#allocation9 + $0x48] sm:$0xff]
    %v2446 = vld [vmem:[#allocation9 + $0x50] sm:$0xff]
    %v2447 = vld [vmem:[#allocation9 + $0x58] sm:$0xff]
    %v2448 = vld [vmem:[#allocation9 + $0x60] sm:$0xff]
    %v2449 = vld [vmem:[#allocation9 + $0x68] sm:$0xff]
    %v2450 = vld [vmem:[#allocation9 + $0x70] sm:$0xff]
    %v2451 = vld [vmem:[#allocation9 + $0x78] sm:$0xff]
    %v2452 = vld [vmem:[#allocation9 + $0x80] sm:$0xff]
    %v2453 = vld [vmem:[#allocation9 + $0x88] sm:$0xff]
    %v2454 = vld [vmem:[#allocation9 + $0x90] sm:$0xff]
    %v2455 = vld [vmem:[#allocation9 + $0x98] sm:$0xff]
    %v2456 = vld [vmem:[#allocation9 + $0xa0] sm:$0xff]
    %v2457 = vld [vmem:[#allocation9 + $0xa8] sm:$0xff]
    %v2458 = vld [vmem:[#allocation9 + $0xb0] sm:$0xff]
    %v2459 = vld [vmem:[#allocation9 + $0xb8] sm:$0xff]
    %v2460 = vld [vmem:[#allocation9 + $0xc0] sm:$0xff]
    %v2461 = vld [vmem:[#allocation9 + $0xc8] sm:$0xff]
    %v2462 = vld [vmem:[#allocation9 + $0xd0] sm:$0xff]
    %v2463 = vld [vmem:[#allocation9 + $0xd8] sm:$0xff]
    %v2464 = vld [vmem:[#allocation9 + $0xe0] sm:$0xff]
    %v2465 = vld [vmem:[#allocation9 + $0xe8] sm:$0xff]
    %v2466 = vld [vmem:[#allocation9 + $0xf0] sm:$0xff]
    %v2467 = vld [vmem:[#allocation9 + $0xf8] sm:$0xff]
    %v2469 = vrot.slane %v2435, 1
    %v2503 = vunpack.c.l.b16 %v2436
    %v2504 = vunpack.c.h.b16 %v2436
    %v2505 = vunpack.c.l.b16 %v2437
    %v2506 = vunpack.c.h.b16 %v2437
    %v2507 = vunpack.c.l.b16 %v2438
    %v2508 = vunpack.c.h.b16 %v2438
    %v2509 = vunpack.c.l.b16 %v2439
    %v2510 = vunpack.c.h.b16 %v2439
    %v2511 = vunpack.c.l.b16 %v2440
    %v2512 = vunpack.c.h.b16 %v2440
    %v2513 = vunpack.c.l.b16 %v2441
    %v2514 = vunpack.c.h.b16 %v2441
    %v2515 = vunpack.c.l.b16 %v2442
    %v2516 = vunpack.c.h.b16 %v2442
    %v2517 = vunpack.c.l.b16 %v2443
    %v2518 = vunpack.c.h.b16 %v2443
    %v2519 = vunpack.c.l.b16 %v2444
    %v2520 = vunpack.c.h.b16 %v2444
    %v2521 = vunpack.c.l.b16 %v2445
    %v2522 = vunpack.c.h.b16 %v2445
    %v2523 = vunpack.c.l.b16 %v2446
    %v2524 = vunpack.c.h.b16 %v2446
    %v2525 = vunpack.c.l.b16 %v2447
    %v2526 = vunpack.c.h.b16 %v2447
    %v2527 = vunpack.c.l.b16 %v2448
    %v2528 = vunpack.c.h.b16 %v2448
    %v2529 = vunpack.c.l.b16 %v2449
    %v2530 = vunpack.c.h.b16 %v2449
    %v2531 = vunpack.c.l.b16 %v2450
    %v2532 = vunpack.c.h.b16 %v2450
    %v2533 = vunpack.c.l.b16 %v2451
    %v2534 = vunpack.c.h.b16 %v2451
    %v2535 = vunpack.c.l.b16 %v2452
    %v2536 = vunpack.c.h.b16 %v2452
    %v2537 = vunpack.c.l.b16 %v2453
    %v2538 = vunpack.c.h.b16 %v2453
    %v2539 = vunpack.c.l.b16 %v2454
    %v2540 = vunpack.c.h.b16 %v2454
    %v2541 = vunpack.c.l.b16 %v2455
    %v2542 = vunpack.c.h.b16 %v2455
    %v2543 = vunpack.c.l.b16 %v2456
    %v2544 = vunpack.c.h.b16 %v2456
    %v2545 = vunpack.c.l.b16 %v2457
    %v2546 = vunpack.c.h.b16 %v2457
    %v2547 = vunpack.c.l.b16 %v2458
    %v2548 = vunpack.c.h.b16 %v2458
    %v2549 = vunpack.c.l.b16 %v2459
    %v2550 = vunpack.c.h.b16 %v2459
    %v2551 = vunpack.c.l.b16 %v2460
    %v2552 = vunpack.c.h.b16 %v2460
    %v2553 = vunpack.c.l.b16 %v2461
    %v2554 = vunpack.c.h.b16 %v2461
    %v2555 = vunpack.c.l.b16 %v2462
    %v2556 = vunpack.c.h.b16 %v2462
    %v2557 = vunpack.c.l.b16 %v2463
    %v2558 = vunpack.c.h.b16 %v2463
    %v2559 = vunpack.c.l.b16 %v2464
    %v2560 = vunpack.c.h.b16 %v2464
    %v2561 = vunpack.c.l.b16 %v2465
    %v2562 = vunpack.c.h.b16 %v2465
    %v2563 = vunpack.c.l.b16 %v2466
    %v2564 = vunpack.c.h.b16 %v2466
    %v2565 = vunpack.c.l.b16 %v2467
    %v2566 = vunpack.c.h.b16 %v2467
    %v2567 = vpack.c.b16 %v2507, %v2503
    %v2568 = vpack.c.b16 %v2508, %v2504
    %v2569 = vpack.c.b16 %v2509, %v2505
    %v2570 = vpack.c.b16 %v2510, %v2506
    %v2571 = vpack.c.b16 %v2515, %v2511
    %v2572 = vpack.c.b16 %v2516, %v2512
    %v2573 = vpack.c.b16 %v2517, %v2513
    %v2574 = vpack.c.b16 %v2518, %v2514
    %v2575 = vpack.c.b16 %v2523, %v2519
    %v2576 = vpack.c.b16 %v2524, %v2520
    %v2577 = vpack.c.b16 %v2525, %v2521
    %v2578 = vpack.c.b16 %v2526, %v2522
    %v2579 = vpack.c.b16 %v2531, %v2527
    %v2580 = vpack.c.b16 %v2532, %v2528
    %v2581 = vpack.c.b16 %v2533, %v2529
    %v2582 = vpack.c.b16 %v2534, %v2530
    %v2583 = vpack.c.b16 %v2539, %v2535
    %v2584 = vpack.c.b16 %v2540, %v2536
    %v2585 = vpack.c.b16 %v2541, %v2537
    %v2586 = vpack.c.b16 %v2542, %v2538
    %v2587 = vpack.c.b16 %v2547, %v2543
    %v2588 = vpack.c.b16 %v2548, %v2544
    %v2589 = vpack.c.b16 %v2549, %v2545
    %v2590 = vpack.c.b16 %v2550, %v2546
    %v2591 = vpack.c.b16 %v2555, %v2551
    %v2592 = vpack.c.b16 %v2556, %v2552
    %v2593 = vpack.c.b16 %v2557, %v2553
    %v2594 = vpack.c.b16 %v2558, %v2554
    %v2595 = vpack.c.b16 %v2563, %v2559
    %v2596 = vpack.c.b16 %v2564, %v2560
    %v2597 = vpack.c.b16 %v2565, %v2561
    %v2598 = vpack.c.b16 %v2566, %v2562
    %2631 = vmatprep.subr.bf16.mxu0 %v2596
    %2632 = vmatpush1.bf16.msra.mxu0 %v2595
    %2633 = vmatprep.subr.bf16.mxu0 %v2592
    %2634 = vmatpush1.bf16.msra.mxu0 %v2591
    %2635 = vmatprep.subr.bf16.mxu0 %v2588
    %2636 = vmatpush1.bf16.msra.mxu0 %v2587
    %2637 = vmatprep.subr.bf16.mxu0 %v2584
    %2638 = vmatpush1.bf16.msra.mxu0 %v2583
    %2639 = vmatprep.subr.bf16.mxu0 %v2580
    %2640 = vmatpush1.bf16.msra.mxu0 %v2579
    %2641 = vmatprep.subr.bf16.mxu0 %v2576
    %2642 = vmatpush1.bf16.msra.mxu0 %v2575
    %2643 = vmatprep.subr.bf16.mxu0 %v2572
    %2644 = vmatpush1.bf16.msra.mxu0 %v2571
    %2645 = vmatprep.subr.bf16.mxu0 %v2568
    %2646 = vmatpush1.bf16.msra.mxu0 %v2567
    %2647 = vmatprep.subr.bf16.mxu0 0
    %2648 = vmatpush2.bf16.msra.mxu0 0
    %2649 = vmatprep.subr.bf16.mxu0 0
    %2650 = vmatpush2.bf16.msra.mxu0 0
    %2651 = vmatprep.subr.bf16.mxu0 0
    %2652 = vmatpush2.bf16.msra.mxu0 0
    %2653 = vmatprep.subr.bf16.mxu0 0
    %2654 = vmatpush2.bf16.msra.mxu0 0
    %2655 = vmatprep.subr.bf16.mxu0 0
    %2656 = vmatpush2.bf16.msra.mxu0 0
    %2657 = vmatprep.subr.bf16.mxu0 0
    %2658 = vmatpush2.bf16.msra.mxu0 0
    %2659 = vmatprep.subr.bf16.mxu0 0
    %2660 = vmatpush2.bf16.msra.mxu0 0
    %2661 = vmatprep.subr.bf16.mxu0 0
    %2662 = vmatpush2.bf16.msra.mxu0 0
    %2663 = vmatprep.mubr.bf16.mxu0 0
    %2664 = vmatmul.mubr.bf16.gmra.mxu0 %v2469
    %v2665 = vpop.f32.mrf.mxu0
    %v2666 = vadd.f32 0.0, %v2665
    %v2667 = vpop.f32.mrf.mxu0
    %v2668 = vadd.f32 0.0, %v2667
    %v2669 = vpop.f32.mrf.mxu0
    %v2670 = vpop.f32.mrf.mxu0
    %2671 = vdwg.mxu0
    %2672 = vmatprep.subr.bf16.mxu0 %v2598
    %2673 = vmatpush1.bf16.msra.mxu0 %v2597
    %2674 = vmatprep.subr.bf16.mxu0 %v2594
    %2675 = vmatpush1.bf16.msra.mxu0 %v2593
    %2676 = vmatprep.subr.bf16.mxu0 %v2590
    %2677 = vmatpush1.bf16.msra.mxu0 %v2589
    %2678 = vmatprep.subr.bf16.mxu0 %v2586
    %2679 = vmatpush1.bf16.msra.mxu0 %v2585
    %2680 = vmatprep.subr.bf16.mxu0 %v2582
    %2681 = vmatpush1.bf16.msra.mxu0 %v2581
    %2682 = vmatprep.subr.bf16.mxu0 %v2578
    %2683 = vmatpush1.bf16.msra.mxu0 %v2577
    %2684 = vmatprep.subr.bf16.mxu0 %v2574
    %2685 = vmatpush1.bf16.msra.mxu0 %v2573
    %2686 = vmatprep.subr.bf16.mxu0 %v2570
    %2687 = vmatpush1.bf16.msra.mxu0 %v2569
    %2688 = vmatprep.subr.bf16.mxu0 0
    %2689 = vmatpush2.bf16.msra.mxu0 0
    %2690 = vmatprep.subr.bf16.mxu0 0
    %2691 = vmatpush2.bf16.msra.mxu0 0
    %2692 = vmatprep.subr.bf16.mxu0 0
    %2693 = vmatpush2.bf16.msra.mxu0 0
    %2694 = vmatprep.subr.bf16.mxu0 0
    %2695 = vmatpush2.bf16.msra.mxu0 0
    %2696 = vmatprep.subr.bf16.mxu0 0
    %2697 = vmatpush2.bf16.msra.mxu0 0
    %2698 = vmatprep.subr.bf16.mxu0 0
    %2699 = vmatpush2.bf16.msra.mxu0 0
    %2700 = vmatprep.subr.bf16.mxu0 0
    %2701 = vmatpush2.bf16.msra.mxu0 0
    %2702 = vmatprep.subr.bf16.mxu0 0
    %2703 = vmatpush2.bf16.msra.mxu0 0
    %2704 = vmatprep.mubr.bf16.mxu0 0
    %2705 = vmatmul.mubr.bf16.gmra.mxu0 %v2469
    %v2706 = vpop.f32.mrf.mxu0
    %v2707 = vadd.f32 0.0, %v2706
    %v2708 = vpop.f32.mrf.mxu0
    %v2709 = vadd.f32 0.0, %v2708
    %v2710 = vpop.f32.mrf.mxu0
    %v2711 = vpop.f32.mrf.mxu0
    %2712 = vdwg.mxu0
    %v2717 = vrot.slane %v2666, 4
    %v2718 = vrot.slane %v2668, 4
    %v2719 = vrot.slane %v2707, 4
    %v2720 = vrot.slane %v2709, 4
    %v2725 = vadd.f32 %v2431, %v2717
    %v2726 = vadd.f32 %v2432, %v2718
    %v2727 = vadd.f32 %v2433, %v2719
    %v2728 = vadd.f32 %v2434, %v2720
    %v2729 = vxor.u32 %v2725, 2147483648
    %v2730 = vxor.u32 %v2726, 2147483648
    %v2731 = vxor.u32 %v2727, 2147483648
    %v2732 = vmul.f32 %v2729, 1.442695
    %v2733 = vpow.pop %v2732
    %v2734 = vmul.f32 %v2730, 1.442695
    %v2735 = vpow.pop %v2734
    %v2736 = vmul.f32 %v2731, 1.442695
    %v2737 = vpow.pop %v2736
    %v2738 = vadd.f32 %v2733, 1.0
    %v2739 = vadd.f32 %v2735, 1.0
    %v2740 = vadd.f32 %v2737, 1.0
    %v2741 = vrcp.pop %v2738
    %v2742 = vmul.f32 1.0, %v2741
    %v2743 = vrcp.pop %v2739
    %v2744 = vmul.f32 1.0, %v2743
    %v2745 = vrcp.pop %v2740
    %v2746 = vmul.f32 1.0, %v2745
    %v2747 = vtanh.pop %v2728
    %v2749 = vrot.slane %v2406, 6
    %v2751 = vmul.f32 %v2744, %v2749
    %v2752 = vmul.f32 %v2742, %v2747
    %v2753 = vadd.f32 %v2751, %v2752
    %v2754 = vtanh.pop %v2753
    %v2755 = vmul.f32 %v2746, %v2754
    %2756 = vst.msk [vmem:[#allocation3 + $0x8] sm:$0x30] %vm1379, %v2755
    %2757 = vst.msk [vmem:[#allocation3 - $0x2] sm:$0x30] %vm1381, %v2755
    %v2758 = vld [vmem:[#allocation2 + $0x20] sm:$0xc0]
    %v2759 = vld [vmem:[#allocation2 + $0x28] sm:$0xc0]
    %v2760 = vld [vmem:[#allocation2 + $0x30] sm:$0xc0]
    %v2761 = vld [vmem:[#allocation2 + $0x38] sm:$0xc0]
    %v2762 = vld [vmem:[#allocation2] sm:$0x3]
    %v2763 = vld [vmem:[#allocation2 + $0x8] sm:$0x3]
    %v2764 = vld [vmem:[#allocation2 + $0x10] sm:$0x3]
    %v2765 = vld [vmem:[#allocation2 + $0x18] sm:$0x3]
    %v2770 = vrot.slane %v2762, 2
    %v2771 = vrot.slane %v2763, 2
    %v2772 = vrot.slane %v2764, 2
    %v2773 = vrot.slane %v2765, 2
    %v2778 = vsel %vm179, %v2758, %v2770
    %v2779 = vsel %vm180, %v2759, %v2771
    %v2780 = vsel %vm181, %v2760, %v2772
    %v2781 = vsel %vm182, %v2761, %v2773
    %v2782 = vpack.c.bf16 %v2755, %v2755
    %v2783 = vld [vmem:[#allocation9] sm:$0xff]
    %v2784 = vld [vmem:[#allocation9 + $0x8] sm:$0xff]
    %v2785 = vld [vmem:[#allocation9 + $0x10] sm:$0xff]
    %v2786 = vld [vmem:[#allocation9 + $0x18] sm:$0xff]
    %v2787 = vld [vmem:[#allocation9 + $0x20] sm:$0xff]
    %v2788 = vld [vmem:[#allocation9 + $0x28] sm:$0xff]
    %v2789 = vld [vmem:[#allocation9 + $0x30] sm:$0xff]
    %v2790 = vld [vmem:[#allocation9 + $0x38] sm:$0xff]
    %v2791 = vld [vmem:[#allocation9 + $0x40] sm:$0xff]
    %v2792 = vld [vmem:[#allocation9 + $0x48] sm:$0xff]
    %v2793 = vld [vmem:[#allocation9 + $0x50] sm:$0xff]
    %v2794 = vld [vmem:[#allocation9 + $0x58] sm:$0xff]
    %v2795 = vld [vmem:[#allocation9 + $0x60] sm:$0xff]
    %v2796 = vld [vmem:[#allocation9 + $0x68] sm:$0xff]
    %v2797 = vld [vmem:[#allocation9 + $0x70] sm:$0xff]
    %v2798 = vld [vmem:[#allocation9 + $0x78] sm:$0xff]
    %v2799 = vld [vmem:[#allocation9 + $0x80] sm:$0xff]
    %v2800 = vld [vmem:[#allocation9 + $0x88] sm:$0xff]
    %v2801 = vld [vmem:[#allocation9 + $0x90] sm:$0xff]
    %v2802 = vld [vmem:[#allocation9 + $0x98] sm:$0xff]
    %v2803 = vld [vmem:[#allocation9 + $0xa0] sm:$0xff]
    %v2804 = vld [vmem:[#allocation9 + $0xa8] sm:$0xff]
    %v2805 = vld [vmem:[#allocation9 + $0xb0] sm:$0xff]
    %v2806 = vld [vmem:[#allocation9 + $0xb8] sm:$0xff]
    %v2807 = vld [vmem:[#allocation9 + $0xc0] sm:$0xff]
    %v2808 = vld [vmem:[#allocation9 + $0xc8] sm:$0xff]
    %v2809 = vld [vmem:[#allocation9 + $0xd0] sm:$0xff]
    %v2810 = vld [vmem:[#allocation9 + $0xd8] sm:$0xff]
    %v2811 = vld [vmem:[#allocation9 + $0xe0] sm:$0xff]
    %v2812 = vld [vmem:[#allocation9 + $0xe8] sm:$0xff]
    %v2813 = vld [vmem:[#allocation9 + $0xf0] sm:$0xff]
    %v2814 = vld [vmem:[#allocation9 + $0xf8] sm:$0xff]
    %v2816 = vrot.slane %v2782, 2
    %v2850 = vunpack.c.l.b16 %v2783
    %v2851 = vunpack.c.h.b16 %v2783
    %v2852 = vunpack.c.l.b16 %v2784
    %v2853 = vunpack.c.h.b16 %v2784
    %v2854 = vunpack.c.l.b16 %v2785
    %v2855 = vunpack.c.h.b16 %v2785
    %v2856 = vunpack.c.l.b16 %v2786
    %v2857 = vunpack.c.h.b16 %v2786
    %v2858 = vunpack.c.l.b16 %v2787
    %v2859 = vunpack.c.h.b16 %v2787
    %v2860 = vunpack.c.l.b16 %v2788
    %v2861 = vunpack.c.h.b16 %v2788
    %v2862 = vunpack.c.l.b16 %v2789
    %v2863 = vunpack.c.h.b16 %v2789
    %v2864 = vunpack.c.l.b16 %v2790
    %v2865 = vunpack.c.h.b16 %v2790
    %v2866 = vunpack.c.l.b16 %v2791
    %v2867 = vunpack.c.h.b16 %v2791
    %v2868 = vunpack.c.l.b16 %v2792
    %v2869 = vunpack.c.h.b16 %v2792
    %v2870 = vunpack.c.l.b16 %v2793
    %v2871 = vunpack.c.h.b16 %v2793
    %v2872 = vunpack.c.l.b16 %v2794
    %v2873 = vunpack.c.h.b16 %v2794
    %v2874 = vunpack.c.l.b16 %v2795
    %v2875 = vunpack.c.h.b16 %v2795
    %v2876 = vunpack.c.l.b16 %v2796
    %v2877 = vunpack.c.h.b16 %v2796
    %v2878 = vunpack.c.l.b16 %v2797
    %v2879 = vunpack.c.h.b16 %v2797
    %v2880 = vunpack.c.l.b16 %v2798
    %v2881 = vunpack.c.h.b16 %v2798
    %v2882 = vunpack.c.l.b16 %v2799
    %v2883 = vunpack.c.h.b16 %v2799
    %v2884 = vunpack.c.l.b16 %v2800
    %v2885 = vunpack.c.h.b16 %v2800
    %v2886 = vunpack.c.l.b16 %v2801
    %v2887 = vunpack.c.h.b16 %v2801
    %v2888 = vunpack.c.l.b16 %v2802
    %v2889 = vunpack.c.h.b16 %v2802
    %v2890 = vunpack.c.l.b16 %v2803
    %v2891 = vunpack.c.h.b16 %v2803
    %v2892 = vunpack.c.l.b16 %v2804
    %v2893 = vunpack.c.h.b16 %v2804
    %v2894 = vunpack.c.l.b16 %v2805
    %v2895 = vunpack.c.h.b16 %v2805
    %v2896 = vunpack.c.l.b16 %v2806
    %v2897 = vunpack.c.h.b16 %v2806
    %v2898 = vunpack.c.l.b16 %v2807
    %v2899 = vunpack.c.h.b16 %v2807
    %v2900 = vunpack.c.l.b16 %v2808
    %v2901 = vunpack.c.h.b16 %v2808
    %v2902 = vunpack.c.l.b16 %v2809
    %v2903 = vunpack.c.h.b16 %v2809
    %v2904 = vunpack.c.l.b16 %v2810
    %v2905 = vunpack.c.h.b16 %v2810
    %v2906 = vunpack.c.l.b16 %v2811
    %v2907 = vunpack.c.h.b16 %v2811
    %v2908 = vunpack.c.l.b16 %v2812
    %v2909 = vunpack.c.h.b16 %v2812
    %v2910 = vunpack.c.l.b16 %v2813
    %v2911 = vunpack.c.h.b16 %v2813
    %v2912 = vunpack.c.l.b16 %v2814
    %v2913 = vunpack.c.h.b16 %v2814
    %v2914 = vpack.c.b16 %v2854, %v2850
    %v2915 = vpack.c.b16 %v2855, %v2851
    %v2916 = vpack.c.b16 %v2856, %v2852
    %v2917 = vpack.c.b16 %v2857, %v2853
    %v2918 = vpack.c.b16 %v2862, %v2858
    %v2919 = vpack.c.b16 %v2863, %v2859
    %v2920 = vpack.c.b16 %v2864, %v2860
    %v2921 = vpack.c.b16 %v2865, %v2861
    %v2922 = vpack.c.b16 %v2870, %v2866
    %v2923 = vpack.c.b16 %v2871, %v2867
    %v2924 = vpack.c.b16 %v2872, %v2868
    %v2925 = vpack.c.b16 %v2873, %v2869
    %v2926 = vpack.c.b16 %v2878, %v2874
    %v2927 = vpack.c.b16 %v2879, %v2875
    %v2928 = vpack.c.b16 %v2880, %v2876
    %v2929 = vpack.c.b16 %v2881, %v2877
    %v2930 = vpack.c.b16 %v2886, %v2882
    %v2931 = vpack.c.b16 %v2887, %v2883
    %v2932 = vpack.c.b16 %v2888, %v2884
    %v2933 = vpack.c.b16 %v2889, %v2885
    %v2934 = vpack.c.b16 %v2894, %v2890
    %v2935 = vpack.c.b16 %v2895, %v2891
    %v2936 = vpack.c.b16 %v2896, %v2892
    %v2937 = vpack.c.b16 %v2897, %v2893
    %v2938 = vpack.c.b16 %v2902, %v2898
    %v2939 = vpack.c.b16 %v2903, %v2899
    %v2940 = vpack.c.b16 %v2904, %v2900
    %v2941 = vpack.c.b16 %v2905, %v2901
    %v2942 = vpack.c.b16 %v2910, %v2906
    %v2943 = vpack.c.b16 %v2911, %v2907
    %v2944 = vpack.c.b16 %v2912, %v2908
    %v2945 = vpack.c.b16 %v2913, %v2909
    %2978 = vmatprep.subr.bf16.mxu0 %v2943
    %2979 = vmatpush1.bf16.msra.mxu0 %v2942
    %2980 = vmatprep.subr.bf16.mxu0 %v2939
    %2981 = vmatpush1.bf16.msra.mxu0 %v2938
    %2982 = vmatprep.subr.bf16.mxu0 %v2935
    %2983 = vmatpush1.bf16.msra.mxu0 %v2934
    %2984 = vmatprep.subr.bf16.mxu0 %v2931
    %2985 = vmatpush1.bf16.msra.mxu0 %v2930
    %2986 = vmatprep.subr.bf16.mxu0 %v2927
    %2987 = vmatpush1.bf16.msra.mxu0 %v2926
    %2988 = vmatprep.subr.bf16.mxu0 %v2923
    %2989 = vmatpush1.bf16.msra.mxu0 %v2922
    %2990 = vmatprep.subr.bf16.mxu0 %v2919
    %2991 = vmatpush1.bf16.msra.mxu0 %v2918
    %2992 = vmatprep.subr.bf16.mxu0 %v2915
    %2993 = vmatpush1.bf16.msra.mxu0 %v2914
    %2994 = vmatprep.subr.bf16.mxu0 0
    %2995 = vmatpush2.bf16.msra.mxu0 0
    %2996 = vmatprep.subr.bf16.mxu0 0
    %2997 = vmatpush2.bf16.msra.mxu0 0
    %2998 = vmatprep.subr.bf16.mxu0 0
    %2999 = vmatpush2.bf16.msra.mxu0 0
    %3000 = vmatprep.subr.bf16.mxu0 0
    %3001 = vmatpush2.bf16.msra.mxu0 0
    %3002 = vmatprep.subr.bf16.mxu0 0
    %3003 = vmatpush2.bf16.msra.mxu0 0
    %3004 = vmatprep.subr.bf16.mxu0 0
    %3005 = vmatpush2.bf16.msra.mxu0 0
    %3006 = vmatprep.subr.bf16.mxu0 0
    %3007 = vmatpush2.bf16.msra.mxu0 0
    %3008 = vmatprep.subr.bf16.mxu0 0
    %3009 = vmatpush2.bf16.msra.mxu0 0
    %3010 = vmatprep.mubr.bf16.mxu0 0
    %3011 = vmatmul.mubr.bf16.gmra.mxu0 %v2816
    %v3012 = vpop.f32.mrf.mxu0
    %v3013 = vadd.f32 0.0, %v3012
    %v3014 = vpop.f32.mrf.mxu0
    %v3015 = vadd.f32 0.0, %v3014
    %v3016 = vpop.f32.mrf.mxu0
    %v3017 = vpop.f32.mrf.mxu0
    %3018 = vdwg.mxu0
    %3019 = vmatprep.subr.bf16.mxu0 %v2945
    %3020 = vmatpush1.bf16.msra.mxu0 %v2944
    %3021 = vmatprep.subr.bf16.mxu0 %v2941
    %3022 = vmatpush1.bf16.msra.mxu0 %v2940
    %3023 = vmatprep.subr.bf16.mxu0 %v2937
    %3024 = vmatpush1.bf16.msra.mxu0 %v2936
    %3025 = vmatprep.subr.bf16.mxu0 %v2933
    %3026 = vmatpush1.bf16.msra.mxu0 %v2932
    %3027 = vmatprep.subr.bf16.mxu0 %v2929
    %3028 = vmatpush1.bf16.msra.mxu0 %v2928
    %3029 = vmatprep.subr.bf16.mxu0 %v2925
    %3030 = vmatpush1.bf16.msra.mxu0 %v2924
    %3031 = vmatprep.subr.bf16.mxu0 %v2921
    %3032 = vmatpush1.bf16.msra.mxu0 %v2920
    %3033 = vmatprep.subr.bf16.mxu0 %v2917
    %3034 = vmatpush1.bf16.msra.mxu0 %v2916
    %3035 = vmatprep.subr.bf16.mxu0 0
    %3036 = vmatpush2.bf16.msra.mxu0 0
    %3037 = vmatprep.subr.bf16.mxu0 0
    %3038 = vmatpush2.bf16.msra.mxu0 0
    %3039 = vmatprep.subr.bf16.mxu0 0
    %3040 = vmatpush2.bf16.msra.mxu0 0
    %3041 = vmatprep.subr.bf16.mxu0 0
    %3042 = vmatpush2.bf16.msra.mxu0 0
    %3043 = vmatprep.subr.bf16.mxu0 0
    %3044 = vmatpush2.bf16.msra.mxu0 0
    %3045 = vmatprep.subr.bf16.mxu0 0
    %3046 = vmatpush2.bf16.msra.mxu0 0
    %3047 = vmatprep.subr.bf16.mxu0 0
    %3048 = vmatpush2.bf16.msra.mxu0 0
    %3049 = vmatprep.subr.bf16.mxu0 0
    %3050 = vmatpush2.bf16.msra.mxu0 0
    %3051 = vmatprep.mubr.bf16.mxu0 0
    %3052 = vmatmul.mubr.bf16.gmra.mxu0 %v2816
    %v3053 = vpop.f32.mrf.mxu0
    %v3054 = vadd.f32 0.0, %v3053
    %v3055 = vpop.f32.mrf.mxu0
    %v3056 = vadd.f32 0.0, %v3055
    %v3057 = vpop.f32.mrf.mxu0
    %v3058 = vpop.f32.mrf.mxu0
    %3059 = vdwg.mxu0
    %v3064 = vrot.slane %v3013, 2
    %v3065 = vrot.slane %v3015, 2
    %v3066 = vrot.slane %v3054, 2
    %v3067 = vrot.slane %v3056, 2
    %v3072 = vadd.f32 %v2778, %v3064
    %v3073 = vadd.f32 %v2779, %v3065
    %v3074 = vadd.f32 %v2780, %v3066
    %v3075 = vadd.f32 %v2781, %v3067
    %v3076 = vxor.u32 %v3072, 2147483648
    %v3077 = vxor.u32 %v3073, 2147483648
    %v3078 = vxor.u32 %v3074, 2147483648
    %v3079 = vmul.f32 %v3076, 1.442695
    %v3080 = vpow.pop %v3079
    %v3081 = vmul.f32 %v3077, 1.442695
    %v3082 = vpow.pop %v3081
    %v3083 = vmul.f32 %v3078, 1.442695
    %v3084 = vpow.pop %v3083
    %v3085 = vadd.f32 %v3080, 1.0
    %v3086 = vadd.f32 %v3082, 1.0
    %v3087 = vadd.f32 %v3084, 1.0
    %v3088 = vrcp.pop %v3085
    %v3089 = vmul.f32 1.0, %v3088
    %v3090 = vrcp.pop %v3086
    %v3091 = vmul.f32 1.0, %v3090
    %v3092 = vrcp.pop %v3087
    %v3093 = vmul.f32 1.0, %v3092
    %v3094 = vtanh.pop %v3075
    %v3096 = vrot.slane %v2753, 6
    %v3098 = vmul.f32 %v3091, %v3096
    %v3099 = vmul.f32 %v3089, %v3094
    %v3100 = vadd.f32 %v3098, %v3099
    %v3101 = vtanh.pop %v3100
    %v3102 = vmul.f32 %v3093, %v3101
    %3103 = vst.msk [vmem:[#allocation3 + $0x8] sm:$0xc0] %vm1728, %v3102
    %3104 = vst.msk [vmem:[#allocation3 - $0x6] sm:$0xc0] %vm1730, %v3102
    %v3105 = vld [vmem:[#allocation3] sm:$0xff]
    %v3106 = vld [vmem:[#allocation3 + $0x8] sm:$0xff]
    %v3107 = vpack.c.bf16 %v3106, %v3105
    %v3108 = vld [vmem:[#allocation11] sm:$0xff]
    %v3109 = vld [vmem:[#allocation11 + $0x8] sm:$0xf]
    %v3110 = vld [vmem:[#allocation11 + $0xc] sm:$0xff]
    %v3111 = vld [vmem:[#allocation11 + $0x14] sm:$0xf]
    %v3112 = vld [vmem:[#allocation11 + $0x18] sm:$0xff]
    %v3113 = vld [vmem:[#allocation11 + $0x20] sm:$0xf]
    %v3114 = vld [vmem:[#allocation11 + $0x24] sm:$0xff]
    %v3115 = vld [vmem:[#allocation11 + $0x2c] sm:$0xf]
    %v3116 = vld [vmem:[#allocation11 + $0x30] sm:$0xff]
    %v3117 = vld [vmem:[#allocation11 + $0x38] sm:$0xf]
    %v3118 = vld [vmem:[#allocation11 + $0x3c] sm:$0xff]
    %v3119 = vld [vmem:[#allocation11 + $0x44] sm:$0xf]
    %v3120 = vld [vmem:[#allocation11 + $0x48] sm:$0xff]
    %v3121 = vld [vmem:[#allocation11 + $0x50] sm:$0xf]
    %v3122 = vld [vmem:[#allocation11 + $0x54] sm:$0xff]
    %v3123 = vld [vmem:[#allocation11 + $0x5c] sm:$0xf]
    %v3124 = vld [vmem:[#allocation11 + $0x60] sm:$0xff]
    %v3125 = vld [vmem:[#allocation11 + $0x68] sm:$0xf]
    %v3126 = vld [vmem:[#allocation11 + $0x6c] sm:$0xff]
    %v3127 = vld [vmem:[#allocation11 + $0x74] sm:$0xf]
    %v3128 = vld [vmem:[#allocation11 + $0x78] sm:$0xff]
    %v3129 = vld [vmem:[#allocation11 + $0x80] sm:$0xf]
    %v3130 = vld [vmem:[#allocation11 + $0x84] sm:$0xff]
    %v3131 = vld [vmem:[#allocation11 + $0x8c] sm:$0xf]
    %v3132 = vld [vmem:[#allocation11 + $0x90] sm:$0xff]
    %v3133 = vld [vmem:[#allocation11 + $0x98] sm:$0xf]
    %v3134 = vld [vmem:[#allocation11 + $0x9c] sm:$0xff]
    %v3135 = vld [vmem:[#allocation11 + $0xa4] sm:$0xf]
    %v3136 = vld [vmem:[#allocation11 + $0xa8] sm:$0xff]
    %v3137 = vld [vmem:[#allocation11 + $0xb0] sm:$0xf]
    %v3138 = vld [vmem:[#allocation11 + $0xb4] sm:$0xff]
    %v3139 = vld [vmem:[#allocation11 + $0xbc] sm:$0xf]
    %v3140 = vld [vmem:[%s7] sm:$0x7]
    %v3142 = vlaneseq
    %v3143 = vshrl.u32 %v3142, 7
    %v3144 = vsub.s32 0, %v3143
    %v3145 = vrot.slane %v3140, %v3144
    %v3146 = vlaneseq
    %v3147 = vshrl.u32 %v3146, 7
    %v3148 = vsub.s32 1, %v3147
    %v3149 = vrot.slane %v3140, %v3148
    %v3150 = vlaneseq
    %v3151 = vshrl.u32 %v3150, 7
    %v3152 = vsub.s32 2, %v3151
    %v3153 = vrot.slane %v3140, %v3152
    %v3189 = vunpack.c.l.b16 %v3108
    %v3190 = vunpack.c.h.b16 %v3108
    %v3191 = vunpack.c.l.b16 %v3109
    %v3192 = vunpack.c.l.b16 %v3110
    %v3193 = vunpack.c.h.b16 %v3110
    %v3194 = vunpack.c.l.b16 %v3111
    %v3195 = vunpack.c.l.b16 %v3112
    %v3196 = vunpack.c.h.b16 %v3112
    %v3197 = vunpack.c.l.b16 %v3113
    %v3198 = vunpack.c.l.b16 %v3114
    %v3199 = vunpack.c.h.b16 %v3114
    %v3200 = vunpack.c.l.b16 %v3115
    %v3201 = vunpack.c.l.b16 %v3116
    %v3202 = vunpack.c.h.b16 %v3116
    %v3203 = vunpack.c.l.b16 %v3117
    %v3204 = vunpack.c.l.b16 %v3118
    %v3205 = vunpack.c.h.b16 %v3118
    %v3206 = vunpack.c.l.b16 %v3119
    %v3207 = vunpack.c.l.b16 %v3120
    %v3208 = vunpack.c.h.b16 %v3120
    %v3209 = vunpack.c.l.b16 %v3121
    %v3210 = vunpack.c.l.b16 %v3122
    %v3211 = vunpack.c.h.b16 %v3122
    %v3212 = vunpack.c.l.b16 %v3123
    %v3213 = vunpack.c.l.b16 %v3124
    %v3214 = vunpack.c.h.b16 %v3124
    %v3215 = vunpack.c.l.b16 %v3125
    %v3216 = vunpack.c.l.b16 %v3126
    %v3217 = vunpack.c.h.b16 %v3126
    %v3218 = vunpack.c.l.b16 %v3127
    %v3219 = vunpack.c.l.b16 %v3128
    %v3220 = vunpack.c.h.b16 %v3128
    %v3221 = vunpack.c.l.b16 %v3129
    %v3222 = vunpack.c.l.b16 %v3130
    %v3223 = vunpack.c.h.b16 %v3130
    %v3224 = vunpack.c.l.b16 %v3131
    %v3225 = vunpack.c.l.b16 %v3132
    %v3226 = vunpack.c.h.b16 %v3132
    %v3227 = vunpack.c.l.b16 %v3133
    %v3228 = vunpack.c.l.b16 %v3134
    %v3229 = vunpack.c.h.b16 %v3134
    %v3230 = vunpack.c.l.b16 %v3135
    %v3231 = vunpack.c.l.b16 %v3136
    %v3232 = vunpack.c.h.b16 %v3136
    %v3233 = vunpack.c.l.b16 %v3137
    %v3234 = vunpack.c.l.b16 %v3138
    %v3235 = vunpack.c.h.b16 %v3138
    %v3236 = vunpack.c.l.b16 %v3139
    %v3237 = vpack.c.b16 %v3192, %v3189
    %v3238 = vpack.c.b16 %v3193, %v3190
    %v3239 = vpack.c.b16 %v3194, %v3191
    %v3240 = vpack.c.b16 %v3198, %v3195
    %v3241 = vpack.c.b16 %v3199, %v3196
    %v3242 = vpack.c.b16 %v3200, %v3197
    %v3243 = vpack.c.b16 %v3204, %v3201
    %v3244 = vpack.c.b16 %v3205, %v3202
    %v3245 = vpack.c.b16 %v3206, %v3203
    %v3246 = vpack.c.b16 %v3210, %v3207
    %v3247 = vpack.c.b16 %v3211, %v3208
    %v3248 = vpack.c.b16 %v3212, %v3209
    %v3249 = vpack.c.b16 %v3216, %v3213
    %v3250 = vpack.c.b16 %v3217, %v3214
    %v3251 = vpack.c.b16 %v3218, %v3215
    %v3252 = vpack.c.b16 %v3222, %v3219
    %v3253 = vpack.c.b16 %v3223, %v3220
    %v3254 = vpack.c.b16 %v3224, %v3221
    %v3255 = vpack.c.b16 %v3228, %v3225
    %v3256 = vpack.c.b16 %v3229, %v3226
    %v3257 = vpack.c.b16 %v3230, %v3227
    %v3258 = vpack.c.b16 %v3234, %v3231
    %v3259 = vpack.c.b16 %v3235, %v3232
    %v3260 = vpack.c.b16 %v3236, %v3233
    %3285 = vmatprep.subr.bf16.mxu0 %v3259
    %3286 = vmatpush1.bf16.msra.mxu0 %v3258
    %3287 = vmatprep.subr.bf16.mxu0 %v3256
    %3288 = vmatpush1.bf16.msra.mxu0 %v3255
    %3289 = vmatprep.subr.bf16.mxu0 %v3253
    %3290 = vmatpush1.bf16.msra.mxu0 %v3252
    %3291 = vmatprep.subr.bf16.mxu0 %v3250
    %3292 = vmatpush1.bf16.msra.mxu0 %v3249
    %3293 = vmatprep.subr.bf16.mxu0 %v3247
    %3294 = vmatpush1.bf16.msra.mxu0 %v3246
    %3295 = vmatprep.subr.bf16.mxu0 %v3244
    %3296 = vmatpush1.bf16.msra.mxu0 %v3243
    %3297 = vmatprep.subr.bf16.mxu0 %v3241
    %3298 = vmatpush1.bf16.msra.mxu0 %v3240
    %3299 = vmatprep.subr.bf16.mxu0 %v3238
    %3300 = vmatpush1.bf16.msra.mxu0 %v3237
    %3301 = vmatprep.subr.bf16.mxu0 0
    %3302 = vmatpush2.bf16.msra.mxu0 0
    %3303 = vmatprep.subr.bf16.mxu0 0
    %3304 = vmatpush2.bf16.msra.mxu0 0
    %3305 = vmatprep.subr.bf16.mxu0 0
    %3306 = vmatpush2.bf16.msra.mxu0 0
    %3307 = vmatprep.subr.bf16.mxu0 0
    %3308 = vmatpush2.bf16.msra.mxu0 0
    %3309 = vmatprep.subr.bf16.mxu0 0
    %3310 = vmatpush2.bf16.msra.mxu0 0
    %3311 = vmatprep.subr.bf16.mxu0 0
    %3312 = vmatpush2.bf16.msra.mxu0 0
    %3313 = vmatprep.subr.bf16.mxu0 0
    %3314 = vmatpush2.bf16.msra.mxu0 0
    %3315 = vmatprep.subr.bf16.mxu0 0
    %3316 = vmatpush2.bf16.msra.mxu0 0
    %3317 = vmatprep.mubr.bf16.mxu0 0
    %3318 = vmatmul.mubr.bf16.gmra.mxu0 %v3107
    %v3319 = vpop.f32.mrf.mxu0
    %v3320 = vadd.f32 %v3145, %v3319
    %v3321 = vpop.f32.mrf.mxu0
    %v3322 = vadd.f32 %v3149, %v3321
    %v3323 = vpop.f32.mrf.mxu0
    %v3324 = vadd.f32 %v3145, %v3323
    %v3325 = vpop.f32.mrf.mxu0
    %v3326 = vadd.f32 %v3149, %v3325
    %3327 = vdwg.mxu0
    %3328 = vmatprep.subr.bf16.mxu0 0
    %3329 = vmatpush1.bf16.msra.mxu0 %v3260
    %3330 = vmatprep.subr.bf16.mxu0 0
    %3331 = vmatpush1.bf16.msra.mxu0 %v3257
    %3332 = vmatprep.subr.bf16.mxu0 0
    %3333 = vmatpush1.bf16.msra.mxu0 %v3254
    %3334 = vmatprep.subr.bf16.mxu0 0
    %3335 = vmatpush1.bf16.msra.mxu0 %v3251
    %3336 = vmatprep.subr.bf16.mxu0 0
    %3337 = vmatpush1.bf16.msra.mxu0 %v3248
    %3338 = vmatprep.subr.bf16.mxu0 0
    %3339 = vmatpush1.bf16.msra.mxu0 %v3245
    %3340 = vmatprep.subr.bf16.mxu0 0
    %3341 = vmatpush1.bf16.msra.mxu0 %v3242
    %3342 = vmatprep.subr.bf16.mxu0 0
    %3343 = vmatpush1.bf16.msra.mxu0 %v3239
    %3344 = vmatprep.subr.bf16.mxu0 0
    %3345 = vmatpush2.bf16.msra.mxu0 0
    %3346 = vmatprep.subr.bf16.mxu0 0
    %3347 = vmatpush2.bf16.msra.mxu0 0
    %3348 = vmatprep.subr.bf16.mxu0 0
    %3349 = vmatpush2.bf16.msra.mxu0 0
    %3350 = vmatprep.subr.bf16.mxu0 0
    %3351 = vmatpush2.bf16.msra.mxu0 0
    %3352 = vmatprep.subr.bf16.mxu0 0
    %3353 = vmatpush2.bf16.msra.mxu0 0
    %3354 = vmatprep.subr.bf16.mxu0 0
    %3355 = vmatpush2.bf16.msra.mxu0 0
    %3356 = vmatprep.subr.bf16.mxu0 0
    %3357 = vmatpush2.bf16.msra.mxu0 0
    %3358 = vmatprep.subr.bf16.mxu0 0
    %3359 = vmatpush2.bf16.msra.mxu0 0
    %3360 = vmatprep.mubr.bf16.mxu0 0
    %3361 = vmatmul.mubr.bf16.gmra.mxu0 %v3107
    %v3362 = vpop.f32.mrf.mxu0
    %v3363 = vadd.f32 %v3153, %v3362
    %v3364 = vpop.f32.mrf.mxu0
    %v3365 = vpop.f32.mrf.mxu0
    %v3366 = vadd.f32 %v3153, %v3365
    %v3367 = vpop.f32.mrf.mxu0
    %3368 = vdwg.mxu0
    %3369 = vst [vmem:[#allocation4] sm:$0xff] %v3320
    %3370 = vst [vmem:[#allocation4 + $0x8] sm:$0xff] %v3322
    %3371 = vst [vmem:[#allocation4 + $0x10] sm:$0xff] %v3363
    %3372 = vst [vmem:[#allocation4 + $0x18] sm:$0xff] %v3324
    %3373 = vst [vmem:[#allocation4 + $0x20] sm:$0xff] %v3326
    %3374 = vst [vmem:[#allocation4 + $0x28] sm:$0xff] %v3366
    %v3375 = vld [vmem:[#allocation4] sm:$0x3]
    %v3376 = vld [vmem:[#allocation4 + $0x8] sm:$0x3]
    %v3377 = vld [vmem:[#allocation4 + $0x10] sm:$0x3]
    %v3378 = vld [vmem:[#allocation4 + $0x18] sm:$0xc0]
    %v3379 = vld [vmem:[#allocation4 + $0x20] sm:$0xc0]
    %v3380 = vld [vmem:[#allocation4 + $0x28] sm:$0xc0]
    %v3384 = vrot.slane %v3378, 6
    %v3385 = vrot.slane %v3379, 6
    %v3386 = vrot.slane %v3380, 6
    %v3390 = vsel %vm179, %v3375, %v3384
    %v3391 = vsel %vm180, %v3376, %v3385
    %v3392 = vsel %vm181, %v3377, %v3386
    %v3393 = vld [vmem:[#allocation12] sm:$0xff]
    %v3394 = vld [vmem:[#allocation12 + $0x8] sm:$0xf]
    %v3395 = vld [vmem:[#allocation12 + $0xc] sm:$0xff]
    %v3396 = vld [vmem:[#allocation12 + $0x14] sm:$0xf]
    %v3397 = vld [vmem:[#allocation12 + $0x18] sm:$0xff]
    %v3398 = vld [vmem:[#allocation12 + $0x20] sm:$0xf]
    %v3399 = vld [vmem:[#allocation12 + $0x24] sm:$0xff]
    %v3400 = vld [vmem:[#allocation12 + $0x2c] sm:$0xf]
    %v3401 = vld [vmem:[#allocation12 + $0x30] sm:$0xff]
    %v3402 = vld [vmem:[#allocation12 + $0x38] sm:$0xf]
    %v3403 = vld [vmem:[#allocation12 + $0x3c] sm:$0xff]
    %v3404 = vld [vmem:[#allocation12 + $0x44] sm:$0xf]
    %v3405 = vld [vmem:[#allocation12 + $0x48] sm:$0xff]
    %v3406 = vld [vmem:[#allocation12 + $0x50] sm:$0xf]
    %v3407 = vld [vmem:[#allocation12 + $0x54] sm:$0xff]
    %v3408 = vld [vmem:[#allocation12 + $0x5c] sm:$0xf]
    %v3409 = vld [vmem:[#allocation12 + $0x60] sm:$0xff]
    %v3410 = vld [vmem:[#allocation12 + $0x68] sm:$0xf]
    %v3411 = vld [vmem:[#allocation12 + $0x6c] sm:$0xff]
    %v3412 = vld [vmem:[#allocation12 + $0x74] sm:$0xf]
    %v3413 = vld [vmem:[#allocation12 + $0x78] sm:$0xff]
    %v3414 = vld [vmem:[#allocation12 + $0x80] sm:$0xf]
    %v3415 = vld [vmem:[#allocation12 + $0x84] sm:$0xff]
    %v3416 = vld [vmem:[#allocation12 + $0x8c] sm:$0xf]
    %v3417 = vld [vmem:[#allocation12 + $0x90] sm:$0xff]
    %v3418 = vld [vmem:[#allocation12 + $0x98] sm:$0xf]
    %v3419 = vld [vmem:[#allocation12 + $0x9c] sm:$0xff]
    %v3420 = vld [vmem:[#allocation12 + $0xa4] sm:$0xf]
    %v3421 = vld [vmem:[#allocation12 + $0xa8] sm:$0xff]
    %v3422 = vld [vmem:[#allocation12 + $0xb0] sm:$0xf]
    %v3423 = vld [vmem:[#allocation12 + $0xb4] sm:$0xff]
    %v3424 = vld [vmem:[#allocation12 + $0xbc] sm:$0xf]
    %v3425 = vld [vmem:[%s8] sm:$0x7]
    %v3427 = vlaneseq
    %v3428 = vshrl.u32 %v3427, 7
    %v3429 = vsub.s32 0, %v3428
    %v3430 = vrot.slane %v3425, %v3429
    %v3431 = vlaneseq
    %v3432 = vshrl.u32 %v3431, 7
    %v3433 = vsub.s32 1, %v3432
    %v3434 = vrot.slane %v3425, %v3433
    %v3435 = vlaneseq
    %v3436 = vshrl.u32 %v3435, 7
    %v3437 = vsub.s32 2, %v3436
    %v3438 = vrot.slane %v3425, %v3437
    %v3474 = vunpack.c.l.b16 %v3393
    %v3475 = vunpack.c.h.b16 %v3393
    %v3476 = vunpack.c.l.b16 %v3394
    %v3477 = vunpack.c.l.b16 %v3395
    %v3478 = vunpack.c.h.b16 %v3395
    %v3479 = vunpack.c.l.b16 %v3396
    %v3480 = vunpack.c.l.b16 %v3397
    %v3481 = vunpack.c.h.b16 %v3397
    %v3482 = vunpack.c.l.b16 %v3398
    %v3483 = vunpack.c.l.b16 %v3399
    %v3484 = vunpack.c.h.b16 %v3399
    %v3485 = vunpack.c.l.b16 %v3400
    %v3486 = vunpack.c.l.b16 %v3401
    %v3487 = vunpack.c.h.b16 %v3401
    %v3488 = vunpack.c.l.b16 %v3402
    %v3489 = vunpack.c.l.b16 %v3403
    %v3490 = vunpack.c.h.b16 %v3403
    %v3491 = vunpack.c.l.b16 %v3404
    %v3492 = vunpack.c.l.b16 %v3405
    %v3493 = vunpack.c.h.b16 %v3405
    %v3494 = vunpack.c.l.b16 %v3406
    %v3495 = vunpack.c.l.b16 %v3407
    %v3496 = vunpack.c.h.b16 %v3407
    %v3497 = vunpack.c.l.b16 %v3408
    %v3498 = vunpack.c.l.b16 %v3409
    %v3499 = vunpack.c.h.b16 %v3409
    %v3500 = vunpack.c.l.b16 %v3410
    %v3501 = vunpack.c.l.b16 %v3411
    %v3502 = vunpack.c.h.b16 %v3411
    %v3503 = vunpack.c.l.b16 %v3412
    %v3504 = vunpack.c.l.b16 %v3413
    %v3505 = vunpack.c.h.b16 %v3413
    %v3506 = vunpack.c.l.b16 %v3414
    %v3507 = vunpack.c.l.b16 %v3415
    %v3508 = vunpack.c.h.b16 %v3415
    %v3509 = vunpack.c.l.b16 %v3416
    %v3510 = vunpack.c.l.b16 %v3417
    %v3511 = vunpack.c.h.b16 %v3417
    %v3512 = vunpack.c.l.b16 %v3418
    %v3513 = vunpack.c.l.b16 %v3419
    %v3514 = vunpack.c.h.b16 %v3419
    %v3515 = vunpack.c.l.b16 %v3420
    %v3516 = vunpack.c.l.b16 %v3421
    %v3517 = vunpack.c.h.b16 %v3421
    %v3518 = vunpack.c.l.b16 %v3422
    %v3519 = vunpack.c.l.b16 %v3423
    %v3520 = vunpack.c.h.b16 %v3423
    %v3521 = vunpack.c.l.b16 %v3424
    %v3522 = vpack.c.b16 %v3477, %v3474
    %v3523 = vpack.c.b16 %v3478, %v3475
    %v3524 = vpack.c.b16 %v3479, %v3476
    %v3525 = vpack.c.b16 %v3483, %v3480
    %v3526 = vpack.c.b16 %v3484, %v3481
    %v3527 = vpack.c.b16 %v3485, %v3482
    %v3528 = vpack.c.b16 %v3489, %v3486
    %v3529 = vpack.c.b16 %v3490, %v3487
    %v3530 = vpack.c.b16 %v3491, %v3488
    %v3531 = vpack.c.b16 %v3495, %v3492
    %v3532 = vpack.c.b16 %v3496, %v3493
    %v3533 = vpack.c.b16 %v3497, %v3494
    %v3534 = vpack.c.b16 %v3501, %v3498
    %v3535 = vpack.c.b16 %v3502, %v3499
    %v3536 = vpack.c.b16 %v3503, %v3500
    %v3537 = vpack.c.b16 %v3507, %v3504
    %v3538 = vpack.c.b16 %v3508, %v3505
    %v3539 = vpack.c.b16 %v3509, %v3506
    %v3540 = vpack.c.b16 %v3513, %v3510
    %v3541 = vpack.c.b16 %v3514, %v3511
    %v3542 = vpack.c.b16 %v3515, %v3512
    %v3543 = vpack.c.b16 %v3519, %v3516
    %v3544 = vpack.c.b16 %v3520, %v3517
    %v3545 = vpack.c.b16 %v3521, %v3518
    %3570 = vmatprep.subr.bf16.mxu0 %v3544
    %3571 = vmatpush1.bf16.msra.mxu0 %v3543
    %3572 = vmatprep.subr.bf16.mxu0 %v3541
    %3573 = vmatpush1.bf16.msra.mxu0 %v3540
    %3574 = vmatprep.subr.bf16.mxu0 %v3538
    %3575 = vmatpush1.bf16.msra.mxu0 %v3537
    %3576 = vmatprep.subr.bf16.mxu0 %v3535
    %3577 = vmatpush1.bf16.msra.mxu0 %v3534
    %3578 = vmatprep.subr.bf16.mxu0 %v3532
    %3579 = vmatpush1.bf16.msra.mxu0 %v3531
    %3580 = vmatprep.subr.bf16.mxu0 %v3529
    %3581 = vmatpush1.bf16.msra.mxu0 %v3528
    %3582 = vmatprep.subr.bf16.mxu0 %v3526
    %3583 = vmatpush1.bf16.msra.mxu0 %v3525
    %3584 = vmatprep.subr.bf16.mxu0 %v3523
    %3585 = vmatpush1.bf16.msra.mxu0 %v3522
    %3586 = vmatprep.subr.bf16.mxu0 0
    %3587 = vmatpush2.bf16.msra.mxu0 0
    %3588 = vmatprep.subr.bf16.mxu0 0
    %3589 = vmatpush2.bf16.msra.mxu0 0
    %3590 = vmatprep.subr.bf16.mxu0 0
    %3591 = vmatpush2.bf16.msra.mxu0 0
    %3592 = vmatprep.subr.bf16.mxu0 0
    %3593 = vmatpush2.bf16.msra.mxu0 0
    %3594 = vmatprep.subr.bf16.mxu0 0
    %3595 = vmatpush2.bf16.msra.mxu0 0
    %3596 = vmatprep.subr.bf16.mxu0 0
    %3597 = vmatpush2.bf16.msra.mxu0 0
    %3598 = vmatprep.subr.bf16.mxu0 0
    %3599 = vmatpush2.bf16.msra.mxu0 0
    %3600 = vmatprep.subr.bf16.mxu0 0
    %3601 = vmatpush2.bf16.msra.mxu0 0
    %3602 = vmatprep.mubr.bf16.mxu0 0
    %3603 = vmatmul.mubr.bf16.gmra.mxu0 0
    %v3604 = vpop.f32.mrf.mxu0
    %v3605 = vadd.f32 %v3430, %v3604
    %v3606 = vpop.f32.mrf.mxu0
    %v3607 = vadd.f32 %v3434, %v3606
    %v3608 = vpop.f32.mrf.mxu0
    %v3609 = vpop.f32.mrf.mxu0
    %3610 = vdwg.mxu0
    %3611 = vmatprep.subr.bf16.mxu0 0
    %3612 = vmatpush1.bf16.msra.mxu0 %v3545
    %3613 = vmatprep.subr.bf16.mxu0 0
    %3614 = vmatpush1.bf16.msra.mxu0 %v3542
    %3615 = vmatprep.subr.bf16.mxu0 0
    %3616 = vmatpush1.bf16.msra.mxu0 %v3539
    %3617 = vmatprep.subr.bf16.mxu0 0
    %3618 = vmatpush1.bf16.msra.mxu0 %v3536
    %3619 = vmatprep.subr.bf16.mxu0 0
    %3620 = vmatpush1.bf16.msra.mxu0 %v3533
    %3621 = vmatprep.subr.bf16.mxu0 0
    %3622 = vmatpush1.bf16.msra.mxu0 %v3530
    %3623 = vmatprep.subr.bf16.mxu0 0
    %3624 = vmatpush1.bf16.msra.mxu0 %v3527
    %3625 = vmatprep.subr.bf16.mxu0 0
    %3626 = vmatpush1.bf16.msra.mxu0 %v3524
    %3627 = vmatprep.subr.bf16.mxu0 0
    %3628 = vmatpush2.bf16.msra.mxu0 0
    %3629 = vmatprep.subr.bf16.mxu0 0
    %3630 = vmatpush2.bf16.msra.mxu0 0
    %3631 = vmatprep.subr.bf16.mxu0 0
    %3632 = vmatpush2.bf16.msra.mxu0 0
    %3633 = vmatprep.subr.bf16.mxu0 0
    %3634 = vmatpush2.bf16.msra.mxu0 0
    %3635 = vmatprep.subr.bf16.mxu0 0
    %3636 = vmatpush2.bf16.msra.mxu0 0
    %3637 = vmatprep.subr.bf16.mxu0 0
    %3638 = vmatpush2.bf16.msra.mxu0 0
    %3639 = vmatprep.subr.bf16.mxu0 0
    %3640 = vmatpush2.bf16.msra.mxu0 0
    %3641 = vmatprep.subr.bf16.mxu0 0
    %3642 = vmatpush2.bf16.msra.mxu0 0
    %3643 = vmatprep.mubr.bf16.mxu0 0
    %3644 = vmatmul.mubr.bf16.gmra.mxu0 0
    %v3645 = vpop.f32.mrf.mxu0
    %v3646 = vadd.f32 %v3438, %v3645
    %v3647 = vpop.f32.mrf.mxu0
    %v3648 = vpop.f32.mrf.mxu0
    %v3649 = vpop.f32.mrf.mxu0
    %3650 = vdwg.mxu0
    %v3651 = vadd.f32 %v3390, %v3605
    %v3652 = vadd.f32 %v3391, %v3607
    %v3653 = vxor.u32 %v3651, 2147483648
    %v3654 = vxor.u32 %v3652, 2147483648
    %v3655 = vmul.f32 %v3653, 1.442695
    %v3656 = vpow.pop %v3655
    %v3657 = vmul.f32 %v3654, 1.442695
    %v3658 = vpow.pop %v3657
    %v3659 = vadd.f32 %v3656, 1.0
    %v3660 = vadd.f32 %v3658, 1.0
    %v3661 = vrcp.pop %v3659
    %v3662 = vmul.f32 1.0, %v3661
    %v3663 = vrcp.pop %v3660
    %v3664 = vmul.f32 1.0, %v3663
    %v3665 = vmul.f32 %v3662, %v3646
    %v3666 = vadd.f32 %v3392, %v3665
    %v3667 = vtanh.pop %v3666
    %v3668 = vsub.f32 1.0, %v3664
    %v3669 = vmul.f32 %v3668, %v3667
    %v3670 = vmul.f32 %v3664, 0.0
    %v3671 = vadd.f32 %v3669, %v3670
    %3672 = vst.msk [vmem:[#allocation5] sm:$0x3] %vm684, %v3671
    %3673 = vst.msk [vmem:[#allocation5 + $0xe] sm:$0x3] %vm686, %v3671
    %v3674 = vld [vmem:[#allocation4] sm:$0xc]
    %v3675 = vld [vmem:[#allocation4 + $0x8] sm:$0xc]
    %v3676 = vld [vmem:[#allocation4 + $0x10] sm:$0xc]
    %v3677 = vld [vmem:[#allocation4 + $0x18] sm:$0x30]
    %v3678 = vld [vmem:[#allocation4 + $0x20] sm:$0x30]
    %v3679 = vld [vmem:[#allocation4 + $0x28] sm:$0x30]
    %v3683 = vrot.slane %v3677, 2
    %v3684 = vrot.slane %v3678, 2
    %v3685 = vrot.slane %v3679, 2
    %v3689 = vsel %vm179, %v3674, %v3683
    %v3690 = vsel %vm180, %v3675, %v3684
    %v3691 = vsel %vm181, %v3676, %v3685
    %v3692 = vpack.c.bf16 %v3671, %v3671
    %v3693 = vld [vmem:[#allocation12] sm:$0xff]
    %v3694 = vld [vmem:[#allocation12 + $0x8] sm:$0xf]
    %v3695 = vld [vmem:[#allocation12 + $0xc] sm:$0xff]
    %v3696 = vld [vmem:[#allocation12 + $0x14] sm:$0xf]
    %v3697 = vld [vmem:[#allocation12 + $0x18] sm:$0xff]
    %v3698 = vld [vmem:[#allocation12 + $0x20] sm:$0xf]
    %v3699 = vld [vmem:[#allocation12 + $0x24] sm:$0xff]
    %v3700 = vld [vmem:[#allocation12 + $0x2c] sm:$0xf]
    %v3701 = vld [vmem:[#allocation12 + $0x30] sm:$0xff]
    %v3702 = vld [vmem:[#allocation12 + $0x38] sm:$0xf]
    %v3703 = vld [vmem:[#allocation12 + $0x3c] sm:$0xff]
    %v3704 = vld [vmem:[#allocation12 + $0x44] sm:$0xf]
    %v3705 = vld [vmem:[#allocation12 + $0x48] sm:$0xff]
    %v3706 = vld [vmem:[#allocation12 + $0x50] sm:$0xf]
    %v3707 = vld [vmem:[#allocation12 + $0x54] sm:$0xff]
    %v3708 = vld [vmem:[#allocation12 + $0x5c] sm:$0xf]
    %v3709 = vld [vmem:[#allocation12 + $0x60] sm:$0xff]
    %v3710 = vld [vmem:[#allocation12 + $0x68] sm:$0xf]
    %v3711 = vld [vmem:[#allocation12 + $0x6c] sm:$0xff]
    %v3712 = vld [vmem:[#allocation12 + $0x74] sm:$0xf]
    %v3713 = vld [vmem:[#allocation12 + $0x78] sm:$0xff]
    %v3714 = vld [vmem:[#allocation12 + $0x80] sm:$0xf]
    %v3715 = vld [vmem:[#allocation12 + $0x84] sm:$0xff]
    %v3716 = vld [vmem:[#allocation12 + $0x8c] sm:$0xf]
    %v3717 = vld [vmem:[#allocation12 + $0x90] sm:$0xff]
    %v3718 = vld [vmem:[#allocation12 + $0x98] sm:$0xf]
    %v3719 = vld [vmem:[#allocation12 + $0x9c] sm:$0xff]
    %v3720 = vld [vmem:[#allocation12 + $0xa4] sm:$0xf]
    %v3721 = vld [vmem:[#allocation12 + $0xa8] sm:$0xff]
    %v3722 = vld [vmem:[#allocation12 + $0xb0] sm:$0xf]
    %v3723 = vld [vmem:[#allocation12 + $0xb4] sm:$0xff]
    %v3724 = vld [vmem:[#allocation12 + $0xbc] sm:$0xf]
    %v3725 = vld [vmem:[%s8] sm:$0x7]
    %v3727 = vlaneseq
    %v3728 = vshrl.u32 %v3727, 7
    %v3729 = vsub.s32 0, %v3728
    %v3730 = vrot.slane %v3725, %v3729
    %v3731 = vlaneseq
    %v3732 = vshrl.u32 %v3731, 7
    %v3733 = vsub.s32 1, %v3732
    %v3734 = vrot.slane %v3725, %v3733
    %v3735 = vlaneseq
    %v3736 = vshrl.u32 %v3735, 7
    %v3737 = vsub.s32 2, %v3736
    %v3738 = vrot.slane %v3725, %v3737
    %v3774 = vunpack.c.l.b16 %v3693
    %v3775 = vunpack.c.h.b16 %v3693
    %v3776 = vunpack.c.l.b16 %v3694
    %v3777 = vunpack.c.l.b16 %v3695
    %v3778 = vunpack.c.h.b16 %v3695
    %v3779 = vunpack.c.l.b16 %v3696
    %v3780 = vunpack.c.l.b16 %v3697
    %v3781 = vunpack.c.h.b16 %v3697
    %v3782 = vunpack.c.l.b16 %v3698
    %v3783 = vunpack.c.l.b16 %v3699
    %v3784 = vunpack.c.h.b16 %v3699
    %v3785 = vunpack.c.l.b16 %v3700
    %v3786 = vunpack.c.l.b16 %v3701
    %v3787 = vunpack.c.h.b16 %v3701
    %v3788 = vunpack.c.l.b16 %v3702
    %v3789 = vunpack.c.l.b16 %v3703
    %v3790 = vunpack.c.h.b16 %v3703
    %v3791 = vunpack.c.l.b16 %v3704
    %v3792 = vunpack.c.l.b16 %v3705
    %v3793 = vunpack.c.h.b16 %v3705
    %v3794 = vunpack.c.l.b16 %v3706
    %v3795 = vunpack.c.l.b16 %v3707
    %v3796 = vunpack.c.h.b16 %v3707
    %v3797 = vunpack.c.l.b16 %v3708
    %v3798 = vunpack.c.l.b16 %v3709
    %v3799 = vunpack.c.h.b16 %v3709
    %v3800 = vunpack.c.l.b16 %v3710
    %v3801 = vunpack.c.l.b16 %v3711
    %v3802 = vunpack.c.h.b16 %v3711
    %v3803 = vunpack.c.l.b16 %v3712
    %v3804 = vunpack.c.l.b16 %v3713
    %v3805 = vunpack.c.h.b16 %v3713
    %v3806 = vunpack.c.l.b16 %v3714
    %v3807 = vunpack.c.l.b16 %v3715
    %v3808 = vunpack.c.h.b16 %v3715
    %v3809 = vunpack.c.l.b16 %v3716
    %v3810 = vunpack.c.l.b16 %v3717
    %v3811 = vunpack.c.h.b16 %v3717
    %v3812 = vunpack.c.l.b16 %v3718
    %v3813 = vunpack.c.l.b16 %v3719
    %v3814 = vunpack.c.h.b16 %v3719
    %v3815 = vunpack.c.l.b16 %v3720
    %v3816 = vunpack.c.l.b16 %v3721
    %v3817 = vunpack.c.h.b16 %v3721
    %v3818 = vunpack.c.l.b16 %v3722
    %v3819 = vunpack.c.l.b16 %v3723
    %v3820 = vunpack.c.h.b16 %v3723
    %v3821 = vunpack.c.l.b16 %v3724
    %v3822 = vpack.c.b16 %v3777, %v3774
    %v3823 = vpack.c.b16 %v3778, %v3775
    %v3824 = vpack.c.b16 %v3779, %v3776
    %v3825 = vpack.c.b16 %v3783, %v3780
    %v3826 = vpack.c.b16 %v3784, %v3781
    %v3827 = vpack.c.b16 %v3785, %v3782
    %v3828 = vpack.c.b16 %v3789, %v3786
    %v3829 = vpack.c.b16 %v3790, %v3787
    %v3830 = vpack.c.b16 %v3791, %v3788
    %v3831 = vpack.c.b16 %v3795, %v3792
    %v3832 = vpack.c.b16 %v3796, %v3793
    %v3833 = vpack.c.b16 %v3797, %v3794
    %v3834 = vpack.c.b16 %v3801, %v3798
    %v3835 = vpack.c.b16 %v3802, %v3799
    %v3836 = vpack.c.b16 %v3803, %v3800
    %v3837 = vpack.c.b16 %v3807, %v3804
    %v3838 = vpack.c.b16 %v3808, %v3805
    %v3839 = vpack.c.b16 %v3809, %v3806
    %v3840 = vpack.c.b16 %v3813, %v3810
    %v3841 = vpack.c.b16 %v3814, %v3811
    %v3842 = vpack.c.b16 %v3815, %v3812
    %v3843 = vpack.c.b16 %v3819, %v3816
    %v3844 = vpack.c.b16 %v3820, %v3817
    %v3845 = vpack.c.b16 %v3821, %v3818
    %3870 = vmatprep.subr.bf16.mxu0 %v3844
    %3871 = vmatpush1.bf16.msra.mxu0 %v3843
    %3872 = vmatprep.subr.bf16.mxu0 %v3841
    %3873 = vmatpush1.bf16.msra.mxu0 %v3840
    %3874 = vmatprep.subr.bf16.mxu0 %v3838
    %3875 = vmatpush1.bf16.msra.mxu0 %v3837
    %3876 = vmatprep.subr.bf16.mxu0 %v3835
    %3877 = vmatpush1.bf16.msra.mxu0 %v3834
    %3878 = vmatprep.subr.bf16.mxu0 %v3832
    %3879 = vmatpush1.bf16.msra.mxu0 %v3831
    %3880 = vmatprep.subr.bf16.mxu0 %v3829
    %3881 = vmatpush1.bf16.msra.mxu0 %v3828
    %3882 = vmatprep.subr.bf16.mxu0 %v3826
    %3883 = vmatpush1.bf16.msra.mxu0 %v3825
    %3884 = vmatprep.subr.bf16.mxu0 %v3823
    %3885 = vmatpush1.bf16.msra.mxu0 %v3822
    %3886 = vmatprep.subr.bf16.mxu0 0
    %3887 = vmatpush2.bf16.msra.mxu0 0
    %3888 = vmatprep.subr.bf16.mxu0 0
    %3889 = vmatpush2.bf16.msra.mxu0 0
    %3890 = vmatprep.subr.bf16.mxu0 0
    %3891 = vmatpush2.bf16.msra.mxu0 0
    %3892 = vmatprep.subr.bf16.mxu0 0
    %3893 = vmatpush2.bf16.msra.mxu0 0
    %3894 = vmatprep.subr.bf16.mxu0 0
    %3895 = vmatpush2.bf16.msra.mxu0 0
    %3896 = vmatprep.subr.bf16.mxu0 0
    %3897 = vmatpush2.bf16.msra.mxu0 0
    %3898 = vmatprep.subr.bf16.mxu0 0
    %3899 = vmatpush2.bf16.msra.mxu0 0
    %3900 = vmatprep.subr.bf16.mxu0 0
    %3901 = vmatpush2.bf16.msra.mxu0 0
    %3902 = vmatprep.mubr.bf16.mxu0 0
    %3903 = vmatmul.mubr.bf16.gmra.mxu0 %v3692
    %v3904 = vpop.f32.mrf.mxu0
    %v3905 = vadd.f32 %v3730, %v3904
    %v3906 = vpop.f32.mrf.mxu0
    %v3907 = vadd.f32 %v3734, %v3906
    %v3908 = vpop.f32.mrf.mxu0
    %v3909 = vpop.f32.mrf.mxu0
    %3910 = vdwg.mxu0
    %3911 = vmatprep.subr.bf16.mxu0 0
    %3912 = vmatpush1.bf16.msra.mxu0 %v3845
    %3913 = vmatprep.subr.bf16.mxu0 0
    %3914 = vmatpush1.bf16.msra.mxu0 %v3842
    %3915 = vmatprep.subr.bf16.mxu0 0
    %3916 = vmatpush1.bf16.msra.mxu0 %v3839
    %3917 = vmatprep.subr.bf16.mxu0 0
    %3918 = vmatpush1.bf16.msra.mxu0 %v3836
    %3919 = vmatprep.subr.bf16.mxu0 0
    %3920 = vmatpush1.bf16.msra.mxu0 %v3833
    %3921 = vmatprep.subr.bf16.mxu0 0
    %3922 = vmatpush1.bf16.msra.mxu0 %v3830
    %3923 = vmatprep.subr.bf16.mxu0 0
    %3924 = vmatpush1.bf16.msra.mxu0 %v3827
    %3925 = vmatprep.subr.bf16.mxu0 0
    %3926 = vmatpush1.bf16.msra.mxu0 %v3824
    %3927 = vmatprep.subr.bf16.mxu0 0
    %3928 = vmatpush2.bf16.msra.mxu0 0
    %3929 = vmatprep.subr.bf16.mxu0 0
    %3930 = vmatpush2.bf16.msra.mxu0 0
    %3931 = vmatprep.subr.bf16.mxu0 0
    %3932 = vmatpush2.bf16.msra.mxu0 0
    %3933 = vmatprep.subr.bf16.mxu0 0
    %3934 = vmatpush2.bf16.msra.mxu0 0
    %3935 = vmatprep.subr.bf16.mxu0 0
    %3936 = vmatpush2.bf16.msra.mxu0 0
    %3937 = vmatprep.subr.bf16.mxu0 0
    %3938 = vmatpush2.bf16.msra.mxu0 0
    %3939 = vmatprep.subr.bf16.mxu0 0
    %3940 = vmatpush2.bf16.msra.mxu0 0
    %3941 = vmatprep.subr.bf16.mxu0 0
    %3942 = vmatpush2.bf16.msra.mxu0 0
    %3943 = vmatprep.mubr.bf16.mxu0 0
    %3944 = vmatmul.mubr.bf16.gmra.mxu0 %v3692
    %v3945 = vpop.f32.mrf.mxu0
    %v3946 = vadd.f32 %v3738, %v3945
    %v3947 = vpop.f32.mrf.mxu0
    %v3948 = vpop.f32.mrf.mxu0
    %v3949 = vpop.f32.mrf.mxu0
    %3950 = vdwg.mxu0
    %v3953 = vrot.slane %v3905, 6
    %v3954 = vrot.slane %v3907, 6
    %v3957 = vadd.f32 %v3689, %v3953
    %v3958 = vadd.f32 %v3690, %v3954
    %v3959 = vxor.u32 %v3957, 2147483648
    %v3960 = vxor.u32 %v3958, 2147483648
    %v3961 = vmul.f32 %v3959, 1.442695
    %v3962 = vpow.pop %v3961
    %v3963 = vmul.f32 %v3960, 1.442695
    %v3964 = vpow.pop %v3963
    %v3965 = vadd.f32 %v3962, 1.0
    %v3966 = vadd.f32 %v3964, 1.0
    %v3967 = vrcp.pop %v3965
    %v3968 = vmul.f32 1.0, %v3967
    %v3969 = vrcp.pop %v3966
    %v3970 = vmul.f32 1.0, %v3969
    %v3972 = vrot.slane %v3946, 6
    %v3974 = vmul.f32 %v3968, %v3972
    %v3975 = vadd.f32 %v3691, %v3974
    %v3976 = vtanh.pop %v3975
    %v3977 = vsub.f32 1.0, %v3970
    %v3978 = vmul.f32 %v3977, %v3976
    %v3980 = vrot.slane %v3671, 6
    %v3982 = vmul.f32 %v3970, %v3980
    %v3983 = vadd.f32 %v3978, %v3982
    %3984 = vst.msk [vmem:[#allocation5] sm:$0xc] %vm1030, %v3983
    %3985 = vst.msk [vmem:[#allocation5 + $0xa] sm:$0xc] %vm1032, %v3983
    %v3986 = vld [vmem:[#allocation4] sm:$0x30]
    %v3987 = vld [vmem:[#allocation4 + $0x8] sm:$0x30]
    %v3988 = vld [vmem:[#allocation4 + $0x10] sm:$0x30]
    %v3989 = vld [vmem:[#allocation4 + $0x18] sm:$0xc]
    %v3990 = vld [vmem:[#allocation4 + $0x20] sm:$0xc]
    %v3991 = vld [vmem:[#allocation4 + $0x28] sm:$0xc]
    %v3995 = vrot.slane %v3989, 6
    %v3996 = vrot.slane %v3990, 6
    %v3997 = vrot.slane %v3991, 6
    %v4001 = vsel %vm179, %v3986, %v3995
    %v4002 = vsel %vm180, %v3987, %v3996
    %v4003 = vsel %vm181, %v3988, %v3997
    %v4004 = vpack.c.bf16 %v3983, %v3983
    %v4005 = vld [vmem:[#allocation12] sm:$0xff]
    %v4006 = vld [vmem:[#allocation12 + $0x8] sm:$0xf]
    %v4007 = vld [vmem:[#allocation12 + $0xc] sm:$0xff]
    %v4008 = vld [vmem:[#allocation12 + $0x14] sm:$0xf]
    %v4009 = vld [vmem:[#allocation12 + $0x18] sm:$0xff]
    %v4010 = vld [vmem:[#allocation12 + $0x20] sm:$0xf]
    %v4011 = vld [vmem:[#allocation12 + $0x24] sm:$0xff]
    %v4012 = vld [vmem:[#allocation12 + $0x2c] sm:$0xf]
    %v4013 = vld [vmem:[#allocation12 + $0x30] sm:$0xff]
    %v4014 = vld [vmem:[#allocation12 + $0x38] sm:$0xf]
    %v4015 = vld [vmem:[#allocation12 + $0x3c] sm:$0xff]
    %v4016 = vld [vmem:[#allocation12 + $0x44] sm:$0xf]
    %v4017 = vld [vmem:[#allocation12 + $0x48] sm:$0xff]
    %v4018 = vld [vmem:[#allocation12 + $0x50] sm:$0xf]
    %v4019 = vld [vmem:[#allocation12 + $0x54] sm:$0xff]
    %v4020 = vld [vmem:[#allocation12 + $0x5c] sm:$0xf]
    %v4021 = vld [vmem:[#allocation12 + $0x60] sm:$0xff]
    %v4022 = vld [vmem:[#allocation12 + $0x68] sm:$0xf]
    %v4023 = vld [vmem:[#allocation12 + $0x6c] sm:$0xff]
    %v4024 = vld [vmem:[#allocation12 + $0x74] sm:$0xf]
    %v4025 = vld [vmem:[#allocation12 + $0x78] sm:$0xff]
    %v4026 = vld [vmem:[#allocation12 + $0x80] sm:$0xf]
    %v4027 = vld [vmem:[#allocation12 + $0x84] sm:$0xff]
    %v4028 = vld [vmem:[#allocation12 + $0x8c] sm:$0xf]
    %v4029 = vld [vmem:[#allocation12 + $0x90] sm:$0xff]
    %v4030 = vld [vmem:[#allocation12 + $0x98] sm:$0xf]
    %v4031 = vld [vmem:[#allocation12 + $0x9c] sm:$0xff]
    %v4032 = vld [vmem:[#allocation12 + $0xa4] sm:$0xf]
    %v4033 = vld [vmem:[#allocation12 + $0xa8] sm:$0xff]
    %v4034 = vld [vmem:[#allocation12 + $0xb0] sm:$0xf]
    %v4035 = vld [vmem:[#allocation12 + $0xb4] sm:$0xff]
    %v4036 = vld [vmem:[#allocation12 + $0xbc] sm:$0xf]
    %v4037 = vld [vmem:[%s8] sm:$0x7]
    %v4039 = vlaneseq
    %v4040 = vshrl.u32 %v4039, 7
    %v4041 = vsub.s32 0, %v4040
    %v4042 = vrot.slane %v4037, %v4041
    %v4043 = vlaneseq
    %v4044 = vshrl.u32 %v4043, 7
    %v4045 = vsub.s32 1, %v4044
    %v4046 = vrot.slane %v4037, %v4045
    %v4047 = vlaneseq
    %v4048 = vshrl.u32 %v4047, 7
    %v4049 = vsub.s32 2, %v4048
    %v4050 = vrot.slane %v4037, %v4049
    %v4055 = vrot.slane %v4004, 1
    %v4089 = vunpack.c.l.b16 %v4005
    %v4090 = vunpack.c.h.b16 %v4005
    %v4091 = vunpack.c.l.b16 %v4006
    %v4092 = vunpack.c.l.b16 %v4007
    %v4093 = vunpack.c.h.b16 %v4007
    %v4094 = vunpack.c.l.b16 %v4008
    %v4095 = vunpack.c.l.b16 %v4009
    %v4096 = vunpack.c.h.b16 %v4009
    %v4097 = vunpack.c.l.b16 %v4010
    %v4098 = vunpack.c.l.b16 %v4011
    %v4099 = vunpack.c.h.b16 %v4011
    %v4100 = vunpack.c.l.b16 %v4012
    %v4101 = vunpack.c.l.b16 %v4013
    %v4102 = vunpack.c.h.b16 %v4013
    %v4103 = vunpack.c.l.b16 %v4014
    %v4104 = vunpack.c.l.b16 %v4015
    %v4105 = vunpack.c.h.b16 %v4015
    %v4106 = vunpack.c.l.b16 %v4016
    %v4107 = vunpack.c.l.b16 %v4017
    %v4108 = vunpack.c.h.b16 %v4017
    %v4109 = vunpack.c.l.b16 %v4018
    %v4110 = vunpack.c.l.b16 %v4019
    %v4111 = vunpack.c.h.b16 %v4019
    %v4112 = vunpack.c.l.b16 %v4020
    %v4113 = vunpack.c.l.b16 %v4021
    %v4114 = vunpack.c.h.b16 %v4021
    %v4115 = vunpack.c.l.b16 %v4022
    %v4116 = vunpack.c.l.b16 %v4023
    %v4117 = vunpack.c.h.b16 %v4023
    %v4118 = vunpack.c.l.b16 %v4024
    %v4119 = vunpack.c.l.b16 %v4025
    %v4120 = vunpack.c.h.b16 %v4025
    %v4121 = vunpack.c.l.b16 %v4026
    %v4122 = vunpack.c.l.b16 %v4027
    %v4123 = vunpack.c.h.b16 %v4027
    %v4124 = vunpack.c.l.b16 %v4028
    %v4125 = vunpack.c.l.b16 %v4029
    %v4126 = vunpack.c.h.b16 %v4029
    %v4127 = vunpack.c.l.b16 %v4030
    %v4128 = vunpack.c.l.b16 %v4031
    %v4129 = vunpack.c.h.b16 %v4031
    %v4130 = vunpack.c.l.b16 %v4032
    %v4131 = vunpack.c.l.b16 %v4033
    %v4132 = vunpack.c.h.b16 %v4033
    %v4133 = vunpack.c.l.b16 %v4034
    %v4134 = vunpack.c.l.b16 %v4035
    %v4135 = vunpack.c.h.b16 %v4035
    %v4136 = vunpack.c.l.b16 %v4036
    %v4137 = vpack.c.b16 %v4092, %v4089
    %v4138 = vpack.c.b16 %v4093, %v4090
    %v4139 = vpack.c.b16 %v4094, %v4091
    %v4140 = vpack.c.b16 %v4098, %v4095
    %v4141 = vpack.c.b16 %v4099, %v4096
    %v4142 = vpack.c.b16 %v4100, %v4097
    %v4143 = vpack.c.b16 %v4104, %v4101
    %v4144 = vpack.c.b16 %v4105, %v4102
    %v4145 = vpack.c.b16 %v4106, %v4103
    %v4146 = vpack.c.b16 %v4110, %v4107
    %v4147 = vpack.c.b16 %v4111, %v4108
    %v4148 = vpack.c.b16 %v4112, %v4109
    %v4149 = vpack.c.b16 %v4116, %v4113
    %v4150 = vpack.c.b16 %v4117, %v4114
    %v4151 = vpack.c.b16 %v4118, %v4115
    %v4152 = vpack.c.b16 %v4122, %v4119
    %v4153 = vpack.c.b16 %v4123, %v4120
    %v4154 = vpack.c.b16 %v4124, %v4121
    %v4155 = vpack.c.b16 %v4128, %v4125
    %v4156 = vpack.c.b16 %v4129, %v4126
    %v4157 = vpack.c.b16 %v4130, %v4127
    %v4158 = vpack.c.b16 %v4134, %v4131
    %v4159 = vpack.c.b16 %v4135, %v4132
    %v4160 = vpack.c.b16 %v4136, %v4133
    %4185 = vmatprep.subr.bf16.mxu0 %v4159
    %4186 = vmatpush1.bf16.msra.mxu0 %v4158
    %4187 = vmatprep.subr.bf16.mxu0 %v4156
    %4188 = vmatpush1.bf16.msra.mxu0 %v4155
    %4189 = vmatprep.subr.bf16.mxu0 %v4153
    %4190 = vmatpush1.bf16.msra.mxu0 %v4152
    %4191 = vmatprep.subr.bf16.mxu0 %v4150
    %4192 = vmatpush1.bf16.msra.mxu0 %v4149
    %4193 = vmatprep.subr.bf16.mxu0 %v4147
    %4194 = vmatpush1.bf16.msra.mxu0 %v4146
    %4195 = vmatprep.subr.bf16.mxu0 %v4144
    %4196 = vmatpush1.bf16.msra.mxu0 %v4143
    %4197 = vmatprep.subr.bf16.mxu0 %v4141
    %4198 = vmatpush1.bf16.msra.mxu0 %v4140
    %4199 = vmatprep.subr.bf16.mxu0 %v4138
    %4200 = vmatpush1.bf16.msra.mxu0 %v4137
    %4201 = vmatprep.subr.bf16.mxu0 0
    %4202 = vmatpush2.bf16.msra.mxu0 0
    %4203 = vmatprep.subr.bf16.mxu0 0
    %4204 = vmatpush2.bf16.msra.mxu0 0
    %4205 = vmatprep.subr.bf16.mxu0 0
    %4206 = vmatpush2.bf16.msra.mxu0 0
    %4207 = vmatprep.subr.bf16.mxu0 0
    %4208 = vmatpush2.bf16.msra.mxu0 0
    %4209 = vmatprep.subr.bf16.mxu0 0
    %4210 = vmatpush2.bf16.msra.mxu0 0
    %4211 = vmatprep.subr.bf16.mxu0 0
    %4212 = vmatpush2.bf16.msra.mxu0 0
    %4213 = vmatprep.subr.bf16.mxu0 0
    %4214 = vmatpush2.bf16.msra.mxu0 0
    %4215 = vmatprep.subr.bf16.mxu0 0
    %4216 = vmatpush2.bf16.msra.mxu0 0
    %4217 = vmatprep.mubr.bf16.mxu0 0
    %4218 = vmatmul.mubr.bf16.gmra.mxu0 %v4055
    %v4219 = vpop.f32.mrf.mxu0
    %v4220 = vadd.f32 %v4042, %v4219
    %v4221 = vpop.f32.mrf.mxu0
    %v4222 = vadd.f32 %v4046, %v4221
    %v4223 = vpop.f32.mrf.mxu0
    %v4224 = vpop.f32.mrf.mxu0
    %4225 = vdwg.mxu0
    %4226 = vmatprep.subr.bf16.mxu0 0
    %4227 = vmatpush1.bf16.msra.mxu0 %v4160
    %4228 = vmatprep.subr.bf16.mxu0 0
    %4229 = vmatpush1.bf16.msra.mxu0 %v4157
    %4230 = vmatprep.subr.bf16.mxu0 0
    %4231 = vmatpush1.bf16.msra.mxu0 %v4154
    %4232 = vmatprep.subr.bf16.mxu0 0
    %4233 = vmatpush1.bf16.msra.mxu0 %v4151
    %4234 = vmatprep.subr.bf16.mxu0 0
    %4235 = vmatpush1.bf16.msra.mxu0 %v4148
    %4236 = vmatprep.subr.bf16.mxu0 0
    %4237 = vmatpush1.bf16.msra.mxu0 %v4145
    %4238 = vmatprep.subr.bf16.mxu0 0
    %4239 = vmatpush1.bf16.msra.mxu0 %v4142
    %4240 = vmatprep.subr.bf16.mxu0 0
    %4241 = vmatpush1.bf16.msra.mxu0 %v4139
    %4242 = vmatprep.subr.bf16.mxu0 0
    %4243 = vmatpush2.bf16.msra.mxu0 0
    %4244 = vmatprep.subr.bf16.mxu0 0
    %4245 = vmatpush2.bf16.msra.mxu0 0
    %4246 = vmatprep.subr.bf16.mxu0 0
    %4247 = vmatpush2.bf16.msra.mxu0 0
    %4248 = vmatprep.subr.bf16.mxu0 0
    %4249 = vmatpush2.bf16.msra.mxu0 0
    %4250 = vmatprep.subr.bf16.mxu0 0
    %4251 = vmatpush2.bf16.msra.mxu0 0
    %4252 = vmatprep.subr.bf16.mxu0 0
    %4253 = vmatpush2.bf16.msra.mxu0 0
    %4254 = vmatprep.subr.bf16.mxu0 0
    %4255 = vmatpush2.bf16.msra.mxu0 0
    %4256 = vmatprep.subr.bf16.mxu0 0
    %4257 = vmatpush2.bf16.msra.mxu0 0
    %4258 = vmatprep.mubr.bf16.mxu0 0
    %4259 = vmatmul.mubr.bf16.gmra.mxu0 %v4055
    %v4260 = vpop.f32.mrf.mxu0
    %v4261 = vadd.f32 %v4050, %v4260
    %v4262 = vpop.f32.mrf.mxu0
    %v4263 = vpop.f32.mrf.mxu0
    %v4264 = vpop.f32.mrf.mxu0
    %4265 = vdwg.mxu0
    %v4268 = vrot.slane %v4220, 4
    %v4269 = vrot.slane %v4222, 4
    %v4272 = vadd.f32 %v4001, %v4268
    %v4273 = vadd.f32 %v4002, %v4269
    %v4274 = vxor.u32 %v4272, 2147483648
    %v4275 = vxor.u32 %v4273, 2147483648
    %v4276 = vmul.f32 %v4274, 1.442695
    %v4277 = vpow.pop %v4276
    %v4278 = vmul.f32 %v4275, 1.442695
    %v4279 = vpow.pop %v4278
    %v4280 = vadd.f32 %v4277, 1.0
    %v4281 = vadd.f32 %v4279, 1.0
    %v4282 = vrcp.pop %v4280
    %v4283 = vmul.f32 1.0, %v4282
    %v4284 = vrcp.pop %v4281
    %v4285 = vmul.f32 1.0, %v4284
    %v4287 = vrot.slane %v4261, 4
    %v4289 = vmul.f32 %v4283, %v4287
    %v4290 = vadd.f32 %v4003, %v4289
    %v4291 = vtanh.pop %v4290
    %v4292 = vsub.f32 1.0, %v4285
    %v4293 = vmul.f32 %v4292, %v4291
    %v4295 = vrot.slane %v3983, 6
    %v4297 = vmul.f32 %v4285, %v4295
    %v4298 = vadd.f32 %v4293, %v4297
    %4299 = vst.msk [vmem:[#allocation5] sm:$0x30] %vm1379, %v4298
    %4300 = vst.msk [vmem:[#allocation5 + $0x6] sm:$0x30] %vm1381, %v4298
    %v4301 = vld [vmem:[#allocation4] sm:$0xc0]
    %v4302 = vld [vmem:[#allocation4 + $0x8] sm:$0xc0]
    %v4303 = vld [vmem:[#allocation4 + $0x10] sm:$0xc0]
    %v4304 = vld [vmem:[#allocation4 + $0x18] sm:$0x3]
    %v4305 = vld [vmem:[#allocation4 + $0x20] sm:$0x3]
    %v4306 = vld [vmem:[#allocation4 + $0x28] sm:$0x3]
    %v4310 = vrot.slane %v4304, 2
    %v4311 = vrot.slane %v4305, 2
    %v4312 = vrot.slane %v4306, 2
    %v4316 = vsel %vm179, %v4301, %v4310
    %v4317 = vsel %vm180, %v4302, %v4311
    %v4318 = vsel %vm181, %v4303, %v4312
    %v4319 = vpack.c.bf16 %v4298, %v4298
    %v4320 = vld [vmem:[#allocation12] sm:$0xff]
    %v4321 = vld [vmem:[#allocation12 + $0x8] sm:$0xf]
    %v4322 = vld [vmem:[#allocation12 + $0xc] sm:$0xff]
    %v4323 = vld [vmem:[#allocation12 + $0x14] sm:$0xf]
    %v4324 = vld [vmem:[#allocation12 + $0x18] sm:$0xff]
    %v4325 = vld [vmem:[#allocation12 + $0x20] sm:$0xf]
    %v4326 = vld [vmem:[#allocation12 + $0x24] sm:$0xff]
    %v4327 = vld [vmem:[#allocation12 + $0x2c] sm:$0xf]
    %v4328 = vld [vmem:[#allocation12 + $0x30] sm:$0xff]
    %v4329 = vld [vmem:[#allocation12 + $0x38] sm:$0xf]
    %v4330 = vld [vmem:[#allocation12 + $0x3c] sm:$0xff]
    %v4331 = vld [vmem:[#allocation12 + $0x44] sm:$0xf]
    %v4332 = vld [vmem:[#allocation12 + $0x48] sm:$0xff]
    %v4333 = vld [vmem:[#allocation12 + $0x50] sm:$0xf]
    %v4334 = vld [vmem:[#allocation12 + $0x54] sm:$0xff]
    %v4335 = vld [vmem:[#allocation12 + $0x5c] sm:$0xf]
    %v4336 = vld [vmem:[#allocation12 + $0x60] sm:$0xff]
    %v4337 = vld [vmem:[#allocation12 + $0x68] sm:$0xf]
    %v4338 = vld [vmem:[#allocation12 + $0x6c] sm:$0xff]
    %v4339 = vld [vmem:[#allocation12 + $0x74] sm:$0xf]
    %v4340 = vld [vmem:[#allocation12 + $0x78] sm:$0xff]
    %v4341 = vld [vmem:[#allocation12 + $0x80] sm:$0xf]
    %v4342 = vld [vmem:[#allocation12 + $0x84] sm:$0xff]
    %v4343 = vld [vmem:[#allocation12 + $0x8c] sm:$0xf]
    %v4344 = vld [vmem:[#allocation12 + $0x90] sm:$0xff]
    %v4345 = vld [vmem:[#allocation12 + $0x98] sm:$0xf]
    %v4346 = vld [vmem:[#allocation12 + $0x9c] sm:$0xff]
    %v4347 = vld [vmem:[#allocation12 + $0xa4] sm:$0xf]
    %v4348 = vld [vmem:[#allocation12 + $0xa8] sm:$0xff]
    %v4349 = vld [vmem:[#allocation12 + $0xb0] sm:$0xf]
    %v4350 = vld [vmem:[#allocation12 + $0xb4] sm:$0xff]
    %v4351 = vld [vmem:[#allocation12 + $0xbc] sm:$0xf]
    %v4352 = vld [vmem:[%s8] sm:$0x7]
    %v4354 = vlaneseq
    %v4355 = vshrl.u32 %v4354, 7
    %v4356 = vsub.s32 0, %v4355
    %v4357 = vrot.slane %v4352, %v4356
    %v4358 = vlaneseq
    %v4359 = vshrl.u32 %v4358, 7
    %v4360 = vsub.s32 1, %v4359
    %v4361 = vrot.slane %v4352, %v4360
    %v4362 = vlaneseq
    %v4363 = vshrl.u32 %v4362, 7
    %v4364 = vsub.s32 2, %v4363
    %v4365 = vrot.slane %v4352, %v4364
    %v4370 = vrot.slane %v4319, 2
    %v4404 = vunpack.c.l.b16 %v4320
    %v4405 = vunpack.c.h.b16 %v4320
    %v4406 = vunpack.c.l.b16 %v4321
    %v4407 = vunpack.c.l.b16 %v4322
    %v4408 = vunpack.c.h.b16 %v4322
    %v4409 = vunpack.c.l.b16 %v4323
    %v4410 = vunpack.c.l.b16 %v4324
    %v4411 = vunpack.c.h.b16 %v4324
    %v4412 = vunpack.c.l.b16 %v4325
    %v4413 = vunpack.c.l.b16 %v4326
    %v4414 = vunpack.c.h.b16 %v4326
    %v4415 = vunpack.c.l.b16 %v4327
    %v4416 = vunpack.c.l.b16 %v4328
    %v4417 = vunpack.c.h.b16 %v4328
    %v4418 = vunpack.c.l.b16 %v4329
    %v4419 = vunpack.c.l.b16 %v4330
    %v4420 = vunpack.c.h.b16 %v4330
    %v4421 = vunpack.c.l.b16 %v4331
    %v4422 = vunpack.c.l.b16 %v4332
    %v4423 = vunpack.c.h.b16 %v4332
    %v4424 = vunpack.c.l.b16 %v4333
    %v4425 = vunpack.c.l.b16 %v4334
    %v4426 = vunpack.c.h.b16 %v4334
    %v4427 = vunpack.c.l.b16 %v4335
    %v4428 = vunpack.c.l.b16 %v4336
    %v4429 = vunpack.c.h.b16 %v4336
    %v4430 = vunpack.c.l.b16 %v4337
    %v4431 = vunpack.c.l.b16 %v4338
    %v4432 = vunpack.c.h.b16 %v4338
    %v4433 = vunpack.c.l.b16 %v4339
    %v4434 = vunpack.c.l.b16 %v4340
    %v4435 = vunpack.c.h.b16 %v4340
    %v4436 = vunpack.c.l.b16 %v4341
    %v4437 = vunpack.c.l.b16 %v4342
    %v4438 = vunpack.c.h.b16 %v4342
    %v4439 = vunpack.c.l.b16 %v4343
    %v4440 = vunpack.c.l.b16 %v4344
    %v4441 = vunpack.c.h.b16 %v4344
    %v4442 = vunpack.c.l.b16 %v4345
    %v4443 = vunpack.c.l.b16 %v4346
    %v4444 = vunpack.c.h.b16 %v4346
    %v4445 = vunpack.c.l.b16 %v4347
    %v4446 = vunpack.c.l.b16 %v4348
    %v4447 = vunpack.c.h.b16 %v4348
    %v4448 = vunpack.c.l.b16 %v4349
    %v4449 = vunpack.c.l.b16 %v4350
    %v4450 = vunpack.c.h.b16 %v4350
    %v4451 = vunpack.c.l.b16 %v4351
    %v4452 = vpack.c.b16 %v4407, %v4404
    %v4453 = vpack.c.b16 %v4408, %v4405
    %v4454 = vpack.c.b16 %v4409, %v4406
    %v4455 = vpack.c.b16 %v4413, %v4410
    %v4456 = vpack.c.b16 %v4414, %v4411
    %v4457 = vpack.c.b16 %v4415, %v4412
    %v4458 = vpack.c.b16 %v4419, %v4416
    %v4459 = vpack.c.b16 %v4420, %v4417
    %v4460 = vpack.c.b16 %v4421, %v4418
    %v4461 = vpack.c.b16 %v4425, %v4422
    %v4462 = vpack.c.b16 %v4426, %v4423
    %v4463 = vpack.c.b16 %v4427, %v4424
    %v4464 = vpack.c.b16 %v4431, %v4428
    %v4465 = vpack.c.b16 %v4432, %v4429
    %v4466 = vpack.c.b16 %v4433, %v4430
    %v4467 = vpack.c.b16 %v4437, %v4434
    %v4468 = vpack.c.b16 %v4438, %v4435
    %v4469 = vpack.c.b16 %v4439, %v4436
    %v4470 = vpack.c.b16 %v4443, %v4440
    %v4471 = vpack.c.b16 %v4444, %v4441
    %v4472 = vpack.c.b16 %v4445, %v4442
    %v4473 = vpack.c.b16 %v4449, %v4446
    %v4474 = vpack.c.b16 %v4450, %v4447
    %v4475 = vpack.c.b16 %v4451, %v4448
    %4500 = vmatprep.subr.bf16.mxu0 %v4474
    %4501 = vmatpush1.bf16.msra.mxu0 %v4473
    %4502 = vmatprep.subr.bf16.mxu0 %v4471
    %4503 = vmatpush1.bf16.msra.mxu0 %v4470
    %4504 = vmatprep.subr.bf16.mxu0 %v4468
    %4505 = vmatpush1.bf16.msra.mxu0 %v4467
    %4506 = vmatprep.subr.bf16.mxu0 %v4465
    %4507 = vmatpush1.bf16.msra.mxu0 %v4464
    %4508 = vmatprep.subr.bf16.mxu0 %v4462
    %4509 = vmatpush1.bf16.msra.mxu0 %v4461
    %4510 = vmatprep.subr.bf16.mxu0 %v4459
    %4511 = vmatpush1.bf16.msra.mxu0 %v4458
    %4512 = vmatprep.subr.bf16.mxu0 %v4456
    %4513 = vmatpush1.bf16.msra.mxu0 %v4455
    %4514 = vmatprep.subr.bf16.mxu0 %v4453
    %4515 = vmatpush1.bf16.msra.mxu0 %v4452
    %4516 = vmatprep.subr.bf16.mxu0 0
    %4517 = vmatpush2.bf16.msra.mxu0 0
    %4518 = vmatprep.subr.bf16.mxu0 0
    %4519 = vmatpush2.bf16.msra.mxu0 0
    %4520 = vmatprep.subr.bf16.mxu0 0
    %4521 = vmatpush2.bf16.msra.mxu0 0
    %4522 = vmatprep.subr.bf16.mxu0 0
    %4523 = vmatpush2.bf16.msra.mxu0 0
    %4524 = vmatprep.subr.bf16.mxu0 0
    %4525 = vmatpush2.bf16.msra.mxu0 0
    %4526 = vmatprep.subr.bf16.mxu0 0
    %4527 = vmatpush2.bf16.msra.mxu0 0
    %4528 = vmatprep.subr.bf16.mxu0 0
    %4529 = vmatpush2.bf16.msra.mxu0 0
    %4530 = vmatprep.subr.bf16.mxu0 0
    %4531 = vmatpush2.bf16.msra.mxu0 0
    %4532 = vmatprep.mubr.bf16.mxu0 0
    %4533 = vmatmul.mubr.bf16.gmra.mxu0 %v4370
    %v4534 = vpop.f32.mrf.mxu0
    %v4535 = vadd.f32 %v4357, %v4534
    %v4536 = vpop.f32.mrf.mxu0
    %v4537 = vadd.f32 %v4361, %v4536
    %v4538 = vpop.f32.mrf.mxu0
    %v4539 = vpop.f32.mrf.mxu0
    %4540 = vdwg.mxu0
    %4541 = vmatprep.subr.bf16.mxu0 0
    %4542 = vmatpush1.bf16.msra.mxu0 %v4475
    %4543 = vmatprep.subr.bf16.mxu0 0
    %4544 = vmatpush1.bf16.msra.mxu0 %v4472
    %4545 = vmatprep.subr.bf16.mxu0 0
    %4546 = vmatpush1.bf16.msra.mxu0 %v4469
    %4547 = vmatprep.subr.bf16.mxu0 0
    %4548 = vmatpush1.bf16.msra.mxu0 %v4466
    %4549 = vmatprep.subr.bf16.mxu0 0
    %4550 = vmatpush1.bf16.msra.mxu0 %v4463
    %4551 = vmatprep.subr.bf16.mxu0 0
    %4552 = vmatpush1.bf16.msra.mxu0 %v4460
    %4553 = vmatprep.subr.bf16.mxu0 0
    %4554 = vmatpush1.bf16.msra.mxu0 %v4457
    %4555 = vmatprep.subr.bf16.mxu0 0
    %4556 = vmatpush1.bf16.msra.mxu0 %v4454
    %4557 = vmatprep.subr.bf16.mxu0 0
    %4558 = vmatpush2.bf16.msra.mxu0 0
    %4559 = vmatprep.subr.bf16.mxu0 0
    %4560 = vmatpush2.bf16.msra.mxu0 0
    %4561 = vmatprep.subr.bf16.mxu0 0
    %4562 = vmatpush2.bf16.msra.mxu0 0
    %4563 = vmatprep.subr.bf16.mxu0 0
    %4564 = vmatpush2.bf16.msra.mxu0 0
    %4565 = vmatprep.subr.bf16.mxu0 0
    %4566 = vmatpush2.bf16.msra.mxu0 0
    %4567 = vmatprep.subr.bf16.mxu0 0
    %4568 = vmatpush2.bf16.msra.mxu0 0
    %4569 = vmatprep.subr.bf16.mxu0 0
    %4570 = vmatpush2.bf16.msra.mxu0 0
    %4571 = vmatprep.subr.bf16.mxu0 0
    %4572 = vmatpush2.bf16.msra.mxu0 0
    %4573 = vmatprep.mubr.bf16.mxu0 0
    %4574 = vmatmul.mubr.bf16.gmra.mxu0 %v4370
    %v4575 = vpop.f32.mrf.mxu0
    %v4576 = vadd.f32 %v4365, %v4575
    %v4577 = vpop.f32.mrf.mxu0
    %v4578 = vpop.f32.mrf.mxu0
    %v4579 = vpop.f32.mrf.mxu0
    %4580 = vdwg.mxu0
    %v4583 = vrot.slane %v4535, 2
    %v4584 = vrot.slane %v4537, 2
    %v4587 = vadd.f32 %v4316, %v4583
    %v4588 = vadd.f32 %v4317, %v4584
    %v4589 = vxor.u32 %v4587, 2147483648
    %v4590 = vxor.u32 %v4588, 2147483648
    %v4591 = vmul.f32 %v4589, 1.442695
    %v4592 = vpow.pop %v4591
    %v4593 = vmul.f32 %v4590, 1.442695
    %v4594 = vpow.pop %v4593
    %v4595 = vadd.f32 %v4592, 1.0
    %v4596 = vadd.f32 %v4594, 1.0
    %v4597 = vrcp.pop %v4595
    %v4598 = vmul.f32 1.0, %v4597
    %v4599 = vrcp.pop %v4596
    %v4600 = vmul.f32 1.0, %v4599
    %v4602 = vrot.slane %v4576, 2
    %v4604 = vmul.f32 %v4598, %v4602
    %v4605 = vadd.f32 %v4318, %v4604
    %v4606 = vtanh.pop %v4605
    %v4607 = vsub.f32 1.0, %v4600
    %v4608 = vmul.f32 %v4607, %v4606
    %v4610 = vrot.slane %v4298, 6
    %v4612 = vmul.f32 %v4600, %v4610
    %v4613 = vadd.f32 %v4608, %v4612
    %4614 = vst.msk [vmem:[#allocation5] sm:$0xc0] %vm1728, %v4613
    %4615 = vst.msk [vmem:[#allocation5 + $0x2] sm:$0xc0] %vm1730, %v4613
    %v4616 = vld [vmem:[#allocation4 + $0x18] sm:$0x3]
    %v4617 = vld [vmem:[#allocation4 + $0x20] sm:$0x3]
    %v4618 = vld [vmem:[#allocation4 + $0x28] sm:$0x3]
    %v4619 = vld [vmem:[#allocation4] sm:$0xc0]
    %v4620 = vld [vmem:[#allocation4 + $0x8] sm:$0xc0]
    %v4621 = vld [vmem:[#allocation4 + $0x10] sm:$0xc0]
    %v4625 = vrot.slane %v4619, 6
    %v4626 = vrot.slane %v4620, 6
    %v4627 = vrot.slane %v4621, 6
    %v4631 = vsel %vm179, %v4616, %v4625
    %v4632 = vsel %vm180, %v4617, %v4626
    %v4633 = vsel %vm181, %v4618, %v4627
    %v4634 = vpack.c.bf16 %v4613, %v4613
    %v4635 = vld [vmem:[#allocation12] sm:$0xff]
    %v4636 = vld [vmem:[#allocation12 + $0x8] sm:$0xf]
    %v4637 = vld [vmem:[#allocation12 + $0xc] sm:$0xff]
    %v4638 = vld [vmem:[#allocation12 + $0x14] sm:$0xf]
    %v4639 = vld [vmem:[#allocation12 + $0x18] sm:$0xff]
    %v4640 = vld [vmem:[#allocation12 + $0x20] sm:$0xf]
    %v4641 = vld [vmem:[#allocation12 + $0x24] sm:$0xff]
    %v4642 = vld [vmem:[#allocation12 + $0x2c] sm:$0xf]
    %v4643 = vld [vmem:[#allocation12 + $0x30] sm:$0xff]
    %v4644 = vld [vmem:[#allocation12 + $0x38] sm:$0xf]
    %v4645 = vld [vmem:[#allocation12 + $0x3c] sm:$0xff]
    %v4646 = vld [vmem:[#allocation12 + $0x44] sm:$0xf]
    %v4647 = vld [vmem:[#allocation12 + $0x48] sm:$0xff]
    %v4648 = vld [vmem:[#allocation12 + $0x50] sm:$0xf]
    %v4649 = vld [vmem:[#allocation12 + $0x54] sm:$0xff]
    %v4650 = vld [vmem:[#allocation12 + $0x5c] sm:$0xf]
    %v4651 = vld [vmem:[#allocation12 + $0x60] sm:$0xff]
    %v4652 = vld [vmem:[#allocation12 + $0x68] sm:$0xf]
    %v4653 = vld [vmem:[#allocation12 + $0x6c] sm:$0xff]
    %v4654 = vld [vmem:[#allocation12 + $0x74] sm:$0xf]
    %v4655 = vld [vmem:[#allocation12 + $0x78] sm:$0xff]
    %v4656 = vld [vmem:[#allocation12 + $0x80] sm:$0xf]
    %v4657 = vld [vmem:[#allocation12 + $0x84] sm:$0xff]
    %v4658 = vld [vmem:[#allocation12 + $0x8c] sm:$0xf]
    %v4659 = vld [vmem:[#allocation12 + $0x90] sm:$0xff]
    %v4660 = vld [vmem:[#allocation12 + $0x98] sm:$0xf]
    %v4661 = vld [vmem:[#allocation12 + $0x9c] sm:$0xff]
    %v4662 = vld [vmem:[#allocation12 + $0xa4] sm:$0xf]
    %v4663 = vld [vmem:[#allocation12 + $0xa8] sm:$0xff]
    %v4664 = vld [vmem:[#allocation12 + $0xb0] sm:$0xf]
    %v4665 = vld [vmem:[#allocation12 + $0xb4] sm:$0xff]
    %v4666 = vld [vmem:[#allocation12 + $0xbc] sm:$0xf]
    %v4667 = vld [vmem:[%s8] sm:$0x7]
    %v4669 = vlaneseq
    %v4670 = vshrl.u32 %v4669, 7
    %v4671 = vsub.s32 0, %v4670
    %v4672 = vrot.slane %v4667, %v4671
    %v4673 = vlaneseq
    %v4674 = vshrl.u32 %v4673, 7
    %v4675 = vsub.s32 1, %v4674
    %v4676 = vrot.slane %v4667, %v4675
    %v4677 = vlaneseq
    %v4678 = vshrl.u32 %v4677, 7
    %v4679 = vsub.s32 2, %v4678
    %v4680 = vrot.slane %v4667, %v4679
    %v4685 = vrot.slane %v4634, 3
    %v4719 = vunpack.c.l.b16 %v4635
    %v4720 = vunpack.c.h.b16 %v4635
    %v4721 = vunpack.c.l.b16 %v4636
    %v4722 = vunpack.c.l.b16 %v4637
    %v4723 = vunpack.c.h.b16 %v4637
    %v4724 = vunpack.c.l.b16 %v4638
    %v4725 = vunpack.c.l.b16 %v4639
    %v4726 = vunpack.c.h.b16 %v4639
    %v4727 = vunpack.c.l.b16 %v4640
    %v4728 = vunpack.c.l.b16 %v4641
    %v4729 = vunpack.c.h.b16 %v4641
    %v4730 = vunpack.c.l.b16 %v4642
    %v4731 = vunpack.c.l.b16 %v4643
    %v4732 = vunpack.c.h.b16 %v4643
    %v4733 = vunpack.c.l.b16 %v4644
    %v4734 = vunpack.c.l.b16 %v4645
    %v4735 = vunpack.c.h.b16 %v4645
    %v4736 = vunpack.c.l.b16 %v4646
    %v4737 = vunpack.c.l.b16 %v4647
    %v4738 = vunpack.c.h.b16 %v4647
    %v4739 = vunpack.c.l.b16 %v4648
    %v4740 = vunpack.c.l.b16 %v4649
    %v4741 = vunpack.c.h.b16 %v4649
    %v4742 = vunpack.c.l.b16 %v4650
    %v4743 = vunpack.c.l.b16 %v4651
    %v4744 = vunpack.c.h.b16 %v4651
    %v4745 = vunpack.c.l.b16 %v4652
    %v4746 = vunpack.c.l.b16 %v4653
    %v4747 = vunpack.c.h.b16 %v4653
    %v4748 = vunpack.c.l.b16 %v4654
    %v4749 = vunpack.c.l.b16 %v4655
    %v4750 = vunpack.c.h.b16 %v4655
    %v4751 = vunpack.c.l.b16 %v4656
    %v4752 = vunpack.c.l.b16 %v4657
    %v4753 = vunpack.c.h.b16 %v4657
    %v4754 = vunpack.c.l.b16 %v4658
    %v4755 = vunpack.c.l.b16 %v4659
    %v4756 = vunpack.c.h.b16 %v4659
    %v4757 = vunpack.c.l.b16 %v4660
    %v4758 = vunpack.c.l.b16 %v4661
    %v4759 = vunpack.c.h.b16 %v4661
    %v4760 = vunpack.c.l.b16 %v4662
    %v4761 = vunpack.c.l.b16 %v4663
    %v4762 = vunpack.c.h.b16 %v4663
    %v4763 = vunpack.c.l.b16 %v4664
    %v4764 = vunpack.c.l.b16 %v4665
    %v4765 = vunpack.c.h.b16 %v4665
    %v4766 = vunpack.c.l.b16 %v4666
    %v4767 = vpack.c.b16 %v4722, %v4719
    %v4768 = vpack.c.b16 %v4723, %v4720
    %v4769 = vpack.c.b16 %v4724, %v4721
    %v4770 = vpack.c.b16 %v4728, %v4725
    %v4771 = vpack.c.b16 %v4729, %v4726
    %v4772 = vpack.c.b16 %v4730, %v4727
    %v4773 = vpack.c.b16 %v4734, %v4731
    %v4774 = vpack.c.b16 %v4735, %v4732
    %v4775 = vpack.c.b16 %v4736, %v4733
    %v4776 = vpack.c.b16 %v4740, %v4737
    %v4777 = vpack.c.b16 %v4741, %v4738
    %v4778 = vpack.c.b16 %v4742, %v4739
    %v4779 = vpack.c.b16 %v4746, %v4743
    %v4780 = vpack.c.b16 %v4747, %v4744
    %v4781 = vpack.c.b16 %v4748, %v4745
    %v4782 = vpack.c.b16 %v4752, %v4749
    %v4783 = vpack.c.b16 %v4753, %v4750
    %v4784 = vpack.c.b16 %v4754, %v4751
    %v4785 = vpack.c.b16 %v4758, %v4755
    %v4786 = vpack.c.b16 %v4759, %v4756
    %v4787 = vpack.c.b16 %v4760, %v4757
    %v4788 = vpack.c.b16 %v4764, %v4761
    %v4789 = vpack.c.b16 %v4765, %v4762
    %v4790 = vpack.c.b16 %v4766, %v4763
    %4815 = vmatprep.subr.bf16.mxu0 %v4789
    %4816 = vmatpush1.bf16.msra.mxu0 %v4788
    %4817 = vmatprep.subr.bf16.mxu0 %v4786
    %4818 = vmatpush1.bf16.msra.mxu0 %v4785
    %4819 = vmatprep.subr.bf16.mxu0 %v4783
    %4820 = vmatpush1.bf16.msra.mxu0 %v4782
    %4821 = vmatprep.subr.bf16.mxu0 %v4780
    %4822 = vmatpush1.bf16.msra.mxu0 %v4779
    %4823 = vmatprep.subr.bf16.mxu0 %v4777
    %4824 = vmatpush1.bf16.msra.mxu0 %v4776
    %4825 = vmatprep.subr.bf16.mxu0 %v4774
    %4826 = vmatpush1.bf16.msra.mxu0 %v4773
    %4827 = vmatprep.subr.bf16.mxu0 %v4771
    %4828 = vmatpush1.bf16.msra.mxu0 %v4770
    %4829 = vmatprep.subr.bf16.mxu0 %v4768
    %4830 = vmatpush1.bf16.msra.mxu0 %v4767
    %4831 = vmatprep.subr.bf16.mxu0 0
    %4832 = vmatpush2.bf16.msra.mxu0 0
    %4833 = vmatprep.subr.bf16.mxu0 0
    %4834 = vmatpush2.bf16.msra.mxu0 0
    %4835 = vmatprep.subr.bf16.mxu0 0
    %4836 = vmatpush2.bf16.msra.mxu0 0
    %4837 = vmatprep.subr.bf16.mxu0 0
    %4838 = vmatpush2.bf16.msra.mxu0 0
    %4839 = vmatprep.subr.bf16.mxu0 0
    %4840 = vmatpush2.bf16.msra.mxu0 0
    %4841 = vmatprep.subr.bf16.mxu0 0
    %4842 = vmatpush2.bf16.msra.mxu0 0
    %4843 = vmatprep.subr.bf16.mxu0 0
    %4844 = vmatpush2.bf16.msra.mxu0 0
    %4845 = vmatprep.subr.bf16.mxu0 0
    %4846 = vmatpush2.bf16.msra.mxu0 0
    %4847 = vmatprep.mubr.bf16.mxu0 0
    %4848 = vmatmul.mubr.bf16.gmra.mxu0 %v4685
    %v4849 = vpop.f32.mrf.mxu0
    %v4850 = vadd.f32 %v4672, %v4849
    %v4851 = vpop.f32.mrf.mxu0
    %v4852 = vadd.f32 %v4676, %v4851
    %v4853 = vpop.f32.mrf.mxu0
    %v4854 = vpop.f32.mrf.mxu0
    %4855 = vdwg.mxu0
    %4856 = vmatprep.subr.bf16.mxu0 0
    %4857 = vmatpush1.bf16.msra.mxu0 %v4790
    %4858 = vmatprep.subr.bf16.mxu0 0
    %4859 = vmatpush1.bf16.msra.mxu0 %v4787
    %4860 = vmatprep.subr.bf16.mxu0 0
    %4861 = vmatpush1.bf16.msra.mxu0 %v4784
    %4862 = vmatprep.subr.bf16.mxu0 0
    %4863 = vmatpush1.bf16.msra.mxu0 %v4781
    %4864 = vmatprep.subr.bf16.mxu0 0
    %4865 = vmatpush1.bf16.msra.mxu0 %v4778
    %4866 = vmatprep.subr.bf16.mxu0 0
    %4867 = vmatpush1.bf16.msra.mxu0 %v4775
    %4868 = vmatprep.subr.bf16.mxu0 0
    %4869 = vmatpush1.bf16.msra.mxu0 %v4772
    %4870 = vmatprep.subr.bf16.mxu0 0
    %4871 = vmatpush1.bf16.msra.mxu0 %v4769
    %4872 = vmatprep.subr.bf16.mxu0 0
    %4873 = vmatpush2.bf16.msra.mxu0 0
    %4874 = vmatprep.subr.bf16.mxu0 0
    %4875 = vmatpush2.bf16.msra.mxu0 0
    %4876 = vmatprep.subr.bf16.mxu0 0
    %4877 = vmatpush2.bf16.msra.mxu0 0
    %4878 = vmatprep.subr.bf16.mxu0 0
    %4879 = vmatpush2.bf16.msra.mxu0 0
    %4880 = vmatprep.subr.bf16.mxu0 0
    %4881 = vmatpush2.bf16.msra.mxu0 0
    %4882 = vmatprep.subr.bf16.mxu0 0
    %4883 = vmatpush2.bf16.msra.mxu0 0
    %4884 = vmatprep.subr.bf16.mxu0 0
    %4885 = vmatpush2.bf16.msra.mxu0 0
    %4886 = vmatprep.subr.bf16.mxu0 0
    %4887 = vmatpush2.bf16.msra.mxu0 0
    %4888 = vmatprep.mubr.bf16.mxu0 0
    %4889 = vmatmul.mubr.bf16.gmra.mxu0 %v4685
    %v4890 = vpop.f32.mrf.mxu0
    %v4891 = vadd.f32 %v4680, %v4890
    %v4892 = vpop.f32.mrf.mxu0
    %v4893 = vpop.f32.mrf.mxu0
    %v4894 = vpop.f32.mrf.mxu0
    %4895 = vdwg.mxu0
    %v4896 = vadd.f32 %v4631, %v4850
    %v4897 = vadd.f32 %v4632, %v4852
    %v4898 = vxor.u32 %v4896, 2147483648
    %v4899 = vxor.u32 %v4897, 2147483648
    %v4900 = vmul.f32 %v4898, 1.442695
    %v4901 = vpow.pop %v4900
    %v4902 = vmul.f32 %v4899, 1.442695
    %v4903 = vpow.pop %v4902
    %v4904 = vadd.f32 %v4901, 1.0
    %v4905 = vadd.f32 %v4903, 1.0
    %v4906 = vrcp.pop %v4904
    %v4907 = vmul.f32 1.0, %v4906
    %v4908 = vrcp.pop %v4905
    %v4909 = vmul.f32 1.0, %v4908
    %v4910 = vmul.f32 %v4907, %v4891
    %v4911 = vadd.f32 %v4633, %v4910
    %v4912 = vtanh.pop %v4911
    %v4913 = vsub.f32 1.0, %v4909
    %v4914 = vmul.f32 %v4913, %v4912
    %v4916 = vrot.slane %v4613, 6
    %v4918 = vmul.f32 %v4909, %v4916
    %v4919 = vadd.f32 %v4914, %v4918
    %4920 = vst.msk [vmem:[#allocation5 + $0x8] sm:$0x3] %vm684, %v4919
    %4921 = vst.msk [vmem:[#allocation5 + $0x6] sm:$0x3] %vm686, %v4919
    %v4922 = vld [vmem:[#allocation4 + $0x18] sm:$0xc]
    %v4923 = vld [vmem:[#allocation4 + $0x20] sm:$0xc]
    %v4924 = vld [vmem:[#allocation4 + $0x28] sm:$0xc]
    %v4925 = vld [vmem:[#allocation4] sm:$0x30]
    %v4926 = vld [vmem:[#allocation4 + $0x8] sm:$0x30]
    %v4927 = vld [vmem:[#allocation4 + $0x10] sm:$0x30]
    %v4931 = vrot.slane %v4925, 2
    %v4932 = vrot.slane %v4926, 2
    %v4933 = vrot.slane %v4927, 2
    %v4937 = vsel %vm179, %v4922, %v4931
    %v4938 = vsel %vm180, %v4923, %v4932
    %v4939 = vsel %vm181, %v4924, %v4933
    %v4940 = vpack.c.bf16 %v4919, %v4919
    %v4941 = vld [vmem:[#allocation12] sm:$0xff]
    %v4942 = vld [vmem:[#allocation12 + $0x8] sm:$0xf]
    %v4943 = vld [vmem:[#allocation12 + $0xc] sm:$0xff]
    %v4944 = vld [vmem:[#allocation12 + $0x14] sm:$0xf]
    %v4945 = vld [vmem:[#allocation12 + $0x18] sm:$0xff]
    %v4946 = vld [vmem:[#allocation12 + $0x20] sm:$0xf]
    %v4947 = vld [vmem:[#allocation12 + $0x24] sm:$0xff]
    %v4948 = vld [vmem:[#allocation12 + $0x2c] sm:$0xf]
    %v4949 = vld [vmem:[#allocation12 + $0x30] sm:$0xff]
    %v4950 = vld [vmem:[#allocation12 + $0x38] sm:$0xf]
    %v4951 = vld [vmem:[#allocation12 + $0x3c] sm:$0xff]
    %v4952 = vld [vmem:[#allocation12 + $0x44] sm:$0xf]
    %v4953 = vld [vmem:[#allocation12 + $0x48] sm:$0xff]
    %v4954 = vld [vmem:[#allocation12 + $0x50] sm:$0xf]
    %v4955 = vld [vmem:[#allocation12 + $0x54] sm:$0xff]
    %v4956 = vld [vmem:[#allocation12 + $0x5c] sm:$0xf]
    %v4957 = vld [vmem:[#allocation12 + $0x60] sm:$0xff]
    %v4958 = vld [vmem:[#allocation12 + $0x68] sm:$0xf]
    %v4959 = vld [vmem:[#allocation12 + $0x6c] sm:$0xff]
    %v4960 = vld [vmem:[#allocation12 + $0x74] sm:$0xf]
    %v4961 = vld [vmem:[#allocation12 + $0x78] sm:$0xff]
    %v4962 = vld [vmem:[#allocation12 + $0x80] sm:$0xf]
    %v4963 = vld [vmem:[#allocation12 + $0x84] sm:$0xff]
    %v4964 = vld [vmem:[#allocation12 + $0x8c] sm:$0xf]
    %v4965 = vld [vmem:[#allocation12 + $0x90] sm:$0xff]
    %v4966 = vld [vmem:[#allocation12 + $0x98] sm:$0xf]
    %v4967 = vld [vmem:[#allocation12 + $0x9c] sm:$0xff]
    %v4968 = vld [vmem:[#allocation12 + $0xa4] sm:$0xf]
    %v4969 = vld [vmem:[#allocation12 + $0xa8] sm:$0xff]
    %v4970 = vld [vmem:[#allocation12 + $0xb0] sm:$0xf]
    %v4971 = vld [vmem:[#allocation12 + $0xb4] sm:$0xff]
    %v4972 = vld [vmem:[#allocation12 + $0xbc] sm:$0xf]
    %v4973 = vld [vmem:[%s8] sm:$0x7]
    %v4975 = vlaneseq
    %v4976 = vshrl.u32 %v4975, 7
    %v4977 = vsub.s32 0, %v4976
    %v4978 = vrot.slane %v4973, %v4977
    %v4979 = vlaneseq
    %v4980 = vshrl.u32 %v4979, 7
    %v4981 = vsub.s32 1, %v4980
    %v4982 = vrot.slane %v4973, %v4981
    %v4983 = vlaneseq
    %v4984 = vshrl.u32 %v4983, 7
    %v4985 = vsub.s32 2, %v4984
    %v4986 = vrot.slane %v4973, %v4985
    %v5022 = vunpack.c.l.b16 %v4941
    %v5023 = vunpack.c.h.b16 %v4941
    %v5024 = vunpack.c.l.b16 %v4942
    %v5025 = vunpack.c.l.b16 %v4943
    %v5026 = vunpack.c.h.b16 %v4943
    %v5027 = vunpack.c.l.b16 %v4944
    %v5028 = vunpack.c.l.b16 %v4945
    %v5029 = vunpack.c.h.b16 %v4945
    %v5030 = vunpack.c.l.b16 %v4946
    %v5031 = vunpack.c.l.b16 %v4947
    %v5032 = vunpack.c.h.b16 %v4947
    %v5033 = vunpack.c.l.b16 %v4948
    %v5034 = vunpack.c.l.b16 %v4949
    %v5035 = vunpack.c.h.b16 %v4949
    %v5036 = vunpack.c.l.b16 %v4950
    %v5037 = vunpack.c.l.b16 %v4951
    %v5038 = vunpack.c.h.b16 %v4951
    %v5039 = vunpack.c.l.b16 %v4952
    %v5040 = vunpack.c.l.b16 %v4953
    %v5041 = vunpack.c.h.b16 %v4953
    %v5042 = vunpack.c.l.b16 %v4954
    %v5043 = vunpack.c.l.b16 %v4955
    %v5044 = vunpack.c.h.b16 %v4955
    %v5045 = vunpack.c.l.b16 %v4956
    %v5046 = vunpack.c.l.b16 %v4957
    %v5047 = vunpack.c.h.b16 %v4957
    %v5048 = vunpack.c.l.b16 %v4958
    %v5049 = vunpack.c.l.b16 %v4959
    %v5050 = vunpack.c.h.b16 %v4959
    %v5051 = vunpack.c.l.b16 %v4960
    %v5052 = vunpack.c.l.b16 %v4961
    %v5053 = vunpack.c.h.b16 %v4961
    %v5054 = vunpack.c.l.b16 %v4962
    %v5055 = vunpack.c.l.b16 %v4963
    %v5056 = vunpack.c.h.b16 %v4963
    %v5057 = vunpack.c.l.b16 %v4964
    %v5058 = vunpack.c.l.b16 %v4965
    %v5059 = vunpack.c.h.b16 %v4965
    %v5060 = vunpack.c.l.b16 %v4966
    %v5061 = vunpack.c.l.b16 %v4967
    %v5062 = vunpack.c.h.b16 %v4967
    %v5063 = vunpack.c.l.b16 %v4968
    %v5064 = vunpack.c.l.b16 %v4969
    %v5065 = vunpack.c.h.b16 %v4969
    %v5066 = vunpack.c.l.b16 %v4970
    %v5067 = vunpack.c.l.b16 %v4971
    %v5068 = vunpack.c.h.b16 %v4971
    %v5069 = vunpack.c.l.b16 %v4972
    %v5070 = vpack.c.b16 %v5025, %v5022
    %v5071 = vpack.c.b16 %v5026, %v5023
    %v5072 = vpack.c.b16 %v5027, %v5024
    %v5073 = vpack.c.b16 %v5031, %v5028
    %v5074 = vpack.c.b16 %v5032, %v5029
    %v5075 = vpack.c.b16 %v5033, %v5030
    %v5076 = vpack.c.b16 %v5037, %v5034
    %v5077 = vpack.c.b16 %v5038, %v5035
    %v5078 = vpack.c.b16 %v5039, %v5036
    %v5079 = vpack.c.b16 %v5043, %v5040
    %v5080 = vpack.c.b16 %v5044, %v5041
    %v5081 = vpack.c.b16 %v5045, %v5042
    %v5082 = vpack.c.b16 %v5049, %v5046
    %v5083 = vpack.c.b16 %v5050, %v5047
    %v5084 = vpack.c.b16 %v5051, %v5048
    %v5085 = vpack.c.b16 %v5055, %v5052
    %v5086 = vpack.c.b16 %v5056, %v5053
    %v5087 = vpack.c.b16 %v5057, %v5054
    %v5088 = vpack.c.b16 %v5061, %v5058
    %v5089 = vpack.c.b16 %v5062, %v5059
    %v5090 = vpack.c.b16 %v5063, %v5060
    %v5091 = vpack.c.b16 %v5067, %v5064
    %v5092 = vpack.c.b16 %v5068, %v5065
    %v5093 = vpack.c.b16 %v5069, %v5066
    %5118 = vmatprep.subr.bf16.mxu0 %v5092
    %5119 = vmatpush1.bf16.msra.mxu0 %v5091
    %5120 = vmatprep.subr.bf16.mxu0 %v5089
    %5121 = vmatpush1.bf16.msra.mxu0 %v5088
    %5122 = vmatprep.subr.bf16.mxu0 %v5086
    %5123 = vmatpush1.bf16.msra.mxu0 %v5085
    %5124 = vmatprep.subr.bf16.mxu0 %v5083
    %5125 = vmatpush1.bf16.msra.mxu0 %v5082
    %5126 = vmatprep.subr.bf16.mxu0 %v5080
    %5127 = vmatpush1.bf16.msra.mxu0 %v5079
    %5128 = vmatprep.subr.bf16.mxu0 %v5077
    %5129 = vmatpush1.bf16.msra.mxu0 %v5076
    %5130 = vmatprep.subr.bf16.mxu0 %v5074
    %5131 = vmatpush1.bf16.msra.mxu0 %v5073
    %5132 = vmatprep.subr.bf16.mxu0 %v5071
    %5133 = vmatpush1.bf16.msra.mxu0 %v5070
    %5134 = vmatprep.subr.bf16.mxu0 0
    %5135 = vmatpush2.bf16.msra.mxu0 0
    %5136 = vmatprep.subr.bf16.mxu0 0
    %5137 = vmatpush2.bf16.msra.mxu0 0
    %5138 = vmatprep.subr.bf16.mxu0 0
    %5139 = vmatpush2.bf16.msra.mxu0 0
    %5140 = vmatprep.subr.bf16.mxu0 0
    %5141 = vmatpush2.bf16.msra.mxu0 0
    %5142 = vmatprep.subr.bf16.mxu0 0
    %5143 = vmatpush2.bf16.msra.mxu0 0
    %5144 = vmatprep.subr.bf16.mxu0 0
    %5145 = vmatpush2.bf16.msra.mxu0 0
    %5146 = vmatprep.subr.bf16.mxu0 0
    %5147 = vmatpush2.bf16.msra.mxu0 0
    %5148 = vmatprep.subr.bf16.mxu0 0
    %5149 = vmatpush2.bf16.msra.mxu0 0
    %5150 = vmatprep.mubr.bf16.mxu0 0
    %5151 = vmatmul.mubr.bf16.gmra.mxu0 %v4940
    %v5152 = vpop.f32.mrf.mxu0
    %v5153 = vadd.f32 %v4978, %v5152
    %v5154 = vpop.f32.mrf.mxu0
    %v5155 = vadd.f32 %v4982, %v5154
    %v5156 = vpop.f32.mrf.mxu0
    %v5157 = vpop.f32.mrf.mxu0
    %5158 = vdwg.mxu0
    %5159 = vmatprep.subr.bf16.mxu0 0
    %5160 = vmatpush1.bf16.msra.mxu0 %v5093
    %5161 = vmatprep.subr.bf16.mxu0 0
    %5162 = vmatpush1.bf16.msra.mxu0 %v5090
    %5163 = vmatprep.subr.bf16.mxu0 0
    %5164 = vmatpush1.bf16.msra.mxu0 %v5087
    %5165 = vmatprep.subr.bf16.mxu0 0
    %5166 = vmatpush1.bf16.msra.mxu0 %v5084
    %5167 = vmatprep.subr.bf16.mxu0 0
    %5168 = vmatpush1.bf16.msra.mxu0 %v5081
    %5169 = vmatprep.subr.bf16.mxu0 0
    %5170 = vmatpush1.bf16.msra.mxu0 %v5078
    %5171 = vmatprep.subr.bf16.mxu0 0
    %5172 = vmatpush1.bf16.msra.mxu0 %v5075
    %5173 = vmatprep.subr.bf16.mxu0 0
    %5174 = vmatpush1.bf16.msra.mxu0 %v5072
    %5175 = vmatprep.subr.bf16.mxu0 0
    %5176 = vmatpush2.bf16.msra.mxu0 0
    %5177 = vmatprep.subr.bf16.mxu0 0
    %5178 = vmatpush2.bf16.msra.mxu0 0
    %5179 = vmatprep.subr.bf16.mxu0 0
    %5180 = vmatpush2.bf16.msra.mxu0 0
    %5181 = vmatprep.subr.bf16.mxu0 0
    %5182 = vmatpush2.bf16.msra.mxu0 0
    %5183 = vmatprep.subr.bf16.mxu0 0
    %5184 = vmatpush2.bf16.msra.mxu0 0
    %5185 = vmatprep.subr.bf16.mxu0 0
    %5186 = vmatpush2.bf16.msra.mxu0 0
    %5187 = vmatprep.subr.bf16.mxu0 0
    %5188 = vmatpush2.bf16.msra.mxu0 0
    %5189 = vmatprep.subr.bf16.mxu0 0
    %5190 = vmatpush2.bf16.msra.mxu0 0
    %5191 = vmatprep.mubr.bf16.mxu0 0
    %5192 = vmatmul.mubr.bf16.gmra.mxu0 %v4940
    %v5193 = vpop.f32.mrf.mxu0
    %v5194 = vadd.f32 %v4986, %v5193
    %v5195 = vpop.f32.mrf.mxu0
    %v5196 = vpop.f32.mrf.mxu0
    %v5197 = vpop.f32.mrf.mxu0
    %5198 = vdwg.mxu0
    %v5201 = vrot.slane %v5153, 6
    %v5202 = vrot.slane %v5155, 6
    %v5205 = vadd.f32 %v4937, %v5201
    %v5206 = vadd.f32 %v4938, %v5202
    %v5207 = vxor.u32 %v5205, 2147483648
    %v5208 = vxor.u32 %v5206, 2147483648
    %v5209 = vmul.f32 %v5207, 1.442695
    %v5210 = vpow.pop %v5209
    %v5211 = vmul.f32 %v5208, 1.442695
    %v5212 = vpow.pop %v5211
    %v5213 = vadd.f32 %v5210, 1.0
    %v5214 = vadd.f32 %v5212, 1.0
    %v5215 = vrcp.pop %v5213
    %v5216 = vmul.f32 1.0, %v5215
    %v5217 = vrcp.pop %v5214
    %v5218 = vmul.f32 1.0, %v5217
    %v5220 = vrot.slane %v5194, 6
    %v5222 = vmul.f32 %v5216, %v5220
    %v5223 = vadd.f32 %v4939, %v5222
    %v5224 = vtanh.pop %v5223
    %v5225 = vsub.f32 1.0, %v5218
    %v5226 = vmul.f32 %v5225, %v5224
    %v5228 = vrot.slane %v4919, 6
    %v5230 = vmul.f32 %v5218, %v5228
    %v5231 = vadd.f32 %v5226, %v5230
    %5232 = vst.msk [vmem:[#allocation5 + $0x8] sm:$0xc] %vm1030, %v5231
    %5233 = vst.msk [vmem:[#allocation5 + $0x2] sm:$0xc] %vm1032, %v5231
    %v5234 = vld [vmem:[#allocation4 + $0x18] sm:$0x30]
    %v5235 = vld [vmem:[#allocation4 + $0x20] sm:$0x30]
    %v5236 = vld [vmem:[#allocation4 + $0x28] sm:$0x30]
    %v5237 = vld [vmem:[#allocation4] sm:$0xc]
    %v5238 = vld [vmem:[#allocation4 + $0x8] sm:$0xc]
    %v5239 = vld [vmem:[#allocation4 + $0x10] sm:$0xc]
    %v5243 = vrot.slane %v5237, 6
    %v5244 = vrot.slane %v5238, 6
    %v5245 = vrot.slane %v5239, 6
    %v5249 = vsel %vm179, %v5234, %v5243
    %v5250 = vsel %vm180, %v5235, %v5244
    %v5251 = vsel %vm181, %v5236, %v5245
    %v5252 = vpack.c.bf16 %v5231, %v5231
    %v5253 = vld [vmem:[#allocation12] sm:$0xff]
    %v5254 = vld [vmem:[#allocation12 + $0x8] sm:$0xf]
    %v5255 = vld [vmem:[#allocation12 + $0xc] sm:$0xff]
    %v5256 = vld [vmem:[#allocation12 + $0x14] sm:$0xf]
    %v5257 = vld [vmem:[#allocation12 + $0x18] sm:$0xff]
    %v5258 = vld [vmem:[#allocation12 + $0x20] sm:$0xf]
    %v5259 = vld [vmem:[#allocation12 + $0x24] sm:$0xff]
    %v5260 = vld [vmem:[#allocation12 + $0x2c] sm:$0xf]
    %v5261 = vld [vmem:[#allocation12 + $0x30] sm:$0xff]
    %v5262 = vld [vmem:[#allocation12 + $0x38] sm:$0xf]
    %v5263 = vld [vmem:[#allocation12 + $0x3c] sm:$0xff]
    %v5264 = vld [vmem:[#allocation12 + $0x44] sm:$0xf]
    %v5265 = vld [vmem:[#allocation12 + $0x48] sm:$0xff]
    %v5266 = vld [vmem:[#allocation12 + $0x50] sm:$0xf]
    %v5267 = vld [vmem:[#allocation12 + $0x54] sm:$0xff]
    %v5268 = vld [vmem:[#allocation12 + $0x5c] sm:$0xf]
    %v5269 = vld [vmem:[#allocation12 + $0x60] sm:$0xff]
    %v5270 = vld [vmem:[#allocation12 + $0x68] sm:$0xf]
    %v5271 = vld [vmem:[#allocation12 + $0x6c] sm:$0xff]
    %v5272 = vld [vmem:[#allocation12 + $0x74] sm:$0xf]
    %v5273 = vld [vmem:[#allocation12 + $0x78] sm:$0xff]
    %v5274 = vld [vmem:[#allocation12 + $0x80] sm:$0xf]
    %v5275 = vld [vmem:[#allocation12 + $0x84] sm:$0xff]
    %v5276 = vld [vmem:[#allocation12 + $0x8c] sm:$0xf]
    %v5277 = vld [vmem:[#allocation12 + $0x90] sm:$0xff]
    %v5278 = vld [vmem:[#allocation12 + $0x98] sm:$0xf]
    %v5279 = vld [vmem:[#allocation12 + $0x9c] sm:$0xff]
    %v5280 = vld [vmem:[#allocation12 + $0xa4] sm:$0xf]
    %v5281 = vld [vmem:[#allocation12 + $0xa8] sm:$0xff]
    %v5282 = vld [vmem:[#allocation12 + $0xb0] sm:$0xf]
    %v5283 = vld [vmem:[#allocation12 + $0xb4] sm:$0xff]
    %v5284 = vld [vmem:[#allocation12 + $0xbc] sm:$0xf]
    %v5285 = vld [vmem:[%s8] sm:$0x7]
    %v5287 = vlaneseq
    %v5288 = vshrl.u32 %v5287, 7
    %v5289 = vsub.s32 0, %v5288
    %v5290 = vrot.slane %v5285, %v5289
    %v5291 = vlaneseq
    %v5292 = vshrl.u32 %v5291, 7
    %v5293 = vsub.s32 1, %v5292
    %v5294 = vrot.slane %v5285, %v5293
    %v5295 = vlaneseq
    %v5296 = vshrl.u32 %v5295, 7
    %v5297 = vsub.s32 2, %v5296
    %v5298 = vrot.slane %v5285, %v5297
    %v5303 = vrot.slane %v5252, 1
    %v5337 = vunpack.c.l.b16 %v5253
    %v5338 = vunpack.c.h.b16 %v5253
    %v5339 = vunpack.c.l.b16 %v5254
    %v5340 = vunpack.c.l.b16 %v5255
    %v5341 = vunpack.c.h.b16 %v5255
    %v5342 = vunpack.c.l.b16 %v5256
    %v5343 = vunpack.c.l.b16 %v5257
    %v5344 = vunpack.c.h.b16 %v5257
    %v5345 = vunpack.c.l.b16 %v5258
    %v5346 = vunpack.c.l.b16 %v5259
    %v5347 = vunpack.c.h.b16 %v5259
    %v5348 = vunpack.c.l.b16 %v5260
    %v5349 = vunpack.c.l.b16 %v5261
    %v5350 = vunpack.c.h.b16 %v5261
    %v5351 = vunpack.c.l.b16 %v5262
    %v5352 = vunpack.c.l.b16 %v5263
    %v5353 = vunpack.c.h.b16 %v5263
    %v5354 = vunpack.c.l.b16 %v5264
    %v5355 = vunpack.c.l.b16 %v5265
    %v5356 = vunpack.c.h.b16 %v5265
    %v5357 = vunpack.c.l.b16 %v5266
    %v5358 = vunpack.c.l.b16 %v5267
    %v5359 = vunpack.c.h.b16 %v5267
    %v5360 = vunpack.c.l.b16 %v5268
    %v5361 = vunpack.c.l.b16 %v5269
    %v5362 = vunpack.c.h.b16 %v5269
    %v5363 = vunpack.c.l.b16 %v5270
    %v5364 = vunpack.c.l.b16 %v5271
    %v5365 = vunpack.c.h.b16 %v5271
    %v5366 = vunpack.c.l.b16 %v5272
    %v5367 = vunpack.c.l.b16 %v5273
    %v5368 = vunpack.c.h.b16 %v5273
    %v5369 = vunpack.c.l.b16 %v5274
    %v5370 = vunpack.c.l.b16 %v5275
    %v5371 = vunpack.c.h.b16 %v5275
    %v5372 = vunpack.c.l.b16 %v5276
    %v5373 = vunpack.c.l.b16 %v5277
    %v5374 = vunpack.c.h.b16 %v5277
    %v5375 = vunpack.c.l.b16 %v5278
    %v5376 = vunpack.c.l.b16 %v5279
    %v5377 = vunpack.c.h.b16 %v5279
    %v5378 = vunpack.c.l.b16 %v5280
    %v5379 = vunpack.c.l.b16 %v5281
    %v5380 = vunpack.c.h.b16 %v5281
    %v5381 = vunpack.c.l.b16 %v5282
    %v5382 = vunpack.c.l.b16 %v5283
    %v5383 = vunpack.c.h.b16 %v5283
    %v5384 = vunpack.c.l.b16 %v5284
    %v5385 = vpack.c.b16 %v5340, %v5337
    %v5386 = vpack.c.b16 %v5341, %v5338
    %v5387 = vpack.c.b16 %v5342, %v5339
    %v5388 = vpack.c.b16 %v5346, %v5343
    %v5389 = vpack.c.b16 %v5347, %v5344
    %v5390 = vpack.c.b16 %v5348, %v5345
    %v5391 = vpack.c.b16 %v5352, %v5349
    %v5392 = vpack.c.b16 %v5353, %v5350
    %v5393 = vpack.c.b16 %v5354, %v5351
    %v5394 = vpack.c.b16 %v5358, %v5355
    %v5395 = vpack.c.b16 %v5359, %v5356
    %v5396 = vpack.c.b16 %v5360, %v5357
    %v5397 = vpack.c.b16 %v5364, %v5361
    %v5398 = vpack.c.b16 %v5365, %v5362
    %v5399 = vpack.c.b16 %v5366, %v5363
    %v5400 = vpack.c.b16 %v5370, %v5367
    %v5401 = vpack.c.b16 %v5371, %v5368
    %v5402 = vpack.c.b16 %v5372, %v5369
    %v5403 = vpack.c.b16 %v5376, %v5373
    %v5404 = vpack.c.b16 %v5377, %v5374
    %v5405 = vpack.c.b16 %v5378, %v5375
    %v5406 = vpack.c.b16 %v5382, %v5379
    %v5407 = vpack.c.b16 %v5383, %v5380
    %v5408 = vpack.c.b16 %v5384, %v5381
    %5433 = vmatprep.subr.bf16.mxu0 %v5407
    %5434 = vmatpush1.bf16.msra.mxu0 %v5406
    %5435 = vmatprep.subr.bf16.mxu0 %v5404
    %5436 = vmatpush1.bf16.msra.mxu0 %v5403
    %5437 = vmatprep.subr.bf16.mxu0 %v5401
    %5438 = vmatpush1.bf16.msra.mxu0 %v5400
    %5439 = vmatprep.subr.bf16.mxu0 %v5398
    %5440 = vmatpush1.bf16.msra.mxu0 %v5397
    %5441 = vmatprep.subr.bf16.mxu0 %v5395
    %5442 = vmatpush1.bf16.msra.mxu0 %v5394
    %5443 = vmatprep.subr.bf16.mxu0 %v5392
    %5444 = vmatpush1.bf16.msra.mxu0 %v5391
    %5445 = vmatprep.subr.bf16.mxu0 %v5389
    %5446 = vmatpush1.bf16.msra.mxu0 %v5388
    %5447 = vmatprep.subr.bf16.mxu0 %v5386
    %5448 = vmatpush1.bf16.msra.mxu0 %v5385
    %5449 = vmatprep.subr.bf16.mxu0 0
    %5450 = vmatpush2.bf16.msra.mxu0 0
    %5451 = vmatprep.subr.bf16.mxu0 0
    %5452 = vmatpush2.bf16.msra.mxu0 0
    %5453 = vmatprep.subr.bf16.mxu0 0
    %5454 = vmatpush2.bf16.msra.mxu0 0
    %5455 = vmatprep.subr.bf16.mxu0 0
    %5456 = vmatpush2.bf16.msra.mxu0 0
    %5457 = vmatprep.subr.bf16.mxu0 0
    %5458 = vmatpush2.bf16.msra.mxu0 0
    %5459 = vmatprep.subr.bf16.mxu0 0
    %5460 = vmatpush2.bf16.msra.mxu0 0
    %5461 = vmatprep.subr.bf16.mxu0 0
    %5462 = vmatpush2.bf16.msra.mxu0 0
    %5463 = vmatprep.subr.bf16.mxu0 0
    %5464 = vmatpush2.bf16.msra.mxu0 0
    %5465 = vmatprep.mubr.bf16.mxu0 0
    %5466 = vmatmul.mubr.bf16.gmra.mxu0 %v5303
    %v5467 = vpop.f32.mrf.mxu0
    %v5468 = vadd.f32 %v5290, %v5467
    %v5469 = vpop.f32.mrf.mxu0
    %v5470 = vadd.f32 %v5294, %v5469
    %v5471 = vpop.f32.mrf.mxu0
    %v5472 = vpop.f32.mrf.mxu0
    %5473 = vdwg.mxu0
    %5474 = vmatprep.subr.bf16.mxu0 0
    %5475 = vmatpush1.bf16.msra.mxu0 %v5408
    %5476 = vmatprep.subr.bf16.mxu0 0
    %5477 = vmatpush1.bf16.msra.mxu0 %v5405
    %5478 = vmatprep.subr.bf16.mxu0 0
    %5479 = vmatpush1.bf16.msra.mxu0 %v5402
    %5480 = vmatprep.subr.bf16.mxu0 0
    %5481 = vmatpush1.bf16.msra.mxu0 %v5399
    %5482 = vmatprep.subr.bf16.mxu0 0
    %5483 = vmatpush1.bf16.msra.mxu0 %v5396
    %5484 = vmatprep.subr.bf16.mxu0 0
    %5485 = vmatpush1.bf16.msra.mxu0 %v5393
    %5486 = vmatprep.subr.bf16.mxu0 0
    %5487 = vmatpush1.bf16.msra.mxu0 %v5390
    %5488 = vmatprep.subr.bf16.mxu0 0
    %5489 = vmatpush1.bf16.msra.mxu0 %v5387
    %5490 = vmatprep.subr.bf16.mxu0 0
    %5491 = vmatpush2.bf16.msra.mxu0 0
    %5492 = vmatprep.subr.bf16.mxu0 0
    %5493 = vmatpush2.bf16.msra.mxu0 0
    %5494 = vmatprep.subr.bf16.mxu0 0
    %5495 = vmatpush2.bf16.msra.mxu0 0
    %5496 = vmatprep.subr.bf16.mxu0 0
    %5497 = vmatpush2.bf16.msra.mxu0 0
    %5498 = vmatprep.subr.bf16.mxu0 0
    %5499 = vmatpush2.bf16.msra.mxu0 0
    %5500 = vmatprep.subr.bf16.mxu0 0
    %5501 = vmatpush2.bf16.msra.mxu0 0
    %5502 = vmatprep.subr.bf16.mxu0 0
    %5503 = vmatpush2.bf16.msra.mxu0 0
    %5504 = vmatprep.subr.bf16.mxu0 0
    %5505 = vmatpush2.bf16.msra.mxu0 0
    %5506 = vmatprep.mubr.bf16.mxu0 0
    %5507 = vmatmul.mubr.bf16.gmra.mxu0 %v5303
    %v5508 = vpop.f32.mrf.mxu0
    %v5509 = vadd.f32 %v5298, %v5508
    %v5510 = vpop.f32.mrf.mxu0
    %v5511 = vpop.f32.mrf.mxu0
    %v5512 = vpop.f32.mrf.mxu0
    %5513 = vdwg.mxu0
    %v5516 = vrot.slane %v5468, 4
    %v5517 = vrot.slane %v5470, 4
    %v5520 = vadd.f32 %v5249, %v5516
    %v5521 = vadd.f32 %v5250, %v5517
    %v5522 = vxor.u32 %v5520, 2147483648
    %v5523 = vxor.u32 %v5521, 2147483648
    %v5524 = vmul.f32 %v5522, 1.442695
    %v5525 = vpow.pop %v5524
    %v5526 = vmul.f32 %v5523, 1.442695
    %v5527 = vpow.pop %v5526
    %v5528 = vadd.f32 %v5525, 1.0
    %v5529 = vadd.f32 %v5527, 1.0
    %v5530 = vrcp.pop %v5528
    %v5531 = vmul.f32 1.0, %v5530
    %v5532 = vrcp.pop %v5529
    %v5533 = vmul.f32 1.0, %v5532
    %v5535 = vrot.slane %v5509, 4
    %v5537 = vmul.f32 %v5531, %v5535
    %v5538 = vadd.f32 %v5251, %v5537
    %v5539 = vtanh.pop %v5538
    %v5540 = vsub.f32 1.0, %v5533
    %v5541 = vmul.f32 %v5540, %v5539
    %v5543 = vrot.slane %v5231, 6
    %v5545 = vmul.f32 %v5533, %v5543
    %v5546 = vadd.f32 %v5541, %v5545
    %5547 = vst.msk [vmem:[#allocation5 + $0x8] sm:$0x30] %vm1379, %v5546
    %5548 = vst.msk [vmem:[#allocation5 - $0x2] sm:$0x30] %vm1381, %v5546
    %v5549 = vld [vmem:[#allocation4 + $0x18] sm:$0xc0]
    %v5550 = vld [vmem:[#allocation4 + $0x20] sm:$0xc0]
    %v5551 = vld [vmem:[#allocation4 + $0x28] sm:$0xc0]
    %v5552 = vld [vmem:[#allocation4] sm:$0x3]
    %v5553 = vld [vmem:[#allocation4 + $0x8] sm:$0x3]
    %v5554 = vld [vmem:[#allocation4 + $0x10] sm:$0x3]
    %v5558 = vrot.slane %v5552, 2
    %v5559 = vrot.slane %v5553, 2
    %v5560 = vrot.slane %v5554, 2
    %v5564 = vsel %vm179, %v5549, %v5558
    %v5565 = vsel %vm180, %v5550, %v5559
    %v5566 = vsel %vm181, %v5551, %v5560
    %v5567 = vpack.c.bf16 %v5546, %v5546
    %v5568 = vld [vmem:[#allocation12] sm:$0xff]
    %v5569 = vld [vmem:[#allocation12 + $0x8] sm:$0xf]
    %v5570 = vld [vmem:[#allocation12 + $0xc] sm:$0xff]
    %v5571 = vld [vmem:[#allocation12 + $0x14] sm:$0xf]
    %v5572 = vld [vmem:[#allocation12 + $0x18] sm:$0xff]
    %v5573 = vld [vmem:[#allocation12 + $0x20] sm:$0xf]
    %v5574 = vld [vmem:[#allocation12 + $0x24] sm:$0xff]
    %v5575 = vld [vmem:[#allocation12 + $0x2c] sm:$0xf]
    %v5576 = vld [vmem:[#allocation12 + $0x30] sm:$0xff]
    %v5577 = vld [vmem:[#allocation12 + $0x38] sm:$0xf]
    %v5578 = vld [vmem:[#allocation12 + $0x3c] sm:$0xff]
    %v5579 = vld [vmem:[#allocation12 + $0x44] sm:$0xf]
    %v5580 = vld [vmem:[#allocation12 + $0x48] sm:$0xff]
    %v5581 = vld [vmem:[#allocation12 + $0x50] sm:$0xf]
    %v5582 = vld [vmem:[#allocation12 + $0x54] sm:$0xff]
    %v5583 = vld [vmem:[#allocation12 + $0x5c] sm:$0xf]
    %v5584 = vld [vmem:[#allocation12 + $0x60] sm:$0xff]
    %v5585 = vld [vmem:[#allocation12 + $0x68] sm:$0xf]
    %v5586 = vld [vmem:[#allocation12 + $0x6c] sm:$0xff]
    %v5587 = vld [vmem:[#allocation12 + $0x74] sm:$0xf]
    %v5588 = vld [vmem:[#allocation12 + $0x78] sm:$0xff]
    %v5589 = vld [vmem:[#allocation12 + $0x80] sm:$0xf]
    %v5590 = vld [vmem:[#allocation12 + $0x84] sm:$0xff]
    %v5591 = vld [vmem:[#allocation12 + $0x8c] sm:$0xf]
    %v5592 = vld [vmem:[#allocation12 + $0x90] sm:$0xff]
    %v5593 = vld [vmem:[#allocation12 + $0x98] sm:$0xf]
    %v5594 = vld [vmem:[#allocation12 + $0x9c] sm:$0xff]
    %v5595 = vld [vmem:[#allocation12 + $0xa4] sm:$0xf]
    %v5596 = vld [vmem:[#allocation12 + $0xa8] sm:$0xff]
    %v5597 = vld [vmem:[#allocation12 + $0xb0] sm:$0xf]
    %v5598 = vld [vmem:[#allocation12 + $0xb4] sm:$0xff]
    %v5599 = vld [vmem:[#allocation12 + $0xbc] sm:$0xf]
    %v5600 = vld [vmem:[%s8] sm:$0x7]
    %v5602 = vlaneseq
    %v5603 = vshrl.u32 %v5602, 7
    %v5604 = vsub.s32 0, %v5603
    %v5605 = vrot.slane %v5600, %v5604
    %v5606 = vlaneseq
    %v5607 = vshrl.u32 %v5606, 7
    %v5608 = vsub.s32 1, %v5607
    %v5609 = vrot.slane %v5600, %v5608
    %v5610 = vlaneseq
    %v5611 = vshrl.u32 %v5610, 7
    %v5612 = vsub.s32 2, %v5611
    %v5613 = vrot.slane %v5600, %v5612
    %v5618 = vrot.slane %v5567, 2
    %v5652 = vunpack.c.l.b16 %v5568
    %v5653 = vunpack.c.h.b16 %v5568
    %v5654 = vunpack.c.l.b16 %v5569
    %v5655 = vunpack.c.l.b16 %v5570
    %v5656 = vunpack.c.h.b16 %v5570
    %v5657 = vunpack.c.l.b16 %v5571
    %v5658 = vunpack.c.l.b16 %v5572
    %v5659 = vunpack.c.h.b16 %v5572
    %v5660 = vunpack.c.l.b16 %v5573
    %v5661 = vunpack.c.l.b16 %v5574
    %v5662 = vunpack.c.h.b16 %v5574
    %v5663 = vunpack.c.l.b16 %v5575
    %v5664 = vunpack.c.l.b16 %v5576
    %v5665 = vunpack.c.h.b16 %v5576
    %v5666 = vunpack.c.l.b16 %v5577
    %v5667 = vunpack.c.l.b16 %v5578
    %v5668 = vunpack.c.h.b16 %v5578
    %v5669 = vunpack.c.l.b16 %v5579
    %v5670 = vunpack.c.l.b16 %v5580
    %v5671 = vunpack.c.h.b16 %v5580
    %v5672 = vunpack.c.l.b16 %v5581
    %v5673 = vunpack.c.l.b16 %v5582
    %v5674 = vunpack.c.h.b16 %v5582
    %v5675 = vunpack.c.l.b16 %v5583
    %v5676 = vunpack.c.l.b16 %v5584
    %v5677 = vunpack.c.h.b16 %v5584
    %v5678 = vunpack.c.l.b16 %v5585
    %v5679 = vunpack.c.l.b16 %v5586
    %v5680 = vunpack.c.h.b16 %v5586
    %v5681 = vunpack.c.l.b16 %v5587
    %v5682 = vunpack.c.l.b16 %v5588
    %v5683 = vunpack.c.h.b16 %v5588
    %v5684 = vunpack.c.l.b16 %v5589
    %v5685 = vunpack.c.l.b16 %v5590
    %v5686 = vunpack.c.h.b16 %v5590
    %v5687 = vunpack.c.l.b16 %v5591
    %v5688 = vunpack.c.l.b16 %v5592
    %v5689 = vunpack.c.h.b16 %v5592
    %v5690 = vunpack.c.l.b16 %v5593
    %v5691 = vunpack.c.l.b16 %v5594
    %v5692 = vunpack.c.h.b16 %v5594
    %v5693 = vunpack.c.l.b16 %v5595
    %v5694 = vunpack.c.l.b16 %v5596
    %v5695 = vunpack.c.h.b16 %v5596
    %v5696 = vunpack.c.l.b16 %v5597
    %v5697 = vunpack.c.l.b16 %v5598
    %v5698 = vunpack.c.h.b16 %v5598
    %v5699 = vunpack.c.l.b16 %v5599
    %v5700 = vpack.c.b16 %v5655, %v5652
    %v5701 = vpack.c.b16 %v5656, %v5653
    %v5702 = vpack.c.b16 %v5657, %v5654
    %v5703 = vpack.c.b16 %v5661, %v5658
    %v5704 = vpack.c.b16 %v5662, %v5659
    %v5705 = vpack.c.b16 %v5663, %v5660
    %v5706 = vpack.c.b16 %v5667, %v5664
    %v5707 = vpack.c.b16 %v5668, %v5665
    %v5708 = vpack.c.b16 %v5669, %v5666
    %v5709 = vpack.c.b16 %v5673, %v5670
    %v5710 = vpack.c.b16 %v5674, %v5671
    %v5711 = vpack.c.b16 %v5675, %v5672
    %v5712 = vpack.c.b16 %v5679, %v5676
    %v5713 = vpack.c.b16 %v5680, %v5677
    %v5714 = vpack.c.b16 %v5681, %v5678
    %v5715 = vpack.c.b16 %v5685, %v5682
    %v5716 = vpack.c.b16 %v5686, %v5683
    %v5717 = vpack.c.b16 %v5687, %v5684
    %v5718 = vpack.c.b16 %v5691, %v5688
    %v5719 = vpack.c.b16 %v5692, %v5689
    %v5720 = vpack.c.b16 %v5693, %v5690
    %v5721 = vpack.c.b16 %v5697, %v5694
    %v5722 = vpack.c.b16 %v5698, %v5695
    %v5723 = vpack.c.b16 %v5699, %v5696
    %5748 = vmatprep.subr.bf16.mxu0 %v5722
    %5749 = vmatpush1.bf16.msra.mxu0 %v5721
    %5750 = vmatprep.subr.bf16.mxu0 %v5719
    %5751 = vmatpush1.bf16.msra.mxu0 %v5718
    %5752 = vmatprep.subr.bf16.mxu0 %v5716
    %5753 = vmatpush1.bf16.msra.mxu0 %v5715
    %5754 = vmatprep.subr.bf16.mxu0 %v5713
    %5755 = vmatpush1.bf16.msra.mxu0 %v5712
    %5756 = vmatprep.subr.bf16.mxu0 %v5710
    %5757 = vmatpush1.bf16.msra.mxu0 %v5709
    %5758 = vmatprep.subr.bf16.mxu0 %v5707
    %5759 = vmatpush1.bf16.msra.mxu0 %v5706
    %5760 = vmatprep.subr.bf16.mxu0 %v5704
    %5761 = vmatpush1.bf16.msra.mxu0 %v5703
    %5762 = vmatprep.subr.bf16.mxu0 %v5701
    %5763 = vmatpush1.bf16.msra.mxu0 %v5700
    %5764 = vmatprep.subr.bf16.mxu0 0
    %5765 = vmatpush2.bf16.msra.mxu0 0
    %5766 = vmatprep.subr.bf16.mxu0 0
    %5767 = vmatpush2.bf16.msra.mxu0 0
    %5768 = vmatprep.subr.bf16.mxu0 0
    %5769 = vmatpush2.bf16.msra.mxu0 0
    %5770 = vmatprep.subr.bf16.mxu0 0
    %5771 = vmatpush2.bf16.msra.mxu0 0
    %5772 = vmatprep.subr.bf16.mxu0 0
    %5773 = vmatpush2.bf16.msra.mxu0 0
    %5774 = vmatprep.subr.bf16.mxu0 0
    %5775 = vmatpush2.bf16.msra.mxu0 0
    %5776 = vmatprep.subr.bf16.mxu0 0
    %5777 = vmatpush2.bf16.msra.mxu0 0
    %5778 = vmatprep.subr.bf16.mxu0 0
    %5779 = vmatpush2.bf16.msra.mxu0 0
    %5780 = vmatprep.mubr.bf16.mxu0 0
    %5781 = vmatmul.mubr.bf16.gmra.mxu0 %v5618
    %v5782 = vpop.f32.mrf.mxu0
    %v5783 = vadd.f32 %v5605, %v5782
    %v5784 = vpop.f32.mrf.mxu0
    %v5785 = vadd.f32 %v5609, %v5784
    %v5786 = vpop.f32.mrf.mxu0
    %v5787 = vpop.f32.mrf.mxu0
    %5788 = vdwg.mxu0
    %5789 = vmatprep.subr.bf16.mxu0 0
    %5790 = vmatpush1.bf16.msra.mxu0 %v5723
    %5791 = vmatprep.subr.bf16.mxu0 0
    %5792 = vmatpush1.bf16.msra.mxu0 %v5720
    %5793 = vmatprep.subr.bf16.mxu0 0
    %5794 = vmatpush1.bf16.msra.mxu0 %v5717
    %5795 = vmatprep.subr.bf16.mxu0 0
    %5796 = vmatpush1.bf16.msra.mxu0 %v5714
    %5797 = vmatprep.subr.bf16.mxu0 0
    %5798 = vmatpush1.bf16.msra.mxu0 %v5711
    %5799 = vmatprep.subr.bf16.mxu0 0
    %5800 = vmatpush1.bf16.msra.mxu0 %v5708
    %5801 = vmatprep.subr.bf16.mxu0 0
    %5802 = vmatpush1.bf16.msra.mxu0 %v5705
    %5803 = vmatprep.subr.bf16.mxu0 0
    %5804 = vmatpush1.bf16.msra.mxu0 %v5702
    %5805 = vmatprep.subr.bf16.mxu0 0
    %5806 = vmatpush2.bf16.msra.mxu0 0
    %5807 = vmatprep.subr.bf16.mxu0 0
    %5808 = vmatpush2.bf16.msra.mxu0 0
    %5809 = vmatprep.subr.bf16.mxu0 0
    %5810 = vmatpush2.bf16.msra.mxu0 0
    %5811 = vmatprep.subr.bf16.mxu0 0
    %5812 = vmatpush2.bf16.msra.mxu0 0
    %5813 = vmatprep.subr.bf16.mxu0 0
    %5814 = vmatpush2.bf16.msra.mxu0 0
    %5815 = vmatprep.subr.bf16.mxu0 0
    %5816 = vmatpush2.bf16.msra.mxu0 0
    %5817 = vmatprep.subr.bf16.mxu0 0
    %5818 = vmatpush2.bf16.msra.mxu0 0
    %5819 = vmatprep.subr.bf16.mxu0 0
    %5820 = vmatpush2.bf16.msra.mxu0 0
    %5821 = vmatprep.mubr.bf16.mxu0 0
    %5822 = vmatmul.mubr.bf16.gmra.mxu0 %v5618
    %v5823 = vpop.f32.mrf.mxu0
    %v5824 = vadd.f32 %v5613, %v5823
    %v5825 = vpop.f32.mrf.mxu0
    %v5826 = vpop.f32.mrf.mxu0
    %v5827 = vpop.f32.mrf.mxu0
    %5828 = vdwg.mxu0
    %v5831 = vrot.slane %v5783, 2
    %v5832 = vrot.slane %v5785, 2
    %v5835 = vadd.f32 %v5564, %v5831
    %v5836 = vadd.f32 %v5565, %v5832
    %v5837 = vxor.u32 %v5835, 2147483648
    %v5838 = vxor.u32 %v5836, 2147483648
    %v5839 = vmul.f32 %v5837, 1.442695
    %v5840 = vpow.pop %v5839
    %v5841 = vmul.f32 %v5838, 1.442695
    %v5842 = vpow.pop %v5841
    %v5843 = vadd.f32 %v5840, 1.0
    %v5844 = vadd.f32 %v5842, 1.0
    %v5845 = vrcp.pop %v5843
    %v5846 = vmul.f32 1.0, %v5845
    %v5847 = vrcp.pop %v5844
    %v5848 = vmul.f32 1.0, %v5847
    %v5850 = vrot.slane %v5824, 2
    %v5852 = vmul.f32 %v5846, %v5850
    %v5853 = vadd.f32 %v5566, %v5852
    %v5854 = vtanh.pop %v5853
    %v5855 = vsub.f32 1.0, %v5848
    %v5856 = vmul.f32 %v5855, %v5854
    %v5858 = vrot.slane %v5546, 6
    %v5860 = vmul.f32 %v5848, %v5858
    %v5861 = vadd.f32 %v5856, %v5860
    %5862 = vst.msk [vmem:[#allocation5 + $0x8] sm:$0xc0] %vm1728, %v5861
    %5863 = vst.msk [vmem:[#allocation5 - $0x6] sm:$0xc0] %vm1730, %v5861
    %v5864 = vld [vmem:[#allocation3] sm:$0xff]
    %v5865 = vld [vmem:[#allocation3 + $0x8] sm:$0xff]
    %v5866 = vld [vmem:[#allocation5] sm:$0xff]
    %v5867 = vld [vmem:[#allocation5 + $0x8] sm:$0xff]
    %v5868 = vld [vmem:[%s9] sm:$0xff]
    %v5869 = vld [vmem:[%s9 + $0x8] sm:$0xff]
    %v5870 = vld [vmem:[%s9 + $0x10] sm:$0xff]
    %v5871 = vld [vmem:[%s9 + $0x18] sm:$0xff]
    %v5872 = vld [vmem:[%s9 + $0x20] sm:$0xff]
    %v5873 = vld [vmem:[%s9 + $0x28] sm:$0xff]
    %v5874 = vld [vmem:[%s9 + $0x30] sm:$0xff]
    %v5875 = vld [vmem:[%s9 + $0x38] sm:$0xff]
    %v5876 = vld [vmem:[%s9 + $0x40] sm:$0xff]
    %v5877 = vld [vmem:[%s9 + $0x48] sm:$0xff]
    %v5878 = vld [vmem:[%s9 + $0x50] sm:$0xff]
    %v5879 = vld [vmem:[%s9 + $0x58] sm:$0xff]
    %v5880 = vld [vmem:[%s9 + $0x60] sm:$0xff]
    %v5881 = vld [vmem:[%s9 + $0x68] sm:$0xff]
    %v5882 = vld [vmem:[%s9 + $0x70] sm:$0xff]
    %v5883 = vld [vmem:[%s9 + $0x78] sm:$0xff]
    %v5884 = vld [vmem:[%s10] sm:$0xff]
    %v5885 = vld [vmem:[%s10 + $0x8] sm:$0xff]
    %5886 = vmatprep.subr.mxu0 0.0
    %5887 = vmatpush1.msra.mxu0 %v5883
    %5888 = vmatprep.subr.mxu0 0.0
    %5889 = vmatpush1.msra.mxu0 %v5882
    %5890 = vmatprep.subr.mxu0 0.0
    %5891 = vmatpush1.msra.mxu0 %v5881
    %5892 = vmatprep.subr.mxu0 0.0
    %5893 = vmatpush1.msra.mxu0 %v5880
    %5894 = vmatprep.subr.mxu0 0.0
    %5895 = vmatpush1.msra.mxu0 %v5879
    %5896 = vmatprep.subr.mxu0 0.0
    %5897 = vmatpush1.msra.mxu0 %v5878
    %5898 = vmatprep.subr.mxu0 0.0
    %5899 = vmatpush1.msra.mxu0 %v5877
    %5900 = vmatprep.subr.mxu0 0.0
    %5901 = vmatpush1.msra.mxu0 %v5876
    %5902 = vmatprep.subr.mxu0 0.0
    %5903 = vmatpush1.msra.mxu0 %v5875
    %5904 = vmatprep.subr.mxu0 0.0
    %5905 = vmatpush1.msra.mxu0 %v5874
    %5906 = vmatprep.subr.mxu0 0.0
    %5907 = vmatpush1.msra.mxu0 %v5873
    %5908 = vmatprep.subr.mxu0 0.0
    %5909 = vmatpush1.msra.mxu0 %v5872
    %5910 = vmatprep.subr.mxu0 0.0
    %5911 = vmatpush1.msra.mxu0 %v5871
    %5912 = vmatprep.subr.mxu0 0.0
    %5913 = vmatpush1.msra.mxu0 %v5870
    %5914 = vmatprep.subr.mxu0 0.0
    %5915 = vmatpush1.msra.mxu0 %v5869
    %5916 = vmatprep.subr.mxu0 0.0
    %5917 = vmatpush1.msra.mxu0 %v5868
    %5918 = vmatprep.subr.mxu0 0.0
    %5919 = vmatpush2.msra.mxu0 0.0
    %5920 = vmatprep.subr.mxu0 0.0
    %5921 = vmatpush2.msra.mxu0 0.0
    %5922 = vmatprep.subr.mxu0 0.0
    %5923 = vmatpush2.msra.mxu0 0.0
    %5924 = vmatprep.subr.mxu0 0.0
    %5925 = vmatpush2.msra.mxu0 0.0
    %5926 = vmatprep.subr.mxu0 0.0
    %5927 = vmatpush2.msra.mxu0 0.0
    %5928 = vmatprep.subr.mxu0 0.0
    %5929 = vmatpush2.msra.mxu0 0.0
    %5930 = vmatprep.subr.mxu0 0.0
    %5931 = vmatpush2.msra.mxu0 0.0
    %5932 = vmatprep.subr.mxu0 0.0
    %5933 = vmatpush2.msra.mxu0 0.0
    %5934 = vmatprep.subr.mxu0 0.0
    %5935 = vmatpush2.msra.mxu0 0.0
    %5936 = vmatprep.subr.mxu0 0.0
    %5937 = vmatpush2.msra.mxu0 0.0
    %5938 = vmatprep.subr.mxu0 0.0
    %5939 = vmatpush2.msra.mxu0 0.0
    %5940 = vmatprep.subr.mxu0 0.0
    %5941 = vmatpush2.msra.mxu0 0.0
    %5942 = vmatprep.subr.mxu0 0.0
    %5943 = vmatpush2.msra.mxu0 0.0
    %5944 = vmatprep.subr.mxu0 0.0
    %5945 = vmatpush2.msra.mxu0 0.0
    %5946 = vmatprep.subr.mxu0 0.0
    %5947 = vmatpush2.msra.mxu0 0.0
    %5948 = vmatprep.subr.mxu0 0.0
    %5949 = vmatpush2.msra.mxu0 0.0
    %5950 = vmatprep.mubr.f32.mxu0 0.0
    %5951 = vmatmul.mubr.f32.gmra.mxu0 %v5864
    %v5952 = vpop.f32.mrf.mxu0
    %v5953 = vadd.f32 %v5884, %v5952
    %v5954 = vpop.f32.mrf.mxu0
    %5955 = vmatprep.mubr.f32.mxu0 0.0
    %5956 = vmatmul.mubr.f32.gmra.mxu0 %v5865
    %v5957 = vpop.f32.mrf.mxu0
    %v5958 = vadd.f32 %v5885, %v5957
    %v5959 = vpop.f32.mrf.mxu0
    %5960 = vdwg.mxu0
    %v5961 = vtanh.pop %v5953
    %v5962 = vtanh.pop %v5958
    %v5963 = vmul.f32 %v5961, 1.442695
    %v5964 = vpow.pop %v5963
    %v5965 = vmul.f32 %v5962, 1.442695
    %v5966 = vpow.pop %v5965
    %5968 = vset.pattern.permute.xlu0 0
    %5969 = vperm.xlu0 %5968, %v5964
    %v5970 = vpop.permute.xlu0 %5969
    %5973 = vset.pattern.permute.xlu0 0
    %5974 = vperm.xlu0 %5973, %v5966
    %v5975 = vpop.permute.xlu0 %5974
    %v5977 = vmul.f32 %v5970, %v5864
    %v5978 = vmul.f32 %v5975, %v5865
    %v5979 = vadd.f32 %v5977, %v5978
    %v5981 = vrot.slane %v5979, 4
    %v5983 = vadd.f32 %v5979, %v5981
    %v5985 = vrot.slane %v5983, 2
    %v5987 = vadd.f32 %v5983, %v5985
    %v5988 = vadd.f32 %v5964, %v5966
    %v5990 = vrot.slane %v5988, 4
    %v5992 = vadd.f32 %v5988, %v5990
    %v5994 = vrot.slane %v5992, 2
    %v5996 = vadd.f32 %v5992, %v5994
    %5998 = vset.pattern.permute.xlu0 0
    %5999 = vperm.xlu0 %5998, %v5996
    %v6000 = vpop.permute.xlu0 %5999
    %v6002 = vrcp.pop %v6000
    %v6003 = vmul.f32 %v5987, %v6002
    %v6004 = vadd.f32 %v5864, %v5865
    %v6006 = vrot.slane %v6004, 4
    %v6008 = vadd.f32 %v6004, %v6006
    %v6010 = vrot.slane %v6008, 2
    %v6012 = vadd.f32 %v6008, %v6010
    %v6013 = vmul.f32 %v6012, 1e-10
    %v6014 = vadd.f32 %v6003, %v6013
    %v6015 = vld [vmem:[%s11] sm:$0xff]
    %v6016 = vld [vmem:[%s11 + $0x8] sm:$0xff]
    %v6017 = vld [vmem:[%s11 + $0x10] sm:$0xff]
    %v6018 = vld [vmem:[%s11 + $0x18] sm:$0xff]
    %v6019 = vld [vmem:[%s11 + $0x20] sm:$0xff]
    %v6020 = vld [vmem:[%s11 + $0x28] sm:$0xff]
    %v6021 = vld [vmem:[%s11 + $0x30] sm:$0xff]
    %v6022 = vld [vmem:[%s11 + $0x38] sm:$0xff]
    %v6023 = vld [vmem:[%s11 + $0x40] sm:$0xff]
    %v6024 = vld [vmem:[%s11 + $0x48] sm:$0xff]
    %v6025 = vld [vmem:[%s11 + $0x50] sm:$0xff]
    %v6026 = vld [vmem:[%s11 + $0x58] sm:$0xff]
    %v6027 = vld [vmem:[%s11 + $0x60] sm:$0xff]
    %v6028 = vld [vmem:[%s11 + $0x68] sm:$0xff]
    %v6029 = vld [vmem:[%s11 + $0x70] sm:$0xff]
    %v6030 = vld [vmem:[%s11 + $0x78] sm:$0xff]
    %v6031 = vld [vmem:[%s12] sm:$0xff]
    %v6032 = vld [vmem:[%s12 + $0x8] sm:$0xff]
    %6033 = vmatprep.subr.mxu0 0.0
    %6034 = vmatpush1.msra.mxu0 %v6030
    %6035 = vmatprep.subr.mxu0 0.0
    %6036 = vmatpush1.msra.mxu0 %v6029
    %6037 = vmatprep.subr.mxu0 0.0
    %6038 = vmatpush1.msra.mxu0 %v6028
    %6039 = vmatprep.subr.mxu0 0.0
    %6040 = vmatpush1.msra.mxu0 %v6027
    %6041 = vmatprep.subr.mxu0 0.0
    %6042 = vmatpush1.msra.mxu0 %v6026
    %6043 = vmatprep.subr.mxu0 0.0
    %6044 = vmatpush1.msra.mxu0 %v6025
    %6045 = vmatprep.subr.mxu0 0.0
    %6046 = vmatpush1.msra.mxu0 %v6024
    %6047 = vmatprep.subr.mxu0 0.0
    %6048 = vmatpush1.msra.mxu0 %v6023
    %6049 = vmatprep.subr.mxu0 0.0
    %6050 = vmatpush1.msra.mxu0 %v6022
    %6051 = vmatprep.subr.mxu0 0.0
    %6052 = vmatpush1.msra.mxu0 %v6021
    %6053 = vmatprep.subr.mxu0 0.0
    %6054 = vmatpush1.msra.mxu0 %v6020
    %6055 = vmatprep.subr.mxu0 0.0
    %6056 = vmatpush1.msra.mxu0 %v6019
    %6057 = vmatprep.subr.mxu0 0.0
    %6058 = vmatpush1.msra.mxu0 %v6018
    %6059 = vmatprep.subr.mxu0 0.0
    %6060 = vmatpush1.msra.mxu0 %v6017
    %6061 = vmatprep.subr.mxu0 0.0
    %6062 = vmatpush1.msra.mxu0 %v6016
    %6063 = vmatprep.subr.mxu0 0.0
    %6064 = vmatpush1.msra.mxu0 %v6015
    %6065 = vmatprep.subr.mxu0 0.0
    %6066 = vmatpush2.msra.mxu0 0.0
    %6067 = vmatprep.subr.mxu0 0.0
    %6068 = vmatpush2.msra.mxu0 0.0
    %6069 = vmatprep.subr.mxu0 0.0
    %6070 = vmatpush2.msra.mxu0 0.0
    %6071 = vmatprep.subr.mxu0 0.0
    %6072 = vmatpush2.msra.mxu0 0.0
    %6073 = vmatprep.subr.mxu0 0.0
    %6074 = vmatpush2.msra.mxu0 0.0
    %6075 = vmatprep.subr.mxu0 0.0
    %6076 = vmatpush2.msra.mxu0 0.0
    %6077 = vmatprep.subr.mxu0 0.0
    %6078 = vmatpush2.msra.mxu0 0.0
    %6079 = vmatprep.subr.mxu0 0.0
    %6080 = vmatpush2.msra.mxu0 0.0
    %6081 = vmatprep.subr.mxu0 0.0
    %6082 = vmatpush2.msra.mxu0 0.0
    %6083 = vmatprep.subr.mxu0 0.0
    %6084 = vmatpush2.msra.mxu0 0.0
    %6085 = vmatprep.subr.mxu0 0.0
    %6086 = vmatpush2.msra.mxu0 0.0
    %6087 = vmatprep.subr.mxu0 0.0
    %6088 = vmatpush2.msra.mxu0 0.0
    %6089 = vmatprep.subr.mxu0 0.0
    %6090 = vmatpush2.msra.mxu0 0.0
    %6091 = vmatprep.subr.mxu0 0.0
    %6092 = vmatpush2.msra.mxu0 0.0
    %6093 = vmatprep.subr.mxu0 0.0
    %6094 = vmatpush2.msra.mxu0 0.0
    %6095 = vmatprep.subr.mxu0 0.0
    %6096 = vmatpush2.msra.mxu0 0.0
    %6097 = vmatprep.mubr.f32.mxu0 0.0
    %6098 = vmatmul.mubr.f32.gmra.mxu0 %v5866
    %v6099 = vpop.f32.mrf.mxu0
    %v6100 = vadd.f32 %v6031, %v6099
    %v6101 = vpop.f32.mrf.mxu0
    %6102 = vmatprep.mubr.f32.mxu0 0.0
    %6103 = vmatmul.mubr.f32.gmra.mxu0 %v5867
    %v6104 = vpop.f32.mrf.mxu0
    %v6105 = vadd.f32 %v6032, %v6104
    %v6106 = vpop.f32.mrf.mxu0
    %6107 = vdwg.mxu0
    %v6108 = vtanh.pop %v6100
    %v6109 = vtanh.pop %v6105
    %v6110 = vmul.f32 %v6108, 1.442695
    %v6111 = vpow.pop %v6110
    %v6112 = vmul.f32 %v6109, 1.442695
    %v6113 = vpow.pop %v6112
    %6115 = vset.pattern.permute.xlu0 0
    %6116 = vperm.xlu0 %6115, %v6111
    %v6117 = vpop.permute.xlu0 %6116
    %6120 = vset.pattern.permute.xlu0 0
    %6121 = vperm.xlu0 %6120, %v6113
    %v6122 = vpop.permute.xlu0 %6121
    %v6124 = vmul.f32 %v6117, %v5866
    %v6125 = vmul.f32 %v6122, %v5867
    %v6126 = vadd.f32 %v6124, %v6125
    %v6128 = vrot.slane %v6126, 4
    %v6130 = vadd.f32 %v6126, %v6128
    %v6132 = vrot.slane %v6130, 2
    %v6134 = vadd.f32 %v6130, %v6132
    %v6135 = vadd.f32 %v6111, %v6113
    %v6137 = vrot.slane %v6135, 4
    %v6139 = vadd.f32 %v6135, %v6137
    %v6141 = vrot.slane %v6139, 2
    %v6143 = vadd.f32 %v6139, %v6141
    %6145 = vset.pattern.permute.xlu0 0
    %6146 = vperm.xlu0 %6145, %v6143
    %v6147 = vpop.permute.xlu0 %6146
    %v6149 = vrcp.pop %v6147
    %v6150 = vmul.f32 %v6134, %v6149
    %v6151 = vadd.f32 %v5866, %v5867
    %v6153 = vrot.slane %v6151, 4
    %v6155 = vadd.f32 %v6151, %v6153
    %v6157 = vrot.slane %v6155, 2
    %v6159 = vadd.f32 %v6155, %v6157
    %v6160 = vmul.f32 %v6159, 1e-10
    %v6161 = vadd.f32 %v6150, %v6160
    %v6162 = vmul.f32 %v6159, 0.125
    %v6163 = vmax.f32 %v5866, %v5867
    %v6165 = vrot.slane %v6163, 4
    %v6167 = vmax.f32 %v6163, %v6165
    %v6169 = vrot.slane %v6167, 2
    %v6171 = vmax.f32 %v6167, %v6169
    %v6172 = vld [vmem:[%s1] sm:$0x3]
    %v6173 = vpack.c.bf16 %v6014, %v6014
    %v6174 = vpack.c.bf16 %v6161, %v6161
    %v6175 = vpack.c.bf16 %v6162, %v6162
    %v6176 = vpack.c.bf16 %v6171, %v6171
    %v6177 = vpack.c.bf16 %v6172, %v6172
    %v6178 = vld [vmem:[%s13] sm:$0xff]
    %v6179 = vld [vmem:[%s13 + $0x8] sm:$0xff]
    %v6180 = vld [vmem:[%s13 + $0x10] sm:$0xf]
    %v6181 = vld [vmem:[%s13 + $0x14] sm:$0xff]
    %v6182 = vld [vmem:[%s13 + $0x1c] sm:$0xff]
    %v6183 = vld [vmem:[%s13 + $0x24] sm:$0xf]
    %v6184 = vld [vmem:[%s13 + $0x28] sm:$0xff]
    %v6185 = vld [vmem:[%s13 + $0x30] sm:$0xff]
    %v6186 = vld [vmem:[%s13 + $0x38] sm:$0xf]
    %v6187 = vld [vmem:[%s13 + $0x3c] sm:$0xff]
    %v6188 = vld [vmem:[%s13 + $0x44] sm:$0xff]
    %v6189 = vld [vmem:[%s13 + $0x4c] sm:$0xf]
    %v6190 = vld [vmem:[%s13 + $0x50] sm:$0xff]
    %v6191 = vld [vmem:[%s13 + $0x58] sm:$0xff]
    %v6192 = vld [vmem:[%s13 + $0x60] sm:$0xf]
    %v6193 = vld [vmem:[%s13 + $0x64] sm:$0xff]
    %v6194 = vld [vmem:[%s13 + $0x6c] sm:$0xff]
    %v6195 = vld [vmem:[%s13 + $0x74] sm:$0xf]
    %v6196 = vld [vmem:[%s13 + $0x78] sm:$0xff]
    %v6197 = vld [vmem:[%s13 + $0x80] sm:$0xff]
    %v6198 = vld [vmem:[%s13 + $0x88] sm:$0xf]
    %v6199 = vld [vmem:[%s13 + $0x8c] sm:$0xff]
    %v6200 = vld [vmem:[%s13 + $0x94] sm:$0xff]
    %v6201 = vld [vmem:[%s13 + $0x9c] sm:$0xf]
    %v6202 = vld [vmem:[%s13 + $0xa0] sm:$0xff]
    %v6203 = vld [vmem:[%s13 + $0xa8] sm:$0xff]
    %v6204 = vld [vmem:[%s13 + $0xb0] sm:$0xf]
    %v6205 = vld [vmem:[%s13 + $0xb4] sm:$0xff]
    %v6206 = vld [vmem:[%s13 + $0xbc] sm:$0xff]
    %v6207 = vld [vmem:[%s13 + $0xc4] sm:$0xf]
    %v6208 = vld [vmem:[%s13 + $0xc8] sm:$0xff]
    %v6209 = vld [vmem:[%s13 + $0xd0] sm:$0xff]
    %v6210 = vld [vmem:[%s13 + $0xd8] sm:$0xf]
    %v6211 = vld [vmem:[%s13 + $0xdc] sm:$0xff]
    %v6212 = vld [vmem:[%s13 + $0xe4] sm:$0xff]
    %v6213 = vld [vmem:[%s13 + $0xec] sm:$0xf]
    %v6214 = vld [vmem:[%s13 + $0xf0] sm:$0xff]
    %v6215 = vld [vmem:[%s13 + $0xf8] sm:$0xff]
    %v6216 = vld [vmem:[%s13 + $0x100] sm:$0xf]
    %v6217 = vld [vmem:[%s13 + $0x104] sm:$0xff]
    %v6218 = vld [vmem:[%s13 + $0x10c] sm:$0xff]
    %v6219 = vld [vmem:[%s13 + $0x114] sm:$0xf]
    %v6220 = vld [vmem:[%s13 + $0x118] sm:$0xff]
    %v6221 = vld [vmem:[%s13 + $0x120] sm:$0xff]
    %v6222 = vld [vmem:[%s13 + $0x128] sm:$0xf]
    %v6223 = vld [vmem:[%s13 + $0x12c] sm:$0xff]
    %v6224 = vld [vmem:[%s13 + $0x134] sm:$0xff]
    %v6225 = vld [vmem:[%s13 + $0x13c] sm:$0xf]
    %v6226 = vld [vmem:[%s13 + $0x140] sm:$0xff]
    %v6227 = vld [vmem:[%s13 + $0x148] sm:$0xff]
    %v6228 = vld [vmem:[%s13 + $0x150] sm:$0xf]
    %v6229 = vld [vmem:[%s13 + $0x154] sm:$0xff]
    %v6230 = vld [vmem:[%s13 + $0x15c] sm:$0xff]
    %v6231 = vld [vmem:[%s13 + $0x164] sm:$0xf]
    %v6232 = vld [vmem:[%s13 + $0x168] sm:$0xff]
    %v6233 = vld [vmem:[%s13 + $0x170] sm:$0xff]
    %v6234 = vld [vmem:[%s13 + $0x178] sm:$0xf]
    %v6235 = vld [vmem:[%s13 + $0x17c] sm:$0xff]
    %v6236 = vld [vmem:[%s13 + $0x184] sm:$0xff]
    %v6237 = vld [vmem:[%s13 + $0x18c] sm:$0xf]
    %v6238 = vld [vmem:[%s13 + $0x190] sm:$0xff]
    %v6239 = vld [vmem:[%s13 + $0x198] sm:$0xff]
    %v6240 = vld [vmem:[%s13 + $0x1a0] sm:$0xf]
    %v6241 = vld [vmem:[%s13 + $0x1a4] sm:$0xff]
    %v6242 = vld [vmem:[%s13 + $0x1ac] sm:$0xff]
    %v6243 = vld [vmem:[%s13 + $0x1b4] sm:$0xf]
    %v6244 = vld [vmem:[%s13 + $0x1b8] sm:$0xff]
    %v6245 = vld [vmem:[%s13 + $0x1c0] sm:$0xff]
    %v6246 = vld [vmem:[%s13 + $0x1c8] sm:$0xf]
    %v6247 = vld [vmem:[%s13 + $0x1cc] sm:$0xff]
    %v6248 = vld [vmem:[%s13 + $0x1d4] sm:$0xff]
    %v6249 = vld [vmem:[%s13 + $0x1dc] sm:$0xf]
    %v6250 = vld [vmem:[%s13 + $0x1e0] sm:$0xff]
    %v6251 = vld [vmem:[%s13 + $0x1e8] sm:$0xff]
    %v6252 = vld [vmem:[%s13 + $0x1f0] sm:$0xf]
    %v6253 = vld [vmem:[%s13 + $0x1f4] sm:$0xff]
    %v6254 = vld [vmem:[%s13 + $0x1fc] sm:$0xff]
    %v6255 = vld [vmem:[%s13 + $0x204] sm:$0xf]
    %v6256 = vld [vmem:[%s13 + $0x208] sm:$0xff]
    %v6257 = vld [vmem:[%s13 + $0x210] sm:$0xff]
    %v6258 = vld [vmem:[%s13 + $0x218] sm:$0xf]
    %v6259 = vld [vmem:[%s13 + $0x21c] sm:$0xff]
    %v6260 = vld [vmem:[%s13 + $0x224] sm:$0xff]
    %v6261 = vld [vmem:[%s13 + $0x22c] sm:$0xf]
    %v6262 = vld [vmem:[%s13 + $0x230] sm:$0xff]
    %v6263 = vld [vmem:[%s13 + $0x238] sm:$0xff]
    %v6264 = vld [vmem:[%s13 + $0x240] sm:$0xf]
    %v6265 = vld [vmem:[%s13 + $0x244] sm:$0xff]
    %v6266 = vld [vmem:[%s13 + $0x24c] sm:$0xff]
    %v6267 = vld [vmem:[%s13 + $0x254] sm:$0xf]
    %v6268 = vld [vmem:[%s13 + $0x258] sm:$0xff]
    %v6269 = vld [vmem:[%s13 + $0x260] sm:$0xff]
    %v6270 = vld [vmem:[%s13 + $0x268] sm:$0xf]
    %v6271 = vld [vmem:[%s13 + $0x26c] sm:$0xff]
    %v6272 = vld [vmem:[%s13 + $0x274] sm:$0xff]
    %v6273 = vld [vmem:[%s13 + $0x27c] sm:$0xf]
    %v6274 = vld [vmem:[%s13 + $0x280] sm:$0xff]
    %v6275 = vld [vmem:[%s13 + $0x288] sm:$0xff]
    %v6276 = vld [vmem:[%s13 + $0x290] sm:$0xf]
    %v6277 = vld [vmem:[%s13 + $0x294] sm:$0xff]
    %v6278 = vld [vmem:[%s13 + $0x29c] sm:$0xff]
    %v6279 = vld [vmem:[%s13 + $0x2a4] sm:$0xf]
    %v6280 = vld [vmem:[%s13 + $0x2a8] sm:$0xff]
    %v6281 = vld [vmem:[%s13 + $0x2b0] sm:$0xff]
    %v6282 = vld [vmem:[%s13 + $0x2b8] sm:$0xf]
    %v6283 = vld [vmem:[%s13 + $0x2bc] sm:$0xff]
    %v6284 = vld [vmem:[%s13 + $0x2c4] sm:$0xff]
    %v6285 = vld [vmem:[%s13 + $0x2cc] sm:$0xf]
    %v6286 = vld [vmem:[%s13 + $0x2d0] sm:$0xff]
    %v6287 = vld [vmem:[%s13 + $0x2d8] sm:$0xff]
    %v6288 = vld [vmem:[%s13 + $0x2e0] sm:$0xf]
    %v6289 = vld [vmem:[%s13 + $0x2e4] sm:$0xff]
    %v6290 = vld [vmem:[%s13 + $0x2ec] sm:$0xff]
    %v6291 = vld [vmem:[%s13 + $0x2f4] sm:$0xf]
    %v6292 = vld [vmem:[%s13 + $0x2f8] sm:$0xff]
    %v6293 = vld [vmem:[%s13 + $0x300] sm:$0xff]
    %v6294 = vld [vmem:[%s13 + $0x308] sm:$0xf]
    %v6295 = vld [vmem:[%s13 + $0x30c] sm:$0xff]
    %v6296 = vld [vmem:[%s13 + $0x314] sm:$0xff]
    %v6297 = vld [vmem:[%s13 + $0x31c] sm:$0xf]
    %v6298 = vld [vmem:[%s13 + $0x320] sm:$0xff]
    %v6299 = vld [vmem:[%s13 + $0x328] sm:$0xff]
    %v6300 = vld [vmem:[%s13 + $0x330] sm:$0xf]
    %v6301 = vld [vmem:[%s13 + $0x334] sm:$0xff]
    %v6302 = vld [vmem:[%s13 + $0x33c] sm:$0xff]
    %v6303 = vld [vmem:[%s13 + $0x344] sm:$0xf]
    %v6304 = vld [vmem:[%s13 + $0x348] sm:$0xff]
    %v6305 = vld [vmem:[%s13 + $0x350] sm:$0xff]
    %v6306 = vld [vmem:[%s13 + $0x358] sm:$0xf]
    %v6307 = vld [vmem:[%s13 + $0x35c] sm:$0xff]
    %v6308 = vld [vmem:[%s13 + $0x364] sm:$0xff]
    %v6309 = vld [vmem:[%s13 + $0x36c] sm:$0xf]
    %v6310 = vld [vmem:[%s13 + $0x370] sm:$0xff]
    %v6311 = vld [vmem:[%s13 + $0x378] sm:$0xff]
    %v6312 = vld [vmem:[%s13 + $0x380] sm:$0xf]
    %v6313 = vld [vmem:[%s13 + $0x384] sm:$0xff]
    %v6314 = vld [vmem:[%s13 + $0x38c] sm:$0xff]
    %v6315 = vld [vmem:[%s13 + $0x394] sm:$0xf]
    %v6316 = vld [vmem:[%s13 + $0x398] sm:$0xff]
    %v6317 = vld [vmem:[%s13 + $0x3a0] sm:$0xff]
    %v6318 = vld [vmem:[%s13 + $0x3a8] sm:$0xf]
    %v6319 = vld [vmem:[%s13 + $0x3ac] sm:$0xff]
    %v6320 = vld [vmem:[%s13 + $0x3b4] sm:$0xff]
    %v6321 = vld [vmem:[%s13 + $0x3bc] sm:$0xf]
    %v6322 = vld [vmem:[%s13 + $0x3c0] sm:$0xff]
    %v6323 = vld [vmem:[%s13 + $0x3c8] sm:$0xff]
    %v6324 = vld [vmem:[%s13 + $0x3d0] sm:$0xf]
    %v6325 = vld [vmem:[%s13 + $0x3d4] sm:$0xff]
    %v6326 = vld [vmem:[%s13 + $0x3dc] sm:$0xff]
    %v6327 = vld [vmem:[%s13 + $0x3e4] sm:$0xf]
    %v6328 = vld [vmem:[%s13 + $0x3e8] sm:$0xff]
    %v6329 = vld [vmem:[%s13 + $0x3f0] sm:$0xff]
    %v6330 = vld [vmem:[%s13 + $0x3f8] sm:$0xf]
    %v6331 = vld [vmem:[%s13 + $0x3fc] sm:$0xff]
    %v6332 = vld [vmem:[%s13 + $0x404] sm:$0xff]
    %v6333 = vld [vmem:[%s13 + $0x40c] sm:$0xf]
    %v6334 = vld [vmem:[%s13 + $0x410] sm:$0xff]
    %v6335 = vld [vmem:[%s13 + $0x418] sm:$0xff]
    %v6336 = vld [vmem:[%s13 + $0x420] sm:$0xf]
    %v6337 = vld [vmem:[%s13 + $0x424] sm:$0xff]
    %v6338 = vld [vmem:[%s13 + $0x42c] sm:$0xff]
    %v6339 = vld [vmem:[%s13 + $0x434] sm:$0xf]
    %v6340 = vld [vmem:[%s13 + $0x438] sm:$0xff]
    %v6341 = vld [vmem:[%s13 + $0x440] sm:$0xff]
    %v6342 = vld [vmem:[%s13 + $0x448] sm:$0xf]
    %v6343 = vld [vmem:[%s13 + $0x44c] sm:$0xff]
    %v6344 = vld [vmem:[%s13 + $0x454] sm:$0xff]
    %v6345 = vld [vmem:[%s13 + $0x45c] sm:$0xf]
    %v6346 = vld [vmem:[%s13 + $0x460] sm:$0xff]
    %v6347 = vld [vmem:[%s13 + $0x468] sm:$0xff]
    %v6348 = vld [vmem:[%s13 + $0x470] sm:$0xf]
    %v6349 = vld [vmem:[%s13 + $0x474] sm:$0xff]
    %v6350 = vld [vmem:[%s13 + $0x47c] sm:$0xff]
    %v6351 = vld [vmem:[%s13 + $0x484] sm:$0xf]
    %v6352 = vld [vmem:[%s13 + $0x488] sm:$0xff]
    %v6353 = vld [vmem:[%s13 + $0x490] sm:$0xff]
    %v6354 = vld [vmem:[%s13 + $0x498] sm:$0xf]
    %v6355 = vld [vmem:[%s13 + $0x49c] sm:$0xff]
    %v6356 = vld [vmem:[%s13 + $0x4a4] sm:$0xff]
    %v6357 = vld [vmem:[%s13 + $0x4ac] sm:$0xf]
    %v6358 = vld [vmem:[%s13 + $0x4b0] sm:$0xff]
    %v6359 = vld [vmem:[%s13 + $0x4b8] sm:$0xff]
    %v6360 = vld [vmem:[%s13 + $0x4c0] sm:$0xf]
    %v6361 = vld [vmem:[%s13 + $0x4c4] sm:$0xff]
    %v6362 = vld [vmem:[%s13 + $0x4cc] sm:$0xff]
    %v6363 = vld [vmem:[%s13 + $0x4d4] sm:$0xf]
    %v6364 = vld [vmem:[%s13 + $0x4d8] sm:$0xff]
    %v6365 = vld [vmem:[%s13 + $0x4e0] sm:$0xff]
    %v6366 = vld [vmem:[%s13 + $0x4e8] sm:$0xf]
    %v6367 = vld [vmem:[%s13 + $0x4ec] sm:$0xff]
    %v6368 = vld [vmem:[%s13 + $0x4f4] sm:$0xff]
    %v6369 = vld [vmem:[%s13 + $0x4fc] sm:$0xf]
    %v6370 = vld [vmem:[%s13 + $0x500] sm:$0xff]
    %v6371 = vld [vmem:[%s13 + $0x508] sm:$0xff]
    %v6372 = vld [vmem:[%s13 + $0x510] sm:$0xf]
    %v6373 = vld [vmem:[%s13 + $0x514] sm:$0xff]
    %v6374 = vld [vmem:[%s13 + $0x51c] sm:$0xff]
    %v6375 = vld [vmem:[%s13 + $0x524] sm:$0xf]
    %v6376 = vld [vmem:[%s13 + $0x528] sm:$0xff]
    %v6377 = vld [vmem:[%s13 + $0x530] sm:$0xff]
    %v6378 = vld [vmem:[%s13 + $0x538] sm:$0xf]
    %v6379 = vld [vmem:[%s13 + $0x53c] sm:$0xff]
    %v6380 = vld [vmem:[%s13 + $0x544] sm:$0xff]
    %v6381 = vld [vmem:[%s13 + $0x54c] sm:$0xf]
    %v6382 = vld [vmem:[%s13 + $0x550] sm:$0xff]
    %v6383 = vld [vmem:[%s13 + $0x558] sm:$0xff]
    %v6384 = vld [vmem:[%s13 + $0x560] sm:$0xf]
    %v6385 = vld [vmem:[%s13 + $0x564] sm:$0xff]
    %v6386 = vld [vmem:[%s13 + $0x56c] sm:$0xff]
    %v6387 = vld [vmem:[%s13 + $0x574] sm:$0xf]
    %v6388 = vld [vmem:[%s13 + $0x578] sm:$0xff]
    %v6389 = vld [vmem:[%s13 + $0x580] sm:$0xff]
    %v6390 = vld [vmem:[%s13 + $0x588] sm:$0xf]
    %v6391 = vld [vmem:[%s13 + $0x58c] sm:$0xff]
    %v6392 = vld [vmem:[%s13 + $0x594] sm:$0xff]
    %v6393 = vld [vmem:[%s13 + $0x59c] sm:$0xf]
    %v6394 = vld [vmem:[%s13 + $0x5a0] sm:$0xff]
    %v6395 = vld [vmem:[%s13 + $0x5a8] sm:$0xff]
    %v6396 = vld [vmem:[%s13 + $0x5b0] sm:$0xf]
    %v6397 = vld [vmem:[%s13 + $0x5b4] sm:$0xff]
    %v6398 = vld [vmem:[%s13 + $0x5bc] sm:$0xff]
    %v6399 = vld [vmem:[%s13 + $0x5c4] sm:$0xf]
    %v6400 = vld [vmem:[%s13 + $0x5c8] sm:$0xff]
    %v6401 = vld [vmem:[%s13 + $0x5d0] sm:$0xff]
    %v6402 = vld [vmem:[%s13 + $0x5d8] sm:$0xf]
    %v6403 = vld [vmem:[%s13 + $0x5dc] sm:$0xff]
    %v6404 = vld [vmem:[%s13 + $0x5e4] sm:$0xff]
    %v6405 = vld [vmem:[%s13 + $0x5ec] sm:$0xf]
    %v6406 = vld [vmem:[%s13 + $0x5f0] sm:$0xff]
    %v6407 = vld [vmem:[%s13 + $0x5f8] sm:$0xff]
    %v6408 = vld [vmem:[%s13 + $0x600] sm:$0xf]
    %v6409 = vld [vmem:[%s13 + $0x604] sm:$0xff]
    %v6410 = vld [vmem:[%s13 + $0x60c] sm:$0xff]
    %v6411 = vld [vmem:[%s13 + $0x614] sm:$0xf]
    %v6412 = vld [vmem:[%s13 + $0x618] sm:$0xff]
    %v6413 = vld [vmem:[%s13 + $0x620] sm:$0xff]
    %v6414 = vld [vmem:[%s13 + $0x628] sm:$0xf]
    %v6415 = vld [vmem:[%s13 + $0x62c] sm:$0xff]
    %v6416 = vld [vmem:[%s13 + $0x634] sm:$0xff]
    %v6417 = vld [vmem:[%s13 + $0x63c] sm:$0xf]
    %v6418 = vld [vmem:[%s14] sm:$0x1f]
    %v6420 = vlaneseq
    %v6421 = vshrl.u32 %v6420, 7
    %v6422 = vsub.s32 0, %v6421
    %v6423 = vrot.slane %v6418, %v6422
    %v6424 = vlaneseq
    %v6425 = vshrl.u32 %v6424, 7
    %v6426 = vsub.s32 1, %v6425
    %v6427 = vrot.slane %v6418, %v6426
    %v6428 = vlaneseq
    %v6429 = vshrl.u32 %v6428, 7
    %v6430 = vsub.s32 2, %v6429
    %v6431 = vrot.slane %v6418, %v6430
    %v6432 = vlaneseq
    %v6433 = vshrl.u32 %v6432, 7
    %v6434 = vsub.s32 3, %v6433
    %v6435 = vrot.slane %v6418, %v6434
    %v6436 = vlaneseq
    %v6437 = vshrl.u32 %v6436, 7
    %v6438 = vsub.s32 4, %v6437
    %v6439 = vrot.slane %v6418, %v6438
    %v6685 = vunpack.c.l.b16 %v6178
    %v6686 = vunpack.c.h.b16 %v6178
    %v6687 = vunpack.c.l.b16 %v6179
    %v6688 = vunpack.c.h.b16 %v6179
    %v6689 = vunpack.c.l.b16 %v6180
    %v6690 = vunpack.c.l.b16 %v6181
    %v6691 = vunpack.c.h.b16 %v6181
    %v6692 = vunpack.c.l.b16 %v6182
    %v6693 = vunpack.c.h.b16 %v6182
    %v6694 = vunpack.c.l.b16 %v6183
    %v6695 = vunpack.c.l.b16 %v6184
    %v6696 = vunpack.c.h.b16 %v6184
    %v6697 = vunpack.c.l.b16 %v6185
    %v6698 = vunpack.c.h.b16 %v6185
    %v6699 = vunpack.c.l.b16 %v6186
    %v6700 = vunpack.c.l.b16 %v6187
    %v6701 = vunpack.c.h.b16 %v6187
    %v6702 = vunpack.c.l.b16 %v6188
    %v6703 = vunpack.c.h.b16 %v6188
    %v6704 = vunpack.c.l.b16 %v6189
    %v6705 = vunpack.c.l.b16 %v6190
    %v6706 = vunpack.c.h.b16 %v6190
    %v6707 = vunpack.c.l.b16 %v6191
    %v6708 = vunpack.c.h.b16 %v6191
    %v6709 = vunpack.c.l.b16 %v6192
    %v6710 = vunpack.c.l.b16 %v6193
    %v6711 = vunpack.c.h.b16 %v6193
    %v6712 = vunpack.c.l.b16 %v6194
    %v6713 = vunpack.c.h.b16 %v6194
    %v6714 = vunpack.c.l.b16 %v6195
    %v6715 = vunpack.c.l.b16 %v6196
    %v6716 = vunpack.c.h.b16 %v6196
    %v6717 = vunpack.c.l.b16 %v6197
    %v6718 = vunpack.c.h.b16 %v6197
    %v6719 = vunpack.c.l.b16 %v6198
    %v6720 = vunpack.c.l.b16 %v6199
    %v6721 = vunpack.c.h.b16 %v6199
    %v6722 = vunpack.c.l.b16 %v6200
    %v6723 = vunpack.c.h.b16 %v6200
    %v6724 = vunpack.c.l.b16 %v6201
    %v6725 = vunpack.c.l.b16 %v6202
    %v6726 = vunpack.c.h.b16 %v6202
    %v6727 = vunpack.c.l.b16 %v6203
    %v6728 = vunpack.c.h.b16 %v6203
    %v6729 = vunpack.c.l.b16 %v6204
    %v6730 = vunpack.c.l.b16 %v6205
    %v6731 = vunpack.c.h.b16 %v6205
    %v6732 = vunpack.c.l.b16 %v6206
    %v6733 = vunpack.c.h.b16 %v6206
    %v6734 = vunpack.c.l.b16 %v6207
    %v6735 = vunpack.c.l.b16 %v6208
    %v6736 = vunpack.c.h.b16 %v6208
    %v6737 = vunpack.c.l.b16 %v6209
    %v6738 = vunpack.c.h.b16 %v6209
    %v6739 = vunpack.c.l.b16 %v6210
    %v6740 = vunpack.c.l.b16 %v6211
    %v6741 = vunpack.c.h.b16 %v6211
    %v6742 = vunpack.c.l.b16 %v6212
    %v6743 = vunpack.c.h.b16 %v6212
    %v6744 = vunpack.c.l.b16 %v6213
    %v6745 = vunpack.c.l.b16 %v6214
    %v6746 = vunpack.c.h.b16 %v6214
    %v6747 = vunpack.c.l.b16 %v6215
    %v6748 = vunpack.c.h.b16 %v6215
    %v6749 = vunpack.c.l.b16 %v6216
    %v6750 = vunpack.c.l.b16 %v6217
    %v6751 = vunpack.c.h.b16 %v6217
    %v6752 = vunpack.c.l.b16 %v6218
    %v6753 = vunpack.c.h.b16 %v6218
    %v6754 = vunpack.c.l.b16 %v6219
    %v6755 = vunpack.c.l.b16 %v6220
    %v6756 = vunpack.c.h.b16 %v6220
    %v6757 = vunpack.c.l.b16 %v6221
    %v6758 = vunpack.c.h.b16 %v6221
    %v6759 = vunpack.c.l.b16 %v6222
    %v6760 = vunpack.c.l.b16 %v6223
    %v6761 = vunpack.c.h.b16 %v6223
    %v6762 = vunpack.c.l.b16 %v6224
    %v6763 = vunpack.c.h.b16 %v6224
    %v6764 = vunpack.c.l.b16 %v6225
    %v6765 = vunpack.c.l.b16 %v6226
    %v6766 = vunpack.c.h.b16 %v6226
    %v6767 = vunpack.c.l.b16 %v6227
    %v6768 = vunpack.c.h.b16 %v6227
    %v6769 = vunpack.c.l.b16 %v6228
    %v6770 = vunpack.c.l.b16 %v6229
    %v6771 = vunpack.c.h.b16 %v6229
    %v6772 = vunpack.c.l.b16 %v6230
    %v6773 = vunpack.c.h.b16 %v6230
    %v6774 = vunpack.c.l.b16 %v6231
    %v6775 = vunpack.c.l.b16 %v6232
    %v6776 = vunpack.c.h.b16 %v6232
    %v6777 = vunpack.c.l.b16 %v6233
    %v6778 = vunpack.c.h.b16 %v6233
    %v6779 = vunpack.c.l.b16 %v6234
    %v6780 = vunpack.c.l.b16 %v6235
    %v6781 = vunpack.c.h.b16 %v6235
    %v6782 = vunpack.c.l.b16 %v6236
    %v6783 = vunpack.c.h.b16 %v6236
    %v6784 = vunpack.c.l.b16 %v6237
    %v6785 = vunpack.c.l.b16 %v6238
    %v6786 = vunpack.c.h.b16 %v6238
    %v6787 = vunpack.c.l.b16 %v6239
    %v6788 = vunpack.c.h.b16 %v6239
    %v6789 = vunpack.c.l.b16 %v6240
    %v6790 = vunpack.c.l.b16 %v6241
    %v6791 = vunpack.c.h.b16 %v6241
    %v6792 = vunpack.c.l.b16 %v6242
    %v6793 = vunpack.c.h.b16 %v6242
    %v6794 = vunpack.c.l.b16 %v6243
    %v6795 = vunpack.c.l.b16 %v6244
    %v6796 = vunpack.c.h.b16 %v6244
    %v6797 = vunpack.c.l.b16 %v6245
    %v6798 = vunpack.c.h.b16 %v6245
    %v6799 = vunpack.c.l.b16 %v6246
    %v6800 = vunpack.c.l.b16 %v6247
    %v6801 = vunpack.c.h.b16 %v6247
    %v6802 = vunpack.c.l.b16 %v6248
    %v6803 = vunpack.c.h.b16 %v6248
    %v6804 = vunpack.c.l.b16 %v6249
    %v6805 = vunpack.c.l.b16 %v6250
    %v6806 = vunpack.c.h.b16 %v6250
    %v6807 = vunpack.c.l.b16 %v6251
    %v6808 = vunpack.c.h.b16 %v6251
    %v6809 = vunpack.c.l.b16 %v6252
    %v6810 = vunpack.c.l.b16 %v6253
    %v6811 = vunpack.c.h.b16 %v6253
    %v6812 = vunpack.c.l.b16 %v6254
    %v6813 = vunpack.c.h.b16 %v6254
    %v6814 = vunpack.c.l.b16 %v6255
    %v6815 = vunpack.c.l.b16 %v6256
    %v6816 = vunpack.c.h.b16 %v6256
    %v6817 = vunpack.c.l.b16 %v6257
    %v6818 = vunpack.c.h.b16 %v6257
    %v6819 = vunpack.c.l.b16 %v6258
    %v6820 = vunpack.c.l.b16 %v6259
    %v6821 = vunpack.c.h.b16 %v6259
    %v6822 = vunpack.c.l.b16 %v6260
    %v6823 = vunpack.c.h.b16 %v6260
    %v6824 = vunpack.c.l.b16 %v6261
    %v6825 = vunpack.c.l.b16 %v6262
    %v6826 = vunpack.c.h.b16 %v6262
    %v6827 = vunpack.c.l.b16 %v6263
    %v6828 = vunpack.c.h.b16 %v6263
    %v6829 = vunpack.c.l.b16 %v6264
    %v6830 = vunpack.c.l.b16 %v6265
    %v6831 = vunpack.c.h.b16 %v6265
    %v6832 = vunpack.c.l.b16 %v6266
    %v6833 = vunpack.c.h.b16 %v6266
    %v6834 = vunpack.c.l.b16 %v6267
    %v6835 = vunpack.c.l.b16 %v6268
    %v6836 = vunpack.c.h.b16 %v6268
    %v6837 = vunpack.c.l.b16 %v6269
    %v6838 = vunpack.c.h.b16 %v6269
    %v6839 = vunpack.c.l.b16 %v6270
    %v6840 = vunpack.c.l.b16 %v6271
    %v6841 = vunpack.c.h.b16 %v6271
    %v6842 = vunpack.c.l.b16 %v6272
    %v6843 = vunpack.c.h.b16 %v6272
    %v6844 = vunpack.c.l.b16 %v6273
    %v6845 = vunpack.c.l.b16 %v6274
    %v6846 = vunpack.c.h.b16 %v6274
    %v6847 = vunpack.c.l.b16 %v6275
    %v6848 = vunpack.c.h.b16 %v6275
    %v6849 = vunpack.c.l.b16 %v6276
    %v6850 = vunpack.c.l.b16 %v6277
    %v6851 = vunpack.c.h.b16 %v6277
    %v6852 = vunpack.c.l.b16 %v6278
    %v6853 = vunpack.c.h.b16 %v6278
    %v6854 = vunpack.c.l.b16 %v6279
    %v6855 = vunpack.c.l.b16 %v6280
    %v6856 = vunpack.c.h.b16 %v6280
    %v6857 = vunpack.c.l.b16 %v6281
    %v6858 = vunpack.c.h.b16 %v6281
    %v6859 = vunpack.c.l.b16 %v6282
    %v6860 = vunpack.c.l.b16 %v6283
    %v6861 = vunpack.c.h.b16 %v6283
    %v6862 = vunpack.c.l.b16 %v6284
    %v6863 = vunpack.c.h.b16 %v6284
    %v6864 = vunpack.c.l.b16 %v6285
    %v6865 = vunpack.c.l.b16 %v6286
    %v6866 = vunpack.c.h.b16 %v6286
    %v6867 = vunpack.c.l.b16 %v6287
    %v6868 = vunpack.c.h.b16 %v6287
    %v6869 = vunpack.c.l.b16 %v6288
    %v6870 = vunpack.c.l.b16 %v6289
    %v6871 = vunpack.c.h.b16 %v6289
    %v6872 = vunpack.c.l.b16 %v6290
    %v6873 = vunpack.c.h.b16 %v6290
    %v6874 = vunpack.c.l.b16 %v6291
    %v6875 = vunpack.c.l.b16 %v6292
    %v6876 = vunpack.c.h.b16 %v6292
    %v6877 = vunpack.c.l.b16 %v6293
    %v6878 = vunpack.c.h.b16 %v6293
    %v6879 = vunpack.c.l.b16 %v6294
    %v6880 = vunpack.c.l.b16 %v6295
    %v6881 = vunpack.c.h.b16 %v6295
    %v6882 = vunpack.c.l.b16 %v6296
    %v6883 = vunpack.c.h.b16 %v6296
    %v6884 = vunpack.c.l.b16 %v6297
    %v6885 = vunpack.c.l.b16 %v6298
    %v6886 = vunpack.c.h.b16 %v6298
    %v6887 = vunpack.c.l.b16 %v6299
    %v6888 = vunpack.c.h.b16 %v6299
    %v6889 = vunpack.c.l.b16 %v6300
    %v6890 = vunpack.c.l.b16 %v6301
    %v6891 = vunpack.c.h.b16 %v6301
    %v6892 = vunpack.c.l.b16 %v6302
    %v6893 = vunpack.c.h.b16 %v6302
    %v6894 = vunpack.c.l.b16 %v6303
    %v6895 = vunpack.c.l.b16 %v6304
    %v6896 = vunpack.c.h.b16 %v6304
    %v6897 = vunpack.c.l.b16 %v6305
    %v6898 = vunpack.c.h.b16 %v6305
    %v6899 = vunpack.c.l.b16 %v6306
    %v6900 = vunpack.c.l.b16 %v6307
    %v6901 = vunpack.c.h.b16 %v6307
    %v6902 = vunpack.c.l.b16 %v6308
    %v6903 = vunpack.c.h.b16 %v6308
    %v6904 = vunpack.c.l.b16 %v6309
    %v6905 = vunpack.c.l.b16 %v6310
    %v6906 = vunpack.c.h.b16 %v6310
    %v6907 = vunpack.c.l.b16 %v6311
    %v6908 = vunpack.c.h.b16 %v6311
    %v6909 = vunpack.c.l.b16 %v6312
    %v6910 = vunpack.c.l.b16 %v6313
    %v6911 = vunpack.c.h.b16 %v6313
    %v6912 = vunpack.c.l.b16 %v6314
    %v6913 = vunpack.c.h.b16 %v6314
    %v6914 = vunpack.c.l.b16 %v6315
    %v6915 = vunpack.c.l.b16 %v6316
    %v6916 = vunpack.c.h.b16 %v6316
    %v6917 = vunpack.c.l.b16 %v6317
    %v6918 = vunpack.c.h.b16 %v6317
    %v6919 = vunpack.c.l.b16 %v6318
    %v6920 = vunpack.c.l.b16 %v6319
    %v6921 = vunpack.c.h.b16 %v6319
    %v6922 = vunpack.c.l.b16 %v6320
    %v6923 = vunpack.c.h.b16 %v6320
    %v6924 = vunpack.c.l.b16 %v6321
    %v6925 = vunpack.c.l.b16 %v6322
    %v6926 = vunpack.c.h.b16 %v6322
    %v6927 = vunpack.c.l.b16 %v6323
    %v6928 = vunpack.c.h.b16 %v6323
    %v6929 = vunpack.c.l.b16 %v6324
    %v6930 = vunpack.c.l.b16 %v6325
    %v6931 = vunpack.c.h.b16 %v6325
    %v6932 = vunpack.c.l.b16 %v6326
    %v6933 = vunpack.c.h.b16 %v6326
    %v6934 = vunpack.c.l.b16 %v6327
    %v6935 = vunpack.c.l.b16 %v6328
    %v6936 = vunpack.c.h.b16 %v6328
    %v6937 = vunpack.c.l.b16 %v6329
    %v6938 = vunpack.c.h.b16 %v6329
    %v6939 = vunpack.c.l.b16 %v6330
    %v6940 = vunpack.c.l.b16 %v6331
    %v6941 = vunpack.c.h.b16 %v6331
    %v6942 = vunpack.c.l.b16 %v6332
    %v6943 = vunpack.c.h.b16 %v6332
    %v6944 = vunpack.c.l.b16 %v6333
    %v6945 = vunpack.c.l.b16 %v6334
    %v6946 = vunpack.c.h.b16 %v6334
    %v6947 = vunpack.c.l.b16 %v6335
    %v6948 = vunpack.c.h.b16 %v6335
    %v6949 = vunpack.c.l.b16 %v6336
    %v6950 = vunpack.c.l.b16 %v6337
    %v6951 = vunpack.c.h.b16 %v6337
    %v6952 = vunpack.c.l.b16 %v6338
    %v6953 = vunpack.c.h.b16 %v6338
    %v6954 = vunpack.c.l.b16 %v6339
    %v6955 = vunpack.c.l.b16 %v6340
    %v6956 = vunpack.c.h.b16 %v6340
    %v6957 = vunpack.c.l.b16 %v6341
    %v6958 = vunpack.c.h.b16 %v6341
    %v6959 = vunpack.c.l.b16 %v6342
    %v6960 = vunpack.c.l.b16 %v6343
    %v6961 = vunpack.c.h.b16 %v6343
    %v6962 = vunpack.c.l.b16 %v6344
    %v6963 = vunpack.c.h.b16 %v6344
    %v6964 = vunpack.c.l.b16 %v6345
    %v6965 = vunpack.c.l.b16 %v6346
    %v6966 = vunpack.c.h.b16 %v6346
    %v6967 = vunpack.c.l.b16 %v6347
    %v6968 = vunpack.c.h.b16 %v6347
    %v6969 = vunpack.c.l.b16 %v6348
    %v6970 = vunpack.c.l.b16 %v6349
    %v6971 = vunpack.c.h.b16 %v6349
    %v6972 = vunpack.c.l.b16 %v6350
    %v6973 = vunpack.c.h.b16 %v6350
    %v6974 = vunpack.c.l.b16 %v6351
    %v6975 = vunpack.c.l.b16 %v6352
    %v6976 = vunpack.c.h.b16 %v6352
    %v6977 = vunpack.c.l.b16 %v6353
    %v6978 = vunpack.c.h.b16 %v6353
    %v6979 = vunpack.c.l.b16 %v6354
    %v6980 = vunpack.c.l.b16 %v6355
    %v6981 = vunpack.c.h.b16 %v6355
    %v6982 = vunpack.c.l.b16 %v6356
    %v6983 = vunpack.c.h.b16 %v6356
    %v6984 = vunpack.c.l.b16 %v6357
    %v6985 = vunpack.c.l.b16 %v6358
    %v6986 = vunpack.c.h.b16 %v6358
    %v6987 = vunpack.c.l.b16 %v6359
    %v6988 = vunpack.c.h.b16 %v6359
    %v6989 = vunpack.c.l.b16 %v6360
    %v6990 = vunpack.c.l.b16 %v6361
    %v6991 = vunpack.c.h.b16 %v6361
    %v6992 = vunpack.c.l.b16 %v6362
    %v6993 = vunpack.c.h.b16 %v6362
    %v6994 = vunpack.c.l.b16 %v6363
    %v6995 = vunpack.c.l.b16 %v6364
    %v6996 = vunpack.c.h.b16 %v6364
    %v6997 = vunpack.c.l.b16 %v6365
    %v6998 = vunpack.c.h.b16 %v6365
    %v6999 = vunpack.c.l.b16 %v6366
    %v7000 = vunpack.c.l.b16 %v6367
    %v7001 = vunpack.c.h.b16 %v6367
    %v7002 = vunpack.c.l.b16 %v6368
    %v7003 = vunpack.c.h.b16 %v6368
    %v7004 = vunpack.c.l.b16 %v6369
    %v7005 = vunpack.c.l.b16 %v6370
    %v7006 = vunpack.c.h.b16 %v6370
    %v7007 = vunpack.c.l.b16 %v6371
    %v7008 = vunpack.c.h.b16 %v6371
    %v7009 = vunpack.c.l.b16 %v6372
    %v7010 = vunpack.c.l.b16 %v6373
    %v7011 = vunpack.c.h.b16 %v6373
    %v7012 = vunpack.c.l.b16 %v6374
    %v7013 = vunpack.c.h.b16 %v6374
    %v7014 = vunpack.c.l.b16 %v6375
    %v7015 = vunpack.c.l.b16 %v6376
    %v7016 = vunpack.c.h.b16 %v6376
    %v7017 = vunpack.c.l.b16 %v6377
    %v7018 = vunpack.c.h.b16 %v6377
    %v7019 = vunpack.c.l.b16 %v6378
    %v7020 = vunpack.c.l.b16 %v6379
    %v7021 = vunpack.c.h.b16 %v6379
    %v7022 = vunpack.c.l.b16 %v6380
    %v7023 = vunpack.c.h.b16 %v6380
    %v7024 = vunpack.c.l.b16 %v6381
    %v7025 = vunpack.c.l.b16 %v6382
    %v7026 = vunpack.c.h.b16 %v6382
    %v7027 = vunpack.c.l.b16 %v6383
    %v7028 = vunpack.c.h.b16 %v6383
    %v7029 = vunpack.c.l.b16 %v6384
    %v7030 = vunpack.c.l.b16 %v6385
    %v7031 = vunpack.c.h.b16 %v6385
    %v7032 = vunpack.c.l.b16 %v6386
    %v7033 = vunpack.c.h.b16 %v6386
    %v7034 = vunpack.c.l.b16 %v6387
    %v7035 = vunpack.c.l.b16 %v6388
    %v7036 = vunpack.c.h.b16 %v6388
    %v7037 = vunpack.c.l.b16 %v6389
    %v7038 = vunpack.c.h.b16 %v6389
    %v7039 = vunpack.c.l.b16 %v6390
    %v7040 = vunpack.c.l.b16 %v6391
    %v7041 = vunpack.c.h.b16 %v6391
    %v7042 = vunpack.c.l.b16 %v6392
    %v7043 = vunpack.c.h.b16 %v6392
    %v7044 = vunpack.c.l.b16 %v6393
    %v7045 = vunpack.c.l.b16 %v6394
    %v7046 = vunpack.c.h.b16 %v6394
    %v7047 = vunpack.c.l.b16 %v6395
    %v7048 = vunpack.c.h.b16 %v6395
    %v7049 = vunpack.c.l.b16 %v6396
    %v7050 = vunpack.c.l.b16 %v6397
    %v7051 = vunpack.c.h.b16 %v6397
    %v7052 = vunpack.c.l.b16 %v6398
    %v7053 = vunpack.c.h.b16 %v6398
    %v7054 = vunpack.c.l.b16 %v6399
    %v7055 = vunpack.c.l.b16 %v6400
    %v7056 = vunpack.c.h.b16 %v6400
    %v7057 = vunpack.c.l.b16 %v6401
    %v7058 = vunpack.c.h.b16 %v6401
    %v7059 = vunpack.c.l.b16 %v6402
    %v7060 = vunpack.c.l.b16 %v6403
    %v7061 = vunpack.c.h.b16 %v6403
    %v7062 = vunpack.c.l.b16 %v6404
    %v7063 = vunpack.c.h.b16 %v6404
    %v7064 = vunpack.c.l.b16 %v6405
    %v7065 = vunpack.c.l.b16 %v6406
    %v7066 = vunpack.c.h.b16 %v6406
    %v7067 = vunpack.c.l.b16 %v6407
    %v7068 = vunpack.c.h.b16 %v6407
    %v7069 = vunpack.c.l.b16 %v6408
    %v7070 = vunpack.c.l.b16 %v6409
    %v7071 = vunpack.c.h.b16 %v6409
    %v7072 = vunpack.c.l.b16 %v6410
    %v7073 = vunpack.c.h.b16 %v6410
    %v7074 = vunpack.c.l.b16 %v6411
    %v7075 = vunpack.c.l.b16 %v6412
    %v7076 = vunpack.c.h.b16 %v6412
    %v7077 = vunpack.c.l.b16 %v6413
    %v7078 = vunpack.c.h.b16 %v6413
    %v7079 = vunpack.c.l.b16 %v6414
    %v7080 = vunpack.c.l.b16 %v6415
    %v7081 = vunpack.c.h.b16 %v6415
    %v7082 = vunpack.c.l.b16 %v6416
    %v7083 = vunpack.c.h.b16 %v6416
    %v7084 = vunpack.c.l.b16 %v6417
    %v7085 = vpack.c.b16 %v6690, %v6685
    %v7086 = vpack.c.b16 %v6691, %v6686
    %v7087 = vpack.c.b16 %v6692, %v6687
    %v7088 = vpack.c.b16 %v6693, %v6688
    %v7089 = vpack.c.b16 %v6694, %v6689
    %v7090 = vpack.c.b16 %v6700, %v6695
    %v7091 = vpack.c.b16 %v6701, %v6696
    %v7092 = vpack.c.b16 %v6702, %v6697
    %v7093 = vpack.c.b16 %v6703, %v6698
    %v7094 = vpack.c.b16 %v6704, %v6699
    %v7095 = vpack.c.b16 %v6710, %v6705
    %v7096 = vpack.c.b16 %v6711, %v6706
    %v7097 = vpack.c.b16 %v6712, %v6707
    %v7098 = vpack.c.b16 %v6713, %v6708
    %v7099 = vpack.c.b16 %v6714, %v6709
    %v7100 = vpack.c.b16 %v6720, %v6715
    %v7101 = vpack.c.b16 %v6721, %v6716
    %v7102 = vpack.c.b16 %v6722, %v6717
    %v7103 = vpack.c.b16 %v6723, %v6718
    %v7104 = vpack.c.b16 %v6724, %v6719
    %v7105 = vpack.c.b16 %v6730, %v6725
    %v7106 = vpack.c.b16 %v6731, %v6726
    %v7107 = vpack.c.b16 %v6732, %v6727
    %v7108 = vpack.c.b16 %v6733, %v6728
    %v7109 = vpack.c.b16 %v6734, %v6729
    %v7110 = vpack.c.b16 %v6740, %v6735
    %v7111 = vpack.c.b16 %v6741, %v6736
    %v7112 = vpack.c.b16 %v6742, %v6737
    %v7113 = vpack.c.b16 %v6743, %v6738
    %v7114 = vpack.c.b16 %v6744, %v6739
    %v7115 = vpack.c.b16 %v6750, %v6745
    %v7116 = vpack.c.b16 %v6751, %v6746
    %v7117 = vpack.c.b16 %v6752, %v6747
    %v7118 = vpack.c.b16 %v6753, %v6748
    %v7119 = vpack.c.b16 %v6754, %v6749
    %v7120 = vpack.c.b16 %v6760, %v6755
    %v7121 = vpack.c.b16 %v6761, %v6756
    %v7122 = vpack.c.b16 %v6762, %v6757
    %v7123 = vpack.c.b16 %v6763, %v6758
    %v7124 = vpack.c.b16 %v6764, %v6759
    %v7125 = vpack.c.b16 %v6770, %v6765
    %v7126 = vpack.c.b16 %v6771, %v6766
    %v7127 = vpack.c.b16 %v6772, %v6767
    %v7128 = vpack.c.b16 %v6773, %v6768
    %v7129 = vpack.c.b16 %v6774, %v6769
    %v7130 = vpack.c.b16 %v6780, %v6775
    %v7131 = vpack.c.b16 %v6781, %v6776
    %v7132 = vpack.c.b16 %v6782, %v6777
    %v7133 = vpack.c.b16 %v6783, %v6778
    %v7134 = vpack.c.b16 %v6784, %v6779
    %v7135 = vpack.c.b16 %v6790, %v6785
    %v7136 = vpack.c.b16 %v6791, %v6786
    %v7137 = vpack.c.b16 %v6792, %v6787
    %v7138 = vpack.c.b16 %v6793, %v6788
    %v7139 = vpack.c.b16 %v6794, %v6789
    %v7140 = vpack.c.b16 %v6800, %v6795
    %v7141 = vpack.c.b16 %v6801, %v6796
    %v7142 = vpack.c.b16 %v6802, %v6797
    %v7143 = vpack.c.b16 %v6803, %v6798
    %v7144 = vpack.c.b16 %v6804, %v6799
    %v7145 = vpack.c.b16 %v6810, %v6805
    %v7146 = vpack.c.b16 %v6811, %v6806
    %v7147 = vpack.c.b16 %v6812, %v6807
    %v7148 = vpack.c.b16 %v6813, %v6808
    %v7149 = vpack.c.b16 %v6814, %v6809
    %v7150 = vpack.c.b16 %v6820, %v6815
    %v7151 = vpack.c.b16 %v6821, %v6816
    %v7152 = vpack.c.b16 %v6822, %v6817
    %v7153 = vpack.c.b16 %v6823, %v6818
    %v7154 = vpack.c.b16 %v6824, %v6819
    %v7155 = vpack.c.b16 %v6830, %v6825
    %v7156 = vpack.c.b16 %v6831, %v6826
    %v7157 = vpack.c.b16 %v6832, %v6827
    %v7158 = vpack.c.b16 %v6833, %v6828
    %v7159 = vpack.c.b16 %v6834, %v6829
    %v7160 = vpack.c.b16 %v6840, %v6835
    %v7161 = vpack.c.b16 %v6841, %v6836
    %v7162 = vpack.c.b16 %v6842, %v6837
    %v7163 = vpack.c.b16 %v6843, %v6838
    %v7164 = vpack.c.b16 %v6844, %v6839
    %v7165 = vpack.c.b16 %v6850, %v6845
    %v7166 = vpack.c.b16 %v6851, %v6846
    %v7167 = vpack.c.b16 %v6852, %v6847
    %v7168 = vpack.c.b16 %v6853, %v6848
    %v7169 = vpack.c.b16 %v6854, %v6849
    %v7170 = vpack.c.b16 %v6860, %v6855
    %v7171 = vpack.c.b16 %v6861, %v6856
    %v7172 = vpack.c.b16 %v6862, %v6857
    %v7173 = vpack.c.b16 %v6863, %v6858
    %v7174 = vpack.c.b16 %v6864, %v6859
    %v7175 = vpack.c.b16 %v6870, %v6865
    %v7176 = vpack.c.b16 %v6871, %v6866
    %v7177 = vpack.c.b16 %v6872, %v6867
    %v7178 = vpack.c.b16 %v6873, %v6868
    %v7179 = vpack.c.b16 %v6874, %v6869
    %v7180 = vpack.c.b16 %v6880, %v6875
    %v7181 = vpack.c.b16 %v6881, %v6876
    %v7182 = vpack.c.b16 %v6882, %v6877
    %v7183 = vpack.c.b16 %v6883, %v6878
    %v7184 = vpack.c.b16 %v6884, %v6879
    %v7185 = vpack.c.b16 %v6890, %v6885
    %v7186 = vpack.c.b16 %v6891, %v6886
    %v7187 = vpack.c.b16 %v6892, %v6887
    %v7188 = vpack.c.b16 %v6893, %v6888
    %v7189 = vpack.c.b16 %v6894, %v6889
    %v7190 = vpack.c.b16 %v6900, %v6895
    %v7191 = vpack.c.b16 %v6901, %v6896
    %v7192 = vpack.c.b16 %v6902, %v6897
    %v7193 = vpack.c.b16 %v6903, %v6898
    %v7194 = vpack.c.b16 %v6904, %v6899
    %v7195 = vpack.c.b16 %v6910, %v6905
    %v7196 = vpack.c.b16 %v6911, %v6906
    %v7197 = vpack.c.b16 %v6912, %v6907
    %v7198 = vpack.c.b16 %v6913, %v6908
    %v7199 = vpack.c.b16 %v6914, %v6909
    %v7200 = vpack.c.b16 %v6920, %v6915
    %v7201 = vpack.c.b16 %v6921, %v6916
    %v7202 = vpack.c.b16 %v6922, %v6917
    %v7203 = vpack.c.b16 %v6923, %v6918
    %v7204 = vpack.c.b16 %v6924, %v6919
    %v7205 = vpack.c.b16 %v6930, %v6925
    %v7206 = vpack.c.b16 %v6931, %v6926
    %v7207 = vpack.c.b16 %v6932, %v6927
    %v7208 = vpack.c.b16 %v6933, %v6928
    %v7209 = vpack.c.b16 %v6934, %v6929
    %v7210 = vpack.c.b16 %v6940, %v6935
    %v7211 = vpack.c.b16 %v6941, %v6936
    %v7212 = vpack.c.b16 %v6942, %v6937
    %v7213 = vpack.c.b16 %v6943, %v6938
    %v7214 = vpack.c.b16 %v6944, %v6939
    %v7215 = vpack.c.b16 %v6950, %v6945
    %v7216 = vpack.c.b16 %v6951, %v6946
    %v7217 = vpack.c.b16 %v6952, %v6947
    %v7218 = vpack.c.b16 %v6953, %v6948
    %v7219 = vpack.c.b16 %v6954, %v6949
    %v7220 = vpack.c.b16 %v6960, %v6955
    %v7221 = vpack.c.b16 %v6961, %v6956
    %v7222 = vpack.c.b16 %v6962, %v6957
    %v7223 = vpack.c.b16 %v6963, %v6958
    %v7224 = vpack.c.b16 %v6964, %v6959
    %v7225 = vpack.c.b16 %v6970, %v6965
    %v7226 = vpack.c.b16 %v6971, %v6966
    %v7227 = vpack.c.b16 %v6972, %v6967
    %v7228 = vpack.c.b16 %v6973, %v6968
    %v7229 = vpack.c.b16 %v6974, %v6969
    %v7230 = vpack.c.b16 %v6980, %v6975
    %v7231 = vpack.c.b16 %v6981, %v6976
    %v7232 = vpack.c.b16 %v6982, %v6977
    %v7233 = vpack.c.b16 %v6983, %v6978
    %v7234 = vpack.c.b16 %v6984, %v6979
    %v7235 = vpack.c.b16 %v6990, %v6985
    %v7236 = vpack.c.b16 %v6991, %v6986
    %v7237 = vpack.c.b16 %v6992, %v6987
    %v7238 = vpack.c.b16 %v6993, %v6988
    %v7239 = vpack.c.b16 %v6994, %v6989
    %v7240 = vpack.c.b16 %v7000, %v6995
    %v7241 = vpack.c.b16 %v7001, %v6996
    %v7242 = vpack.c.b16 %v7002, %v6997
    %v7243 = vpack.c.b16 %v7003, %v6998
    %v7244 = vpack.c.b16 %v7004, %v6999
    %v7245 = vpack.c.b16 %v7010, %v7005
    %v7246 = vpack.c.b16 %v7011, %v7006
    %v7247 = vpack.c.b16 %v7012, %v7007
    %v7248 = vpack.c.b16 %v7013, %v7008
    %v7249 = vpack.c.b16 %v7014, %v7009
    %v7250 = vpack.c.b16 %v7020, %v7015
    %v7251 = vpack.c.b16 %v7021, %v7016
    %v7252 = vpack.c.b16 %v7022, %v7017
    %v7253 = vpack.c.b16 %v7023, %v7018
    %v7254 = vpack.c.b16 %v7024, %v7019
    %v7255 = vpack.c.b16 %v7030, %v7025
    %v7256 = vpack.c.b16 %v7031, %v7026
    %v7257 = vpack.c.b16 %v7032, %v7027
    %v7258 = vpack.c.b16 %v7033, %v7028
    %v7259 = vpack.c.b16 %v7034, %v7029
    %v7260 = vpack.c.b16 %v7040, %v7035
    %v7261 = vpack.c.b16 %v7041, %v7036
    %v7262 = vpack.c.b16 %v7042, %v7037
    %v7263 = vpack.c.b16 %v7043, %v7038
    %v7264 = vpack.c.b16 %v7044, %v7039
    %v7265 = vpack.c.b16 %v7050, %v7045
    %v7266 = vpack.c.b16 %v7051, %v7046
    %v7267 = vpack.c.b16 %v7052, %v7047
    %v7268 = vpack.c.b16 %v7053, %v7048
    %v7269 = vpack.c.b16 %v7054, %v7049
    %v7270 = vpack.c.b16 %v7060, %v7055
    %v7271 = vpack.c.b16 %v7061, %v7056
    %v7272 = vpack.c.b16 %v7062, %v7057
    %v7273 = vpack.c.b16 %v7063, %v7058
    %v7274 = vpack.c.b16 %v7064, %v7059
    %v7275 = vpack.c.b16 %v7070, %v7065
    %v7276 = vpack.c.b16 %v7071, %v7066
    %v7277 = vpack.c.b16 %v7072, %v7067
    %v7278 = vpack.c.b16 %v7073, %v7068
    %v7279 = vpack.c.b16 %v7074, %v7069
    %v7280 = vpack.c.b16 %v7080, %v7075
    %v7281 = vpack.c.b16 %v7081, %v7076
    %v7282 = vpack.c.b16 %v7082, %v7077
    %v7283 = vpack.c.b16 %v7083, %v7078
    %v7284 = vpack.c.b16 %v7084, %v7079
    %7485 = vmatprep.subr.bf16.mxu0 %v7121
    %7486 = vmatpush1.bf16.msra.mxu0 %v7120
    %7487 = vmatprep.subr.bf16.mxu0 %v7116
    %7488 = vmatpush1.bf16.msra.mxu0 %v7115
    %7489 = vmatprep.subr.bf16.mxu0 %v7111
    %7490 = vmatpush1.bf16.msra.mxu0 %v7110
    %7491 = vmatprep.subr.bf16.mxu0 %v7106
    %7492 = vmatpush1.bf16.msra.mxu0 %v7105
    %7493 = vmatprep.subr.bf16.mxu0 %v7101
    %7494 = vmatpush1.bf16.msra.mxu0 %v7100
    %7495 = vmatprep.subr.bf16.mxu0 %v7096
    %7496 = vmatpush1.bf16.msra.mxu0 %v7095
    %7497 = vmatprep.subr.bf16.mxu0 %v7091
    %7498 = vmatpush1.bf16.msra.mxu0 %v7090
    %7499 = vmatprep.subr.bf16.mxu0 %v7086
    %7500 = vmatpush1.bf16.msra.mxu0 %v7085
    %7501 = vmatprep.subr.bf16.mxu0 %v7161
    %7502 = vmatpush2.bf16.msra.mxu0 %v7160
    %7503 = vmatprep.subr.bf16.mxu0 %v7156
    %7504 = vmatpush2.bf16.msra.mxu0 %v7155
    %7505 = vmatprep.subr.bf16.mxu0 %v7151
    %7506 = vmatpush2.bf16.msra.mxu0 %v7150
    %7507 = vmatprep.subr.bf16.mxu0 %v7146
    %7508 = vmatpush2.bf16.msra.mxu0 %v7145
    %7509 = vmatprep.subr.bf16.mxu0 %v7141
    %7510 = vmatpush2.bf16.msra.mxu0 %v7140
    %7511 = vmatprep.subr.bf16.mxu0 %v7136
    %7512 = vmatpush2.bf16.msra.mxu0 %v7135
    %7513 = vmatprep.subr.bf16.mxu0 %v7131
    %7514 = vmatpush2.bf16.msra.mxu0 %v7130
    %7515 = vmatprep.subr.bf16.mxu0 %v7126
    %7516 = vmatpush2.bf16.msra.mxu0 %v7125
    %7517 = vmatprep.mubr.bf16.mxu0 %v6174
    %7518 = vmatmul.mubr.bf16.gmra.mxu0 %v6173
    %v7519 = vpop.f32.mrf.mxu0
    %v7520 = vadd.f32 %v6423, %v7519
    %v7521 = vpop.f32.mrf.mxu0
    %v7522 = vadd.f32 %v6427, %v7521
    %v7523 = vpop.f32.mrf.mxu0
    %v7524 = vpop.f32.mrf.mxu0
    %7525 = vdwg.mxu0
    %7526 = vmatprep.subr.bf16.mxu0 %v7201
    %7527 = vmatpush1.bf16.msra.mxu0 %v7200
    %7528 = vmatprep.subr.bf16.mxu0 %v7196
    %7529 = vmatpush1.bf16.msra.mxu0 %v7195
    %7530 = vmatprep.subr.bf16.mxu0 %v7191
    %7531 = vmatpush1.bf16.msra.mxu0 %v7190
    %7532 = vmatprep.subr.bf16.mxu0 %v7186
    %7533 = vmatpush1.bf16.msra.mxu0 %v7185
    %7534 = vmatprep.subr.bf16.mxu0 %v7181
    %7535 = vmatpush1.bf16.msra.mxu0 %v7180
    %7536 = vmatprep.subr.bf16.mxu0 %v7176
    %7537 = vmatpush1.bf16.msra.mxu0 %v7175
    %7538 = vmatprep.subr.bf16.mxu0 %v7171
    %7539 = vmatpush1.bf16.msra.mxu0 %v7170
    %7540 = vmatprep.subr.bf16.mxu0 %v7166
    %7541 = vmatpush1.bf16.msra.mxu0 %v7165
    %7542 = vmatprep.subr.bf16.mxu0 %v7241
    %7543 = vmatpush2.bf16.msra.mxu0 %v7240
    %7544 = vmatprep.subr.bf16.mxu0 %v7236
    %7545 = vmatpush2.bf16.msra.mxu0 %v7235
    %7546 = vmatprep.subr.bf16.mxu0 %v7231
    %7547 = vmatpush2.bf16.msra.mxu0 %v7230
    %7548 = vmatprep.subr.bf16.mxu0 %v7226
    %7549 = vmatpush2.bf16.msra.mxu0 %v7225
    %7550 = vmatprep.subr.bf16.mxu0 %v7221
    %7551 = vmatpush2.bf16.msra.mxu0 %v7220
    %7552 = vmatprep.subr.bf16.mxu0 %v7216
    %7553 = vmatpush2.bf16.msra.mxu0 %v7215
    %7554 = vmatprep.subr.bf16.mxu0 %v7211
    %7555 = vmatpush2.bf16.msra.mxu0 %v7210
    %7556 = vmatprep.subr.bf16.mxu0 %v7206
    %7557 = vmatpush2.bf16.msra.mxu0 %v7205
    %7558 = vmatprep.mubr.bf16.mxu0 %v6176
    %7559 = vmatmul.mubr.bf16.gmra.mxu0 %v6175
    %v7560 = vpop.f32.mrf.mxu0
    %v7561 = vadd.f32 %v7520, %v7560
    %v7562 = vpop.f32.mrf.mxu0
    %v7563 = vadd.f32 %v7522, %v7562
    %v7564 = vpop.f32.mrf.mxu0
    %v7565 = vpop.f32.mrf.mxu0
    %7566 = vdwg.mxu0
    %7567 = vmatprep.subr.bf16.mxu0 %v7281
    %7568 = vmatpush1.bf16.msra.mxu0 %v7280
    %7569 = vmatprep.subr.bf16.mxu0 %v7276
    %7570 = vmatpush1.bf16.msra.mxu0 %v7275
    %7571 = vmatprep.subr.bf16.mxu0 %v7271
    %7572 = vmatpush1.bf16.msra.mxu0 %v7270
    %7573 = vmatprep.subr.bf16.mxu0 %v7266
    %7574 = vmatpush1.bf16.msra.mxu0 %v7265
    %7575 = vmatprep.subr.bf16.mxu0 %v7261
    %7576 = vmatpush1.bf16.msra.mxu0 %v7260
    %7577 = vmatprep.subr.bf16.mxu0 %v7256
    %7578 = vmatpush1.bf16.msra.mxu0 %v7255
    %7579 = vmatprep.subr.bf16.mxu0 %v7251
    %7580 = vmatpush1.bf16.msra.mxu0 %v7250
    %7581 = vmatprep.subr.bf16.mxu0 %v7246
    %7582 = vmatpush1.bf16.msra.mxu0 %v7245
    %7583 = vmatprep.subr.bf16.mxu0 0
    %7584 = vmatpush2.bf16.msra.mxu0 0
    %7585 = vmatprep.subr.bf16.mxu0 0
    %7586 = vmatpush2.bf16.msra.mxu0 0
    %7587 = vmatprep.subr.bf16.mxu0 0
    %7588 = vmatpush2.bf16.msra.mxu0 0
    %7589 = vmatprep.subr.bf16.mxu0 0
    %7590 = vmatpush2.bf16.msra.mxu0 0
    %7591 = vmatprep.subr.bf16.mxu0 0
    %7592 = vmatpush2.bf16.msra.mxu0 0
    %7593 = vmatprep.subr.bf16.mxu0 0
    %7594 = vmatpush2.bf16.msra.mxu0 0
    %7595 = vmatprep.subr.bf16.mxu0 0
    %7596 = vmatpush2.bf16.msra.mxu0 0
    %7597 = vmatprep.subr.bf16.mxu0 0
    %7598 = vmatpush2.bf16.msra.mxu0 0
    %7599 = vmatprep.mubr.bf16.mxu0 0
    %7600 = vmatmul.mubr.bf16.gmra.mxu0 %v6177
    %v7601 = vpop.f32.mrf.mxu0
    %v7602 = vadd.f32 %v7561, %v7601
    %v7603 = vpop.f32.mrf.mxu0
    %v7604 = vadd.f32 %v7563, %v7603
    %v7605 = vpop.f32.mrf.mxu0
    %v7606 = vpop.f32.mrf.mxu0
    %7607 = vdwg.mxu0
    %7608 = vmatprep.subr.bf16.mxu0 %v7123
    %7609 = vmatpush1.bf16.msra.mxu0 %v7122
    %7610 = vmatprep.subr.bf16.mxu0 %v7118
    %7611 = vmatpush1.bf16.msra.mxu0 %v7117
    %7612 = vmatprep.subr.bf16.mxu0 %v7113
    %7613 = vmatpush1.bf16.msra.mxu0 %v7112
    %7614 = vmatprep.subr.bf16.mxu0 %v7108
    %7615 = vmatpush1.bf16.msra.mxu0 %v7107
    %7616 = vmatprep.subr.bf16.mxu0 %v7103
    %7617 = vmatpush1.bf16.msra.mxu0 %v7102
    %7618 = vmatprep.subr.bf16.mxu0 %v7098
    %7619 = vmatpush1.bf16.msra.mxu0 %v7097
    %7620 = vmatprep.subr.bf16.mxu0 %v7093
    %7621 = vmatpush1.bf16.msra.mxu0 %v7092
    %7622 = vmatprep.subr.bf16.mxu0 %v7088
    %7623 = vmatpush1.bf16.msra.mxu0 %v7087
    %7624 = vmatprep.subr.bf16.mxu0 %v7163
    %7625 = vmatpush2.bf16.msra.mxu0 %v7162
    %7626 = vmatprep.subr.bf16.mxu0 %v7158
    %7627 = vmatpush2.bf16.msra.mxu0 %v7157
    %7628 = vmatprep.subr.bf16.mxu0 %v7153
    %7629 = vmatpush2.bf16.msra.mxu0 %v7152
    %7630 = vmatprep.subr.bf16.mxu0 %v7148
    %7631 = vmatpush2.bf16.msra.mxu0 %v7147
    %7632 = vmatprep.subr.bf16.mxu0 %v7143
    %7633 = vmatpush2.bf16.msra.mxu0 %v7142
    %7634 = vmatprep.subr.bf16.mxu0 %v7138
    %7635 = vmatpush2.bf16.msra.mxu0 %v7137
    %7636 = vmatprep.subr.bf16.mxu0 %v7133
    %7637 = vmatpush2.bf16.msra.mxu0 %v7132
    %7638 = vmatprep.subr.bf16.mxu0 %v7128
    %7639 = vmatpush2.bf16.msra.mxu0 %v7127
    %7640 = vmatprep.mubr.bf16.mxu0 %v6174
    %7641 = vmatmul.mubr.bf16.gmra.mxu0 %v6173
    %v7642 = vpop.f32.mrf.mxu0
    %v7643 = vadd.f32 %v6431, %v7642
    %v7644 = vpop.f32.mrf.mxu0
    %v7645 = vadd.f32 %v6435, %v7644
    %v7646 = vpop.f32.mrf.mxu0
    %v7647 = vpop.f32.mrf.mxu0
    %7648 = vdwg.mxu0
    %7649 = vmatprep.subr.bf16.mxu0 %v7203
    %7650 = vmatpush1.bf16.msra.mxu0 %v7202
    %7651 = vmatprep.subr.bf16.mxu0 %v7198
    %7652 = vmatpush1.bf16.msra.mxu0 %v7197
    %7653 = vmatprep.subr.bf16.mxu0 %v7193
    %7654 = vmatpush1.bf16.msra.mxu0 %v7192
    %7655 = vmatprep.subr.bf16.mxu0 %v7188
    %7656 = vmatpush1.bf16.msra.mxu0 %v7187
    %7657 = vmatprep.subr.bf16.mxu0 %v7183
    %7658 = vmatpush1.bf16.msra.mxu0 %v7182
    %7659 = vmatprep.subr.bf16.mxu0 %v7178
    %7660 = vmatpush1.bf16.msra.mxu0 %v7177
    %7661 = vmatprep.subr.bf16.mxu0 %v7173
    %7662 = vmatpush1.bf16.msra.mxu0 %v7172
    %7663 = vmatprep.subr.bf16.mxu0 %v7168
    %7664 = vmatpush1.bf16.msra.mxu0 %v7167
    %7665 = vmatprep.subr.bf16.mxu0 %v7243
    %7666 = vmatpush2.bf16.msra.mxu0 %v7242
    %7667 = vmatprep.subr.bf16.mxu0 %v7238
    %7668 = vmatpush2.bf16.msra.mxu0 %v7237
    %7669 = vmatprep.subr.bf16.mxu0 %v7233
    %7670 = vmatpush2.bf16.msra.mxu0 %v7232
    %7671 = vmatprep.subr.bf16.mxu0 %v7228
    %7672 = vmatpush2.bf16.msra.mxu0 %v7227
    %7673 = vmatprep.subr.bf16.mxu0 %v7223
    %7674 = vmatpush2.bf16.msra.mxu0 %v7222
    %7675 = vmatprep.subr.bf16.mxu0 %v7218
    %7676 = vmatpush2.bf16.msra.mxu0 %v7217
    %7677 = vmatprep.subr.bf16.mxu0 %v7213
    %7678 = vmatpush2.bf16.msra.mxu0 %v7212
    %7679 = vmatprep.subr.bf16.mxu0 %v7208
    %7680 = vmatpush2.bf16.msra.mxu0 %v7207
    %7681 = vmatprep.mubr.bf16.mxu0 %v6176
    %7682 = vmatmul.mubr.bf16.gmra.mxu0 %v6175
    %v7683 = vpop.f32.mrf.mxu0
    %v7684 = vadd.f32 %v7643, %v7683
    %v7685 = vpop.f32.mrf.mxu0
    %v7686 = vadd.f32 %v7645, %v7685
    %v7687 = vpop.f32.mrf.mxu0
    %v7688 = vpop.f32.mrf.mxu0
    %7689 = vdwg.mxu0
    %7690 = vmatprep.subr.bf16.mxu0 %v7283
    %7691 = vmatpush1.bf16.msra.mxu0 %v7282
    %7692 = vmatprep.subr.bf16.mxu0 %v7278
    %7693 = vmatpush1.bf16.msra.mxu0 %v7277
    %7694 = vmatprep.subr.bf16.mxu0 %v7273
    %7695 = vmatpush1.bf16.msra.mxu0 %v7272
    %7696 = vmatprep.subr.bf16.mxu0 %v7268
    %7697 = vmatpush1.bf16.msra.mxu0 %v7267
    %7698 = vmatprep.subr.bf16.mxu0 %v7263
    %7699 = vmatpush1.bf16.msra.mxu0 %v7262
    %7700 = vmatprep.subr.bf16.mxu0 %v7258
    %7701 = vmatpush1.bf16.msra.mxu0 %v7257
    %7702 = vmatprep.subr.bf16.mxu0 %v7253
    %7703 = vmatpush1.bf16.msra.mxu0 %v7252
    %7704 = vmatprep.subr.bf16.mxu0 %v7248
    %7705 = vmatpush1.bf16.msra.mxu0 %v7247
    %7706 = vmatprep.subr.bf16.mxu0 0
    %7707 = vmatpush2.bf16.msra.mxu0 0
    %7708 = vmatprep.subr.bf16.mxu0 0
    %7709 = vmatpush2.bf16.msra.mxu0 0
    %7710 = vmatprep.subr.bf16.mxu0 0
    %7711 = vmatpush2.bf16.msra.mxu0 0
    %7712 = vmatprep.subr.bf16.mxu0 0
    %7713 = vmatpush2.bf16.msra.mxu0 0
    %7714 = vmatprep.subr.bf16.mxu0 0
    %7715 = vmatpush2.bf16.msra.mxu0 0
    %7716 = vmatprep.subr.bf16.mxu0 0
    %7717 = vmatpush2.bf16.msra.mxu0 0
    %7718 = vmatprep.subr.bf16.mxu0 0
    %7719 = vmatpush2.bf16.msra.mxu0 0
    %7720 = vmatprep.subr.bf16.mxu0 0
    %7721 = vmatpush2.bf16.msra.mxu0 0
    %7722 = vmatprep.mubr.bf16.mxu0 0
    %7723 = vmatmul.mubr.bf16.gmra.mxu0 %v6177
    %v7724 = vpop.f32.mrf.mxu0
    %v7725 = vadd.f32 %v7684, %v7724
    %v7726 = vpop.f32.mrf.mxu0
    %v7727 = vadd.f32 %v7686, %v7726
    %v7728 = vpop.f32.mrf.mxu0
    %v7729 = vpop.f32.mrf.mxu0
    %7730 = vdwg.mxu0
    %7731 = vmatprep.subr.bf16.mxu0 0
    %7732 = vmatpush1.bf16.msra.mxu0 %v7124
    %7733 = vmatprep.subr.bf16.mxu0 0
    %7734 = vmatpush1.bf16.msra.mxu0 %v7119
    %7735 = vmatprep.subr.bf16.mxu0 0
    %7736 = vmatpush1.bf16.msra.mxu0 %v7114
    %7737 = vmatprep.subr.bf16.mxu0 0
    %7738 = vmatpush1.bf16.msra.mxu0 %v7109
    %7739 = vmatprep.subr.bf16.mxu0 0
    %7740 = vmatpush1.bf16.msra.mxu0 %v7104
    %7741 = vmatprep.subr.bf16.mxu0 0
    %7742 = vmatpush1.bf16.msra.mxu0 %v7099
    %7743 = vmatprep.subr.bf16.mxu0 0
    %7744 = vmatpush1.bf16.msra.mxu0 %v7094
    %7745 = vmatprep.subr.bf16.mxu0 0
    %7746 = vmatpush1.bf16.msra.mxu0 %v7089
    %7747 = vmatprep.subr.bf16.mxu0 0
    %7748 = vmatpush2.bf16.msra.mxu0 %v7164
    %7749 = vmatprep.subr.bf16.mxu0 0
    %7750 = vmatpush2.bf16.msra.mxu0 %v7159
    %7751 = vmatprep.subr.bf16.mxu0 0
    %7752 = vmatpush2.bf16.msra.mxu0 %v7154
    %7753 = vmatprep.subr.bf16.mxu0 0
    %7754 = vmatpush2.bf16.msra.mxu0 %v7149
    %7755 = vmatprep.subr.bf16.mxu0 0
    %7756 = vmatpush2.bf16.msra.mxu0 %v7144
    %7757 = vmatprep.subr.bf16.mxu0 0
    %7758 = vmatpush2.bf16.msra.mxu0 %v7139
    %7759 = vmatprep.subr.bf16.mxu0 0
    %7760 = vmatpush2.bf16.msra.mxu0 %v7134
    %7761 = vmatprep.subr.bf16.mxu0 0
    %7762 = vmatpush2.bf16.msra.mxu0 %v7129
    %7763 = vmatprep.mubr.bf16.mxu0 %v6174
    %7764 = vmatmul.mubr.bf16.gmra.mxu0 %v6173
    %v7765 = vpop.f32.mrf.mxu0
    %v7766 = vadd.f32 %v6439, %v7765
    %v7767 = vpop.f32.mrf.mxu0
    %v7768 = vpop.f32.mrf.mxu0
    %v7769 = vpop.f32.mrf.mxu0
    %7770 = vdwg.mxu0
    %7771 = vmatprep.subr.bf16.mxu0 0
    %7772 = vmatpush1.bf16.msra.mxu0 %v7204
    %7773 = vmatprep.subr.bf16.mxu0 0
    %7774 = vmatpush1.bf16.msra.mxu0 %v7199
    %7775 = vmatprep.subr.bf16.mxu0 0
    %7776 = vmatpush1.bf16.msra.mxu0 %v7194
    %7777 = vmatprep.subr.bf16.mxu0 0
    %7778 = vmatpush1.bf16.msra.mxu0 %v7189
    %7779 = vmatprep.subr.bf16.mxu0 0
    %7780 = vmatpush1.bf16.msra.mxu0 %v7184
    %7781 = vmatprep.subr.bf16.mxu0 0
    %7782 = vmatpush1.bf16.msra.mxu0 %v7179
    %7783 = vmatprep.subr.bf16.mxu0 0
    %7784 = vmatpush1.bf16.msra.mxu0 %v7174
    %7785 = vmatprep.subr.bf16.mxu0 0
    %7786 = vmatpush1.bf16.msra.mxu0 %v7169
    %7787 = vmatprep.subr.bf16.mxu0 0
    %7788 = vmatpush2.bf16.msra.mxu0 %v7244
    %7789 = vmatprep.subr.bf16.mxu0 0
    %7790 = vmatpush2.bf16.msra.mxu0 %v7239
    %7791 = vmatprep.subr.bf16.mxu0 0
    %7792 = vmatpush2.bf16.msra.mxu0 %v7234
    %7793 = vmatprep.subr.bf16.mxu0 0
    %7794 = vmatpush2.bf16.msra.mxu0 %v7229
    %7795 = vmatprep.subr.bf16.mxu0 0
    %7796 = vmatpush2.bf16.msra.mxu0 %v7224
    %7797 = vmatprep.subr.bf16.mxu0 0
    %7798 = vmatpush2.bf16.msra.mxu0 %v7219
    %7799 = vmatprep.subr.bf16.mxu0 0
    %7800 = vmatpush2.bf16.msra.mxu0 %v7214
    %7801 = vmatprep.subr.bf16.mxu0 0
    %7802 = vmatpush2.bf16.msra.mxu0 %v7209
    %7803 = vmatprep.mubr.bf16.mxu0 %v6176
    %7804 = vmatmul.mubr.bf16.gmra.mxu0 %v6175
    %v7805 = vpop.f32.mrf.mxu0
    %v7806 = vadd.f32 %v7766, %v7805
    %v7807 = vpop.f32.mrf.mxu0
    %v7808 = vpop.f32.mrf.mxu0
    %v7809 = vpop.f32.mrf.mxu0
    %7810 = vdwg.mxu0
    %7811 = vmatprep.subr.bf16.mxu0 0
    %7812 = vmatpush1.bf16.msra.mxu0 %v7284
    %7813 = vmatprep.subr.bf16.mxu0 0
    %7814 = vmatpush1.bf16.msra.mxu0 %v7279
    %7815 = vmatprep.subr.bf16.mxu0 0
    %7816 = vmatpush1.bf16.msra.mxu0 %v7274
    %7817 = vmatprep.subr.bf16.mxu0 0
    %7818 = vmatpush1.bf16.msra.mxu0 %v7269
    %7819 = vmatprep.subr.bf16.mxu0 0
    %7820 = vmatpush1.bf16.msra.mxu0 %v7264
    %7821 = vmatprep.subr.bf16.mxu0 0
    %7822 = vmatpush1.bf16.msra.mxu0 %v7259
    %7823 = vmatprep.subr.bf16.mxu0 0
    %7824 = vmatpush1.bf16.msra.mxu0 %v7254
    %7825 = vmatprep.subr.bf16.mxu0 0
    %7826 = vmatpush1.bf16.msra.mxu0 %v7249
    %7827 = vmatprep.subr.bf16.mxu0 0
    %7828 = vmatpush2.bf16.msra.mxu0 0
    %7829 = vmatprep.subr.bf16.mxu0 0
    %7830 = vmatpush2.bf16.msra.mxu0 0
    %7831 = vmatprep.subr.bf16.mxu0 0
    %7832 = vmatpush2.bf16.msra.mxu0 0
    %7833 = vmatprep.subr.bf16.mxu0 0
    %7834 = vmatpush2.bf16.msra.mxu0 0
    %7835 = vmatprep.subr.bf16.mxu0 0
    %7836 = vmatpush2.bf16.msra.mxu0 0
    %7837 = vmatprep.subr.bf16.mxu0 0
    %7838 = vmatpush2.bf16.msra.mxu0 0
    %7839 = vmatprep.subr.bf16.mxu0 0
    %7840 = vmatpush2.bf16.msra.mxu0 0
    %7841 = vmatprep.subr.bf16.mxu0 0
    %7842 = vmatpush2.bf16.msra.mxu0 0
    %7843 = vmatprep.mubr.bf16.mxu0 0
    %7844 = vmatmul.mubr.bf16.gmra.mxu0 %v6177
    %v7845 = vpop.f32.mrf.mxu0
    %v7846 = vadd.f32 %v7806, %v7845
    %v7847 = vpop.f32.mrf.mxu0
    %v7848 = vpop.f32.mrf.mxu0
    %v7849 = vpop.f32.mrf.mxu0
    %7850 = vdwg.mxu0
    %v7851 = vmax.f32 %v7602, 0.0
    %v7852 = vmax.f32 %v7604, 0.0
    %v7853 = vmax.f32 %v7725, 0.0
    %v7854 = vmax.f32 %v7727, 0.0
    %v7855 = vmax.f32 %v7846, 0.0
    %v7856 = vpack.c.bf16 %v7851, %v7851
    %v7857 = vpack.c.bf16 %v7852, %v7852
    %v7858 = vpack.c.bf16 %v7853, %v7853
    %v7859 = vpack.c.bf16 %v7854, %v7854
    %v7860 = vpack.c.bf16 %v7855, %v7855
    %v7861 = vld [vmem:[%s15] sm:$0xf]
    %v7862 = vld [vmem:[%s15 + $0x4] sm:$0xf]
    %v7863 = vld [vmem:[%s15 + $0x8] sm:$0xf]
    %v7864 = vld [vmem:[%s15 + $0xc] sm:$0xf]
    %v7865 = vld [vmem:[%s15 + $0x10] sm:$0xf]
    %v7866 = vld [vmem:[%s15 + $0x14] sm:$0xf]
    %v7867 = vld [vmem:[%s15 + $0x18] sm:$0xf]
    %v7868 = vld [vmem:[%s15 + $0x1c] sm:$0xf]
    %v7869 = vld [vmem:[%s15 + $0x20] sm:$0xf]
    %v7870 = vld [vmem:[%s15 + $0x24] sm:$0xf]
    %v7871 = vld [vmem:[%s15 + $0x28] sm:$0xf]
    %v7872 = vld [vmem:[%s15 + $0x2c] sm:$0xf]
    %v7873 = vld [vmem:[%s15 + $0x30] sm:$0xf]
    %v7874 = vld [vmem:[%s15 + $0x34] sm:$0xf]
    %v7875 = vld [vmem:[%s15 + $0x38] sm:$0xf]
    %v7876 = vld [vmem:[%s15 + $0x3c] sm:$0xf]
    %v7877 = vld [vmem:[%s15 + $0x40] sm:$0xf]
    %v7878 = vld [vmem:[%s15 + $0x44] sm:$0xf]
    %v7879 = vld [vmem:[%s15 + $0x48] sm:$0xf]
    %v7880 = vld [vmem:[%s15 + $0x4c] sm:$0xf]
    %v7881 = vld [vmem:[%s15 + $0x50] sm:$0xf]
    %v7882 = vld [vmem:[%s15 + $0x54] sm:$0xf]
    %v7883 = vld [vmem:[%s15 + $0x58] sm:$0xf]
    %v7884 = vld [vmem:[%s15 + $0x5c] sm:$0xf]
    %v7885 = vld [vmem:[%s15 + $0x60] sm:$0xf]
    %v7886 = vld [vmem:[%s15 + $0x64] sm:$0xf]
    %v7887 = vld [vmem:[%s15 + $0x68] sm:$0xf]
    %v7888 = vld [vmem:[%s15 + $0x6c] sm:$0xf]
    %v7889 = vld [vmem:[%s15 + $0x70] sm:$0xf]
    %v7890 = vld [vmem:[%s15 + $0x74] sm:$0xf]
    %v7891 = vld [vmem:[%s15 + $0x78] sm:$0xf]
    %v7892 = vld [vmem:[%s15 + $0x7c] sm:$0xf]
    %v7893 = vld [vmem:[%s15 + $0x80] sm:$0xf]
    %v7894 = vld [vmem:[%s15 + $0x84] sm:$0xf]
    %v7895 = vld [vmem:[%s15 + $0x88] sm:$0xf]
    %v7896 = vld [vmem:[%s15 + $0x8c] sm:$0xf]
    %v7897 = vld [vmem:[%s15 + $0x90] sm:$0xf]
    %v7898 = vld [vmem:[%s15 + $0x94] sm:$0xf]
    %v7899 = vld [vmem:[%s15 + $0x98] sm:$0xf]
    %v7900 = vld [vmem:[%s15 + $0x9c] sm:$0xf]
    %v7901 = vld [vmem:[%s15 + $0xa0] sm:$0xf]
    %v7902 = vld [vmem:[%s15 + $0xa4] sm:$0xf]
    %v7903 = vld [vmem:[%s15 + $0xa8] sm:$0xf]
    %v7904 = vld [vmem:[%s15 + $0xac] sm:$0xf]
    %v7905 = vld [vmem:[%s15 + $0xb0] sm:$0xf]
    %v7906 = vld [vmem:[%s15 + $0xb4] sm:$0xf]
    %v7907 = vld [vmem:[%s15 + $0xb8] sm:$0xf]
    %v7908 = vld [vmem:[%s15 + $0xbc] sm:$0xf]
    %v7909 = vld [vmem:[%s15 + $0xc0] sm:$0xf]
    %v7910 = vld [vmem:[%s15 + $0xc4] sm:$0xf]
    %v7911 = vld [vmem:[%s15 + $0xc8] sm:$0xf]
    %v7912 = vld [vmem:[%s15 + $0xcc] sm:$0xf]
    %v7913 = vld [vmem:[%s15 + $0xd0] sm:$0xf]
    %v7914 = vld [vmem:[%s15 + $0xd4] sm:$0xf]
    %v7915 = vld [vmem:[%s15 + $0xd8] sm:$0xf]
    %v7916 = vld [vmem:[%s15 + $0xdc] sm:$0xf]
    %v7917 = vld [vmem:[%s15 + $0xe0] sm:$0xf]
    %v7918 = vld [vmem:[%s15 + $0xe4] sm:$0xf]
    %v7919 = vld [vmem:[%s15 + $0xe8] sm:$0xf]
    %v7920 = vld [vmem:[%s15 + $0xec] sm:$0xf]
    %v7921 = vld [vmem:[%s15 + $0xf0] sm:$0xf]
    %v7922 = vld [vmem:[%s15 + $0xf4] sm:$0xf]
    %v7923 = vld [vmem:[%s15 + $0xf8] sm:$0xf]
    %v7924 = vld [vmem:[%s15 + $0xfc] sm:$0xf]
    %v7925 = vld [vmem:[%s15 + $0x100] sm:$0xf]
    %v7926 = vld [vmem:[%s15 + $0x104] sm:$0xf]
    %v7927 = vld [vmem:[%s15 + $0x108] sm:$0xf]
    %v7928 = vld [vmem:[%s15 + $0x10c] sm:$0xf]
    %v7929 = vld [vmem:[%s15 + $0x110] sm:$0xf]
    %v7930 = vld [vmem:[%s15 + $0x114] sm:$0xf]
    %v7931 = vld [vmem:[%s15 + $0x118] sm:$0xf]
    %v7932 = vld [vmem:[%s15 + $0x11c] sm:$0xf]
    %v7933 = vld [vmem:[%s15 + $0x120] sm:$0xf]
    %v7934 = vld [vmem:[%s15 + $0x124] sm:$0xf]
    %v7935 = vld [vmem:[%s15 + $0x128] sm:$0xf]
    %v7936 = vld [vmem:[%s15 + $0x12c] sm:$0xf]
    %v7937 = vld [vmem:[%s15 + $0x130] sm:$0xf]
    %v7938 = vld [vmem:[%s15 + $0x134] sm:$0xf]
    %v7939 = vld [vmem:[%s15 + $0x138] sm:$0xf]
    %v7940 = vld [vmem:[%s15 + $0x13c] sm:$0xf]
    %v7941 = vld [vmem:[%s16] sm:$0x1]
    %v7943 = vlaneseq
    %v7944 = vshrl.u32 %v7943, 7
    %v7945 = vsub.s32 0, %v7944
    %v7946 = vrot.slane %v7941, %v7945
    %v8028 = vunpack.c.l.b16 %v7861
    %v8029 = vunpack.c.l.b16 %v7862
    %v8030 = vunpack.c.l.b16 %v7863
    %v8031 = vunpack.c.l.b16 %v7864
    %v8032 = vunpack.c.l.b16 %v7865
    %v8033 = vunpack.c.l.b16 %v7866
    %v8034 = vunpack.c.l.b16 %v7867
    %v8035 = vunpack.c.l.b16 %v7868
    %v8036 = vunpack.c.l.b16 %v7869
    %v8037 = vunpack.c.l.b16 %v7870
    %v8038 = vunpack.c.l.b16 %v7871
    %v8039 = vunpack.c.l.b16 %v7872
    %v8040 = vunpack.c.l.b16 %v7873
    %v8041 = vunpack.c.l.b16 %v7874
    %v8042 = vunpack.c.l.b16 %v7875
    %v8043 = vunpack.c.l.b16 %v7876
    %v8044 = vunpack.c.l.b16 %v7877
    %v8045 = vunpack.c.l.b16 %v7878
    %v8046 = vunpack.c.l.b16 %v7879
    %v8047 = vunpack.c.l.b16 %v7880
    %v8048 = vunpack.c.l.b16 %v7881
    %v8049 = vunpack.c.l.b16 %v7882
    %v8050 = vunpack.c.l.b16 %v7883
    %v8051 = vunpack.c.l.b16 %v7884
    %v8052 = vunpack.c.l.b16 %v7885
    %v8053 = vunpack.c.l.b16 %v7886
    %v8054 = vunpack.c.l.b16 %v7887
    %v8055 = vunpack.c.l.b16 %v7888
    %v8056 = vunpack.c.l.b16 %v7889
    %v8057 = vunpack.c.l.b16 %v7890
    %v8058 = vunpack.c.l.b16 %v7891
    %v8059 = vunpack.c.l.b16 %v7892
    %v8060 = vunpack.c.l.b16 %v7893
    %v8061 = vunpack.c.l.b16 %v7894
    %v8062 = vunpack.c.l.b16 %v7895
    %v8063 = vunpack.c.l.b16 %v7896
    %v8064 = vunpack.c.l.b16 %v7897
    %v8065 = vunpack.c.l.b16 %v7898
    %v8066 = vunpack.c.l.b16 %v7899
    %v8067 = vunpack.c.l.b16 %v7900
    %v8068 = vunpack.c.l.b16 %v7901
    %v8069 = vunpack.c.l.b16 %v7902
    %v8070 = vunpack.c.l.b16 %v7903
    %v8071 = vunpack.c.l.b16 %v7904
    %v8072 = vunpack.c.l.b16 %v7905
    %v8073 = vunpack.c.l.b16 %v7906
    %v8074 = vunpack.c.l.b16 %v7907
    %v8075 = vunpack.c.l.b16 %v7908
    %v8076 = vunpack.c.l.b16 %v7909
    %v8077 = vunpack.c.l.b16 %v7910
    %v8078 = vunpack.c.l.b16 %v7911
    %v8079 = vunpack.c.l.b16 %v7912
    %v8080 = vunpack.c.l.b16 %v7913
    %v8081 = vunpack.c.l.b16 %v7914
    %v8082 = vunpack.c.l.b16 %v7915
    %v8083 = vunpack.c.l.b16 %v7916
    %v8084 = vunpack.c.l.b16 %v7917
    %v8085 = vunpack.c.l.b16 %v7918
    %v8086 = vunpack.c.l.b16 %v7919
    %v8087 = vunpack.c.l.b16 %v7920
    %v8088 = vunpack.c.l.b16 %v7921
    %v8089 = vunpack.c.l.b16 %v7922
    %v8090 = vunpack.c.l.b16 %v7923
    %v8091 = vunpack.c.l.b16 %v7924
    %v8092 = vunpack.c.l.b16 %v7925
    %v8093 = vunpack.c.l.b16 %v7926
    %v8094 = vunpack.c.l.b16 %v7927
    %v8095 = vunpack.c.l.b16 %v7928
    %v8096 = vunpack.c.l.b16 %v7929
    %v8097 = vunpack.c.l.b16 %v7930
    %v8098 = vunpack.c.l.b16 %v7931
    %v8099 = vunpack.c.l.b16 %v7932
    %v8100 = vunpack.c.l.b16 %v7933
    %v8101 = vunpack.c.l.b16 %v7934
    %v8102 = vunpack.c.l.b16 %v7935
    %v8103 = vunpack.c.l.b16 %v7936
    %v8104 = vunpack.c.l.b16 %v7937
    %v8105 = vunpack.c.l.b16 %v7938
    %v8106 = vunpack.c.l.b16 %v7939
    %v8107 = vunpack.c.l.b16 %v7940
    %v8108 = vpack.c.b16 %v8029, %v8028
    %v8109 = vpack.c.b16 %v8031, %v8030
    %v8110 = vpack.c.b16 %v8033, %v8032
    %v8111 = vpack.c.b16 %v8035, %v8034
    %v8112 = vpack.c.b16 %v8037, %v8036
    %v8113 = vpack.c.b16 %v8039, %v8038
    %v8114 = vpack.c.b16 %v8041, %v8040
    %v8115 = vpack.c.b16 %v8043, %v8042
    %v8116 = vpack.c.b16 %v8045, %v8044
    %v8117 = vpack.c.b16 %v8047, %v8046
    %v8118 = vpack.c.b16 %v8049, %v8048
    %v8119 = vpack.c.b16 %v8051, %v8050
    %v8120 = vpack.c.b16 %v8053, %v8052
    %v8121 = vpack.c.b16 %v8055, %v8054
    %v8122 = vpack.c.b16 %v8057, %v8056
    %v8123 = vpack.c.b16 %v8059, %v8058
    %v8124 = vpack.c.b16 %v8061, %v8060
    %v8125 = vpack.c.b16 %v8063, %v8062
    %v8126 = vpack.c.b16 %v8065, %v8064
    %v8127 = vpack.c.b16 %v8067, %v8066
    %v8128 = vpack.c.b16 %v8069, %v8068
    %v8129 = vpack.c.b16 %v8071, %v8070
    %v8130 = vpack.c.b16 %v8073, %v8072
    %v8131 = vpack.c.b16 %v8075, %v8074
    %v8132 = vpack.c.b16 %v8077, %v8076
    %v8133 = vpack.c.b16 %v8079, %v8078
    %v8134 = vpack.c.b16 %v8081, %v8080
    %v8135 = vpack.c.b16 %v8083, %v8082
    %v8136 = vpack.c.b16 %v8085, %v8084
    %v8137 = vpack.c.b16 %v8087, %v8086
    %v8138 = vpack.c.b16 %v8089, %v8088
    %v8139 = vpack.c.b16 %v8091, %v8090
    %v8140 = vpack.c.b16 %v8093, %v8092
    %v8141 = vpack.c.b16 %v8095, %v8094
    %v8142 = vpack.c.b16 %v8097, %v8096
    %v8143 = vpack.c.b16 %v8099, %v8098
    %v8144 = vpack.c.b16 %v8101, %v8100
    %v8145 = vpack.c.b16 %v8103, %v8102
    %v8146 = vpack.c.b16 %v8105, %v8104
    %v8147 = vpack.c.b16 %v8107, %v8106
    %8188 = vmatprep.subr.bf16.mxu0 0
    %8189 = vmatpush1.bf16.msra.mxu0 %v8115
    %8190 = vmatprep.subr.bf16.mxu0 0
    %8191 = vmatpush1.bf16.msra.mxu0 %v8114
    %8192 = vmatprep.subr.bf16.mxu0 0
    %8193 = vmatpush1.bf16.msra.mxu0 %v8113
    %8194 = vmatprep.subr.bf16.mxu0 0
    %8195 = vmatpush1.bf16.msra.mxu0 %v8112
    %8196 = vmatprep.subr.bf16.mxu0 0
    %8197 = vmatpush1.bf16.msra.mxu0 %v8111
    %8198 = vmatprep.subr.bf16.mxu0 0
    %8199 = vmatpush1.bf16.msra.mxu0 %v8110
    %8200 = vmatprep.subr.bf16.mxu0 0
    %8201 = vmatpush1.bf16.msra.mxu0 %v8109
    %8202 = vmatprep.subr.bf16.mxu0 0
    %8203 = vmatpush1.bf16.msra.mxu0 %v8108
    %8204 = vmatprep.subr.bf16.mxu0 0
    %8205 = vmatpush2.bf16.msra.mxu0 %v8123
    %8206 = vmatprep.subr.bf16.mxu0 0
    %8207 = vmatpush2.bf16.msra.mxu0 %v8122
    %8208 = vmatprep.subr.bf16.mxu0 0
    %8209 = vmatpush2.bf16.msra.mxu0 %v8121
    %8210 = vmatprep.subr.bf16.mxu0 0
    %8211 = vmatpush2.bf16.msra.mxu0 %v8120
    %8212 = vmatprep.subr.bf16.mxu0 0
    %8213 = vmatpush2.bf16.msra.mxu0 %v8119
    %8214 = vmatprep.subr.bf16.mxu0 0
    %8215 = vmatpush2.bf16.msra.mxu0 %v8118
    %8216 = vmatprep.subr.bf16.mxu0 0
    %8217 = vmatpush2.bf16.msra.mxu0 %v8117
    %8218 = vmatprep.subr.bf16.mxu0 0
    %8219 = vmatpush2.bf16.msra.mxu0 %v8116
    %8220 = vmatprep.mubr.bf16.mxu0 %v7857
    %8221 = vmatmul.mubr.bf16.gmra.mxu0 %v7856
    %v8222 = vpop.f32.mrf.mxu0
    %v8223 = vadd.f32 %v7946, %v8222
    %v8224 = vpop.f32.mrf.mxu0
    %v8225 = vpop.f32.mrf.mxu0
    %v8226 = vpop.f32.mrf.mxu0
    %8227 = vdwg.mxu0
    %8228 = vmatprep.subr.bf16.mxu0 0
    %8229 = vmatpush1.bf16.msra.mxu0 %v8131
    %8230 = vmatprep.subr.bf16.mxu0 0
    %8231 = vmatpush1.bf16.msra.mxu0 %v8130
    %8232 = vmatprep.subr.bf16.mxu0 0
    %8233 = vmatpush1.bf16.msra.mxu0 %v8129
    %8234 = vmatprep.subr.bf16.mxu0 0
    %8235 = vmatpush1.bf16.msra.mxu0 %v8128
    %8236 = vmatprep.subr.bf16.mxu0 0
    %8237 = vmatpush1.bf16.msra.mxu0 %v8127
    %8238 = vmatprep.subr.bf16.mxu0 0
    %8239 = vmatpush1.bf16.msra.mxu0 %v8126
    %8240 = vmatprep.subr.bf16.mxu0 0
    %8241 = vmatpush1.bf16.msra.mxu0 %v8125
    %8242 = vmatprep.subr.bf16.mxu0 0
    %8243 = vmatpush1.bf16.msra.mxu0 %v8124
    %8244 = vmatprep.subr.bf16.mxu0 0
    %8245 = vmatpush2.bf16.msra.mxu0 %v8139
    %8246 = vmatprep.subr.bf16.mxu0 0
    %8247 = vmatpush2.bf16.msra.mxu0 %v8138
    %8248 = vmatprep.subr.bf16.mxu0 0
    %8249 = vmatpush2.bf16.msra.mxu0 %v8137
    %8250 = vmatprep.subr.bf16.mxu0 0
    %8251 = vmatpush2.bf16.msra.mxu0 %v8136
    %8252 = vmatprep.subr.bf16.mxu0 0
    %8253 = vmatpush2.bf16.msra.mxu0 %v8135
    %8254 = vmatprep.subr.bf16.mxu0 0
    %8255 = vmatpush2.bf16.msra.mxu0 %v8134
    %8256 = vmatprep.subr.bf16.mxu0 0
    %8257 = vmatpush2.bf16.msra.mxu0 %v8133
    %8258 = vmatprep.subr.bf16.mxu0 0
    %8259 = vmatpush2.bf16.msra.mxu0 %v8132
    %8260 = vmatprep.mubr.bf16.mxu0 %v7859
    %8261 = vmatmul.mubr.bf16.gmra.mxu0 %v7858
    %v8262 = vpop.f32.mrf.mxu0
    %v8263 = vadd.f32 %v8223, %v8262
    %v8264 = vpop.f32.mrf.mxu0
    %v8265 = vpop.f32.mrf.mxu0
    %v8266 = vpop.f32.mrf.mxu0
    %8267 = vdwg.mxu0
    %8268 = vmatprep.subr.bf16.mxu0 0
    %8269 = vmatpush1.bf16.msra.mxu0 %v8147
    %8270 = vmatprep.subr.bf16.mxu0 0
    %8271 = vmatpush1.bf16.msra.mxu0 %v8146
    %8272 = vmatprep.subr.bf16.mxu0 0
    %8273 = vmatpush1.bf16.msra.mxu0 %v8145
    %8274 = vmatprep.subr.bf16.mxu0 0
    %8275 = vmatpush1.bf16.msra.mxu0 %v8144
    %8276 = vmatprep.subr.bf16.mxu0 0
    %8277 = vmatpush1.bf16.msra.mxu0 %v8143
    %8278 = vmatprep.subr.bf16.mxu0 0
    %8279 = vmatpush1.bf16.msra.mxu0 %v8142
    %8280 = vmatprep.subr.bf16.mxu0 0
    %8281 = vmatpush1.bf16.msra.mxu0 %v8141
    %8282 = vmatprep.subr.bf16.mxu0 0
    %8283 = vmatpush1.bf16.msra.mxu0 %v8140
    %8284 = vmatprep.subr.bf16.mxu0 0
    %8285 = vmatpush2.bf16.msra.mxu0 0
    %8286 = vmatprep.subr.bf16.mxu0 0
    %8287 = vmatpush2.bf16.msra.mxu0 0
    %8288 = vmatprep.subr.bf16.mxu0 0
    %8289 = vmatpush2.bf16.msra.mxu0 0
    %8290 = vmatprep.subr.bf16.mxu0 0
    %8291 = vmatpush2.bf16.msra.mxu0 0
    %8292 = vmatprep.subr.bf16.mxu0 0
    %8293 = vmatpush2.bf16.msra.mxu0 0
    %8294 = vmatprep.subr.bf16.mxu0 0
    %8295 = vmatpush2.bf16.msra.mxu0 0
    %8296 = vmatprep.subr.bf16.mxu0 0
    %8297 = vmatpush2.bf16.msra.mxu0 0
    %8298 = vmatprep.subr.bf16.mxu0 0
    %8299 = vmatpush2.bf16.msra.mxu0 0
    %8300 = vmatprep.mubr.bf16.mxu0 0
    %8301 = vmatmul.mubr.bf16.gmra.mxu0 %v7860
    %v8302 = vpop.f32.mrf.mxu0
    %v8303 = vadd.f32 %v8263, %v8302
    %v8304 = vpop.f32.mrf.mxu0
    %v8305 = vpop.f32.mrf.mxu0
    %v8306 = vpop.f32.mrf.mxu0
    %8307 = vdwg.mxu0
    %v8308 = vmax.f32 %v8303, 0.0
    %v8309 = vld [vmem:[%s17] sm:$0xff]
    %v8310 = vld [vmem:[%s17 + $0x8] sm:$0xff]
    %v8311 = vld [vmem:[%s17 + $0x10] sm:$0xff]
    %v8312 = vld [vmem:[%s17 + $0x18] sm:$0xff]
    %v8313 = vld [vmem:[%s17 + $0x20] sm:$0xff]
    %v8314 = vld [vmem:[%s17 + $0x28] sm:$0xff]
    %v8315 = vld [vmem:[%s17 + $0x30] sm:$0xff]
    %v8316 = vld [vmem:[%s17 + $0x38] sm:$0xff]
    %v8317 = vld [vmem:[%s18] sm:$0x1]
    %v8319 = vlaneseq
    %v8320 = vshrl.u32 %v8319, 7
    %v8321 = vsub.s32 0, %v8320
    %v8322 = vrot.slane %v8317, %v8321
    %vm8324 = vcmask 523264
    %v8326 = vsel %vm8324, %v8308, 0
    %8328 = vmatprep.subr.mxu0 0.0
    %8329 = vmatpush1.msra.mxu0 0.0
    %8330 = vmatprep.subr.mxu0 0.0
    %8331 = vmatpush1.msra.mxu0 0.0
    %8332 = vmatprep.subr.mxu0 0.0
    %8333 = vmatpush1.msra.mxu0 0.0
    %8334 = vmatprep.subr.mxu0 0.0
    %8335 = vmatpush1.msra.mxu0 0.0
    %8336 = vmatprep.subr.mxu0 0.0
    %8337 = vmatpush1.msra.mxu0 0.0
    %8338 = vmatprep.subr.mxu0 0.0
    %8339 = vmatpush1.msra.mxu0 0.0
    %8340 = vmatprep.subr.mxu0 0.0
    %8341 = vmatpush1.msra.mxu0 0.0
    %8342 = vmatprep.subr.mxu0 0.0
    %8343 = vmatpush1.msra.mxu0 0.0
    %8344 = vmatprep.subr.mxu0 0.0
    %8345 = vmatpush1.msra.mxu0 %v8316
    %8346 = vmatprep.subr.mxu0 0.0
    %8347 = vmatpush1.msra.mxu0 %v8315
    %8348 = vmatprep.subr.mxu0 0.0
    %8349 = vmatpush1.msra.mxu0 %v8314
    %8350 = vmatprep.subr.mxu0 0.0
    %8351 = vmatpush1.msra.mxu0 %v8313
    %8352 = vmatprep.subr.mxu0 0.0
    %8353 = vmatpush1.msra.mxu0 %v8312
    %8354 = vmatprep.subr.mxu0 0.0
    %8355 = vmatpush1.msra.mxu0 %v8311
    %8356 = vmatprep.subr.mxu0 0.0
    %8357 = vmatpush1.msra.mxu0 %v8310
    %8358 = vmatprep.subr.mxu0 0.0
    %8359 = vmatpush1.msra.mxu0 %v8309
    %8360 = vmatprep.subr.mxu0 0.0
    %8361 = vmatpush2.msra.mxu0 0.0
    %8362 = vmatprep.subr.mxu0 0.0
    %8363 = vmatpush2.msra.mxu0 0.0
    %8364 = vmatprep.subr.mxu0 0.0
    %8365 = vmatpush2.msra.mxu0 0.0
    %8366 = vmatprep.subr.mxu0 0.0
    %8367 = vmatpush2.msra.mxu0 0.0
    %8368 = vmatprep.subr.mxu0 0.0
    %8369 = vmatpush2.msra.mxu0 0.0
    %8370 = vmatprep.subr.mxu0 0.0
    %8371 = vmatpush2.msra.mxu0 0.0
    %8372 = vmatprep.subr.mxu0 0.0
    %8373 = vmatpush2.msra.mxu0 0.0
    %8374 = vmatprep.subr.mxu0 0.0
    %8375 = vmatpush2.msra.mxu0 0.0
    %8376 = vmatprep.subr.mxu0 0.0
    %8377 = vmatpush2.msra.mxu0 0.0
    %8378 = vmatprep.subr.mxu0 0.0
    %8379 = vmatpush2.msra.mxu0 0.0
    %8380 = vmatprep.subr.mxu0 0.0
    %8381 = vmatpush2.msra.mxu0 0.0
    %8382 = vmatprep.subr.mxu0 0.0
    %8383 = vmatpush2.msra.mxu0 0.0
    %8384 = vmatprep.subr.mxu0 0.0
    %8385 = vmatpush2.msra.mxu0 0.0
    %8386 = vmatprep.subr.mxu0 0.0
    %8387 = vmatpush2.msra.mxu0 0.0
    %8388 = vmatprep.subr.mxu0 0.0
    %8389 = vmatpush2.msra.mxu0 0.0
    %8390 = vmatprep.subr.mxu0 0.0
    %8391 = vmatpush2.msra.mxu0 0.0
    %8392 = vmatprep.mubr.f32.mxu0 0.0
    %8393 = vmatmul.mubr.f32.gmra.mxu0 %v8326
    %v8394 = vpop.f32.mrf.mxu0
    %v8395 = vadd.f32 %v8322, %v8394
    %v8396 = vpop.f32.mrf.mxu0
    %8397 = vdwg.mxu0
    %v8398 = vmax.f32 %v8395, 0.0
    %v8399 = vld [vmem:[%s19] sm:$0xff]
    %v8400 = vld [vmem:[%s19 + $0x8] sm:$0xff]
    %v8401 = vld [vmem:[#allocation6] sm:$0x1]
    %v8403 = vlaneseq
    %v8404 = vshrl.u32 %v8403, 7
    %v8405 = vsub.s32 0, %v8404
    %v8406 = vrot.slane %v8401, %v8405
    %vm8408 = vcmask 130048
    %v8410 = vsel %vm8408, %v8398, 0
    %8412 = vmatprep.subr.mxu0 0.0
    %8413 = vmatpush1.msra.mxu0 0.0
    %8414 = vmatprep.subr.mxu0 0.0
    %8415 = vmatpush1.msra.mxu0 0.0
    %8416 = vmatprep.subr.mxu0 0.0
    %8417 = vmatpush1.msra.mxu0 0.0
    %8418 = vmatprep.subr.mxu0 0.0
    %8419 = vmatpush1.msra.mxu0 0.0
    %8420 = vmatprep.subr.mxu0 0.0
    %8421 = vmatpush1.msra.mxu0 0.0
    %8422 = vmatprep.subr.mxu0 0.0
    %8423 = vmatpush1.msra.mxu0 0.0
    %8424 = vmatprep.subr.mxu0 0.0
    %8425 = vmatpush1.msra.mxu0 0.0
    %8426 = vmatprep.subr.mxu0 0.0
    %8427 = vmatpush1.msra.mxu0 0.0
    %8428 = vmatprep.subr.mxu0 0.0
    %8429 = vmatpush1.msra.mxu0 0.0
    %8430 = vmatprep.subr.mxu0 0.0
    %8431 = vmatpush1.msra.mxu0 0.0
    %8432 = vmatprep.subr.mxu0 0.0
    %8433 = vmatpush1.msra.mxu0 0.0
    %8434 = vmatprep.subr.mxu0 0.0
    %8435 = vmatpush1.msra.mxu0 0.0
    %8436 = vmatprep.subr.mxu0 0.0
    %8437 = vmatpush1.msra.mxu0 0.0
    %8438 = vmatprep.subr.mxu0 0.0
    %8439 = vmatpush1.msra.mxu0 0.0
    %8440 = vmatprep.subr.mxu0 0.0
    %8441 = vmatpush1.msra.mxu0 %v8400
    %8442 = vmatprep.subr.mxu0 0.0
    %8443 = vmatpush1.msra.mxu0 %v8399
    %8444 = vmatprep.subr.mxu0 0.0
    %8445 = vmatpush2.msra.mxu0 0.0
    %8446 = vmatprep.subr.mxu0 0.0
    %8447 = vmatpush2.msra.mxu0 0.0
    %8448 = vmatprep.subr.mxu0 0.0
    %8449 = vmatpush2.msra.mxu0 0.0
    %8450 = vmatprep.subr.mxu0 0.0
    %8451 = vmatpush2.msra.mxu0 0.0
    %8452 = vmatprep.subr.mxu0 0.0
    %8453 = vmatpush2.msra.mxu0 0.0
    %8454 = vmatprep.subr.mxu0 0.0
    %8455 = vmatpush2.msra.mxu0 0.0
    %8456 = vmatprep.subr.mxu0 0.0
    %8457 = vmatpush2.msra.mxu0 0.0
    %8458 = vmatprep.subr.mxu0 0.0
    %8459 = vmatpush2.msra.mxu0 0.0
    %8460 = vmatprep.subr.mxu0 0.0
    %8461 = vmatpush2.msra.mxu0 0.0
    %8462 = vmatprep.subr.mxu0 0.0
    %8463 = vmatpush2.msra.mxu0 0.0
    %8464 = vmatprep.subr.mxu0 0.0
    %8465 = vmatpush2.msra.mxu0 0.0
    %8466 = vmatprep.subr.mxu0 0.0
    %8467 = vmatpush2.msra.mxu0 0.0
    %8468 = vmatprep.subr.mxu0 0.0
    %8469 = vmatpush2.msra.mxu0 0.0
    %8470 = vmatprep.subr.mxu0 0.0
    %8471 = vmatpush2.msra.mxu0 0.0
    %8472 = vmatprep.subr.mxu0 0.0
    %8473 = vmatpush2.msra.mxu0 0.0
    %8474 = vmatprep.subr.mxu0 0.0
    %8475 = vmatpush2.msra.mxu0 0.0
    %8476 = vmatprep.mubr.f32.mxu0 0.0
    %8477 = vmatmul.mubr.f32.gmra.mxu0 %v8410
    %v8478 = vpop.f32.mrf.mxu0
    %v8479 = vadd.f32 %v8406, %v8478
    %v8480 = vpop.f32.mrf.mxu0
    %8481 = vdwg.mxu0
    %vm8482 = vcmask 1024
    %8483 = vst.msk [vmem:[%s21] sm:$0x3] %vm8482, %v8479
    // Predicated region
    $region102: #{forward.1} parent=1 // pred_check
      _
    $region103: #{forward.1} parent=1 // pred_check_branch
      %8485 = sbr.rel (0) target = $region105
    $region104: #{forward.1} parent=1 // pred_region
      _
    $region105: #{forward.1} parent=1 // pred_fallthru
      _
    // Predicated region
    $region106: #{forward.1} parent=1 // pred_check
      _
    $region107: #{forward.1} parent=1 // pred_check_branch
      %8487 = sbr.rel (0) target = $region109
    $region108: #{forward.1} parent=1 // pred_region
      _
    $region109: #{forward.1} parent=1 // pred_fallthru
      _
    %8488 = vsyncpa [#allocation8], 1
    %8489 = vsyncpa [#allocation10], 1
    %8490 = vsyncpa [#allocation13], 1

</llo_original>
